<compile_context>
chip_gen: v7x
topology: tpu7x:2x2x1
jax: 0.10.0
libtpu: 0.0.40
codegen_flags: <defaults>
</compile_context>

<pallas_src>
import functools

import jax
import jax.numpy as jnp
from jax.experimental import pallas as pl


C1, C2, HID = 8, 16, 32   # layer2 / layer3 channels, IoU-head hidden size
CPAD = 128                # lane-dense slab width for pooled features
PPAD = 128                # lane-dense padded proposal count for the IoU output


# --------------------------------------------------------------------------
# Kernel 1: fused backbone (conv1 + ReLU + conv2 + ReLU + global avg pool)
# --------------------------------------------------------------------------

def _backbone_pool_kernel(cols1_ref, w1_ref, b1_ref, w2_ref, b2_ref,
                          pooled_ref, *, B, H, W):
    # conv1: single K = 9*Cin matmul over wrapper-packed im2col columns.
    f2 = jnp.dot(cols1_ref[...], w1_ref[...], preferred_element_type=jnp.float32)
    f2 = jnp.maximum(f2 + b1_ref[...], 0.0)                       # (B*H*W, C1)
    c1 = f2.shape[-1]
    c2 = w2_ref.shape[-1]

    # conv2: zero-pad + im2col entirely in VMEM (f2 never round-trips to HBM),
    # then one K = 9*C1 matmul instead of 9 tiny taps.
    f2sp = f2.reshape(B, H, W, c1)
    zr = jnp.zeros((B, 1, W, c1), jnp.float32)
    f2p = jnp.concatenate([zr, f2sp, zr], axis=1)                 # (B, H+2, W, C1)
    zc = jnp.zeros((B, H + 2, 1, c1), jnp.float32)
    f2p = jnp.concatenate([zc, f2p, zc], axis=2)                  # (B, H+2, W+2, C1)
    cols2 = jnp.concatenate(
        [f2p[:, kh:kh + H, kw:kw + W, :] for kh in range(3) for kw in range(3)],
        axis=-1)                                                  # (B, H, W, 9*C1)
    f3 = jnp.dot(cols2.reshape(B * H * W, 9 * c1), w2_ref[...],
                 preferred_element_type=jnp.float32)
    f3 = jnp.maximum(f3 + b2_ref[...], 0.0)                       # (B*H*W, C2)

    # Global average pooling while activations are still in vregs; emit one
    # lane-dense (B, CPAD) slab: [pool_layer2 | pool_layer3 | zeros].
    inv = jnp.float32(1.0 / (H * W))
    p2 = jnp.sum(f2.reshape(B, H * W, c1), axis=1) * inv          # (B, C1)
    p3 = jnp.sum(f3.reshape(B, H * W, c2), axis=1) * inv          # (B, C2)
    pad = jnp.zeros((B, pooled_ref.shape[-1] - c1 - c2), jnp.float32)
    pooled_ref[...] = jnp.concatenate([p2, p3, pad], axis=-1)


def backbone_pooled_features(params, im_nchw):
    """Fused conv1+ReLU+conv2+ReLU+GAP.  Returns a (B, CPAD) pooled slab."""
    x = jnp.transpose(im_nchw, (0, 2, 3, 1)).astype(jnp.float32)  # NHWC
    B, H, W, Cin = x.shape
    xp = jnp.pad(x, ((0, 0), (1, 1), (1, 1), (0, 0)))
    # im2col for conv1 in the XLA wrapper: (B*H*W, 9*Cin)
    cols1 = jnp.concatenate(
        [xp[:, kh:kh + H, kw:kw + W, :] for kh in range(3) for kw in range(3)],
        axis=-1).reshape(B * H * W, 9 * Cin)
    w1 = params["conv1_w"].reshape(9 * Cin, C1)   # HWIO -> (9*Cin, Cout)
    w2 = params["conv2_w"].reshape(9 * C1, C2)
    # Single block, no grid: the whole batch fits comfortably in VMEM on
    # v5e/v6e/v7x; per-image grid steps would be pure loop overhead here.
    return pl.pallas_call(
        functools.partial(_backbone_pool_kernel, B=B, H=H, W=W),
        out_shape=jax.ShapeDtypeStruct((B, CPAD), jnp.float32),
    )(cols1, w1, params["conv1_b"].reshape(1, C1),
      w2, params["conv2_b"].reshape(1, C2))


# --------------------------------------------------------------------------
# Kernel 2: fused IoU head (modulation FCs + modulation + fc1 + fc2)
# --------------------------------------------------------------------------

def _iou_head_kernel(ptr_ref, pte_ref, bb_ref, prop_ref,
                     wm2a_ref, wm2b_ref, bm2_ref,
                     wm3a_ref, wm3b_ref, bm3_ref,
                     wf2_ref, wf3_ref, wfp_ref, bf1_ref,
                     wout_ref, bout_ref, iou_ref):
    c1 = wm2a_ref.shape[0]
    c2 = wm3a_ref.shape[0]
    N, Pp, _ = prop_ref.shape
    hid = bf1_ref.shape[-1]

    bb = bb_ref[...]                                              # (N, 4)
    p2_tr = ptr_ref[:, :c1]
    p3_tr = ptr_ref[:, c1:c1 + c2]
    p2_te = pte_ref[:, :c1]
    p3_te = pte_ref[:, c1:c1 + c2]

    # Modulation FCs; the [feat | bb] concat is replaced by split-weight matmuls.
    mod2 = jnp.maximum(
        jnp.dot(p2_tr, wm2a_ref[...], preferred_element_type=jnp.float32)
        + jnp.dot(bb, wm2b_ref[...], preferred_element_type=jnp.float32)
        + bm2_ref[...], 0.0)                                      # (N, C1)
    mod3 = jnp.maximum(
        jnp.dot(p3_tr, wm3a_ref[...], preferred_element_type=jnp.float32)
        + jnp.dot(bb, wm3b_ref[...], preferred_element_type=jnp.float32)
        + bm3_ref[...], 0.0)                                      # (N, C2)

    # Modulated test features -> per-sequence fc1 feature term (computed once
    # per sequence, not once per proposal).
    feat_h = (jnp.dot(p2_te * mod2, wf2_ref[...], preferred_element_type=jnp.float32)
              + jnp.dot(p3_te * mod3, wf3_ref[...], preferred_element_type=jnp.float32))

    # fc1 proposal term per proposal, then fc2 folded into a lane reduction so
    # the only store is one lane-dense (N, PPAD) slab.
    prop_h = jnp.dot(prop_ref[...].reshape(N * Pp, 4), wfp_ref[...],
                     preferred_element_type=jnp.float32)          # (N*Pp, HID)
    h = jnp.maximum(prop_h.reshape(N, Pp, hid) + feat_h[:, None, :]
                    + bf1_ref[...].reshape(1, 1, hid), 0.0)       # (N, Pp, HID)
    iou = jnp.sum(h * wout_ref[...].reshape(1, 1, hid), axis=-1)  # (N, Pp)
    iou_ref[...] = iou + bout_ref[...]


def bb_regressor(params, pooled_train, pooled_test, train_bb, test_proposals):
    """Synthetic AtomIoUNet head on pooled backbone features.

    pooled_train: (num_train*S, CPAD), pooled_test: (num_test*S, CPAD)
    train_bb: (num_train, S, 4), test_proposals: (num_train, S, P, 4)
    Returns iou of shape (num_test, S, P).
    """
    num_train, S = train_bb.shape[0], train_bb.shape[1]
    P = test_proposals.shape[2]
    num_test = pooled_test.shape[0] // S

    # Like AtomIoUNet, the modulation vector is computed from the *first* train
    # image and broadcast over all test images (fixes the previous implicit
    # num_train == num_test == 1 assumption).
    ptr0 = pooled_train.reshape(num_train, S, CPAD)[0]            # (S, CPAD)
    bb0 = train_bb[0]                                             # (S, 4)
    prop0 = test_proposals[0]                                     # (S, P, 4)
    # TODO(synk): real ATOM uses PrRoIPool2D over train_bb / proposals; here
    # features are global averages and the same proposals serve every test image.

    N = num_test * S
    ptr = jnp.tile(ptr0, (num_test, 1))                           # (N, CPAD)
    bb = jnp.tile(bb0, (num_test, 1))                             # (N, 4)
    prop = jnp.tile(prop0, (num_test, 1, 1))                      # (N, P, 4)
    prop = jnp.pad(prop, ((0, 0), (0, PPAD - P), (0, 0)))         # lane-dense out

    wm2a, wm2b = params["mod2_w"][:C1], params["mod2_w"][C1:]
    wm3a, wm3b = params["mod3_w"][:C2], params["mod3_w"][C2:]
    wf2 = params["fc1_w"][:C1]
    wf3 = params["fc1_w"][C1:C1 + C2]
    wfp = params["fc1_w"][C1 + C2:]

    iou = pl.pallas_call(
        _iou_head_kernel,
        out_shape=jax.ShapeDtypeStruct((N, PPAD), jnp.float32),
    )(ptr, pooled_test, bb, prop,
      wm2a, wm2b, params["mod2_b"].reshape(1, C1),
      wm3a, wm3b, params["mod3_b"].reshape(1, C2),
      wf2, wf3, wfp, params["fc1_b"].reshape(1, HID),
      params["fc2_w"].reshape(1, HID), params["fc2_b"].reshape(1, 1))
    return iou[:, :P].reshape(num_test, S, P)


# --------------------------------------------------------------------------
# Synthetic ATOMnet parameters + forward
# --------------------------------------------------------------------------

def init_params(key):
    ks = jax.random.split(key, 6)

    def w(k, shape, fan_in):
        return (jax.random.normal(k, shape, jnp.float32) /
                jnp.sqrt(jnp.float32(fan_in)))

    return {
        "conv1_w": w(ks[0], (3, 3, 3, C1), 3 * 9),
        "conv1_b": jnp.full((C1,), 0.01, jnp.float32),
        "conv2_w": w(ks[1], (3, 3, C1, C2), C1 * 9),
        "conv2_b": jnp.full((C2,), 0.01, jnp.float32),
        "mod2_w": w(ks[2], (C1 + 4, C1), C1 + 4),
        "mod2_b": jnp.zeros((C1,), jnp.float32),
        "mod3_w": w(ks[3], (C2 + 4, C2), C2 + 4),
        "mod3_b": jnp.zeros((C2,), jnp.float32),
        "fc1_w": w(ks[4], (C1 + C2 + 4, HID), C1 + C2 + 4),
        "fc1_b": jnp.zeros((HID,), jnp.float32),
        "fc2_w": w(ks[5], (HID, 1), HID),
        "fc2_b": jnp.zeros((1,), jnp.float32),
    }


def atomnet_forward(params, train_imgs, test_imgs, train_bb, test_proposals):
    """Mirrors ATOMnet.forward semantics."""
    num_sequences = train_imgs.shape[-4]
    num_train_images = train_imgs.shape[0] if train_imgs.ndim == 5 else 1
    num_test_images = test_imgs.shape[0] if test_imgs.ndim == 5 else 1
    del num_test_images  # recomputed inside bb_regressor from the pooled rows

    train_flat = train_imgs.reshape(-1, *train_imgs.shape[-3:])
    test_flat = test_imgs.reshape(-1, *test_imgs.shape[-3:])
    n_tr = train_flat.shape[0]

    # Backbone weights are shared, so train and test batches are processed by a
    # single fused backbone+pool kernel launch.
    pooled = backbone_pooled_features(
        params, jnp.concatenate([train_flat, test_flat], axis=0))
    pooled_train, pooled_test = pooled[:n_tr], pooled[n_tr:]

    iou_pred = bb_regressor(
        params, pooled_train, pooled_test,
        train_bb.reshape(num_train_images, num_sequences, 4),
        test_proposals.reshape(num_train_images, num_sequences, -1, 4))
    return iou_pred


# --------------------------------------------------------------------------

if __name__ == "__main__":
    key = jax.random.PRNGKey(0)
    k1, k2, k3, k4, kp = jax.random.split(key, 5)

    S, P = 2, 8  # num_sequences, num_proposals (num_train = num_test = 1)
    train_imgs = jax.random.normal(k1, (1, S, 3, 16, 16), jnp.float32)
    test_imgs = jax.random.normal(k2, (1, S, 3, 16, 16), jnp.float32)
    train_bb = jax.random.uniform(k3, (1, S, 4), jnp.float32) * 16.0
    test_proposals = jax.random.uniform(k4, (1, S, P, 4), jnp.float32) * 16.0

    params = init_params(kp)

    iou_pred = jax.jit(atomnet_forward)(
        params, train_imgs, test_imgs, train_bb, test_proposals)
    iou_pred = jax.block_until_ready(iou_pred)

    assert iou_pred.shape == (1, S, P), iou_pred.shape
    assert bool(jnp.all(jnp.isfinite(iou_pred)))
    print("KERNEL_OK")
</pallas_src>

<mosaic_0001>
module attributes {stable_mosaic.version = 11 : i64} {
  func.func @_backbone_pool_kernel(%arg0: memref<1024x27xf32, #tpu.memory_space<vmem>>, %arg1: memref<27x8xf32, #tpu.memory_space<vmem>>, %arg2: memref<1x8xf32, #tpu.memory_space<vmem>>, %arg3: memref<72x16xf32, #tpu.memory_space<vmem>>, %arg4: memref<1x16xf32, #tpu.memory_space<vmem>>, %arg5: memref<4x128xf32, #tpu.memory_space<vmem>>) attributes {dimension_semantics = [], scalar_prefetch = 0 : i64, scratch_operands = 0 : i64, tpu.core_type = #tpu.core_type<tc>} {
    %c0 = arith.constant 0 : index
    %c0_0 = arith.constant 0 : index
    %0 = vector.load %arg0[%c0, %c0_0] : memref<1024x27xf32, #tpu.memory_space<vmem>>, vector<1024x27xf32>
    %c0_1 = arith.constant 0 : index
    %c0_2 = arith.constant 0 : index
    %1 = vector.load %arg1[%c0_1, %c0_2] : memref<27x8xf32, #tpu.memory_space<vmem>>, vector<27x8xf32>
    %cst = arith.constant dense<0.000000e+00> : vector<1024x8xf32>
    %2 = tpu.matmul %0, %1, %cst {dimension_numbers = #tpu.dot_dimension_numbers<[1], [0], [0], [1], [0, 0, 1, 1], [], []>} : vector<1024x27xf32>, vector<27x8xf32>, vector<1024x8xf32> -> vector<1024x8xf32>
    %c0_3 = arith.constant 0 : index
    %c0_4 = arith.constant 0 : index
    %3 = vector.load %arg2[%c0_3, %c0_4] : memref<1x8xf32, #tpu.memory_space<vmem>>, vector<1x8xf32>
    %4 = vector.broadcast %3 : vector<1x8xf32> to vector<1024x8xf32>
    %5 = arith.addf %2, %4 : vector<1024x8xf32>
    %cst_5 = arith.constant 0.000000e+00 : f32
    %6 = vector.broadcast %cst_5 : f32 to vector<1024x8xf32>
    %7 = arith.maximumf %5, %6 : vector<1024x8xf32>
    %8 = vector.shape_cast %7 : vector<1024x8xf32> to vector<4x16x16x8xf32>
    %cst_6 = arith.constant 0.000000e+00 : f32
    %9 = vector.broadcast %cst_6 : f32 to vector<4x1x16x8xf32>
    %10 = tpu.concatenate %9, %8, %9 in 1 : vector<4x1x16x8xf32>, vector<4x16x16x8xf32>, vector<4x1x16x8xf32> -> vector<4x18x16x8xf32>
    %cst_7 = arith.constant 0.000000e+00 : f32
    %11 = vector.broadcast %cst_7 : f32 to vector<4x18x1x8xf32>
    %12 = tpu.concatenate %11, %10, %11 in 2 : vector<4x18x1x8xf32>, vector<4x18x16x8xf32>, vector<4x18x1x8xf32> -> vector<4x18x18x8xf32>
    %13 = vector.extract_strided_slice %12 {offsets = [0, 0, 0, 0], sizes = [4, 16, 16, 8], strides = [1, 1, 1, 1]} : vector<4x18x18x8xf32> to vector<4x16x16x8xf32>
    %14 = vector.extract_strided_slice %12 {offsets = [0, 0, 1, 0], sizes = [4, 16, 16, 8], strides = [1, 1, 1, 1]} : vector<4x18x18x8xf32> to vector<4x16x16x8xf32>
    %15 = vector.extract_strided_slice %12 {offsets = [0, 0, 2, 0], sizes = [4, 16, 16, 8], strides = [1, 1, 1, 1]} : vector<4x18x18x8xf32> to vector<4x16x16x8xf32>
    %16 = vector.extract_strided_slice %12 {offsets = [0, 1, 0, 0], sizes = [4, 16, 16, 8], strides = [1, 1, 1, 1]} : vector<4x18x18x8xf32> to vector<4x16x16x8xf32>
    %17 = vector.extract_strided_slice %12 {offsets = [0, 1, 1, 0], sizes = [4, 16, 16, 8], strides = [1, 1, 1, 1]} : vector<4x18x18x8xf32> to vector<4x16x16x8xf32>
    %18 = vector.extract_strided_slice %12 {offsets = [0, 1, 2, 0], sizes = [4, 16, 16, 8], strides = [1, 1, 1, 1]} : vector<4x18x18x8xf32> to vector<4x16x16x8xf32>
    %19 = vector.extract_strided_slice %12 {offsets = [0, 2, 0, 0], sizes = [4, 16, 16, 8], strides = [1, 1, 1, 1]} : vector<4x18x18x8xf32> to vector<4x16x16x8xf32>
    %20 = vector.extract_strided_slice %12 {offsets = [0, 2, 1, 0], sizes = [4, 16, 16, 8], strides = [1, 1, 1, 1]} : vector<4x18x18x8xf32> to vector<4x16x16x8xf32>
    %21 = vector.extract_strided_slice %12 {offsets = [0, 2, 2, 0], sizes = [4, 16, 16, 8], strides = [1, 1, 1, 1]} : vector<4x18x18x8xf32> to vector<4x16x16x8xf32>
    %22 = tpu.concatenate %13, %14, %15, %16, %17, %18, %19, %20, %21 in 3 : vector<4x16x16x8xf32>, vector<4x16x16x8xf32>, vector<4x16x16x8xf32>, vector<4x16x16x8xf32>, vector<4x16x16x8xf32>, vector<4x16x16x8xf32>, vector<4x16x16x8xf32>, vector<4x16x16x8xf32>, vector<4x16x16x8xf32> -> vector<4x16x16x72xf32>
    %23 = vector.shape_cast %22 : vector<4x16x16x72xf32> to vector<1024x72xf32>
    %c0_8 = arith.constant 0 : index
    %c0_9 = arith.constant 0 : index
    %24 = vector.load %arg3[%c0_8, %c0_9] : memref<72x16xf32, #tpu.memory_space<vmem>>, vector<72x16xf32>
    %cst_10 = arith.constant dense<0.000000e+00> : vector<1024x16xf32>
    %25 = tpu.matmul %23, %24, %cst_10 {dimension_numbers = #tpu.dot_dimension_numbers<[1], [0], [0], [1], [0, 0, 1, 1], [], []>} : vector<1024x72xf32>, vector<72x16xf32>, vector<1024x16xf32> -> vector<1024x16xf32>
    %c0_11 = arith.constant 0 : index
    %c0_12 = arith.constant 0 : index
    %26 = vector.load %arg4[%c0_11, %c0_12] : memref<1x16xf32, #tpu.memory_space<vmem>>, vector<1x16xf32>
    %27 = vector.broadcast %26 : vector<1x16xf32> to vector<1024x16xf32>
    %28 = arith.addf %25, %27 : vector<1024x16xf32>
    %cst_13 = arith.constant 0.000000e+00 : f32
    %29 = vector.broadcast %cst_13 : f32 to vector<1024x16xf32>
    %30 = arith.maximumf %28, %29 : vector<1024x16xf32>
    %31 = vector.shape_cast %7 : vector<1024x8xf32> to vector<4x256x8xf32>
    %cst_14 = arith.constant dense<0.000000e+00> : vector<4x8xf32>
    %32 = vector.multi_reduction <add>, %31, %cst_14 [1] : vector<4x256x8xf32> to vector<4x8xf32>
    %cst_15 = arith.constant 3.906250e-03 : f32
    %33 = vector.broadcast %cst_15 : f32 to vector<4x8xf32>
    %34 = arith.mulf %32, %33 : vector<4x8xf32>
    %35 = vector.shape_cast %30 : vector<1024x16xf32> to vector<4x256x16xf32>
    %cst_16 = arith.constant dense<0.000000e+00> : vector<4x16xf32>
    %36 = vector.multi_reduction <add>, %35, %cst_16 [1] : vector<4x256x16xf32> to vector<4x16xf32>
    %cst_17 = arith.constant 3.906250e-03 : f32
    %37 = vector.broadcast %cst_17 : f32 to vector<4x16xf32>
    %38 = arith.mulf %36, %37 : vector<4x16xf32>
    %cst_18 = arith.constant 0.000000e+00 : f32
    %39 = vector.broadcast %cst_18 : f32 to vector<4x104xf32>
    %40 = tpu.concatenate %34, %38, %39 in 1 : vector<4x8xf32>, vector<4x16xf32>, vector<4x104xf32> -> vector<4x128xf32>
    %c0_19 = arith.constant 0 : index
    %c0_20 = arith.constant 0 : index
    %41 = vector.load %arg5[%c0_19, %c0_20] : memref<4x128xf32, #tpu.memory_space<vmem>>, vector<4x128xf32>
    tpu.vector_store %arg5[%c0_19, %c0_20], %40 {strides = array<i32>} : memref<4x128xf32, #tpu.memory_space<vmem>>, vector<4x128xf32>,
    return
  }
}

module attributes {stable_mosaic.version = 11 : i64} {
  func.func @_iou_head_kernel(%arg0: memref<2x128xf32, #tpu.memory_space<vmem>>, %arg1: memref<2x128xf32, #tpu.memory_space<vmem>>, %arg2: memref<2x4xf32, #tpu.memory_space<vmem>>, %arg3: memref<2x128x4xf32, #tpu.memory_space<vmem>>, %arg4: memref<8x8xf32, #tpu.memory_space<vmem>>, %arg5: memref<4x8xf32, #tpu.memory_space<vmem>>, %arg6: memref<1x8xf32, #tpu.memory_space<vmem>>, %arg7: memref<16x16xf32, #tpu.memory_space<vmem>>, %arg8: memref<4x16xf32, #tpu.memory_space<vmem>>, %arg9: memref<1x16xf32, #tpu.memory_space<vmem>>, %arg10: memref<8x32xf32, #tpu.memory_space<vmem>>, %arg11: memref<16x32xf32, #tpu.memory_space<vmem>>, %arg12: memref<4x32xf32, #tpu.memory_space<vmem>>, %arg13: memref<1x32xf32, #tpu.memory_space<vmem>>, %arg14: memref<1x32xf32, #tpu.memory_space<vmem>>, %arg15: memref<1x1xf32, #tpu.memory_space<vmem>>, %arg16: memref<2x128xf32, #tpu.memory_space<vmem>>) attributes {dimension_semantics = [], scalar_prefetch = 0 : i64, scratch_operands = 0 : i64, tpu.core_type = #tpu.core_type<tc>} {
    %c0 = arith.constant 0 : index
    %c0_0 = arith.constant 0 : index
    %0 = vector.load %arg2[%c0, %c0_0] : memref<2x4xf32, #tpu.memory_space<vmem>>, vector<2x4xf32>
    %c0_1 = arith.constant 0 : index
    %c0_2 = arith.constant 0 : index
    %1 = vector.load %arg0[%c0_1, %c0_2] : memref<2x128xf32, #tpu.memory_space<vmem>>, vector<2x8xf32>
    %c0_3 = arith.constant 0 : index
    %c8 = arith.constant 8 : index
    %2 = vector.load %arg0[%c0_3, %c8] : memref<2x128xf32, #tpu.memory_space<vmem>>, vector<2x16xf32>
    %c0_4 = arith.constant 0 : index
    %c0_5 = arith.constant 0 : index
    %3 = vector.load %arg1[%c0_4, %c0_5] : memref<2x128xf32, #tpu.memory_space<vmem>>, vector<2x8xf32>
    %c0_6 = arith.constant 0 : index
    %c8_7 = arith.constant 8 : index
    %4 = vector.load %arg1[%c0_6, %c8_7] : memref<2x128xf32, #tpu.memory_space<vmem>>, vector<2x16xf32>
    %c0_8 = arith.constant 0 : index
    %c0_9 = arith.constant 0 : index
    %5 = vector.load %arg4[%c0_8, %c0_9] : memref<8x8xf32, #tpu.memory_space<vmem>>, vector<8x8xf32>
    %cst = arith.constant dense<0.000000e+00> : vector<2x8xf32>
    %6 = tpu.matmul %1, %5, %cst {dimension_numbers = #tpu.dot_dimension_numbers<[1], [0], [0], [1], [0, 0, 1, 1], [], []>} : vector<2x8xf32>, vector<8x8xf32>, vector<2x8xf32> -> vector<2x8xf32>
    %c0_10 = arith.constant 0 : index
    %c0_11 = arith.constant 0 : index
    %7 = vector.load %arg5[%c0_10, %c0_11] : memref<4x8xf32, #tpu.memory_space<vmem>>, vector<4x8xf32>
    %cst_12 = arith.constant dense<0.000000e+00> : vector<2x8xf32>
    %8 = tpu.matmul %0, %7, %cst_12 {dimension_numbers = #tpu.dot_dimension_numbers<[1], [0], [0], [1], [0, 0, 1, 1], [], []>} : vector<2x4xf32>, vector<4x8xf32>, vector<2x8xf32> -> vector<2x8xf32>
    %9 = arith.addf %6, %8 : vector<2x8xf32>
    %c0_13 = arith.constant 0 : index
    %c0_14 = arith.constant 0 : index
    %10 = vector.load %arg6[%c0_13, %c0_14] : memref<1x8xf32, #tpu.memory_space<vmem>>, vector<1x8xf32>
    %11 = vector.broadcast %10 : vector<1x8xf32> to vector<2x8xf32>
    %12 = arith.addf %9, %11 : vector<2x8xf32>
    %cst_15 = arith.constant 0.000000e+00 : f32
    %13 = vector.broadcast %cst_15 : f32 to vector<2x8xf32>
    %14 = arith.maximumf %12, %13 : vector<2x8xf32>
    %c0_16 = arith.constant 0 : index
    %c0_17 = arith.constant 0 : index
    %15 = vector.load %arg7[%c0_16, %c0_17] : memref<16x16xf32, #tpu.memory_space<vmem>>, vector<16x16xf32>
    %cst_18 = arith.constant dense<0.000000e+00> : vector<2x16xf32>
    %16 = tpu.matmul %2, %15, %cst_18 {dimension_numbers = #tpu.dot_dimension_numbers<[1], [0], [0], [1], [0, 0, 1, 1], [], []>} : vector<2x16xf32>, vector<16x16xf32>, vector<2x16xf32> -> vector<2x16xf32>
    %c0_19 = arith.constant 0 : index
    %c0_20 = arith.constant 0 : index
    %17 = vector.load %arg8[%c0_19, %c0_20] : memref<4x16xf32, #tpu.memory_space<vmem>>, vector<4x16xf32>
    %cst_21 = arith.constant dense<0.000000e+00> : vector<2x16xf32>
    %18 = tpu.matmul %0, %17, %cst_21 {dimension_numbers = #tpu.dot_dimension_numbers<[1], [0], [0], [1], [0, 0, 1, 1], [], []>} : vector<2x4xf32>, vector<4x16xf32>, vector<2x16xf32> -> vector<2x16xf32>
    %19 = arith.addf %16, %18 : vector<2x16xf32>
    %c0_22 = arith.constant 0 : index
    %c0_23 = arith.constant 0 : index
    %20 = vector.load %arg9[%c0_22, %c0_23] : memref<1x16xf32, #tpu.memory_space<vmem>>, vector<1x16xf32>
    %21 = vector.broadcast %20 : vector<1x16xf32> to vector<2x16xf32>
    %22 = arith.addf %19, %21 : vector<2x16xf32>
    %cst_24 = arith.constant 0.000000e+00 : f32
    %23 = vector.broadcast %cst_24 : f32 to vector<2x16xf32>
    %24 = arith.maximumf %22, %23 : vector<2x16xf32>
    %25 = arith.mulf %3, %14 : vector<2x8xf32>
    %c0_25 = arith.constant 0 : index
    %c0_26 = arith.constant 0 : index
    %26 = vector.load %arg10[%c0_25, %c0_26] : memref<8x32xf32, #tpu.memory_space<vmem>>, vector<8x32xf32>
    %cst_27 = arith.constant dense<0.000000e+00> : vector<2x32xf32>
    %27 = tpu.matmul %25, %26, %cst_27 {dimension_numbers = #tpu.dot_dimension_numbers<[1], [0], [0], [1], [0, 0, 1, 1], [], []>} : vector<2x8xf32>, vector<8x32xf32>, vector<2x32xf32> -> vector<2x32xf32>
    %28 = arith.mulf %4, %24 : vector<2x16xf32>
    %c0_28 = arith.constant 0 : index
    %c0_29 = arith.constant 0 : index
    %29 = vector.load %arg11[%c0_28, %c0_29] : memref<16x32xf32, #tpu.memory_space<vmem>>, vector<16x32xf32>
    %cst_30 = arith.constant dense<0.000000e+00> : vector<2x32xf32>
    %30 = tpu.matmul %28, %29, %cst_30 {dimension_numbers = #tpu.dot_dimension_numbers<[1], [0], [0], [1], [0, 0, 1, 1], [], []>} : vector<2x16xf32>, vector<16x32xf32>, vector<2x32xf32> -> vector<2x32xf32>
    %31 = arith.addf %27, %30 : vector<2x32xf32>
    %c0_31 = arith.constant 0 : index
    %c0_32 = arith.constant 0 : index
    %c0_33 = arith.constant 0 : index
    %32 = vector.load %arg3[%c0_31, %c0_32, %c0_33] : memref<2x128x4xf32, #tpu.memory_space<vmem>>, vector<2x128x4xf32>
    %33 = vector.shape_cast %32 : vector<2x128x4xf32> to vector<256x4xf32>
    %c0_34 = arith.constant 0 : index
    %c0_35 = arith.constant 0 : index
    %34 = vector.load %arg12[%c0_34, %c0_35] : memref<4x32xf32, #tpu.memory_space<vmem>>, vector<4x32xf32>
    %cst_36 = arith.constant dense<0.000000e+00> : vector<256x32xf32>
    %35 = tpu.matmul %33, %34, %cst_36 {dimension_numbers = #tpu.dot_dimension_numbers<[1], [0], [0], [1], [0, 0, 1, 1], [], []>} : vector<256x4xf32>, vector<4x32xf32>, vector<256x32xf32> -> vector<256x32xf32>
    %36 = vector.shape_cast %35 : vector<256x32xf32> to vector<2x128x32xf32>
    %37 = vector.shape_cast %31 : vector<2x32xf32> to vector<2x1x32xf32>
    %38 = vector.broadcast %37 : vector<2x1x32xf32> to vector<2x128x32xf32>
    %39 = arith.addf %36, %38 : vector<2x128x32xf32>
    %c0_37 = arith.constant 0 : index
    %c0_38 = arith.constant 0 : index
    %40 = vector.load %arg13[%c0_37, %c0_38] : memref<1x32xf32, #tpu.memory_space<vmem>>, vector<1x32xf32>
    %41 = vector.shape_cast %40 : vector<1x32xf32> to vector<1x1x32xf32>
    %42 = vector.broadcast %41 : vector<1x1x32xf32> to vector<2x128x32xf32>
    %43 = arith.addf %39, %42 : vector<2x128x32xf32>
    %cst_39 = arith.constant 0.000000e+00 : f32
    %44 = vector.broadcast %cst_39 : f32 to vector<2x128x32xf32>
    %45 = arith.maximumf %43, %44 : vector<2x128x32xf32>
    %c0_40 = arith.constant 0 : index
    %c0_41 = arith.constant 0 : index
    %46 = vector.load %arg14[%c0_40, %c0_41] : memref<1x32xf32, #tpu.memory_space<vmem>>, vector<1x32xf32>
    %47 = vector.shape_cast %46 : vector<1x32xf32> to vector<1x1x32xf32>
    %48 = vector.broadcast %47 : vector<1x1x32xf32> to vector<2x128x32xf32>
    %49 = arith.mulf %45, %48 : vector<2x128x32xf32>
    %cst_42 = arith.constant dense<0.000000e+00> : vector<2x128xf32>
    %50 = vector.multi_reduction <add>, %49, %cst_42 [2] : vector<2x128x32xf32> to vector<2x128xf32>
    %c0_43 = arith.constant 0 : index
    %c0_44 = arith.constant 0 : index
    %51 = vector.load %arg15[%c0_43, %c0_44] : memref<1x1xf32, #tpu.memory_space<vmem>>, vector<1x1xf32>
    %52 = vector.broadcast %51 : vector<1x1xf32> to vector<2x128xf32>
    %53 = arith.addf %50, %52 : vector<2x128xf32>
    %c0_45 = arith.constant 0 : index
    %c0_46 = arith.constant 0 : index
    %54 = vector.load %arg16[%c0_45, %c0_46] : memref<2x128xf32, #tpu.memory_space<vmem>>, vector<2x128xf32>
    tpu.vector_store %arg16[%c0_45, %c0_46], %53 {strides = array<i32>} : memref<2x128xf32, #tpu.memory_space<vmem>>, vector<2x128xf32>,
    return
  }
}

</mosaic_0001>

<llo_original>
// kernel: atomnet_forward.3
$region0: #{atomnet_forward.3}
  #allocation0 [shape = 'u32[]', space=smem, size = 0x4, offset = 0x4, fixed_abs, tag = 'smem constant byte address 0x4 - core index']
  #allocation1 [shape = 'u32[144,128]{1,0:T(1,128)}', space=vmem, size = 0x12000, scoped, tag = 'internal scratch']
  #allocation2 [shape = 'f32[1,1]{1,0:T(1,128)S(1)}', space=vmem, size = 0x200, scoped, tag = 'scoped memory for atomnet_forward.3']
  %s0 = inlined_call_operand.vmem [shape: f32[2,128], index: 0, kind: input, shape index: {}]
  %s1 = inlined_call_operand.vmem [shape: f32[2,128], index: 1, kind: input, shape index: {}]
  %s2 = inlined_call_operand.vmem [shape: f32[2,4], index: 2, kind: input, shape index: {}]
  %s3 = inlined_call_operand.vmem [shape: f32[2,128,4], index: 3, kind: input, shape index: {}]
  %s4 = inlined_call_operand.vmem [shape: f32[8,8], index: 4, kind: input, shape index: {}]
  %s5 = inlined_call_operand.vmem [shape: f32[4,8], index: 5, kind: input, shape index: {}]
  %s6 = inlined_call_operand.vmem [shape: f32[1,8], index: 6, kind: input, shape index: {}]
  %s7 = inlined_call_operand.vmem [shape: f32[16,16], index: 7, kind: input, shape index: {}]
  %s8 = inlined_call_operand.vmem [shape: f32[4,16], index: 8, kind: input, shape index: {}]
  %s9 = inlined_call_operand.vmem [shape: f32[1,16], index: 9, kind: input, shape index: {}]
  %s10 = inlined_call_operand.vmem [shape: f32[8,32], index: 10, kind: input, shape index: {}]
  %s11 = inlined_call_operand.vmem [shape: f32[16,32], index: 11, kind: input, shape index: {}]
  %s12 = inlined_call_operand.vmem [shape: f32[4,32], index: 12, kind: input, shape index: {}]
  %s13 = inlined_call_operand.vmem [shape: f32[1,32], index: 13, kind: input, shape index: {}]
  %s14 = inlined_call_operand.vmem [shape: f32[1,32], index: 14, kind: input, shape index: {}]
  %s15 = inlined_call_operand.<no memory space> [shape: f32[1,1], index: 15, kind: input, shape index: {}]
  %s16 = inlined_call_operand.vmem [shape: f32[2,128], index: 16, kind: output, shape index: {}]
  %s17 = sld [smem:[#allocation0]]
  $region74: #{atomnet_forward.3} parent=0
    _
  %s19 = ssub.s32 1, %s17
  %s20 = scalar_select 0, %s19, %s17
  %v21 = vstv %s15
  %22 = vst [vmem:[#allocation2] sm:$0x1] %v21
  // Predicated region
  $region2: #{atomnet_forward.3} parent=0 // pred_check
    _
  $region3: #{atomnet_forward.3} parent=0 // pred_check_branch
    %24 = sbr.rel (0) target = $region5
  $region4: #{atomnet_forward.3} parent=0 // pred_region
    _
  $region5: #{atomnet_forward.3} parent=0 // pred_fallthru
    _
  // Predicated region
  $region6: #{atomnet_forward.3} parent=0 // pred_check
    _
  $region7: #{atomnet_forward.3} parent=0 // pred_check_branch
    %26 = sbr.rel (0) target = $region9
  $region8: #{atomnet_forward.3} parent=0 // pred_region
    _
  $region9: #{atomnet_forward.3} parent=0 // pred_fallthru
    _
  // Predicated region
  $region10: #{atomnet_forward.3} parent=0 // pred_check
    _
  $region11: #{atomnet_forward.3} parent=0 // pred_check_branch
    %28 = sbr.rel (0) target = $region13
  $region12: #{atomnet_forward.3} parent=0 // pred_region
    _
  $region13: #{atomnet_forward.3} parent=0 // pred_fallthru
    _
  // Predicated region
  $region14: #{atomnet_forward.3} parent=0 // pred_check
    _
  $region15: #{atomnet_forward.3} parent=0 // pred_check_branch
    %30 = sbr.rel (0) target = $region17
  $region16: #{atomnet_forward.3} parent=0 // pred_region
    _
  $region17: #{atomnet_forward.3} parent=0 // pred_fallthru
    _
  // Predicated region
  $region18: #{atomnet_forward.3} parent=0 // pred_check
    _
  $region19: #{atomnet_forward.3} parent=0 // pred_check_branch
    %32 = sbr.rel (0) target = $region21
  $region20: #{atomnet_forward.3} parent=0 // pred_region
    _
  $region21: #{atomnet_forward.3} parent=0 // pred_fallthru
    _
  // Predicated region
  $region22: #{atomnet_forward.3} parent=0 // pred_check
    _
  $region23: #{atomnet_forward.3} parent=0 // pred_check_branch
    %34 = sbr.rel (0) target = $region25
  $region24: #{atomnet_forward.3} parent=0 // pred_region
    _
  $region25: #{atomnet_forward.3} parent=0 // pred_fallthru
    _
  // Predicated region
  $region26: #{atomnet_forward.3} parent=0 // pred_check
    _
  $region27: #{atomnet_forward.3} parent=0 // pred_check_branch
    %36 = sbr.rel (0) target = $region29
  $region28: #{atomnet_forward.3} parent=0 // pred_region
    _
  $region29: #{atomnet_forward.3} parent=0 // pred_fallthru
    _
  // Predicated region
  $region30: #{atomnet_forward.3} parent=0 // pred_check
    _
  $region31: #{atomnet_forward.3} parent=0 // pred_check_branch
    %38 = sbr.rel (0) target = $region33
  $region32: #{atomnet_forward.3} parent=0 // pred_region
    _
  $region33: #{atomnet_forward.3} parent=0 // pred_fallthru
    _
  // Predicated region
  $region34: #{atomnet_forward.3} parent=0 // pred_check
    _
  $region35: #{atomnet_forward.3} parent=0 // pred_check_branch
    %40 = sbr.rel (0) target = $region37
  $region36: #{atomnet_forward.3} parent=0 // pred_region
    _
  $region37: #{atomnet_forward.3} parent=0 // pred_fallthru
    _
  // Predicated region
  $region38: #{atomnet_forward.3} parent=0 // pred_check
    _
  $region39: #{atomnet_forward.3} parent=0 // pred_check_branch
    %42 = sbr.rel (0) target = $region41
  $region40: #{atomnet_forward.3} parent=0 // pred_region
    _
  $region41: #{atomnet_forward.3} parent=0 // pred_fallthru
    _
  // Predicated region
  $region42: #{atomnet_forward.3} parent=0 // pred_check
    _
  $region43: #{atomnet_forward.3} parent=0 // pred_check_branch
    %44 = sbr.rel (0) target = $region45
  $region44: #{atomnet_forward.3} parent=0 // pred_region
    _
  $region45: #{atomnet_forward.3} parent=0 // pred_fallthru
    _
  // Predicated region
  $region46: #{atomnet_forward.3} parent=0 // pred_check
    _
  $region47: #{atomnet_forward.3} parent=0 // pred_check_branch
    %46 = sbr.rel (0) target = $region49
  $region48: #{atomnet_forward.3} parent=0 // pred_region
    _
  $region49: #{atomnet_forward.3} parent=0 // pred_fallthru
    _
  // Predicated region
  $region50: #{atomnet_forward.3} parent=0 // pred_check
    _
  $region51: #{atomnet_forward.3} parent=0 // pred_check_branch
    %48 = sbr.rel (0) target = $region53
  $region52: #{atomnet_forward.3} parent=0 // pred_region
    _
  $region53: #{atomnet_forward.3} parent=0 // pred_fallthru
    _
  // Predicated region
  $region54: #{atomnet_forward.3} parent=0 // pred_check
    _
  $region55: #{atomnet_forward.3} parent=0 // pred_check_branch
    %50 = sbr.rel (0) target = $region57
  $region56: #{atomnet_forward.3} parent=0 // pred_region
    _
  $region57: #{atomnet_forward.3} parent=0 // pred_fallthru
    _
  // Predicated region
  $region58: #{atomnet_forward.3} parent=0 // pred_check
    _
  $region59: #{atomnet_forward.3} parent=0 // pred_check_branch
    %52 = sbr.rel (0) target = $region61
  $region60: #{atomnet_forward.3} parent=0 // pred_region
    _
  $region61: #{atomnet_forward.3} parent=0 // pred_fallthru
    _
  // Predicated region
  $region62: #{atomnet_forward.3} parent=0 // pred_check
    _
  $region63: #{atomnet_forward.3} parent=0 // pred_check_branch
    %54 = sbr.rel (0) target = $region65
  $region64: #{atomnet_forward.3} parent=0 // pred_region
    _
  $region65: #{atomnet_forward.3} parent=0 // pred_fallthru
    _
  %v55 = vld [vmem:[%s2] sm:$0x3]
  %v56 = vld [vmem:[%s0] sm:$0x3]
  %v57 = vld [vmem:[%s1] sm:$0x3]
  %v58 = vld [vmem:[%s4] sm:$0xff]
  %v59 = vld [vmem:[%s5] sm:$0xf]
  %vm60 = vcmask 31744
  %v62 = vsel %vm60, %v55, 0
  %vm64 = vcmask 1043456
  %v66 = vsel %vm64, %v59, 0
  %68 = vmatprep.subr.mxu0 0.0
  %69 = vmatpush1.msra.mxu0 %v66
  %70 = vmatprep.subr.mxu0 0.0
  %71 = vmatpush1.msra.mxu0 0.0
  %72 = vmatprep.subr.mxu0 0.0
  %73 = vmatpush1.msra.mxu0 0.0
  %74 = vmatprep.subr.mxu0 0.0
  %75 = vmatpush1.msra.mxu0 0.0
  %76 = vmatprep.subr.mxu0 0.0
  %77 = vmatpush1.msra.mxu0 0.0
  %78 = vmatprep.subr.mxu0 0.0
  %79 = vmatpush1.msra.mxu0 0.0
  %80 = vmatprep.subr.mxu0 0.0
  %81 = vmatpush1.msra.mxu0 0.0
  %82 = vmatprep.subr.mxu0 0.0
  %83 = vmatpush1.msra.mxu0 0.0
  %84 = vmatprep.subr.mxu0 0.0
  %85 = vmatpush1.msra.mxu0 0.0
  %86 = vmatprep.subr.mxu0 0.0
  %87 = vmatpush1.msra.mxu0 0.0
  %88 = vmatprep.subr.mxu0 0.0
  %89 = vmatpush1.msra.mxu0 0.0
  %90 = vmatprep.subr.mxu0 0.0
  %91 = vmatpush1.msra.mxu0 0.0
  %92 = vmatprep.subr.mxu0 0.0
  %93 = vmatpush1.msra.mxu0 0.0
  %94 = vmatprep.subr.mxu0 0.0
  %95 = vmatpush1.msra.mxu0 0.0
  %96 = vmatprep.subr.mxu0 0.0
  %97 = vmatpush1.msra.mxu0 0.0
  %98 = vmatprep.subr.mxu0 0.0
  %99 = vmatpush1.msra.mxu0 0.0
  %100 = vmatprep.subr.mxu0 0.0
  %101 = vmatpush1.msra.mxu0 0.0
  %102 = vmatprep.subr.mxu0 0.0
  %103 = vmatpush1.msra.mxu0 0.0
  %104 = vmatprep.subr.mxu0 0.0
  %105 = vmatpush1.msra.mxu0 0.0
  %106 = vmatprep.subr.mxu0 0.0
  %107 = vmatpush1.msra.mxu0 0.0
  %108 = vmatprep.subr.mxu0 0.0
  %109 = vmatpush1.msra.mxu0 0.0
  %110 = vmatprep.subr.mxu0 0.0
  %111 = vmatpush1.msra.mxu0 0.0
  %112 = vmatprep.subr.mxu0 0.0
  %113 = vmatpush1.msra.mxu0 0.0
  %114 = vmatprep.subr.mxu0 0.0
  %115 = vmatpush1.msra.mxu0 0.0
  %116 = vmatprep.subr.mxu0 0.0
  %117 = vmatpush1.msra.mxu0 0.0
  %118 = vmatprep.subr.mxu0 0.0
  %119 = vmatpush1.msra.mxu0 0.0
  %120 = vmatprep.subr.mxu0 0.0
  %121 = vmatpush1.msra.mxu0 0.0
  %122 = vmatprep.subr.mxu0 0.0
  %123 = vmatpush1.msra.mxu0 0.0
  %124 = vmatprep.subr.mxu0 0.0
  %125 = vmatpush1.msra.mxu0 0.0
  %126 = vmatprep.subr.mxu0 0.0
  %127 = vmatpush1.msra.mxu0 0.0
  %128 = vmatprep.subr.mxu0 0.0
  %129 = vmatpush1.msra.mxu0 0.0
  %130 = vmatprep.subr.mxu0 0.0
  %131 = vmatpush1.msra.mxu0 0.0
  %132 = vmatprep.mubr.f32.mxu0 0.0
  %133 = vmatmul.mubr.f32.gmra.mrb[0].mxu0 %v62
  %v134 = vpop.f32.mrb[0].mxu0
  %v135 = vadd.f32 0.0, %v134
  %v136 = vpop.f32.mrb[0].mxu0
  %137 = vdwg.mxu0
  %vm138 = vcmask 64512
  %v140 = vsel %vm138, %v56, 0
  %142 = vmatprep.subr.mxu0 0.0
  %143 = vmatpush1.msra.mxu0 %v58
  %144 = vmatprep.subr.mxu0 0.0
  %145 = vmatpush1.msra.mxu0 0.0
  %146 = vmatprep.subr.mxu0 0.0
  %147 = vmatpush1.msra.mxu0 0.0
  %148 = vmatprep.subr.mxu0 0.0
  %149 = vmatpush1.msra.mxu0 0.0
  %150 = vmatprep.subr.mxu0 0.0
  %151 = vmatpush1.msra.mxu0 0.0
  %152 = vmatprep.subr.mxu0 0.0
  %153 = vmatpush1.msra.mxu0 0.0
  %154 = vmatprep.subr.mxu0 0.0
  %155 = vmatpush1.msra.mxu0 0.0
  %156 = vmatprep.subr.mxu0 0.0
  %157 = vmatpush1.msra.mxu0 0.0
  %158 = vmatprep.subr.mxu0 0.0
  %159 = vmatpush1.msra.mxu0 0.0
  %160 = vmatprep.subr.mxu0 0.0
  %161 = vmatpush1.msra.mxu0 0.0
  %162 = vmatprep.subr.mxu0 0.0
  %163 = vmatpush1.msra.mxu0 0.0
  %164 = vmatprep.subr.mxu0 0.0
  %165 = vmatpush1.msra.mxu0 0.0
  %166 = vmatprep.subr.mxu0 0.0
  %167 = vmatpush1.msra.mxu0 0.0
  %168 = vmatprep.subr.mxu0 0.0
  %169 = vmatpush1.msra.mxu0 0.0
  %170 = vmatprep.subr.mxu0 0.0
  %171 = vmatpush1.msra.mxu0 0.0
  %172 = vmatprep.subr.mxu0 0.0
  %173 = vmatpush1.msra.mxu0 0.0
  %174 = vmatprep.subr.mxu0 0.0
  %175 = vmatpush1.msra.mxu0 0.0
  %176 = vmatprep.subr.mxu0 0.0
  %177 = vmatpush1.msra.mxu0 0.0
  %178 = vmatprep.subr.mxu0 0.0
  %179 = vmatpush1.msra.mxu0 0.0
  %180 = vmatprep.subr.mxu0 0.0
  %181 = vmatpush1.msra.mxu0 0.0
  %182 = vmatprep.subr.mxu0 0.0
  %183 = vmatpush1.msra.mxu0 0.0
  %184 = vmatprep.subr.mxu0 0.0
  %185 = vmatpush1.msra.mxu0 0.0
  %186 = vmatprep.subr.mxu0 0.0
  %187 = vmatpush1.msra.mxu0 0.0
  %188 = vmatprep.subr.mxu0 0.0
  %189 = vmatpush1.msra.mxu0 0.0
  %190 = vmatprep.subr.mxu0 0.0
  %191 = vmatpush1.msra.mxu0 0.0
  %192 = vmatprep.subr.mxu0 0.0
  %193 = vmatpush1.msra.mxu0 0.0
  %194 = vmatprep.subr.mxu0 0.0
  %195 = vmatpush1.msra.mxu0 0.0
  %196 = vmatprep.subr.mxu0 0.0
  %197 = vmatpush1.msra.mxu0 0.0
  %198 = vmatprep.subr.mxu0 0.0
  %199 = vmatpush1.msra.mxu0 0.0
  %200 = vmatprep.subr.mxu0 0.0
  %201 = vmatpush1.msra.mxu0 0.0
  %202 = vmatprep.subr.mxu0 0.0
  %203 = vmatpush1.msra.mxu0 0.0
  %204 = vmatprep.subr.mxu0 0.0
  %205 = vmatpush1.msra.mxu0 0.0
  %206 = vmatprep.mubr.f32.mxu0 0.0
  %207 = vmatmul.mubr.f32.gmra.mrb[0].mxu0 %v140
  %v208 = vpop.f32.mrb[0].mxu0
  %v209 = vadd.f32 %v135, %v208
  %v210 = vpop.f32.mrb[0].mxu0
  %211 = vdwg.mxu0
  %v212 = vld [vmem:[%s6] sm:$0x1]
  %v214 = vlaneseq
  %v215 = vshrl.u32 %v214, 7
  %v216 = vsub.s32 0, %v215
  %v217 = vrot.slane %v212, %v216
  %v219 = vadd.f32 %v209, %v217
  %v220 = vmax.f32 %v219, 0.0
  %v221 = vld [vmem:[%s7] sm:$0xff]
  %v222 = vld [vmem:[%s7 + $0x8] sm:$0xff]
  %v223 = vld [vmem:[%s8] sm:$0xf]
  %v225 = vsel %vm64, %v223, 0
  %227 = vmatprep.subr.mxu0 0.0
  %228 = vmatpush1.msra.mxu0 %v225
  %229 = vmatprep.subr.mxu0 0.0
  %230 = vmatpush1.msra.mxu0 0.0
  %231 = vmatprep.subr.mxu0 0.0
  %232 = vmatpush1.msra.mxu0 0.0
  %233 = vmatprep.subr.mxu0 0.0
  %234 = vmatpush1.msra.mxu0 0.0
  %235 = vmatprep.subr.mxu0 0.0
  %236 = vmatpush1.msra.mxu0 0.0
  %237 = vmatprep.subr.mxu0 0.0
  %238 = vmatpush1.msra.mxu0 0.0
  %239 = vmatprep.subr.mxu0 0.0
  %240 = vmatpush1.msra.mxu0 0.0
  %241 = vmatprep.subr.mxu0 0.0
  %242 = vmatpush1.msra.mxu0 0.0
  %243 = vmatprep.subr.mxu0 0.0
  %244 = vmatpush1.msra.mxu0 0.0
  %245 = vmatprep.subr.mxu0 0.0
  %246 = vmatpush1.msra.mxu0 0.0
  %247 = vmatprep.subr.mxu0 0.0
  %248 = vmatpush1.msra.mxu0 0.0
  %249 = vmatprep.subr.mxu0 0.0
  %250 = vmatpush1.msra.mxu0 0.0
  %251 = vmatprep.subr.mxu0 0.0
  %252 = vmatpush1.msra.mxu0 0.0
  %253 = vmatprep.subr.mxu0 0.0
  %254 = vmatpush1.msra.mxu0 0.0
  %255 = vmatprep.subr.mxu0 0.0
  %256 = vmatpush1.msra.mxu0 0.0
  %257 = vmatprep.subr.mxu0 0.0
  %258 = vmatpush1.msra.mxu0 0.0
  %259 = vmatprep.subr.mxu0 0.0
  %260 = vmatpush1.msra.mxu0 0.0
  %261 = vmatprep.subr.mxu0 0.0
  %262 = vmatpush1.msra.mxu0 0.0
  %263 = vmatprep.subr.mxu0 0.0
  %264 = vmatpush1.msra.mxu0 0.0
  %265 = vmatprep.subr.mxu0 0.0
  %266 = vmatpush1.msra.mxu0 0.0
  %267 = vmatprep.subr.mxu0 0.0
  %268 = vmatpush1.msra.mxu0 0.0
  %269 = vmatprep.subr.mxu0 0.0
  %270 = vmatpush1.msra.mxu0 0.0
  %271 = vmatprep.subr.mxu0 0.0
  %272 = vmatpush1.msra.mxu0 0.0
  %273 = vmatprep.subr.mxu0 0.0
  %274 = vmatpush1.msra.mxu0 0.0
  %275 = vmatprep.subr.mxu0 0.0
  %276 = vmatpush1.msra.mxu0 0.0
  %277 = vmatprep.subr.mxu0 0.0
  %278 = vmatpush1.msra.mxu0 0.0
  %279 = vmatprep.subr.mxu0 0.0
  %280 = vmatpush1.msra.mxu0 0.0
  %281 = vmatprep.subr.mxu0 0.0
  %282 = vmatpush1.msra.mxu0 0.0
  %283 = vmatprep.subr.mxu0 0.0
  %284 = vmatpush1.msra.mxu0 0.0
  %285 = vmatprep.subr.mxu0 0.0
  %286 = vmatpush1.msra.mxu0 0.0
  %287 = vmatprep.subr.mxu0 0.0
  %288 = vmatpush1.msra.mxu0 0.0
  %289 = vmatprep.subr.mxu0 0.0
  %290 = vmatpush1.msra.mxu0 0.0
  %291 = vmatprep.mubr.f32.mxu0 0.0
  %292 = vmatmul.mubr.f32.gmra.mrb[0].mxu0 %v62
  %v293 = vpop.f32.mrb[0].mxu0
  %v294 = vadd.f32 0.0, %v293
  %v295 = vpop.f32.mrb[0].mxu0
  %296 = vdwg.mxu0
  %297 = vrot.lane.b32.xlu0 %v56, 120
  %v298 = vpop.permute.xlu0 %297
  %vm299 = vcmask 130048
  %v300 = vsel %vm299, %v298, 0
  %302 = vmatprep.subr.mxu0 0.0
  %303 = vmatpush1.msra.mxu0 %v221
  %304 = vmatprep.subr.mxu0 0.0
  %305 = vmatpush1.msra.mxu0 %v222
  %306 = vmatprep.subr.mxu0 0.0
  %307 = vmatpush1.msra.mxu0 0.0
  %308 = vmatprep.subr.mxu0 0.0
  %309 = vmatpush1.msra.mxu0 0.0
  %310 = vmatprep.subr.mxu0 0.0
  %311 = vmatpush1.msra.mxu0 0.0
  %312 = vmatprep.subr.mxu0 0.0
  %313 = vmatpush1.msra.mxu0 0.0
  %314 = vmatprep.subr.mxu0 0.0
  %315 = vmatpush1.msra.mxu0 0.0
  %316 = vmatprep.subr.mxu0 0.0
  %317 = vmatpush1.msra.mxu0 0.0
  %318 = vmatprep.subr.mxu0 0.0
  %319 = vmatpush1.msra.mxu0 0.0
  %320 = vmatprep.subr.mxu0 0.0
  %321 = vmatpush1.msra.mxu0 0.0
  %322 = vmatprep.subr.mxu0 0.0
  %323 = vmatpush1.msra.mxu0 0.0
  %324 = vmatprep.subr.mxu0 0.0
  %325 = vmatpush1.msra.mxu0 0.0
  %326 = vmatprep.subr.mxu0 0.0
  %327 = vmatpush1.msra.mxu0 0.0
  %328 = vmatprep.subr.mxu0 0.0
  %329 = vmatpush1.msra.mxu0 0.0
  %330 = vmatprep.subr.mxu0 0.0
  %331 = vmatpush1.msra.mxu0 0.0
  %332 = vmatprep.subr.mxu0 0.0
  %333 = vmatpush1.msra.mxu0 0.0
  %334 = vmatprep.subr.mxu0 0.0
  %335 = vmatpush1.msra.mxu0 0.0
  %336 = vmatprep.subr.mxu0 0.0
  %337 = vmatpush1.msra.mxu0 0.0
  %338 = vmatprep.subr.mxu0 0.0
  %339 = vmatpush1.msra.mxu0 0.0
  %340 = vmatprep.subr.mxu0 0.0
  %341 = vmatpush1.msra.mxu0 0.0
  %342 = vmatprep.subr.mxu0 0.0
  %343 = vmatpush1.msra.mxu0 0.0
  %344 = vmatprep.subr.mxu0 0.0
  %345 = vmatpush1.msra.mxu0 0.0
  %346 = vmatprep.subr.mxu0 0.0
  %347 = vmatpush1.msra.mxu0 0.0
  %348 = vmatprep.subr.mxu0 0.0
  %349 = vmatpush1.msra.mxu0 0.0
  %350 = vmatprep.subr.mxu0 0.0
  %351 = vmatpush1.msra.mxu0 0.0
  %352 = vmatprep.subr.mxu0 0.0
  %353 = vmatpush1.msra.mxu0 0.0
  %354 = vmatprep.subr.mxu0 0.0
  %355 = vmatpush1.msra.mxu0 0.0
  %356 = vmatprep.subr.mxu0 0.0
  %357 = vmatpush1.msra.mxu0 0.0
  %358 = vmatprep.subr.mxu0 0.0
  %359 = vmatpush1.msra.mxu0 0.0
  %360 = vmatprep.subr.mxu0 0.0
  %361 = vmatpush1.msra.mxu0 0.0
  %362 = vmatprep.subr.mxu0 0.0
  %363 = vmatpush1.msra.mxu0 0.0
  %364 = vmatprep.subr.mxu0 0.0
  %365 = vmatpush1.msra.mxu0 0.0
  %366 = vmatprep.mubr.f32.mxu0 0.0
  %367 = vmatmul.mubr.f32.gmra.mrb[0].mxu0 %v300
  %v368 = vpop.f32.mrb[0].mxu0
  %v369 = vadd.f32 %v294, %v368
  %v370 = vpop.f32.mrb[0].mxu0
  %371 = vdwg.mxu0
  %v372 = vld [vmem:[%s9] sm:$0x1]
  %v374 = vlaneseq
  %v375 = vshrl.u32 %v374, 7
  %v376 = vsub.s32 0, %v375
  %v377 = vrot.slane %v372, %v376
  %v379 = vadd.f32 %v369, %v377
  %v380 = vmax.f32 %v379, 0.0
  %v381 = vmul.f32 %v57, %v220
  %v382 = vld [vmem:[%s10] sm:$0xff]
  %384 = vrot.lane.b32.xlu0 %v380, 8
  %v385 = vpop.permute.xlu0 %384
  %v387 = vmul.f32 %v57, %v385
  %v388 = vld [vmem:[%s11] sm:$0xff]
  %v389 = vld [vmem:[%s11 + $0x8] sm:$0xff]
  %391 = vrot.lane.b32.xlu0 %v387, 120
  %v392 = vpop.permute.xlu0 %391
  %v393 = vsel %vm299, %v392, 0
  %395 = vmatprep.subr.mxu0 0.0
  %396 = vmatpush1.msra.mxu0 %v388
  %397 = vmatprep.subr.mxu0 0.0
  %398 = vmatpush1.msra.mxu0 %v389
  %399 = vmatprep.subr.mxu0 0.0
  %400 = vmatpush1.msra.mxu0 0.0
  %401 = vmatprep.subr.mxu0 0.0
  %402 = vmatpush1.msra.mxu0 0.0
  %403 = vmatprep.subr.mxu0 0.0
  %404 = vmatpush1.msra.mxu0 0.0
  %405 = vmatprep.subr.mxu0 0.0
  %406 = vmatpush1.msra.mxu0 0.0
  %407 = vmatprep.subr.mxu0 0.0
  %408 = vmatpush1.msra.mxu0 0.0
  %409 = vmatprep.subr.mxu0 0.0
  %410 = vmatpush1.msra.mxu0 0.0
  %411 = vmatprep.subr.mxu0 0.0
  %412 = vmatpush1.msra.mxu0 0.0
  %413 = vmatprep.subr.mxu0 0.0
  %414 = vmatpush1.msra.mxu0 0.0
  %415 = vmatprep.subr.mxu0 0.0
  %416 = vmatpush1.msra.mxu0 0.0
  %417 = vmatprep.subr.mxu0 0.0
  %418 = vmatpush1.msra.mxu0 0.0
  %419 = vmatprep.subr.mxu0 0.0
  %420 = vmatpush1.msra.mxu0 0.0
  %421 = vmatprep.subr.mxu0 0.0
  %422 = vmatpush1.msra.mxu0 0.0
  %423 = vmatprep.subr.mxu0 0.0
  %424 = vmatpush1.msra.mxu0 0.0
  %425 = vmatprep.subr.mxu0 0.0
  %426 = vmatpush1.msra.mxu0 0.0
  %427 = vmatprep.subr.mxu0 0.0
  %428 = vmatpush1.msra.mxu0 0.0
  %429 = vmatprep.subr.mxu0 0.0
  %430 = vmatpush1.msra.mxu0 0.0
  %431 = vmatprep.subr.mxu0 0.0
  %432 = vmatpush1.msra.mxu0 0.0
  %433 = vmatprep.subr.mxu0 0.0
  %434 = vmatpush1.msra.mxu0 0.0
  %435 = vmatprep.subr.mxu0 0.0
  %436 = vmatpush1.msra.mxu0 0.0
  %437 = vmatprep.subr.mxu0 0.0
  %438 = vmatpush1.msra.mxu0 0.0
  %439 = vmatprep.subr.mxu0 0.0
  %440 = vmatpush1.msra.mxu0 0.0
  %441 = vmatprep.subr.mxu0 0.0
  %442 = vmatpush1.msra.mxu0 0.0
  %443 = vmatprep.subr.mxu0 0.0
  %444 = vmatpush1.msra.mxu0 0.0
  %445 = vmatprep.subr.mxu0 0.0
  %446 = vmatpush1.msra.mxu0 0.0
  %447 = vmatprep.subr.mxu0 0.0
  %448 = vmatpush1.msra.mxu0 0.0
  %449 = vmatprep.subr.mxu0 0.0
  %450 = vmatpush1.msra.mxu0 0.0
  %451 = vmatprep.subr.mxu0 0.0
  %452 = vmatpush1.msra.mxu0 0.0
  %453 = vmatprep.subr.mxu0 0.0
  %454 = vmatpush1.msra.mxu0 0.0
  %455 = vmatprep.subr.mxu0 0.0
  %456 = vmatpush1.msra.mxu0 0.0
  %457 = vmatprep.subr.mxu0 0.0
  %458 = vmatpush1.msra.mxu0 0.0
  %459 = vmatprep.mubr.f32.mxu0 0.0
  %460 = vmatmul.mubr.f32.gmra.mrb[0].mxu0 %v393
  %v461 = vpop.f32.mrb[0].mxu0
  %v462 = vadd.f32 0.0, %v461
  %v463 = vpop.f32.mrb[0].mxu0
  %464 = vdwg.mxu0
  %v466 = vsel %vm138, %v381, 0
  %468 = vmatprep.subr.mxu0 0.0
  %469 = vmatpush1.msra.mxu0 %v382
  %470 = vmatprep.subr.mxu0 0.0
  %471 = vmatpush1.msra.mxu0 0.0
  %472 = vmatprep.subr.mxu0 0.0
  %473 = vmatpush1.msra.mxu0 0.0
  %474 = vmatprep.subr.mxu0 0.0
  %475 = vmatpush1.msra.mxu0 0.0
  %476 = vmatprep.subr.mxu0 0.0
  %477 = vmatpush1.msra.mxu0 0.0
  %478 = vmatprep.subr.mxu0 0.0
  %479 = vmatpush1.msra.mxu0 0.0
  %480 = vmatprep.subr.mxu0 0.0
  %481 = vmatpush1.msra.mxu0 0.0
  %482 = vmatprep.subr.mxu0 0.0
  %483 = vmatpush1.msra.mxu0 0.0
  %484 = vmatprep.subr.mxu0 0.0
  %485 = vmatpush1.msra.mxu0 0.0
  %486 = vmatprep.subr.mxu0 0.0
  %487 = vmatpush1.msra.mxu0 0.0
  %488 = vmatprep.subr.mxu0 0.0
  %489 = vmatpush1.msra.mxu0 0.0
  %490 = vmatprep.subr.mxu0 0.0
  %491 = vmatpush1.msra.mxu0 0.0
  %492 = vmatprep.subr.mxu0 0.0
  %493 = vmatpush1.msra.mxu0 0.0
  %494 = vmatprep.subr.mxu0 0.0
  %495 = vmatpush1.msra.mxu0 0.0
  %496 = vmatprep.subr.mxu0 0.0
  %497 = vmatpush1.msra.mxu0 0.0
  %498 = vmatprep.subr.mxu0 0.0
  %499 = vmatpush1.msra.mxu0 0.0
  %500 = vmatprep.subr.mxu0 0.0
  %501 = vmatpush1.msra.mxu0 0.0
  %502 = vmatprep.subr.mxu0 0.0
  %503 = vmatpush1.msra.mxu0 0.0
  %504 = vmatprep.subr.mxu0 0.0
  %505 = vmatpush1.msra.mxu0 0.0
  %506 = vmatprep.subr.mxu0 0.0
  %507 = vmatpush1.msra.mxu0 0.0
  %508 = vmatprep.subr.mxu0 0.0
  %509 = vmatpush1.msra.mxu0 0.0
  %510 = vmatprep.subr.mxu0 0.0
  %511 = vmatpush1.msra.mxu0 0.0
  %512 = vmatprep.subr.mxu0 0.0
  %513 = vmatpush1.msra.mxu0 0.0
  %514 = vmatprep.subr.mxu0 0.0
  %515 = vmatpush1.msra.mxu0 0.0
  %516 = vmatprep.subr.mxu0 0.0
  %517 = vmatpush1.msra.mxu0 0.0
  %518 = vmatprep.subr.mxu0 0.0
  %519 = vmatpush1.msra.mxu0 0.0
  %520 = vmatprep.subr.mxu0 0.0
  %521 = vmatpush1.msra.mxu0 0.0
  %522 = vmatprep.subr.mxu0 0.0
  %523 = vmatpush1.msra.mxu0 0.0
  %524 = vmatprep.subr.mxu0 0.0
  %525 = vmatpush1.msra.mxu0 0.0
  %526 = vmatprep.subr.mxu0 0.0
  %527 = vmatpush1.msra.mxu0 0.0
  %528 = vmatprep.subr.mxu0 0.0
  %529 = vmatpush1.msra.mxu0 0.0
  %530 = vmatprep.subr.mxu0 0.0
  %531 = vmatpush1.msra.mxu0 0.0
  %532 = vmatprep.mubr.f32.mxu0 0.0
  %533 = vmatmul.mubr.f32.gmra.mrb[0].mxu0 %v466
  %v534 = vpop.f32.mrb[0].mxu0
  %v535 = vadd.f32 %v462, %v534
  %v536 = vpop.f32.mrb[0].mxu0
  %537 = vdwg.mxu0
  %v538 = vld [vmem:[%s3] sm:$0xff]
  %v539 = vld [vmem:[%s3 + $0x8] sm:$0xff]
  %v540 = vld [vmem:[%s3 + $0x10] sm:$0xff]
  %v541 = vld [vmem:[%s3 + $0x18] sm:$0xff]
  %v542 = vld [vmem:[%s3 + $0x20] sm:$0xff]
  %v543 = vld [vmem:[%s3 + $0x28] sm:$0xff]
  %v544 = vld [vmem:[%s3 + $0x30] sm:$0xff]
  %v545 = vld [vmem:[%s3 + $0x38] sm:$0xff]
  %v546 = vld [vmem:[%s3 + $0x40] sm:$0xff]
  %v547 = vld [vmem:[%s3 + $0x48] sm:$0xff]
  %v548 = vld [vmem:[%s3 + $0x50] sm:$0xff]
  %v549 = vld [vmem:[%s3 + $0x58] sm:$0xff]
  %v550 = vld [vmem:[%s3 + $0x60] sm:$0xff]
  %v551 = vld [vmem:[%s3 + $0x68] sm:$0xff]
  %v552 = vld [vmem:[%s3 + $0x70] sm:$0xff]
  %v553 = vld [vmem:[%s3 + $0x78] sm:$0xff]
  %v554 = vld [vmem:[%s3 + $0x80] sm:$0xff]
  %v555 = vld [vmem:[%s3 + $0x88] sm:$0xff]
  %v556 = vld [vmem:[%s3 + $0x90] sm:$0xff]
  %v557 = vld [vmem:[%s3 + $0x98] sm:$0xff]
  %v558 = vld [vmem:[%s3 + $0xa0] sm:$0xff]
  %v559 = vld [vmem:[%s3 + $0xa8] sm:$0xff]
  %v560 = vld [vmem:[%s3 + $0xb0] sm:$0xff]
  %v561 = vld [vmem:[%s3 + $0xb8] sm:$0xff]
  %v562 = vld [vmem:[%s3 + $0xc0] sm:$0xff]
  %v563 = vld [vmem:[%s3 + $0xc8] sm:$0xff]
  %v564 = vld [vmem:[%s3 + $0xd0] sm:$0xff]
  %v565 = vld [vmem:[%s3 + $0xd8] sm:$0xff]
  %v566 = vld [vmem:[%s3 + $0xe0] sm:$0xff]
  %v567 = vld [vmem:[%s3 + $0xe8] sm:$0xff]
  %v568 = vld [vmem:[%s3 + $0xf0] sm:$0xff]
  %v569 = vld [vmem:[%s3 + $0xf8] sm:$0xff]
  %v570 = vld [vmem:[%s12] sm:$0xf]
  %v572 = vsel %vm60, %v538, 0
  %v575 = vsel %vm60, %v539, 0
  %v578 = vsel %vm60, %v540, 0
  %v581 = vsel %vm60, %v541, 0
  %v584 = vsel %vm60, %v542, 0
  %v587 = vsel %vm60, %v543, 0
  %v590 = vsel %vm60, %v544, 0
  %v593 = vsel %vm60, %v545, 0
  %v596 = vsel %vm60, %v546, 0
  %v599 = vsel %vm60, %v547, 0
  %v602 = vsel %vm60, %v548, 0
  %v605 = vsel %vm60, %v549, 0
  %v608 = vsel %vm60, %v550, 0
  %v611 = vsel %vm60, %v551, 0
  %v614 = vsel %vm60, %v552, 0
  %v617 = vsel %vm60, %v553, 0
  %v620 = vsel %vm60, %v554, 0
  %v623 = vsel %vm60, %v555, 0
  %v626 = vsel %vm60, %v556, 0
  %v629 = vsel %vm60, %v557, 0
  %v632 = vsel %vm60, %v558, 0
  %v635 = vsel %vm60, %v559, 0
  %v638 = vsel %vm60, %v560, 0
  %v641 = vsel %vm60, %v561, 0
  %v644 = vsel %vm60, %v562, 0
  %v647 = vsel %vm60, %v563, 0
  %v650 = vsel %vm60, %v564, 0
  %v653 = vsel %vm60, %v565, 0
  %v656 = vsel %vm60, %v566, 0
  %v659 = vsel %vm60, %v567, 0
  %v662 = vsel %vm60, %v568, 0
  %v665 = vsel %vm60, %v569, 0
  %v668 = vsel %vm64, %v570, 0
  %670 = vmatprep.subr.mxu0 0.0
  %671 = vmatpush1.msra.mxu0 %v668
  %672 = vmatprep.subr.mxu0 0.0
  %673 = vmatpush1.msra.mxu0 0.0
  %674 = vmatprep.subr.mxu0 0.0
  %675 = vmatpush1.msra.mxu0 0.0
  %676 = vmatprep.subr.mxu0 0.0
  %677 = vmatpush1.msra.mxu0 0.0
  %678 = vmatprep.subr.mxu0 0.0
  %679 = vmatpush1.msra.mxu0 0.0
  %680 = vmatprep.subr.mxu0 0.0
  %681 = vmatpush1.msra.mxu0 0.0
  %682 = vmatprep.subr.mxu0 0.0
  %683 = vmatpush1.msra.mxu0 0.0
  %684 = vmatprep.subr.mxu0 0.0
  %685 = vmatpush1.msra.mxu0 0.0
  %686 = vmatprep.subr.mxu0 0.0
  %687 = vmatpush1.msra.mxu0 0.0
  %688 = vmatprep.subr.mxu0 0.0
  %689 = vmatpush1.msra.mxu0 0.0
  %690 = vmatprep.subr.mxu0 0.0
  %691 = vmatpush1.msra.mxu0 0.0
  %692 = vmatprep.subr.mxu0 0.0
  %693 = vmatpush1.msra.mxu0 0.0
  %694 = vmatprep.subr.mxu0 0.0
  %695 = vmatpush1.msra.mxu0 0.0
  %696 = vmatprep.subr.mxu0 0.0
  %697 = vmatpush1.msra.mxu0 0.0
  %698 = vmatprep.subr.mxu0 0.0
  %699 = vmatpush1.msra.mxu0 0.0
  %700 = vmatprep.subr.mxu0 0.0
  %701 = vmatpush1.msra.mxu0 0.0
  %702 = vmatprep.subr.mxu0 0.0
  %703 = vmatpush1.msra.mxu0 0.0
  %704 = vmatprep.subr.mxu0 0.0
  %705 = vmatpush1.msra.mxu0 0.0
  %706 = vmatprep.subr.mxu0 0.0
  %707 = vmatpush1.msra.mxu0 0.0
  %708 = vmatprep.subr.mxu0 0.0
  %709 = vmatpush1.msra.mxu0 0.0
  %710 = vmatprep.subr.mxu0 0.0
  %711 = vmatpush1.msra.mxu0 0.0
  %712 = vmatprep.subr.mxu0 0.0
  %713 = vmatpush1.msra.mxu0 0.0
  %714 = vmatprep.subr.mxu0 0.0
  %715 = vmatpush1.msra.mxu0 0.0
  %716 = vmatprep.subr.mxu0 0.0
  %717 = vmatpush1.msra.mxu0 0.0
  %718 = vmatprep.subr.mxu0 0.0
  %719 = vmatpush1.msra.mxu0 0.0
  %720 = vmatprep.subr.mxu0 0.0
  %721 = vmatpush1.msra.mxu0 0.0
  %722 = vmatprep.subr.mxu0 0.0
  %723 = vmatpush1.msra.mxu0 0.0
  %724 = vmatprep.subr.mxu0 0.0
  %725 = vmatpush1.msra.mxu0 0.0
  %726 = vmatprep.subr.mxu0 0.0
  %727 = vmatpush1.msra.mxu0 0.0
  %728 = vmatprep.subr.mxu0 0.0
  %729 = vmatpush1.msra.mxu0 0.0
  %730 = vmatprep.subr.mxu0 0.0
  %731 = vmatpush1.msra.mxu0 0.0
  %732 = vmatprep.subr.mxu0 0.0
  %733 = vmatpush1.msra.mxu0 0.0
  %734 = vmatprep.mubr.f32.mxu0 0.0
  %735 = vmatmul.mubr.f32.gmra.mrb[0].mxu0 %v572
  %v736 = vpop.f32.mrb[0].mxu0
  %v737 = vadd.f32 0.0, %v736
  %v738 = vpop.f32.mrb[0].mxu0
  %739 = vmatprep.mubr.f32.mxu0 0.0
  %740 = vmatmul.mubr.f32.gmra.mrb[0].mxu0 %v575
  %v741 = vpop.f32.mrb[0].mxu0
  %v742 = vadd.f32 0.0, %v741
  %v743 = vpop.f32.mrb[0].mxu0
  %744 = vmatprep.mubr.f32.mxu0 0.0
  %745 = vmatmul.mubr.f32.gmra.mrb[0].mxu0 %v578
  %v746 = vpop.f32.mrb[0].mxu0
  %v747 = vadd.f32 0.0, %v746
  %v748 = vpop.f32.mrb[0].mxu0
  %749 = vmatprep.mubr.f32.mxu0 0.0
  %750 = vmatmul.mubr.f32.gmra.mrb[0].mxu0 %v581
  %v751 = vpop.f32.mrb[0].mxu0
  %v752 = vadd.f32 0.0, %v751
  %v753 = vpop.f32.mrb[0].mxu0
  %754 = vmatprep.mubr.f32.mxu0 0.0
  %755 = vmatmul.mubr.f32.gmra.mrb[0].mxu0 %v584
  %v756 = vpop.f32.mrb[0].mxu0
  %v757 = vadd.f32 0.0, %v756
  %v758 = vpop.f32.mrb[0].mxu0
  %759 = vmatprep.mubr.f32.mxu0 0.0
  %760 = vmatmul.mubr.f32.gmra.mrb[0].mxu0 %v587
  %v761 = vpop.f32.mrb[0].mxu0
  %v762 = vadd.f32 0.0, %v761
  %v763 = vpop.f32.mrb[0].mxu0
  %764 = vmatprep.mubr.f32.mxu0 0.0
  %765 = vmatmul.mubr.f32.gmra.mrb[0].mxu0 %v590
  %v766 = vpop.f32.mrb[0].mxu0
  %v767 = vadd.f32 0.0, %v766
  %v768 = vpop.f32.mrb[0].mxu0
  %769 = vmatprep.mubr.f32.mxu0 0.0
  %770 = vmatmul.mubr.f32.gmra.mrb[0].mxu0 %v593
  %v771 = vpop.f32.mrb[0].mxu0
  %v772 = vadd.f32 0.0, %v771
  %v773 = vpop.f32.mrb[0].mxu0
  %774 = vmatprep.mubr.f32.mxu0 0.0
  %775 = vmatmul.mubr.f32.gmra.mrb[0].mxu0 %v596
  %v776 = vpop.f32.mrb[0].mxu0
  %v777 = vadd.f32 0.0, %v776
  %v778 = vpop.f32.mrb[0].mxu0
  %779 = vmatprep.mubr.f32.mxu0 0.0
  %780 = vmatmul.mubr.f32.gmra.mrb[0].mxu0 %v599
  %v781 = vpop.f32.mrb[0].mxu0
  %v782 = vadd.f32 0.0, %v781
  %v783 = vpop.f32.mrb[0].mxu0
  %784 = vmatprep.mubr.f32.mxu0 0.0
  %785 = vmatmul.mubr.f32.gmra.mrb[0].mxu0 %v602
  %v786 = vpop.f32.mrb[0].mxu0
  %v787 = vadd.f32 0.0, %v786
  %v788 = vpop.f32.mrb[0].mxu0
  %789 = vmatprep.mubr.f32.mxu0 0.0
  %790 = vmatmul.mubr.f32.gmra.mrb[0].mxu0 %v605
  %v791 = vpop.f32.mrb[0].mxu0
  %v792 = vadd.f32 0.0, %v791
  %v793 = vpop.f32.mrb[0].mxu0
  %794 = vmatprep.mubr.f32.mxu0 0.0
  %795 = vmatmul.mubr.f32.gmra.mrb[0].mxu0 %v608
  %v796 = vpop.f32.mrb[0].mxu0
  %v797 = vadd.f32 0.0, %v796
  %v798 = vpop.f32.mrb[0].mxu0
  %799 = vmatprep.mubr.f32.mxu0 0.0
  %800 = vmatmul.mubr.f32.gmra.mrb[0].mxu0 %v611
  %v801 = vpop.f32.mrb[0].mxu0
  %v802 = vadd.f32 0.0, %v801
  %v803 = vpop.f32.mrb[0].mxu0
  %804 = vmatprep.mubr.f32.mxu0 0.0
  %805 = vmatmul.mubr.f32.gmra.mrb[0].mxu0 %v614
  %v806 = vpop.f32.mrb[0].mxu0
  %v807 = vadd.f32 0.0, %v806
  %v808 = vpop.f32.mrb[0].mxu0
  %809 = vmatprep.mubr.f32.mxu0 0.0
  %810 = vmatmul.mubr.f32.gmra.mrb[0].mxu0 %v617
  %v811 = vpop.f32.mrb[0].mxu0
  %v812 = vadd.f32 0.0, %v811
  %v813 = vpop.f32.mrb[0].mxu0
  %814 = vmatprep.mubr.f32.mxu0 0.0
  %815 = vmatmul.mubr.f32.gmra.mrb[0].mxu0 %v620
  %v816 = vpop.f32.mrb[0].mxu0
  %v817 = vadd.f32 0.0, %v816
  %v818 = vpop.f32.mrb[0].mxu0
  %819 = vmatprep.mubr.f32.mxu0 0.0
  %820 = vmatmul.mubr.f32.gmra.mrb[0].mxu0 %v623
  %v821 = vpop.f32.mrb[0].mxu0
  %v822 = vadd.f32 0.0, %v821
  %v823 = vpop.f32.mrb[0].mxu0
  %824 = vmatprep.mubr.f32.mxu0 0.0
  %825 = vmatmul.mubr.f32.gmra.mrb[0].mxu0 %v626
  %v826 = vpop.f32.mrb[0].mxu0
  %v827 = vadd.f32 0.0, %v826
  %v828 = vpop.f32.mrb[0].mxu0
  %829 = vmatprep.mubr.f32.mxu0 0.0
  %830 = vmatmul.mubr.f32.gmra.mrb[0].mxu0 %v629
  %v831 = vpop.f32.mrb[0].mxu0
  %v832 = vadd.f32 0.0, %v831
  %v833 = vpop.f32.mrb[0].mxu0
  %834 = vmatprep.mubr.f32.mxu0 0.0
  %835 = vmatmul.mubr.f32.gmra.mrb[0].mxu0 %v632
  %v836 = vpop.f32.mrb[0].mxu0
  %v837 = vadd.f32 0.0, %v836
  %v838 = vpop.f32.mrb[0].mxu0
  %839 = vmatprep.mubr.f32.mxu0 0.0
  %840 = vmatmul.mubr.f32.gmra.mrb[0].mxu0 %v635
  %v841 = vpop.f32.mrb[0].mxu0
  %v842 = vadd.f32 0.0, %v841
  %v843 = vpop.f32.mrb[0].mxu0
  %844 = vmatprep.mubr.f32.mxu0 0.0
  %845 = vmatmul.mubr.f32.gmra.mrb[0].mxu0 %v638
  %v846 = vpop.f32.mrb[0].mxu0
  %v847 = vadd.f32 0.0, %v846
  %v848 = vpop.f32.mrb[0].mxu0
  %849 = vmatprep.mubr.f32.mxu0 0.0
  %850 = vmatmul.mubr.f32.gmra.mrb[0].mxu0 %v641
  %v851 = vpop.f32.mrb[0].mxu0
  %v852 = vadd.f32 0.0, %v851
  %v853 = vpop.f32.mrb[0].mxu0
  %854 = vmatprep.mubr.f32.mxu0 0.0
  %855 = vmatmul.mubr.f32.gmra.mrb[0].mxu0 %v644
  %v856 = vpop.f32.mrb[0].mxu0
  %v857 = vadd.f32 0.0, %v856
  %v858 = vpop.f32.mrb[0].mxu0
  %859 = vmatprep.mubr.f32.mxu0 0.0
  %860 = vmatmul.mubr.f32.gmra.mrb[0].mxu0 %v647
  %v861 = vpop.f32.mrb[0].mxu0
  %v862 = vadd.f32 0.0, %v861
  %v863 = vpop.f32.mrb[0].mxu0
  %864 = vmatprep.mubr.f32.mxu0 0.0
  %865 = vmatmul.mubr.f32.gmra.mrb[0].mxu0 %v650
  %v866 = vpop.f32.mrb[0].mxu0
  %v867 = vadd.f32 0.0, %v866
  %v868 = vpop.f32.mrb[0].mxu0
  %869 = vmatprep.mubr.f32.mxu0 0.0
  %870 = vmatmul.mubr.f32.gmra.mrb[0].mxu0 %v653
  %v871 = vpop.f32.mrb[0].mxu0
  %v872 = vadd.f32 0.0, %v871
  %v873 = vpop.f32.mrb[0].mxu0
  %874 = vmatprep.mubr.f32.mxu0 0.0
  %875 = vmatmul.mubr.f32.gmra.mrb[0].mxu0 %v656
  %v876 = vpop.f32.mrb[0].mxu0
  %v877 = vadd.f32 0.0, %v876
  %v878 = vpop.f32.mrb[0].mxu0
  %879 = vmatprep.mubr.f32.mxu0 0.0
  %880 = vmatmul.mubr.f32.gmra.mrb[0].mxu0 %v659
  %v881 = vpop.f32.mrb[0].mxu0
  %v882 = vadd.f32 0.0, %v881
  %v883 = vpop.f32.mrb[0].mxu0
  %884 = vmatprep.mubr.f32.mxu0 0.0
  %885 = vmatmul.mubr.f32.gmra.mrb[0].mxu0 %v662
  %v886 = vpop.f32.mrb[0].mxu0
  %v887 = vadd.f32 0.0, %v886
  %v888 = vpop.f32.mrb[0].mxu0
  %889 = vmatprep.mubr.f32.mxu0 0.0
  %890 = vmatmul.mubr.f32.gmra.mrb[0].mxu0 %v665
  %v891 = vpop.f32.mrb[0].mxu0
  %v892 = vadd.f32 0.0, %v891
  %v893 = vpop.f32.mrb[0].mxu0
  %894 = vdwg.mxu0
  %v897 = vunpack.c.l.s4 1966171168
  %v898 = vunpack.c.0.s8 %v897
  %v899 = vlaneseq
  %v900 = vshrl.u32 %v899, 7
  %v901 = vsub.s32 %v898, %v900
  %v902 = vrot.slane %v535, %v901
  %v903 = vcombine.high %v902, %v902
  %v905 = vunpack.c.l.s4 1966171168
  %v906 = vunpack.c.0.s8 %v905
  %v907 = vlaneseq
  %v908 = vshrl.u32 %v907, 7
  %v909 = vsub.s32 %v906, %v908
  %v910 = vrot.slane %v902, %v909
  %v912 = vunpack.c.l.s4 1966171168
  %v913 = vunpack.c.0.s8 %v912
  %v914 = vlaneseq
  %v915 = vshrl.u32 %v914, 7
  %v916 = vsub.s32 %v913, %v915
  %v917 = vrot.slane %v903, %v916
  %v918 = vlaneseq
  %v919 = vshrl.u32 %v918, 7
  %v920 = vsub.s32 0, %v919
  %v921 = vrot.slane %v910, %v920
  %v922 = vlaneseq
  %v923 = vshrl.u32 %v922, 7
  %v924 = vsub.s32 0, %v923
  %v925 = vrot.slane %v917, %v924
  %v928 = vadd.f32 %v737, %v921
  %v929 = vadd.f32 %v742, %v921
  %v930 = vadd.f32 %v747, %v921
  %v931 = vadd.f32 %v752, %v921
  %v932 = vadd.f32 %v757, %v921
  %v933 = vadd.f32 %v762, %v921
  %v934 = vadd.f32 %v767, %v921
  %v935 = vadd.f32 %v772, %v921
  %v936 = vadd.f32 %v777, %v921
  %v937 = vadd.f32 %v782, %v921
  %v938 = vadd.f32 %v787, %v921
  %v939 = vadd.f32 %v792, %v921
  %v940 = vadd.f32 %v797, %v921
  %v941 = vadd.f32 %v802, %v921
  %v942 = vadd.f32 %v807, %v921
  %v943 = vadd.f32 %v812, %v921
  %v944 = vadd.f32 %v817, %v925
  %v945 = vadd.f32 %v822, %v925
  %v946 = vadd.f32 %v827, %v925
  %v947 = vadd.f32 %v832, %v925
  %v948 = vadd.f32 %v837, %v925
  %v949 = vadd.f32 %v842, %v925
  %v950 = vadd.f32 %v847, %v925
  %v951 = vadd.f32 %v852, %v925
  %v952 = vadd.f32 %v857, %v925
  %v953 = vadd.f32 %v862, %v925
  %v954 = vadd.f32 %v867, %v925
  %v955 = vadd.f32 %v872, %v925
  %v956 = vadd.f32 %v877, %v925
  %v957 = vadd.f32 %v882, %v925
  %v958 = vadd.f32 %v887, %v925
  %v959 = vadd.f32 %v892, %v925
  %v960 = vld [vmem:[%s13] sm:$0x1]
  %v962 = vlaneseq
  %v963 = vshrl.u32 %v962, 7
  %v964 = vsub.s32 0, %v963
  %v965 = vrot.slane %v960, %v964
  %v967 = vadd.f32 %v928, %v965
  %v968 = vadd.f32 %v929, %v965
  %v969 = vadd.f32 %v930, %v965
  %v970 = vadd.f32 %v931, %v965
  %v971 = vadd.f32 %v932, %v965
  %v972 = vadd.f32 %v933, %v965
  %v973 = vadd.f32 %v934, %v965
  %v974 = vadd.f32 %v935, %v965
  %v975 = vadd.f32 %v936, %v965
  %v976 = vadd.f32 %v937, %v965
  %v977 = vadd.f32 %v938, %v965
  %v978 = vadd.f32 %v939, %v965
  %v979 = vadd.f32 %v940, %v965
  %v980 = vadd.f32 %v941, %v965
  %v981 = vadd.f32 %v942, %v965
  %v982 = vadd.f32 %v943, %v965
  %v983 = vadd.f32 %v944, %v965
  %v984 = vadd.f32 %v945, %v965
  %v985 = vadd.f32 %v946, %v965
  %v986 = vadd.f32 %v947, %v965
  %v987 = vadd.f32 %v948, %v965
  %v988 = vadd.f32 %v949, %v965
  %v989 = vadd.f32 %v950, %v965
  %v990 = vadd.f32 %v951, %v965
  %v991 = vadd.f32 %v952, %v965
  %v992 = vadd.f32 %v953, %v965
  %v993 = vadd.f32 %v954, %v965
  %v994 = vadd.f32 %v955, %v965
  %v995 = vadd.f32 %v956, %v965
  %v996 = vadd.f32 %v957, %v965
  %v997 = vadd.f32 %v958, %v965
  %v998 = vadd.f32 %v959, %v965
  %v999 = vmax.f32 %v967, 0.0
  %v1000 = vmax.f32 %v968, 0.0
  %v1001 = vmax.f32 %v969, 0.0
  %v1002 = vmax.f32 %v970, 0.0
  %v1003 = vmax.f32 %v971, 0.0
  %v1004 = vmax.f32 %v972, 0.0
  %v1005 = vmax.f32 %v973, 0.0
  %v1006 = vmax.f32 %v974, 0.0
  %v1007 = vmax.f32 %v975, 0.0
  %v1008 = vmax.f32 %v976, 0.0
  %v1009 = vmax.f32 %v977, 0.0
  %v1010 = vmax.f32 %v978, 0.0
  %v1011 = vmax.f32 %v979, 0.0
  %v1012 = vmax.f32 %v980, 0.0
  %v1013 = vmax.f32 %v981, 0.0
  %v1014 = vmax.f32 %v982, 0.0
  %v1015 = vmax.f32 %v983, 0.0
  %v1016 = vmax.f32 %v984, 0.0
  %v1017 = vmax.f32 %v985, 0.0
  %v1018 = vmax.f32 %v986, 0.0
  %v1019 = vmax.f32 %v987, 0.0
  %v1020 = vmax.f32 %v988, 0.0
  %v1021 = vmax.f32 %v989, 0.0
  %v1022 = vmax.f32 %v990, 0.0
  %v1023 = vmax.f32 %v991, 0.0
  %v1024 = vmax.f32 %v992, 0.0
  %v1025 = vmax.f32 %v993, 0.0
  %v1026 = vmax.f32 %v994, 0.0
  %v1027 = vmax.f32 %v995, 0.0
  %v1028 = vmax.f32 %v996, 0.0
  %v1029 = vmax.f32 %v997, 0.0
  %v1030 = vmax.f32 %v998, 0.0
  %v1031 = vld [vmem:[%s14] sm:$0x1]
  %v1033 = vlaneseq
  %v1034 = vshrl.u32 %v1033, 7
  %v1035 = vsub.s32 0, %v1034
  %v1036 = vrot.slane %v1031, %v1035
  %v1038 = vmul.f32 %v999, %v1036
  %v1039 = vmul.f32 %v1000, %v1036
  %v1040 = vmul.f32 %v1001, %v1036
  %v1041 = vmul.f32 %v1002, %v1036
  %v1042 = vmul.f32 %v1003, %v1036
  %v1043 = vmul.f32 %v1004, %v1036
  %v1044 = vmul.f32 %v1005, %v1036
  %v1045 = vmul.f32 %v1006, %v1036
  %v1046 = vmul.f32 %v1007, %v1036
  %v1047 = vmul.f32 %v1008, %v1036
  %v1048 = vmul.f32 %v1009, %v1036
  %v1049 = vmul.f32 %v1010, %v1036
  %v1050 = vmul.f32 %v1011, %v1036
  %v1051 = vmul.f32 %v1012, %v1036
  %v1052 = vmul.f32 %v1013, %v1036
  %v1053 = vmul.f32 %v1014, %v1036
  %v1054 = vmul.f32 %v1015, %v1036
  %v1055 = vmul.f32 %v1016, %v1036
  %v1056 = vmul.f32 %v1017, %v1036
  %v1057 = vmul.f32 %v1018, %v1036
  %v1058 = vmul.f32 %v1019, %v1036
  %v1059 = vmul.f32 %v1020, %v1036
  %v1060 = vmul.f32 %v1021, %v1036
  %v1061 = vmul.f32 %v1022, %v1036
  %v1062 = vmul.f32 %v1023, %v1036
  %v1063 = vmul.f32 %v1024, %v1036
  %v1064 = vmul.f32 %v1025, %v1036
  %v1065 = vmul.f32 %v1026, %v1036
  %v1066 = vmul.f32 %v1027, %v1036
  %v1067 = vmul.f32 %v1028, %v1036
  %v1068 = vmul.f32 %v1029, %v1036
  %v1069 = vmul.f32 %v1030, %v1036
  %vm1070 = vcmask 261120
  %v1071 = vsel %vm1070, %v1038, 0.0
  %1072 = vadd.xlane.f32.xlu0 %v1071
  %v1073 = vpop.xlane.xlu0 %1072
  %v1074 = vsel %vm1070, %v1039, 0.0
  %1075 = vadd.xlane.f32.xlu0 %v1074
  %v1076 = vpop.xlane.xlu0 %1075
  %v1077 = vsel %vm1070, %v1040, 0.0
  %1078 = vadd.xlane.f32.xlu0 %v1077
  %v1079 = vpop.xlane.xlu0 %1078
  %v1080 = vsel %vm1070, %v1041, 0.0
  %1081 = vadd.xlane.f32.xlu0 %v1080
  %v1082 = vpop.xlane.xlu0 %1081
  %v1083 = vsel %vm1070, %v1042, 0.0
  %1084 = vadd.xlane.f32.xlu0 %v1083
  %v1085 = vpop.xlane.xlu0 %1084
  %v1086 = vsel %vm1070, %v1043, 0.0
  %1087 = vadd.xlane.f32.xlu0 %v1086
  %v1088 = vpop.xlane.xlu0 %1087
  %v1089 = vsel %vm1070, %v1044, 0.0
  %1090 = vadd.xlane.f32.xlu0 %v1089
  %v1091 = vpop.xlane.xlu0 %1090
  %v1092 = vsel %vm1070, %v1045, 0.0
  %1093 = vadd.xlane.f32.xlu0 %v1092
  %v1094 = vpop.xlane.xlu0 %1093
  %v1095 = vsel %vm1070, %v1046, 0.0
  %1096 = vadd.xlane.f32.xlu0 %v1095
  %v1097 = vpop.xlane.xlu0 %1096
  %v1098 = vsel %vm1070, %v1047, 0.0
  %1099 = vadd.xlane.f32.xlu0 %v1098
  %v1100 = vpop.xlane.xlu0 %1099
  %v1101 = vsel %vm1070, %v1048, 0.0
  %1102 = vadd.xlane.f32.xlu0 %v1101
  %v1103 = vpop.xlane.xlu0 %1102
  %v1104 = vsel %vm1070, %v1049, 0.0
  %1105 = vadd.xlane.f32.xlu0 %v1104
  %v1106 = vpop.xlane.xlu0 %1105
  %v1107 = vsel %vm1070, %v1050, 0.0
  %1108 = vadd.xlane.f32.xlu0 %v1107
  %v1109 = vpop.xlane.xlu0 %1108
  %v1110 = vsel %vm1070, %v1051, 0.0
  %1111 = vadd.xlane.f32.xlu0 %v1110
  %v1112 = vpop.xlane.xlu0 %1111
  %v1113 = vsel %vm1070, %v1052, 0.0
  %1114 = vadd.xlane.f32.xlu0 %v1113
  %v1115 = vpop.xlane.xlu0 %1114
  %v1116 = vsel %vm1070, %v1053, 0.0
  %1117 = vadd.xlane.f32.xlu0 %v1116
  %v1118 = vpop.xlane.xlu0 %1117
  %v1119 = vsel %vm1070, %v1054, 0.0
  %1120 = vadd.xlane.f32.xlu0 %v1119
  %v1121 = vpop.xlane.xlu0 %1120
  %v1122 = vsel %vm1070, %v1055, 0.0
  %1123 = vadd.xlane.f32.xlu0 %v1122
  %v1124 = vpop.xlane.xlu0 %1123
  %v1125 = vsel %vm1070, %v1056, 0.0
  %1126 = vadd.xlane.f32.xlu0 %v1125
  %v1127 = vpop.xlane.xlu0 %1126
  %v1128 = vsel %vm1070, %v1057, 0.0
  %1129 = vadd.xlane.f32.xlu0 %v1128
  %v1130 = vpop.xlane.xlu0 %1129
  %v1131 = vsel %vm1070, %v1058, 0.0
  %1132 = vadd.xlane.f32.xlu0 %v1131
  %v1133 = vpop.xlane.xlu0 %1132
  %v1134 = vsel %vm1070, %v1059, 0.0
  %1135 = vadd.xlane.f32.xlu0 %v1134
  %v1136 = vpop.xlane.xlu0 %1135
  %v1137 = vsel %vm1070, %v1060, 0.0
  %1138 = vadd.xlane.f32.xlu0 %v1137
  %v1139 = vpop.xlane.xlu0 %1138
  %v1140 = vsel %vm1070, %v1061, 0.0
  %1141 = vadd.xlane.f32.xlu0 %v1140
  %v1142 = vpop.xlane.xlu0 %1141
  %v1143 = vsel %vm1070, %v1062, 0.0
  %1144 = vadd.xlane.f32.xlu0 %v1143
  %v1145 = vpop.xlane.xlu0 %1144
  %v1146 = vsel %vm1070, %v1063, 0.0
  %1147 = vadd.xlane.f32.xlu0 %v1146
  %v1148 = vpop.xlane.xlu0 %1147
  %v1149 = vsel %vm1070, %v1064, 0.0
  %1150 = vadd.xlane.f32.xlu0 %v1149
  %v1151 = vpop.xlane.xlu0 %1150
  %v1152 = vsel %vm1070, %v1065, 0.0
  %1153 = vadd.xlane.f32.xlu0 %v1152
  %v1154 = vpop.xlane.xlu0 %1153
  %v1155 = vsel %vm1070, %v1066, 0.0
  %1156 = vadd.xlane.f32.xlu0 %v1155
  %v1157 = vpop.xlane.xlu0 %1156
  %v1158 = vsel %vm1070, %v1067, 0.0
  %1159 = vadd.xlane.f32.xlu0 %v1158
  %v1160 = vpop.xlane.xlu0 %1159
  %v1161 = vsel %vm1070, %v1068, 0.0
  %1162 = vadd.xlane.f32.xlu0 %v1161
  %v1163 = vpop.xlane.xlu0 %1162
  %v1164 = vsel %vm1070, %v1069, 0.0
  %1165 = vadd.xlane.f32.xlu0 %v1164
  %v1166 = vpop.xlane.xlu0 %1165
  %v1167 = vld [vmem:[#allocation2] sm:$0x1]
  %v1169 = vlaneseq
  %v1170 = vshrl.u32 %v1169, 7
  %v1171 = vsub.s32 0, %v1170
  %v1172 = vrot.slane %v1167, %v1171
  %1173 = vset.pattern.permute.xlu0 0
  %1174 = vperm.xlu0 %1173, %v1172
  %v1175 = vpop.permute.xlu0 %1174
  %v1177 = vadd.f32 %v1073, %v1175
  %v1178 = vadd.f32 %v1076, %v1175
  %v1179 = vadd.f32 %v1079, %v1175
  %v1180 = vadd.f32 %v1082, %v1175
  %v1181 = vadd.f32 %v1085, %v1175
  %v1182 = vadd.f32 %v1088, %v1175
  %v1183 = vadd.f32 %v1091, %v1175
  %v1184 = vadd.f32 %v1094, %v1175
  %v1185 = vadd.f32 %v1097, %v1175
  %v1186 = vadd.f32 %v1100, %v1175
  %v1187 = vadd.f32 %v1103, %v1175
  %v1188 = vadd.f32 %v1106, %v1175
  %v1189 = vadd.f32 %v1109, %v1175
  %v1190 = vadd.f32 %v1112, %v1175
  %v1191 = vadd.f32 %v1115, %v1175
  %v1192 = vadd.f32 %v1118, %v1175
  %v1193 = vadd.f32 %v1121, %v1175
  %v1194 = vadd.f32 %v1124, %v1175
  %v1195 = vadd.f32 %v1127, %v1175
  %v1196 = vadd.f32 %v1130, %v1175
  %v1197 = vadd.f32 %v1133, %v1175
  %v1198 = vadd.f32 %v1136, %v1175
  %v1199 = vadd.f32 %v1139, %v1175
  %v1200 = vadd.f32 %v1142, %v1175
  %v1201 = vadd.f32 %v1145, %v1175
  %v1202 = vadd.f32 %v1148, %v1175
  %v1203 = vadd.f32 %v1151, %v1175
  %v1204 = vadd.f32 %v1154, %v1175
  %v1205 = vadd.f32 %v1157, %v1175
  %v1206 = vadd.f32 %v1160, %v1175
  %v1207 = vadd.f32 %v1163, %v1175
  %v1208 = vadd.f32 %v1166, %v1175
  %v1241 = vlaneseq
  %v1242 = vand.u32 %v1241, 127
  %v1243 = vlaneseq
  %v1244 = vshrl.u32 %v1243, 7
  %v1245 = vsub.s32 %v1242, %v1244
  %v1246 = vrot.slane %v1177, %v1245
  %v1247 = vadd.s32 %v1242, 4294967288
  %v1248 = vlaneseq
  %v1249 = vshrl.u32 %v1248, 7
  %v1250 = vsub.s32 %v1247, %v1249
  %v1251 = vrot.slane %v1178, %v1250
  %vm1252 = vcmask 130112
  %v1253 = vsel %vm1252, %v1251, %v1246
  %v1254 = vadd.s32 %v1242, 4294967280
  %v1255 = vlaneseq
  %v1256 = vshrl.u32 %v1255, 7
  %v1257 = vsub.s32 %v1254, %v1256
  %v1258 = vrot.slane %v1179, %v1257
  %vm1259 = vcmask 195712
  %v1260 = vsel %vm1259, %v1258, %v1253
  %v1261 = vadd.s32 %v1242, 4294967272
  %v1262 = vlaneseq
  %v1263 = vshrl.u32 %v1262, 7
  %v1264 = vsub.s32 %v1261, %v1263
  %v1265 = vrot.slane %v1180, %v1264
  %vm1266 = vcmask 261312
  %v1267 = vsel %vm1266, %v1265, %v1260
  %v1268 = vadd.s32 %v1242, 4294967264
  %v1269 = vlaneseq
  %v1270 = vshrl.u32 %v1269, 7
  %v1271 = vsub.s32 %v1268, %v1270
  %v1272 = vrot.slane %v1181, %v1271
  %vm1273 = vcmask 326912
  %v1274 = vsel %vm1273, %v1272, %v1267
  %v1275 = vadd.s32 %v1242, 4294967256
  %v1276 = vlaneseq
  %v1277 = vshrl.u32 %v1276, 7
  %v1278 = vsub.s32 %v1275, %v1277
  %v1279 = vrot.slane %v1182, %v1278
  %vm1280 = vcmask 392512
  %v1281 = vsel %vm1280, %v1279, %v1274
  %v1282 = vadd.s32 %v1242, 4294967248
  %v1283 = vlaneseq
  %v1284 = vshrl.u32 %v1283, 7
  %v1285 = vsub.s32 %v1282, %v1284
  %v1286 = vrot.slane %v1183, %v1285
  %vm1287 = vcmask 458112
  %v1288 = vsel %vm1287, %v1286, %v1281
  %v1289 = vadd.s32 %v1242, 4294967240
  %v1290 = vlaneseq
  %v1291 = vshrl.u32 %v1290, 7
  %v1292 = vsub.s32 %v1289, %v1291
  %v1293 = vrot.slane %v1184, %v1292
  %vm1294 = vcmask 523712
  %v1295 = vsel %vm1294, %v1293, %v1288
  %v1296 = vadd.s32 %v1242, 4294967232
  %v1297 = vlaneseq
  %v1298 = vshrl.u32 %v1297, 7
  %v1299 = vsub.s32 %v1296, %v1298
  %v1300 = vrot.slane %v1185, %v1299
  %vm1301 = vcmask 589312
  %v1302 = vsel %vm1301, %v1300, %v1295
  %v1303 = vadd.s32 %v1242, 4294967224
  %v1304 = vlaneseq
  %v1305 = vshrl.u32 %v1304, 7
  %v1306 = vsub.s32 %v1303, %v1305
  %v1307 = vrot.slane %v1186, %v1306
  %vm1308 = vcmask 654912
  %v1309 = vsel %vm1308, %v1307, %v1302
  %v1310 = vadd.s32 %v1242, 4294967216
  %v1311 = vlaneseq
  %v1312 = vshrl.u32 %v1311, 7
  %v1313 = vsub.s32 %v1310, %v1312
  %v1314 = vrot.slane %v1187, %v1313
  %vm1315 = vcmask 720512
  %v1316 = vsel %vm1315, %v1314, %v1309
  %v1317 = vadd.s32 %v1242, 4294967208
  %v1318 = vlaneseq
  %v1319 = vshrl.u32 %v1318, 7
  %v1320 = vsub.s32 %v1317, %v1319
  %v1321 = vrot.slane %v1188, %v1320
  %vm1322 = vcmask 786112
  %v1323 = vsel %vm1322, %v1321, %v1316
  %v1324 = vadd.s32 %v1242, 4294967200
  %v1325 = vlaneseq
  %v1326 = vshrl.u32 %v1325, 7
  %v1327 = vsub.s32 %v1324, %v1326
  %v1328 = vrot.slane %v1189, %v1327
  %vm1329 = vcmask 851712
  %v1330 = vsel %vm1329, %v1328, %v1323
  %v1331 = vadd.s32 %v1242, 4294967192
  %v1332 = vlaneseq
  %v1333 = vshrl.u32 %v1332, 7
  %v1334 = vsub.s32 %v1331, %v1333
  %v1335 = vrot.slane %v1190, %v1334
  %vm1336 = vcmask 917312
  %v1337 = vsel %vm1336, %v1335, %v1330
  %v1338 = vadd.s32 %v1242, 4294967184
  %v1339 = vlaneseq
  %v1340 = vshrl.u32 %v1339, 7
  %v1341 = vsub.s32 %v1338, %v1340
  %v1342 = vrot.slane %v1191, %v1341
  %vm1343 = vcmask 982912
  %v1344 = vsel %vm1343, %v1342, %v1337
  %v1345 = vadd.s32 %v1242, 4294967176
  %v1346 = vlaneseq
  %v1347 = vshrl.u32 %v1346, 7
  %v1348 = vsub.s32 %v1345, %v1347
  %v1349 = vrot.slane %v1192, %v1348
  %vm1350 = vcmask 1048512
  %v1351 = vsel %vm1350, %v1349, %v1344
  %v1352 = vlaneseq
  %v1353 = vshrl.u32 %v1352, 7
  %v1354 = vsub.s32 %v1242, %v1353
  %v1355 = vrot.slane %v1193, %v1354
  %v1356 = vlaneseq
  %v1357 = vshrl.u32 %v1356, 7
  %v1358 = vsub.s32 %v1247, %v1357
  %v1359 = vrot.slane %v1194, %v1358
  %v1360 = vsel %vm1252, %v1359, %v1355
  %v1361 = vlaneseq
  %v1362 = vshrl.u32 %v1361, 7
  %v1363 = vsub.s32 %v1254, %v1362
  %v1364 = vrot.slane %v1195, %v1363
  %v1365 = vsel %vm1259, %v1364, %v1360
  %v1366 = vlaneseq
  %v1367 = vshrl.u32 %v1366, 7
  %v1368 = vsub.s32 %v1261, %v1367
  %v1369 = vrot.slane %v1196, %v1368
  %v1370 = vsel %vm1266, %v1369, %v1365
  %v1371 = vlaneseq
  %v1372 = vshrl.u32 %v1371, 7
  %v1373 = vsub.s32 %v1268, %v1372
  %v1374 = vrot.slane %v1197, %v1373
  %v1375 = vsel %vm1273, %v1374, %v1370
  %v1376 = vlaneseq
  %v1377 = vshrl.u32 %v1376, 7
  %v1378 = vsub.s32 %v1275, %v1377
  %v1379 = vrot.slane %v1198, %v1378
  %v1380 = vsel %vm1280, %v1379, %v1375
  %v1381 = vlaneseq
  %v1382 = vshrl.u32 %v1381, 7
  %v1383 = vsub.s32 %v1282, %v1382
  %v1384 = vrot.slane %v1199, %v1383
  %v1385 = vsel %vm1287, %v1384, %v1380
  %v1386 = vlaneseq
  %v1387 = vshrl.u32 %v1386, 7
  %v1388 = vsub.s32 %v1289, %v1387
  %v1389 = vrot.slane %v1200, %v1388
  %v1390 = vsel %vm1294, %v1389, %v1385
  %v1391 = vlaneseq
  %v1392 = vshrl.u32 %v1391, 7
  %v1393 = vsub.s32 %v1296, %v1392
  %v1394 = vrot.slane %v1201, %v1393
  %v1395 = vsel %vm1301, %v1394, %v1390
  %v1396 = vlaneseq
  %v1397 = vshrl.u32 %v1396, 7
  %v1398 = vsub.s32 %v1303, %v1397
  %v1399 = vrot.slane %v1202, %v1398
  %v1400 = vsel %vm1308, %v1399, %v1395
  %v1401 = vlaneseq
  %v1402 = vshrl.u32 %v1401, 7
  %v1403 = vsub.s32 %v1310, %v1402
  %v1404 = vrot.slane %v1203, %v1403
  %v1405 = vsel %vm1315, %v1404, %v1400
  %v1406 = vlaneseq
  %v1407 = vshrl.u32 %v1406, 7
  %v1408 = vsub.s32 %v1317, %v1407
  %v1409 = vrot.slane %v1204, %v1408
  %v1410 = vsel %vm1322, %v1409, %v1405
  %v1411 = vlaneseq
  %v1412 = vshrl.u32 %v1411, 7
  %v1413 = vsub.s32 %v1324, %v1412
  %v1414 = vrot.slane %v1205, %v1413
  %v1415 = vsel %vm1329, %v1414, %v1410
  %v1416 = vlaneseq
  %v1417 = vshrl.u32 %v1416, 7
  %v1418 = vsub.s32 %v1331, %v1417
  %v1419 = vrot.slane %v1206, %v1418
  %v1420 = vsel %vm1336, %v1419, %v1415
  %v1421 = vlaneseq
  %v1422 = vshrl.u32 %v1421, 7
  %v1423 = vsub.s32 %v1338, %v1422
  %v1424 = vrot.slane %v1207, %v1423
  %v1425 = vsel %vm1343, %v1424, %v1420
  %v1426 = vlaneseq
  %v1427 = vshrl.u32 %v1426, 7
  %v1428 = vsub.s32 %v1345, %v1427
  %v1429 = vrot.slane %v1208, %v1428
  %v1430 = vsel %vm1350, %v1429, %v1425
  %vm1431 = vcmask 1041409
  %v1432 = vsel %vm1431, %v1430, %v1351
  %1434 = vst [vmem:[%s16] sm:$0x3] %v1432
  // Predicated region
  $region66: #{atomnet_forward.3} parent=0 // pred_check
    _
  $region67: #{atomnet_forward.3} parent=0 // pred_check_branch
    %1436 = sbr.rel (0) target = $region69
  $region68: #{atomnet_forward.3} parent=0 // pred_region
    _
  $region69: #{atomnet_forward.3} parent=0 // pred_fallthru
    _
  // Predicated region
  $region70: #{atomnet_forward.3} parent=0 // pred_check
    _
  $region71: #{atomnet_forward.3} parent=0 // pred_check_branch
    %1438 = sbr.rel (0) target = $region73
  $region72: #{atomnet_forward.3} parent=0 // pred_region
    _
  $region73: #{atomnet_forward.3} parent=0 // pred_fallthru
    _

// kernel: atomnet_forward.2
$region0: #{atomnet_forward.2}
  #allocation0 [shape = 'u32[]', space=smem, size = 0x4, offset = 0x4, fixed_abs, tag = 'smem constant byte address 0x4 - core index']
  #allocation1 [shape = 'u32[144,128]{1,0:T(1,128)}', space=vmem, size = 0x12000, scoped, tag = 'internal scratch']
  %s0 = inlined_call_operand.vmem [shape: f32[1024,27], index: 0, kind: input, shape index: {}]
  %s1 = inlined_call_operand.vmem [shape: f32[27,8], index: 1, kind: input, shape index: {}]
  %s2 = inlined_call_operand.vmem [shape: f32[1,8], index: 2, kind: input, shape index: {}]
  %s3 = inlined_call_operand.vmem [shape: f32[72,16], index: 3, kind: input, shape index: {}]
  %s4 = inlined_call_operand.vmem [shape: f32[1,16], index: 4, kind: input, shape index: {}]
  %s5 = inlined_call_operand.vmem [shape: f32[4,128], index: 5, kind: output, shape index: {}]
  %s6 = sld [smem:[#allocation0]]
  $region30: #{atomnet_forward.2} parent=0
    _
  %s8 = ssub.s32 1, %s6
  %s9 = scalar_select 0, %s8, %s6
  // Predicated region
  $region2: #{atomnet_forward.2} parent=0 // pred_check
    _
  $region3: #{atomnet_forward.2} parent=0 // pred_check_branch
    %11 = sbr.rel (0) target = $region5
  $region4: #{atomnet_forward.2} parent=0 // pred_region
    _
  $region5: #{atomnet_forward.2} parent=0 // pred_fallthru
    _
  // Predicated region
  $region6: #{atomnet_forward.2} parent=0 // pred_check
    _
  $region7: #{atomnet_forward.2} parent=0 // pred_check_branch
    %13 = sbr.rel (0) target = $region9
  $region8: #{atomnet_forward.2} parent=0 // pred_region
    _
  $region9: #{atomnet_forward.2} parent=0 // pred_fallthru
    _
  // Predicated region
  $region10: #{atomnet_forward.2} parent=0 // pred_check
    _
  $region11: #{atomnet_forward.2} parent=0 // pred_check_branch
    %15 = sbr.rel (0) target = $region13
  $region12: #{atomnet_forward.2} parent=0 // pred_region
    _
  $region13: #{atomnet_forward.2} parent=0 // pred_fallthru
    _
  // Predicated region
  $region14: #{atomnet_forward.2} parent=0 // pred_check
    _
  $region15: #{atomnet_forward.2} parent=0 // pred_check_branch
    %17 = sbr.rel (0) target = $region17
  $region16: #{atomnet_forward.2} parent=0 // pred_region
    _
  $region17: #{atomnet_forward.2} parent=0 // pred_fallthru
    _
  // Predicated region
  $region18: #{atomnet_forward.2} parent=0 // pred_check
    _
  $region19: #{atomnet_forward.2} parent=0 // pred_check_branch
    %19 = sbr.rel (0) target = $region21
  $region20: #{atomnet_forward.2} parent=0 // pred_region
    _
  $region21: #{atomnet_forward.2} parent=0 // pred_fallthru
    _
  %v20 = vld [vmem:[%s0] sm:$0xff]
  %v21 = vld [vmem:[%s0 + $0x8] sm:$0xff]
  %v22 = vld [vmem:[%s0 + $0x10] sm:$0xff]
  %v23 = vld [vmem:[%s0 + $0x18] sm:$0xff]
  %v24 = vld [vmem:[%s0 + $0x20] sm:$0xff]
  %v25 = vld [vmem:[%s0 + $0x28] sm:$0xff]
  %v26 = vld [vmem:[%s0 + $0x30] sm:$0xff]
  %v27 = vld [vmem:[%s0 + $0x38] sm:$0xff]
  %v28 = vld [vmem:[%s0 + $0x40] sm:$0xff]
  %v29 = vld [vmem:[%s0 + $0x48] sm:$0xff]
  %v30 = vld [vmem:[%s0 + $0x50] sm:$0xff]
  %v31 = vld [vmem:[%s0 + $0x58] sm:$0xff]
  %v32 = vld [vmem:[%s0 + $0x60] sm:$0xff]
  %v33 = vld [vmem:[%s0 + $0x68] sm:$0xff]
  %v34 = vld [vmem:[%s0 + $0x70] sm:$0xff]
  %v35 = vld [vmem:[%s0 + $0x78] sm:$0xff]
  %v36 = vld [vmem:[%s0 + $0x80] sm:$0xff]
  %v37 = vld [vmem:[%s0 + $0x88] sm:$0xff]
  %v38 = vld [vmem:[%s0 + $0x90] sm:$0xff]
  %v39 = vld [vmem:[%s0 + $0x98] sm:$0xff]
  %v40 = vld [vmem:[%s0 + $0xa0] sm:$0xff]
  %v41 = vld [vmem:[%s0 + $0xa8] sm:$0xff]
  %v42 = vld [vmem:[%s0 + $0xb0] sm:$0xff]
  %v43 = vld [vmem:[%s0 + $0xb8] sm:$0xff]
  %v44 = vld [vmem:[%s0 + $0xc0] sm:$0xff]
  %v45 = vld [vmem:[%s0 + $0xc8] sm:$0xff]
  %v46 = vld [vmem:[%s0 + $0xd0] sm:$0xff]
  %v47 = vld [vmem:[%s0 + $0xd8] sm:$0xff]
  %v48 = vld [vmem:[%s0 + $0xe0] sm:$0xff]
  %v49 = vld [vmem:[%s0 + $0xe8] sm:$0xff]
  %v50 = vld [vmem:[%s0 + $0xf0] sm:$0xff]
  %v51 = vld [vmem:[%s0 + $0xf8] sm:$0xff]
  %v52 = vld [vmem:[%s0 + $0x100] sm:$0xff]
  %v53 = vld [vmem:[%s0 + $0x108] sm:$0xff]
  %v54 = vld [vmem:[%s0 + $0x110] sm:$0xff]
  %v55 = vld [vmem:[%s0 + $0x118] sm:$0xff]
  %v56 = vld [vmem:[%s0 + $0x120] sm:$0xff]
  %v57 = vld [vmem:[%s0 + $0x128] sm:$0xff]
  %v58 = vld [vmem:[%s0 + $0x130] sm:$0xff]
  %v59 = vld [vmem:[%s0 + $0x138] sm:$0xff]
  %v60 = vld [vmem:[%s0 + $0x140] sm:$0xff]
  %v61 = vld [vmem:[%s0 + $0x148] sm:$0xff]
  %v62 = vld [vmem:[%s0 + $0x150] sm:$0xff]
  %v63 = vld [vmem:[%s0 + $0x158] sm:$0xff]
  %v64 = vld [vmem:[%s0 + $0x160] sm:$0xff]
  %v65 = vld [vmem:[%s0 + $0x168] sm:$0xff]
  %v66 = vld [vmem:[%s0 + $0x170] sm:$0xff]
  %v67 = vld [vmem:[%s0 + $0x178] sm:$0xff]
  %v68 = vld [vmem:[%s0 + $0x180] sm:$0xff]
  %v69 = vld [vmem:[%s0 + $0x188] sm:$0xff]
  %v70 = vld [vmem:[%s0 + $0x190] sm:$0xff]
  %v71 = vld [vmem:[%s0 + $0x198] sm:$0xff]
  %v72 = vld [vmem:[%s0 + $0x1a0] sm:$0xff]
  %v73 = vld [vmem:[%s0 + $0x1a8] sm:$0xff]
  %v74 = vld [vmem:[%s0 + $0x1b0] sm:$0xff]
  %v75 = vld [vmem:[%s0 + $0x1b8] sm:$0xff]
  %v76 = vld [vmem:[%s0 + $0x1c0] sm:$0xff]
  %v77 = vld [vmem:[%s0 + $0x1c8] sm:$0xff]
  %v78 = vld [vmem:[%s0 + $0x1d0] sm:$0xff]
  %v79 = vld [vmem:[%s0 + $0x1d8] sm:$0xff]
  %v80 = vld [vmem:[%s0 + $0x1e0] sm:$0xff]
  %v81 = vld [vmem:[%s0 + $0x1e8] sm:$0xff]
  %v82 = vld [vmem:[%s0 + $0x1f0] sm:$0xff]
  %v83 = vld [vmem:[%s0 + $0x1f8] sm:$0xff]
  %v84 = vld [vmem:[%s0 + $0x200] sm:$0xff]
  %v85 = vld [vmem:[%s0 + $0x208] sm:$0xff]
  %v86 = vld [vmem:[%s0 + $0x210] sm:$0xff]
  %v87 = vld [vmem:[%s0 + $0x218] sm:$0xff]
  %v88 = vld [vmem:[%s0 + $0x220] sm:$0xff]
  %v89 = vld [vmem:[%s0 + $0x228] sm:$0xff]
  %v90 = vld [vmem:[%s0 + $0x230] sm:$0xff]
  %v91 = vld [vmem:[%s0 + $0x238] sm:$0xff]
  %v92 = vld [vmem:[%s0 + $0x240] sm:$0xff]
  %v93 = vld [vmem:[%s0 + $0x248] sm:$0xff]
  %v94 = vld [vmem:[%s0 + $0x250] sm:$0xff]
  %v95 = vld [vmem:[%s0 + $0x258] sm:$0xff]
  %v96 = vld [vmem:[%s0 + $0x260] sm:$0xff]
  %v97 = vld [vmem:[%s0 + $0x268] sm:$0xff]
  %v98 = vld [vmem:[%s0 + $0x270] sm:$0xff]
  %v99 = vld [vmem:[%s0 + $0x278] sm:$0xff]
  %v100 = vld [vmem:[%s0 + $0x280] sm:$0xff]
  %v101 = vld [vmem:[%s0 + $0x288] sm:$0xff]
  %v102 = vld [vmem:[%s0 + $0x290] sm:$0xff]
  %v103 = vld [vmem:[%s0 + $0x298] sm:$0xff]
  %v104 = vld [vmem:[%s0 + $0x2a0] sm:$0xff]
  %v105 = vld [vmem:[%s0 + $0x2a8] sm:$0xff]
  %v106 = vld [vmem:[%s0 + $0x2b0] sm:$0xff]
  %v107 = vld [vmem:[%s0 + $0x2b8] sm:$0xff]
  %v108 = vld [vmem:[%s0 + $0x2c0] sm:$0xff]
  %v109 = vld [vmem:[%s0 + $0x2c8] sm:$0xff]
  %v110 = vld [vmem:[%s0 + $0x2d0] sm:$0xff]
  %v111 = vld [vmem:[%s0 + $0x2d8] sm:$0xff]
  %v112 = vld [vmem:[%s0 + $0x2e0] sm:$0xff]
  %v113 = vld [vmem:[%s0 + $0x2e8] sm:$0xff]
  %v114 = vld [vmem:[%s0 + $0x2f0] sm:$0xff]
  %v115 = vld [vmem:[%s0 + $0x2f8] sm:$0xff]
  %v116 = vld [vmem:[%s0 + $0x300] sm:$0xff]
  %v117 = vld [vmem:[%s0 + $0x308] sm:$0xff]
  %v118 = vld [vmem:[%s0 + $0x310] sm:$0xff]
  %v119 = vld [vmem:[%s0 + $0x318] sm:$0xff]
  %v120 = vld [vmem:[%s0 + $0x320] sm:$0xff]
  %v121 = vld [vmem:[%s0 + $0x328] sm:$0xff]
  %v122 = vld [vmem:[%s0 + $0x330] sm:$0xff]
  %v123 = vld [vmem:[%s0 + $0x338] sm:$0xff]
  %v124 = vld [vmem:[%s0 + $0x340] sm:$0xff]
  %v125 = vld [vmem:[%s0 + $0x348] sm:$0xff]
  %v126 = vld [vmem:[%s0 + $0x350] sm:$0xff]
  %v127 = vld [vmem:[%s0 + $0x358] sm:$0xff]
  %v128 = vld [vmem:[%s0 + $0x360] sm:$0xff]
  %v129 = vld [vmem:[%s0 + $0x368] sm:$0xff]
  %v130 = vld [vmem:[%s0 + $0x370] sm:$0xff]
  %v131 = vld [vmem:[%s0 + $0x378] sm:$0xff]
  %v132 = vld [vmem:[%s0 + $0x380] sm:$0xff]
  %v133 = vld [vmem:[%s0 + $0x388] sm:$0xff]
  %v134 = vld [vmem:[%s0 + $0x390] sm:$0xff]
  %v135 = vld [vmem:[%s0 + $0x398] sm:$0xff]
  %v136 = vld [vmem:[%s0 + $0x3a0] sm:$0xff]
  %v137 = vld [vmem:[%s0 + $0x3a8] sm:$0xff]
  %v138 = vld [vmem:[%s0 + $0x3b0] sm:$0xff]
  %v139 = vld [vmem:[%s0 + $0x3b8] sm:$0xff]
  %v140 = vld [vmem:[%s0 + $0x3c0] sm:$0xff]
  %v141 = vld [vmem:[%s0 + $0x3c8] sm:$0xff]
  %v142 = vld [vmem:[%s0 + $0x3d0] sm:$0xff]
  %v143 = vld [vmem:[%s0 + $0x3d8] sm:$0xff]
  %v144 = vld [vmem:[%s0 + $0x3e0] sm:$0xff]
  %v145 = vld [vmem:[%s0 + $0x3e8] sm:$0xff]
  %v146 = vld [vmem:[%s0 + $0x3f0] sm:$0xff]
  %v147 = vld [vmem:[%s0 + $0x3f8] sm:$0xff]
  %v148 = vld [vmem:[%s1] sm:$0xff]
  %v149 = vld [vmem:[%s1 + $0x8] sm:$0xff]
  %v150 = vld [vmem:[%s1 + $0x10] sm:$0xff]
  %v151 = vld [vmem:[%s1 + $0x18] sm:$0x7]
  %v152 = vld [vmem:[%s2] sm:$0x1]
  %v154 = vlaneseq
  %v155 = vshrl.u32 %v154, 7
  %v156 = vsub.s32 0, %v155
  %v157 = vrot.slane %v152, %v156
  %vm159 = vcmask 220160
  %v161 = vsel %vm159, %v20, 0
  %v164 = vsel %vm159, %v21, 0
  %v167 = vsel %vm159, %v22, 0
  %v170 = vsel %vm159, %v23, 0
  %v173 = vsel %vm159, %v24, 0
  %v176 = vsel %vm159, %v25, 0
  %v179 = vsel %vm159, %v26, 0
  %v182 = vsel %vm159, %v27, 0
  %v185 = vsel %vm159, %v28, 0
  %v188 = vsel %vm159, %v29, 0
  %v191 = vsel %vm159, %v30, 0
  %v194 = vsel %vm159, %v31, 0
  %v197 = vsel %vm159, %v32, 0
  %v200 = vsel %vm159, %v33, 0
  %v203 = vsel %vm159, %v34, 0
  %v206 = vsel %vm159, %v35, 0
  %v209 = vsel %vm159, %v36, 0
  %v212 = vsel %vm159, %v37, 0
  %v215 = vsel %vm159, %v38, 0
  %v218 = vsel %vm159, %v39, 0
  %v221 = vsel %vm159, %v40, 0
  %v224 = vsel %vm159, %v41, 0
  %v227 = vsel %vm159, %v42, 0
  %v230 = vsel %vm159, %v43, 0
  %v233 = vsel %vm159, %v44, 0
  %v236 = vsel %vm159, %v45, 0
  %v239 = vsel %vm159, %v46, 0
  %v242 = vsel %vm159, %v47, 0
  %v245 = vsel %vm159, %v48, 0
  %v248 = vsel %vm159, %v49, 0
  %v251 = vsel %vm159, %v50, 0
  %v254 = vsel %vm159, %v51, 0
  %v257 = vsel %vm159, %v52, 0
  %v260 = vsel %vm159, %v53, 0
  %v263 = vsel %vm159, %v54, 0
  %v266 = vsel %vm159, %v55, 0
  %v269 = vsel %vm159, %v56, 0
  %v272 = vsel %vm159, %v57, 0
  %v275 = vsel %vm159, %v58, 0
  %v278 = vsel %vm159, %v59, 0
  %v281 = vsel %vm159, %v60, 0
  %v284 = vsel %vm159, %v61, 0
  %v287 = vsel %vm159, %v62, 0
  %v290 = vsel %vm159, %v63, 0
  %v293 = vsel %vm159, %v64, 0
  %v296 = vsel %vm159, %v65, 0
  %v299 = vsel %vm159, %v66, 0
  %v302 = vsel %vm159, %v67, 0
  %v305 = vsel %vm159, %v68, 0
  %v308 = vsel %vm159, %v69, 0
  %v311 = vsel %vm159, %v70, 0
  %v314 = vsel %vm159, %v71, 0
  %v317 = vsel %vm159, %v72, 0
  %v320 = vsel %vm159, %v73, 0
  %v323 = vsel %vm159, %v74, 0
  %v326 = vsel %vm159, %v75, 0
  %v329 = vsel %vm159, %v76, 0
  %v332 = vsel %vm159, %v77, 0
  %v335 = vsel %vm159, %v78, 0
  %v338 = vsel %vm159, %v79, 0
  %v341 = vsel %vm159, %v80, 0
  %v344 = vsel %vm159, %v81, 0
  %v347 = vsel %vm159, %v82, 0
  %v350 = vsel %vm159, %v83, 0
  %v353 = vsel %vm159, %v84, 0
  %v356 = vsel %vm159, %v85, 0
  %v359 = vsel %vm159, %v86, 0
  %v362 = vsel %vm159, %v87, 0
  %v365 = vsel %vm159, %v88, 0
  %v368 = vsel %vm159, %v89, 0
  %v371 = vsel %vm159, %v90, 0
  %v374 = vsel %vm159, %v91, 0
  %v377 = vsel %vm159, %v92, 0
  %v380 = vsel %vm159, %v93, 0
  %v383 = vsel %vm159, %v94, 0
  %v386 = vsel %vm159, %v95, 0
  %v389 = vsel %vm159, %v96, 0
  %v392 = vsel %vm159, %v97, 0
  %v395 = vsel %vm159, %v98, 0
  %v398 = vsel %vm159, %v99, 0
  %v401 = vsel %vm159, %v100, 0
  %v404 = vsel %vm159, %v101, 0
  %v407 = vsel %vm159, %v102, 0
  %v410 = vsel %vm159, %v103, 0
  %v413 = vsel %vm159, %v104, 0
  %v416 = vsel %vm159, %v105, 0
  %v419 = vsel %vm159, %v106, 0
  %v422 = vsel %vm159, %v107, 0
  %v425 = vsel %vm159, %v108, 0
  %v428 = vsel %vm159, %v109, 0
  %v431 = vsel %vm159, %v110, 0
  %v434 = vsel %vm159, %v111, 0
  %v437 = vsel %vm159, %v112, 0
  %v440 = vsel %vm159, %v113, 0
  %v443 = vsel %vm159, %v114, 0
  %v446 = vsel %vm159, %v115, 0
  %v449 = vsel %vm159, %v116, 0
  %v452 = vsel %vm159, %v117, 0
  %v455 = vsel %vm159, %v118, 0
  %v458 = vsel %vm159, %v119, 0
  %v461 = vsel %vm159, %v120, 0
  %v464 = vsel %vm159, %v121, 0
  %v467 = vsel %vm159, %v122, 0
  %v470 = vsel %vm159, %v123, 0
  %v473 = vsel %vm159, %v124, 0
  %v476 = vsel %vm159, %v125, 0
  %v479 = vsel %vm159, %v126, 0
  %v482 = vsel %vm159, %v127, 0
  %v485 = vsel %vm159, %v128, 0
  %v488 = vsel %vm159, %v129, 0
  %v491 = vsel %vm159, %v130, 0
  %v494 = vsel %vm159, %v131, 0
  %v497 = vsel %vm159, %v132, 0
  %v500 = vsel %vm159, %v133, 0
  %v503 = vsel %vm159, %v134, 0
  %v506 = vsel %vm159, %v135, 0
  %v509 = vsel %vm159, %v136, 0
  %v512 = vsel %vm159, %v137, 0
  %v515 = vsel %vm159, %v138, 0
  %v518 = vsel %vm159, %v139, 0
  %v521 = vsel %vm159, %v140, 0
  %v524 = vsel %vm159, %v141, 0
  %v527 = vsel %vm159, %v142, 0
  %v530 = vsel %vm159, %v143, 0
  %v533 = vsel %vm159, %v144, 0
  %v536 = vsel %vm159, %v145, 0
  %v539 = vsel %vm159, %v146, 0
  %v542 = vsel %vm159, %v147, 0
  %vm544 = vcmask 1042432
  %v546 = vsel %vm544, %v151, 0
  %548 = vmatprep.subr.mxu0 0.0
  %549 = vmatpush1.msra.mxu0 %v148
  %550 = vmatprep.subr.mxu0 0.0
  %551 = vmatpush1.msra.mxu0 %v149
  %552 = vmatprep.subr.mxu0 0.0
  %553 = vmatpush1.msra.mxu0 %v150
  %554 = vmatprep.subr.mxu0 0.0
  %555 = vmatpush1.msra.mxu0 %v546
  %556 = vmatprep.subr.mxu0 0.0
  %557 = vmatpush1.msra.mxu0 0.0
  %558 = vmatprep.subr.mxu0 0.0
  %559 = vmatpush1.msra.mxu0 0.0
  %560 = vmatprep.subr.mxu0 0.0
  %561 = vmatpush1.msra.mxu0 0.0
  %562 = vmatprep.subr.mxu0 0.0
  %563 = vmatpush1.msra.mxu0 0.0
  %564 = vmatprep.subr.mxu0 0.0
  %565 = vmatpush1.msra.mxu0 0.0
  %566 = vmatprep.subr.mxu0 0.0
  %567 = vmatpush1.msra.mxu0 0.0
  %568 = vmatprep.subr.mxu0 0.0
  %569 = vmatpush1.msra.mxu0 0.0
  %570 = vmatprep.subr.mxu0 0.0
  %571 = vmatpush1.msra.mxu0 0.0
  %572 = vmatprep.subr.mxu0 0.0
  %573 = vmatpush1.msra.mxu0 0.0
  %574 = vmatprep.subr.mxu0 0.0
  %575 = vmatpush1.msra.mxu0 0.0
  %576 = vmatprep.subr.mxu0 0.0
  %577 = vmatpush1.msra.mxu0 0.0
  %578 = vmatprep.subr.mxu0 0.0
  %579 = vmatpush1.msra.mxu0 0.0
  %580 = vmatprep.subr.mxu0 0.0
  %581 = vmatpush1.msra.mxu0 0.0
  %582 = vmatprep.subr.mxu0 0.0
  %583 = vmatpush1.msra.mxu0 0.0
  %584 = vmatprep.subr.mxu0 0.0
  %585 = vmatpush1.msra.mxu0 0.0
  %586 = vmatprep.subr.mxu0 0.0
  %587 = vmatpush1.msra.mxu0 0.0
  %588 = vmatprep.subr.mxu0 0.0
  %589 = vmatpush1.msra.mxu0 0.0
  %590 = vmatprep.subr.mxu0 0.0
  %591 = vmatpush1.msra.mxu0 0.0
  %592 = vmatprep.subr.mxu0 0.0
  %593 = vmatpush1.msra.mxu0 0.0
  %594 = vmatprep.subr.mxu0 0.0
  %595 = vmatpush1.msra.mxu0 0.0
  %596 = vmatprep.subr.mxu0 0.0
  %597 = vmatpush1.msra.mxu0 0.0
  %598 = vmatprep.subr.mxu0 0.0
  %599 = vmatpush1.msra.mxu0 0.0
  %600 = vmatprep.subr.mxu0 0.0
  %601 = vmatpush1.msra.mxu0 0.0
  %602 = vmatprep.subr.mxu0 0.0
  %603 = vmatpush1.msra.mxu0 0.0
  %604 = vmatprep.subr.mxu0 0.0
  %605 = vmatpush1.msra.mxu0 0.0
  %606 = vmatprep.subr.mxu0 0.0
  %607 = vmatpush1.msra.mxu0 0.0
  %608 = vmatprep.subr.mxu0 0.0
  %609 = vmatpush1.msra.mxu0 0.0
  %610 = vmatprep.subr.mxu0 0.0
  %611 = vmatpush1.msra.mxu0 0.0
  %612 = vmatprep.mubr.f32.mxu0 0.0
  %613 = vmatmul.mubr.f32.gmra.mrb[0].mxu0 %v161
  %v614 = vpop.f32.mrb[0].mxu0
  %v615 = vadd.f32 %v157, %v614
  %v616 = vpop.f32.mrb[0].mxu0
  %617 = vmatprep.mubr.f32.mxu0 0.0
  %618 = vmatmul.mubr.f32.gmra.mrb[0].mxu0 %v164
  %v619 = vpop.f32.mrb[0].mxu0
  %v620 = vadd.f32 %v157, %v619
  %v621 = vpop.f32.mrb[0].mxu0
  %622 = vmatprep.mubr.f32.mxu0 0.0
  %623 = vmatmul.mubr.f32.gmra.mrb[0].mxu0 %v167
  %v624 = vpop.f32.mrb[0].mxu0
  %v625 = vadd.f32 %v157, %v624
  %v626 = vpop.f32.mrb[0].mxu0
  %627 = vmatprep.mubr.f32.mxu0 0.0
  %628 = vmatmul.mubr.f32.gmra.mrb[0].mxu0 %v170
  %v629 = vpop.f32.mrb[0].mxu0
  %v630 = vadd.f32 %v157, %v629
  %v631 = vpop.f32.mrb[0].mxu0
  %632 = vmatprep.mubr.f32.mxu0 0.0
  %633 = vmatmul.mubr.f32.gmra.mrb[0].mxu0 %v173
  %v634 = vpop.f32.mrb[0].mxu0
  %v635 = vadd.f32 %v157, %v634
  %v636 = vpop.f32.mrb[0].mxu0
  %637 = vmatprep.mubr.f32.mxu0 0.0
  %638 = vmatmul.mubr.f32.gmra.mrb[0].mxu0 %v176
  %v639 = vpop.f32.mrb[0].mxu0
  %v640 = vadd.f32 %v157, %v639
  %v641 = vpop.f32.mrb[0].mxu0
  %642 = vmatprep.mubr.f32.mxu0 0.0
  %643 = vmatmul.mubr.f32.gmra.mrb[0].mxu0 %v179
  %v644 = vpop.f32.mrb[0].mxu0
  %v645 = vadd.f32 %v157, %v644
  %v646 = vpop.f32.mrb[0].mxu0
  %647 = vmatprep.mubr.f32.mxu0 0.0
  %648 = vmatmul.mubr.f32.gmra.mrb[0].mxu0 %v182
  %v649 = vpop.f32.mrb[0].mxu0
  %v650 = vadd.f32 %v157, %v649
  %v651 = vpop.f32.mrb[0].mxu0
  %652 = vmatprep.mubr.f32.mxu0 0.0
  %653 = vmatmul.mubr.f32.gmra.mrb[0].mxu0 %v185
  %v654 = vpop.f32.mrb[0].mxu0
  %v655 = vadd.f32 %v157, %v654
  %v656 = vpop.f32.mrb[0].mxu0
  %657 = vmatprep.mubr.f32.mxu0 0.0
  %658 = vmatmul.mubr.f32.gmra.mrb[0].mxu0 %v188
  %v659 = vpop.f32.mrb[0].mxu0
  %v660 = vadd.f32 %v157, %v659
  %v661 = vpop.f32.mrb[0].mxu0
  %662 = vmatprep.mubr.f32.mxu0 0.0
  %663 = vmatmul.mubr.f32.gmra.mrb[0].mxu0 %v191
  %v664 = vpop.f32.mrb[0].mxu0
  %v665 = vadd.f32 %v157, %v664
  %v666 = vpop.f32.mrb[0].mxu0
  %667 = vmatprep.mubr.f32.mxu0 0.0
  %668 = vmatmul.mubr.f32.gmra.mrb[0].mxu0 %v194
  %v669 = vpop.f32.mrb[0].mxu0
  %v670 = vadd.f32 %v157, %v669
  %v671 = vpop.f32.mrb[0].mxu0
  %672 = vmatprep.mubr.f32.mxu0 0.0
  %673 = vmatmul.mubr.f32.gmra.mrb[0].mxu0 %v197
  %v674 = vpop.f32.mrb[0].mxu0
  %v675 = vadd.f32 %v157, %v674
  %v676 = vpop.f32.mrb[0].mxu0
  %677 = vmatprep.mubr.f32.mxu0 0.0
  %678 = vmatmul.mubr.f32.gmra.mrb[0].mxu0 %v200
  %v679 = vpop.f32.mrb[0].mxu0
  %v680 = vadd.f32 %v157, %v679
  %v681 = vpop.f32.mrb[0].mxu0
  %682 = vmatprep.mubr.f32.mxu0 0.0
  %683 = vmatmul.mubr.f32.gmra.mrb[0].mxu0 %v203
  %v684 = vpop.f32.mrb[0].mxu0
  %v685 = vadd.f32 %v157, %v684
  %v686 = vpop.f32.mrb[0].mxu0
  %687 = vmatprep.mubr.f32.mxu0 0.0
  %688 = vmatmul.mubr.f32.gmra.mrb[0].mxu0 %v206
  %v689 = vpop.f32.mrb[0].mxu0
  %v690 = vadd.f32 %v157, %v689
  %v691 = vpop.f32.mrb[0].mxu0
  %692 = vmatprep.mubr.f32.mxu0 0.0
  %693 = vmatmul.mubr.f32.gmra.mrb[0].mxu0 %v209
  %v694 = vpop.f32.mrb[0].mxu0
  %v695 = vadd.f32 %v157, %v694
  %v696 = vpop.f32.mrb[0].mxu0
  %697 = vmatprep.mubr.f32.mxu0 0.0
  %698 = vmatmul.mubr.f32.gmra.mrb[0].mxu0 %v212
  %v699 = vpop.f32.mrb[0].mxu0
  %v700 = vadd.f32 %v157, %v699
  %v701 = vpop.f32.mrb[0].mxu0
  %702 = vmatprep.mubr.f32.mxu0 0.0
  %703 = vmatmul.mubr.f32.gmra.mrb[0].mxu0 %v215
  %v704 = vpop.f32.mrb[0].mxu0
  %v705 = vadd.f32 %v157, %v704
  %v706 = vpop.f32.mrb[0].mxu0
  %707 = vmatprep.mubr.f32.mxu0 0.0
  %708 = vmatmul.mubr.f32.gmra.mrb[0].mxu0 %v218
  %v709 = vpop.f32.mrb[0].mxu0
  %v710 = vadd.f32 %v157, %v709
  %v711 = vpop.f32.mrb[0].mxu0
  %712 = vmatprep.mubr.f32.mxu0 0.0
  %713 = vmatmul.mubr.f32.gmra.mrb[0].mxu0 %v221
  %v714 = vpop.f32.mrb[0].mxu0
  %v715 = vadd.f32 %v157, %v714
  %v716 = vpop.f32.mrb[0].mxu0
  %717 = vmatprep.mubr.f32.mxu0 0.0
  %718 = vmatmul.mubr.f32.gmra.mrb[0].mxu0 %v224
  %v719 = vpop.f32.mrb[0].mxu0
  %v720 = vadd.f32 %v157, %v719
  %v721 = vpop.f32.mrb[0].mxu0
  %722 = vmatprep.mubr.f32.mxu0 0.0
  %723 = vmatmul.mubr.f32.gmra.mrb[0].mxu0 %v227
  %v724 = vpop.f32.mrb[0].mxu0
  %v725 = vadd.f32 %v157, %v724
  %v726 = vpop.f32.mrb[0].mxu0
  %727 = vmatprep.mubr.f32.mxu0 0.0
  %728 = vmatmul.mubr.f32.gmra.mrb[0].mxu0 %v230
  %v729 = vpop.f32.mrb[0].mxu0
  %v730 = vadd.f32 %v157, %v729
  %v731 = vpop.f32.mrb[0].mxu0
  %732 = vmatprep.mubr.f32.mxu0 0.0
  %733 = vmatmul.mubr.f32.gmra.mrb[0].mxu0 %v233
  %v734 = vpop.f32.mrb[0].mxu0
  %v735 = vadd.f32 %v157, %v734
  %v736 = vpop.f32.mrb[0].mxu0
  %737 = vmatprep.mubr.f32.mxu0 0.0
  %738 = vmatmul.mubr.f32.gmra.mrb[0].mxu0 %v236
  %v739 = vpop.f32.mrb[0].mxu0
  %v740 = vadd.f32 %v157, %v739
  %v741 = vpop.f32.mrb[0].mxu0
  %742 = vmatprep.mubr.f32.mxu0 0.0
  %743 = vmatmul.mubr.f32.gmra.mrb[0].mxu0 %v239
  %v744 = vpop.f32.mrb[0].mxu0
  %v745 = vadd.f32 %v157, %v744
  %v746 = vpop.f32.mrb[0].mxu0
  %747 = vmatprep.mubr.f32.mxu0 0.0
  %748 = vmatmul.mubr.f32.gmra.mrb[0].mxu0 %v242
  %v749 = vpop.f32.mrb[0].mxu0
  %v750 = vadd.f32 %v157, %v749
  %v751 = vpop.f32.mrb[0].mxu0
  %752 = vmatprep.mubr.f32.mxu0 0.0
  %753 = vmatmul.mubr.f32.gmra.mrb[0].mxu0 %v245
  %v754 = vpop.f32.mrb[0].mxu0
  %v755 = vadd.f32 %v157, %v754
  %v756 = vpop.f32.mrb[0].mxu0
  %757 = vmatprep.mubr.f32.mxu0 0.0
  %758 = vmatmul.mubr.f32.gmra.mrb[0].mxu0 %v248
  %v759 = vpop.f32.mrb[0].mxu0
  %v760 = vadd.f32 %v157, %v759
  %v761 = vpop.f32.mrb[0].mxu0
  %762 = vmatprep.mubr.f32.mxu0 0.0
  %763 = vmatmul.mubr.f32.gmra.mrb[0].mxu0 %v251
  %v764 = vpop.f32.mrb[0].mxu0
  %v765 = vadd.f32 %v157, %v764
  %v766 = vpop.f32.mrb[0].mxu0
  %767 = vmatprep.mubr.f32.mxu0 0.0
  %768 = vmatmul.mubr.f32.gmra.mrb[0].mxu0 %v254
  %v769 = vpop.f32.mrb[0].mxu0
  %v770 = vadd.f32 %v157, %v769
  %v771 = vpop.f32.mrb[0].mxu0
  %772 = vmatprep.mubr.f32.mxu0 0.0
  %773 = vmatmul.mubr.f32.gmra.mrb[0].mxu0 %v257
  %v774 = vpop.f32.mrb[0].mxu0
  %v775 = vadd.f32 %v157, %v774
  %v776 = vpop.f32.mrb[0].mxu0
  %777 = vmatprep.mubr.f32.mxu0 0.0
  %778 = vmatmul.mubr.f32.gmra.mrb[0].mxu0 %v260
  %v779 = vpop.f32.mrb[0].mxu0
  %v780 = vadd.f32 %v157, %v779
  %v781 = vpop.f32.mrb[0].mxu0
  %782 = vmatprep.mubr.f32.mxu0 0.0
  %783 = vmatmul.mubr.f32.gmra.mrb[0].mxu0 %v263
  %v784 = vpop.f32.mrb[0].mxu0
  %v785 = vadd.f32 %v157, %v784
  %v786 = vpop.f32.mrb[0].mxu0
  %787 = vmatprep.mubr.f32.mxu0 0.0
  %788 = vmatmul.mubr.f32.gmra.mrb[0].mxu0 %v266
  %v789 = vpop.f32.mrb[0].mxu0
  %v790 = vadd.f32 %v157, %v789
  %v791 = vpop.f32.mrb[0].mxu0
  %792 = vmatprep.mubr.f32.mxu0 0.0
  %793 = vmatmul.mubr.f32.gmra.mrb[0].mxu0 %v269
  %v794 = vpop.f32.mrb[0].mxu0
  %v795 = vadd.f32 %v157, %v794
  %v796 = vpop.f32.mrb[0].mxu0
  %797 = vmatprep.mubr.f32.mxu0 0.0
  %798 = vmatmul.mubr.f32.gmra.mrb[0].mxu0 %v272
  %v799 = vpop.f32.mrb[0].mxu0
  %v800 = vadd.f32 %v157, %v799
  %v801 = vpop.f32.mrb[0].mxu0
  %802 = vmatprep.mubr.f32.mxu0 0.0
  %803 = vmatmul.mubr.f32.gmra.mrb[0].mxu0 %v275
  %v804 = vpop.f32.mrb[0].mxu0
  %v805 = vadd.f32 %v157, %v804
  %v806 = vpop.f32.mrb[0].mxu0
  %807 = vmatprep.mubr.f32.mxu0 0.0
  %808 = vmatmul.mubr.f32.gmra.mrb[0].mxu0 %v278
  %v809 = vpop.f32.mrb[0].mxu0
  %v810 = vadd.f32 %v157, %v809
  %v811 = vpop.f32.mrb[0].mxu0
  %812 = vmatprep.mubr.f32.mxu0 0.0
  %813 = vmatmul.mubr.f32.gmra.mrb[0].mxu0 %v281
  %v814 = vpop.f32.mrb[0].mxu0
  %v815 = vadd.f32 %v157, %v814
  %v816 = vpop.f32.mrb[0].mxu0
  %817 = vmatprep.mubr.f32.mxu0 0.0
  %818 = vmatmul.mubr.f32.gmra.mrb[0].mxu0 %v284
  %v819 = vpop.f32.mrb[0].mxu0
  %v820 = vadd.f32 %v157, %v819
  %v821 = vpop.f32.mrb[0].mxu0
  %822 = vmatprep.mubr.f32.mxu0 0.0
  %823 = vmatmul.mubr.f32.gmra.mrb[0].mxu0 %v287
  %v824 = vpop.f32.mrb[0].mxu0
  %v825 = vadd.f32 %v157, %v824
  %v826 = vpop.f32.mrb[0].mxu0
  %827 = vmatprep.mubr.f32.mxu0 0.0
  %828 = vmatmul.mubr.f32.gmra.mrb[0].mxu0 %v290
  %v829 = vpop.f32.mrb[0].mxu0
  %v830 = vadd.f32 %v157, %v829
  %v831 = vpop.f32.mrb[0].mxu0
  %832 = vmatprep.mubr.f32.mxu0 0.0
  %833 = vmatmul.mubr.f32.gmra.mrb[0].mxu0 %v293
  %v834 = vpop.f32.mrb[0].mxu0
  %v835 = vadd.f32 %v157, %v834
  %v836 = vpop.f32.mrb[0].mxu0
  %837 = vmatprep.mubr.f32.mxu0 0.0
  %838 = vmatmul.mubr.f32.gmra.mrb[0].mxu0 %v296
  %v839 = vpop.f32.mrb[0].mxu0
  %v840 = vadd.f32 %v157, %v839
  %v841 = vpop.f32.mrb[0].mxu0
  %842 = vmatprep.mubr.f32.mxu0 0.0
  %843 = vmatmul.mubr.f32.gmra.mrb[0].mxu0 %v299
  %v844 = vpop.f32.mrb[0].mxu0
  %v845 = vadd.f32 %v157, %v844
  %v846 = vpop.f32.mrb[0].mxu0
  %847 = vmatprep.mubr.f32.mxu0 0.0
  %848 = vmatmul.mubr.f32.gmra.mrb[0].mxu0 %v302
  %v849 = vpop.f32.mrb[0].mxu0
  %v850 = vadd.f32 %v157, %v849
  %v851 = vpop.f32.mrb[0].mxu0
  %852 = vmatprep.mubr.f32.mxu0 0.0
  %853 = vmatmul.mubr.f32.gmra.mrb[0].mxu0 %v305
  %v854 = vpop.f32.mrb[0].mxu0
  %v855 = vadd.f32 %v157, %v854
  %v856 = vpop.f32.mrb[0].mxu0
  %857 = vmatprep.mubr.f32.mxu0 0.0
  %858 = vmatmul.mubr.f32.gmra.mrb[0].mxu0 %v308
  %v859 = vpop.f32.mrb[0].mxu0
  %v860 = vadd.f32 %v157, %v859
  %v861 = vpop.f32.mrb[0].mxu0
  %862 = vmatprep.mubr.f32.mxu0 0.0
  %863 = vmatmul.mubr.f32.gmra.mrb[0].mxu0 %v311
  %v864 = vpop.f32.mrb[0].mxu0
  %v865 = vadd.f32 %v157, %v864
  %v866 = vpop.f32.mrb[0].mxu0
  %867 = vmatprep.mubr.f32.mxu0 0.0
  %868 = vmatmul.mubr.f32.gmra.mrb[0].mxu0 %v314
  %v869 = vpop.f32.mrb[0].mxu0
  %v870 = vadd.f32 %v157, %v869
  %v871 = vpop.f32.mrb[0].mxu0
  %872 = vmatprep.mubr.f32.mxu0 0.0
  %873 = vmatmul.mubr.f32.gmra.mrb[0].mxu0 %v317
  %v874 = vpop.f32.mrb[0].mxu0
  %v875 = vadd.f32 %v157, %v874
  %v876 = vpop.f32.mrb[0].mxu0
  %877 = vmatprep.mubr.f32.mxu0 0.0
  %878 = vmatmul.mubr.f32.gmra.mrb[0].mxu0 %v320
  %v879 = vpop.f32.mrb[0].mxu0
  %v880 = vadd.f32 %v157, %v879
  %v881 = vpop.f32.mrb[0].mxu0
  %882 = vmatprep.mubr.f32.mxu0 0.0
  %883 = vmatmul.mubr.f32.gmra.mrb[0].mxu0 %v323
  %v884 = vpop.f32.mrb[0].mxu0
  %v885 = vadd.f32 %v157, %v884
  %v886 = vpop.f32.mrb[0].mxu0
  %887 = vmatprep.mubr.f32.mxu0 0.0
  %888 = vmatmul.mubr.f32.gmra.mrb[0].mxu0 %v326
  %v889 = vpop.f32.mrb[0].mxu0
  %v890 = vadd.f32 %v157, %v889
  %v891 = vpop.f32.mrb[0].mxu0
  %892 = vmatprep.mubr.f32.mxu0 0.0
  %893 = vmatmul.mubr.f32.gmra.mrb[0].mxu0 %v329
  %v894 = vpop.f32.mrb[0].mxu0
  %v895 = vadd.f32 %v157, %v894
  %v896 = vpop.f32.mrb[0].mxu0
  %897 = vmatprep.mubr.f32.mxu0 0.0
  %898 = vmatmul.mubr.f32.gmra.mrb[0].mxu0 %v332
  %v899 = vpop.f32.mrb[0].mxu0
  %v900 = vadd.f32 %v157, %v899
  %v901 = vpop.f32.mrb[0].mxu0
  %902 = vmatprep.mubr.f32.mxu0 0.0
  %903 = vmatmul.mubr.f32.gmra.mrb[0].mxu0 %v335
  %v904 = vpop.f32.mrb[0].mxu0
  %v905 = vadd.f32 %v157, %v904
  %v906 = vpop.f32.mrb[0].mxu0
  %907 = vmatprep.mubr.f32.mxu0 0.0
  %908 = vmatmul.mubr.f32.gmra.mrb[0].mxu0 %v338
  %v909 = vpop.f32.mrb[0].mxu0
  %v910 = vadd.f32 %v157, %v909
  %v911 = vpop.f32.mrb[0].mxu0
  %912 = vmatprep.mubr.f32.mxu0 0.0
  %913 = vmatmul.mubr.f32.gmra.mrb[0].mxu0 %v341
  %v914 = vpop.f32.mrb[0].mxu0
  %v915 = vadd.f32 %v157, %v914
  %v916 = vpop.f32.mrb[0].mxu0
  %917 = vmatprep.mubr.f32.mxu0 0.0
  %918 = vmatmul.mubr.f32.gmra.mrb[0].mxu0 %v344
  %v919 = vpop.f32.mrb[0].mxu0
  %v920 = vadd.f32 %v157, %v919
  %v921 = vpop.f32.mrb[0].mxu0
  %922 = vmatprep.mubr.f32.mxu0 0.0
  %923 = vmatmul.mubr.f32.gmra.mrb[0].mxu0 %v347
  %v924 = vpop.f32.mrb[0].mxu0
  %v925 = vadd.f32 %v157, %v924
  %v926 = vpop.f32.mrb[0].mxu0
  %927 = vmatprep.mubr.f32.mxu0 0.0
  %928 = vmatmul.mubr.f32.gmra.mrb[0].mxu0 %v350
  %v929 = vpop.f32.mrb[0].mxu0
  %v930 = vadd.f32 %v157, %v929
  %v931 = vpop.f32.mrb[0].mxu0
  %932 = vmatprep.mubr.f32.mxu0 0.0
  %933 = vmatmul.mubr.f32.gmra.mrb[0].mxu0 %v353
  %v934 = vpop.f32.mrb[0].mxu0
  %v935 = vadd.f32 %v157, %v934
  %v936 = vpop.f32.mrb[0].mxu0
  %937 = vmatprep.mubr.f32.mxu0 0.0
  %938 = vmatmul.mubr.f32.gmra.mrb[0].mxu0 %v356
  %v939 = vpop.f32.mrb[0].mxu0
  %v940 = vadd.f32 %v157, %v939
  %v941 = vpop.f32.mrb[0].mxu0
  %942 = vmatprep.mubr.f32.mxu0 0.0
  %943 = vmatmul.mubr.f32.gmra.mrb[0].mxu0 %v359
  %v944 = vpop.f32.mrb[0].mxu0
  %v945 = vadd.f32 %v157, %v944
  %v946 = vpop.f32.mrb[0].mxu0
  %947 = vmatprep.mubr.f32.mxu0 0.0
  %948 = vmatmul.mubr.f32.gmra.mrb[0].mxu0 %v362
  %v949 = vpop.f32.mrb[0].mxu0
  %v950 = vadd.f32 %v157, %v949
  %v951 = vpop.f32.mrb[0].mxu0
  %952 = vmatprep.mubr.f32.mxu0 0.0
  %953 = vmatmul.mubr.f32.gmra.mrb[0].mxu0 %v365
  %v954 = vpop.f32.mrb[0].mxu0
  %v955 = vadd.f32 %v157, %v954
  %v956 = vpop.f32.mrb[0].mxu0
  %957 = vmatprep.mubr.f32.mxu0 0.0
  %958 = vmatmul.mubr.f32.gmra.mrb[0].mxu0 %v368
  %v959 = vpop.f32.mrb[0].mxu0
  %v960 = vadd.f32 %v157, %v959
  %v961 = vpop.f32.mrb[0].mxu0
  %962 = vmatprep.mubr.f32.mxu0 0.0
  %963 = vmatmul.mubr.f32.gmra.mrb[0].mxu0 %v371
  %v964 = vpop.f32.mrb[0].mxu0
  %v965 = vadd.f32 %v157, %v964
  %v966 = vpop.f32.mrb[0].mxu0
  %967 = vmatprep.mubr.f32.mxu0 0.0
  %968 = vmatmul.mubr.f32.gmra.mrb[0].mxu0 %v374
  %v969 = vpop.f32.mrb[0].mxu0
  %v970 = vadd.f32 %v157, %v969
  %v971 = vpop.f32.mrb[0].mxu0
  %972 = vmatprep.mubr.f32.mxu0 0.0
  %973 = vmatmul.mubr.f32.gmra.mrb[0].mxu0 %v377
  %v974 = vpop.f32.mrb[0].mxu0
  %v975 = vadd.f32 %v157, %v974
  %v976 = vpop.f32.mrb[0].mxu0
  %977 = vmatprep.mubr.f32.mxu0 0.0
  %978 = vmatmul.mubr.f32.gmra.mrb[0].mxu0 %v380
  %v979 = vpop.f32.mrb[0].mxu0
  %v980 = vadd.f32 %v157, %v979
  %v981 = vpop.f32.mrb[0].mxu0
  %982 = vmatprep.mubr.f32.mxu0 0.0
  %983 = vmatmul.mubr.f32.gmra.mrb[0].mxu0 %v383
  %v984 = vpop.f32.mrb[0].mxu0
  %v985 = vadd.f32 %v157, %v984
  %v986 = vpop.f32.mrb[0].mxu0
  %987 = vmatprep.mubr.f32.mxu0 0.0
  %988 = vmatmul.mubr.f32.gmra.mrb[0].mxu0 %v386
  %v989 = vpop.f32.mrb[0].mxu0
  %v990 = vadd.f32 %v157, %v989
  %v991 = vpop.f32.mrb[0].mxu0
  %992 = vmatprep.mubr.f32.mxu0 0.0
  %993 = vmatmul.mubr.f32.gmra.mrb[0].mxu0 %v389
  %v994 = vpop.f32.mrb[0].mxu0
  %v995 = vadd.f32 %v157, %v994
  %v996 = vpop.f32.mrb[0].mxu0
  %997 = vmatprep.mubr.f32.mxu0 0.0
  %998 = vmatmul.mubr.f32.gmra.mrb[0].mxu0 %v392
  %v999 = vpop.f32.mrb[0].mxu0
  %v1000 = vadd.f32 %v157, %v999
  %v1001 = vpop.f32.mrb[0].mxu0
  %1002 = vmatprep.mubr.f32.mxu0 0.0
  %1003 = vmatmul.mubr.f32.gmra.mrb[0].mxu0 %v395
  %v1004 = vpop.f32.mrb[0].mxu0
  %v1005 = vadd.f32 %v157, %v1004
  %v1006 = vpop.f32.mrb[0].mxu0
  %1007 = vmatprep.mubr.f32.mxu0 0.0
  %1008 = vmatmul.mubr.f32.gmra.mrb[0].mxu0 %v398
  %v1009 = vpop.f32.mrb[0].mxu0
  %v1010 = vadd.f32 %v157, %v1009
  %v1011 = vpop.f32.mrb[0].mxu0
  %1012 = vmatprep.mubr.f32.mxu0 0.0
  %1013 = vmatmul.mubr.f32.gmra.mrb[0].mxu0 %v401
  %v1014 = vpop.f32.mrb[0].mxu0
  %v1015 = vadd.f32 %v157, %v1014
  %v1016 = vpop.f32.mrb[0].mxu0
  %1017 = vmatprep.mubr.f32.mxu0 0.0
  %1018 = vmatmul.mubr.f32.gmra.mrb[0].mxu0 %v404
  %v1019 = vpop.f32.mrb[0].mxu0
  %v1020 = vadd.f32 %v157, %v1019
  %v1021 = vpop.f32.mrb[0].mxu0
  %1022 = vmatprep.mubr.f32.mxu0 0.0
  %1023 = vmatmul.mubr.f32.gmra.mrb[0].mxu0 %v407
  %v1024 = vpop.f32.mrb[0].mxu0
  %v1025 = vadd.f32 %v157, %v1024
  %v1026 = vpop.f32.mrb[0].mxu0
  %1027 = vmatprep.mubr.f32.mxu0 0.0
  %1028 = vmatmul.mubr.f32.gmra.mrb[0].mxu0 %v410
  %v1029 = vpop.f32.mrb[0].mxu0
  %v1030 = vadd.f32 %v157, %v1029
  %v1031 = vpop.f32.mrb[0].mxu0
  %1032 = vmatprep.mubr.f32.mxu0 0.0
  %1033 = vmatmul.mubr.f32.gmra.mrb[0].mxu0 %v413
  %v1034 = vpop.f32.mrb[0].mxu0
  %v1035 = vadd.f32 %v157, %v1034
  %v1036 = vpop.f32.mrb[0].mxu0
  %1037 = vmatprep.mubr.f32.mxu0 0.0
  %1038 = vmatmul.mubr.f32.gmra.mrb[0].mxu0 %v416
  %v1039 = vpop.f32.mrb[0].mxu0
  %v1040 = vadd.f32 %v157, %v1039
  %v1041 = vpop.f32.mrb[0].mxu0
  %1042 = vmatprep.mubr.f32.mxu0 0.0
  %1043 = vmatmul.mubr.f32.gmra.mrb[0].mxu0 %v419
  %v1044 = vpop.f32.mrb[0].mxu0
  %v1045 = vadd.f32 %v157, %v1044
  %v1046 = vpop.f32.mrb[0].mxu0
  %1047 = vmatprep.mubr.f32.mxu0 0.0
  %1048 = vmatmul.mubr.f32.gmra.mrb[0].mxu0 %v422
  %v1049 = vpop.f32.mrb[0].mxu0
  %v1050 = vadd.f32 %v157, %v1049
  %v1051 = vpop.f32.mrb[0].mxu0
  %1052 = vmatprep.mubr.f32.mxu0 0.0
  %1053 = vmatmul.mubr.f32.gmra.mrb[0].mxu0 %v425
  %v1054 = vpop.f32.mrb[0].mxu0
  %v1055 = vadd.f32 %v157, %v1054
  %v1056 = vpop.f32.mrb[0].mxu0
  %1057 = vmatprep.mubr.f32.mxu0 0.0
  %1058 = vmatmul.mubr.f32.gmra.mrb[0].mxu0 %v428
  %v1059 = vpop.f32.mrb[0].mxu0
  %v1060 = vadd.f32 %v157, %v1059
  %v1061 = vpop.f32.mrb[0].mxu0
  %1062 = vmatprep.mubr.f32.mxu0 0.0
  %1063 = vmatmul.mubr.f32.gmra.mrb[0].mxu0 %v431
  %v1064 = vpop.f32.mrb[0].mxu0
  %v1065 = vadd.f32 %v157, %v1064
  %v1066 = vpop.f32.mrb[0].mxu0
  %1067 = vmatprep.mubr.f32.mxu0 0.0
  %1068 = vmatmul.mubr.f32.gmra.mrb[0].mxu0 %v434
  %v1069 = vpop.f32.mrb[0].mxu0
  %v1070 = vadd.f32 %v157, %v1069
  %v1071 = vpop.f32.mrb[0].mxu0
  %1072 = vmatprep.mubr.f32.mxu0 0.0
  %1073 = vmatmul.mubr.f32.gmra.mrb[0].mxu0 %v437
  %v1074 = vpop.f32.mrb[0].mxu0
  %v1075 = vadd.f32 %v157, %v1074
  %v1076 = vpop.f32.mrb[0].mxu0
  %1077 = vmatprep.mubr.f32.mxu0 0.0
  %1078 = vmatmul.mubr.f32.gmra.mrb[0].mxu0 %v440
  %v1079 = vpop.f32.mrb[0].mxu0
  %v1080 = vadd.f32 %v157, %v1079
  %v1081 = vpop.f32.mrb[0].mxu0
  %1082 = vmatprep.mubr.f32.mxu0 0.0
  %1083 = vmatmul.mubr.f32.gmra.mrb[0].mxu0 %v443
  %v1084 = vpop.f32.mrb[0].mxu0
  %v1085 = vadd.f32 %v157, %v1084
  %v1086 = vpop.f32.mrb[0].mxu0
  %1087 = vmatprep.mubr.f32.mxu0 0.0
  %1088 = vmatmul.mubr.f32.gmra.mrb[0].mxu0 %v446
  %v1089 = vpop.f32.mrb[0].mxu0
  %v1090 = vadd.f32 %v157, %v1089
  %v1091 = vpop.f32.mrb[0].mxu0
  %1092 = vmatprep.mubr.f32.mxu0 0.0
  %1093 = vmatmul.mubr.f32.gmra.mrb[0].mxu0 %v449
  %v1094 = vpop.f32.mrb[0].mxu0
  %v1095 = vadd.f32 %v157, %v1094
  %v1096 = vpop.f32.mrb[0].mxu0
  %1097 = vmatprep.mubr.f32.mxu0 0.0
  %1098 = vmatmul.mubr.f32.gmra.mrb[0].mxu0 %v452
  %v1099 = vpop.f32.mrb[0].mxu0
  %v1100 = vadd.f32 %v157, %v1099
  %v1101 = vpop.f32.mrb[0].mxu0
  %1102 = vmatprep.mubr.f32.mxu0 0.0
  %1103 = vmatmul.mubr.f32.gmra.mrb[0].mxu0 %v455
  %v1104 = vpop.f32.mrb[0].mxu0
  %v1105 = vadd.f32 %v157, %v1104
  %v1106 = vpop.f32.mrb[0].mxu0
  %1107 = vmatprep.mubr.f32.mxu0 0.0
  %1108 = vmatmul.mubr.f32.gmra.mrb[0].mxu0 %v458
  %v1109 = vpop.f32.mrb[0].mxu0
  %v1110 = vadd.f32 %v157, %v1109
  %v1111 = vpop.f32.mrb[0].mxu0
  %1112 = vmatprep.mubr.f32.mxu0 0.0
  %1113 = vmatmul.mubr.f32.gmra.mrb[0].mxu0 %v461
  %v1114 = vpop.f32.mrb[0].mxu0
  %v1115 = vadd.f32 %v157, %v1114
  %v1116 = vpop.f32.mrb[0].mxu0
  %1117 = vmatprep.mubr.f32.mxu0 0.0
  %1118 = vmatmul.mubr.f32.gmra.mrb[0].mxu0 %v464
  %v1119 = vpop.f32.mrb[0].mxu0
  %v1120 = vadd.f32 %v157, %v1119
  %v1121 = vpop.f32.mrb[0].mxu0
  %1122 = vmatprep.mubr.f32.mxu0 0.0
  %1123 = vmatmul.mubr.f32.gmra.mrb[0].mxu0 %v467
  %v1124 = vpop.f32.mrb[0].mxu0
  %v1125 = vadd.f32 %v157, %v1124
  %v1126 = vpop.f32.mrb[0].mxu0
  %1127 = vmatprep.mubr.f32.mxu0 0.0
  %1128 = vmatmul.mubr.f32.gmra.mrb[0].mxu0 %v470
  %v1129 = vpop.f32.mrb[0].mxu0
  %v1130 = vadd.f32 %v157, %v1129
  %v1131 = vpop.f32.mrb[0].mxu0
  %1132 = vmatprep.mubr.f32.mxu0 0.0
  %1133 = vmatmul.mubr.f32.gmra.mrb[0].mxu0 %v473
  %v1134 = vpop.f32.mrb[0].mxu0
  %v1135 = vadd.f32 %v157, %v1134
  %v1136 = vpop.f32.mrb[0].mxu0
  %1137 = vmatprep.mubr.f32.mxu0 0.0
  %1138 = vmatmul.mubr.f32.gmra.mrb[0].mxu0 %v476
  %v1139 = vpop.f32.mrb[0].mxu0
  %v1140 = vadd.f32 %v157, %v1139
  %v1141 = vpop.f32.mrb[0].mxu0
  %1142 = vmatprep.mubr.f32.mxu0 0.0
  %1143 = vmatmul.mubr.f32.gmra.mrb[0].mxu0 %v479
  %v1144 = vpop.f32.mrb[0].mxu0
  %v1145 = vadd.f32 %v157, %v1144
  %v1146 = vpop.f32.mrb[0].mxu0
  %1147 = vmatprep.mubr.f32.mxu0 0.0
  %1148 = vmatmul.mubr.f32.gmra.mrb[0].mxu0 %v482
  %v1149 = vpop.f32.mrb[0].mxu0
  %v1150 = vadd.f32 %v157, %v1149
  %v1151 = vpop.f32.mrb[0].mxu0
  %1152 = vmatprep.mubr.f32.mxu0 0.0
  %1153 = vmatmul.mubr.f32.gmra.mrb[0].mxu0 %v485
  %v1154 = vpop.f32.mrb[0].mxu0
  %v1155 = vadd.f32 %v157, %v1154
  %v1156 = vpop.f32.mrb[0].mxu0
  %1157 = vmatprep.mubr.f32.mxu0 0.0
  %1158 = vmatmul.mubr.f32.gmra.mrb[0].mxu0 %v488
  %v1159 = vpop.f32.mrb[0].mxu0
  %v1160 = vadd.f32 %v157, %v1159
  %v1161 = vpop.f32.mrb[0].mxu0
  %1162 = vmatprep.mubr.f32.mxu0 0.0
  %1163 = vmatmul.mubr.f32.gmra.mrb[0].mxu0 %v491
  %v1164 = vpop.f32.mrb[0].mxu0
  %v1165 = vadd.f32 %v157, %v1164
  %v1166 = vpop.f32.mrb[0].mxu0
  %1167 = vmatprep.mubr.f32.mxu0 0.0
  %1168 = vmatmul.mubr.f32.gmra.mrb[0].mxu0 %v494
  %v1169 = vpop.f32.mrb[0].mxu0
  %v1170 = vadd.f32 %v157, %v1169
  %v1171 = vpop.f32.mrb[0].mxu0
  %1172 = vmatprep.mubr.f32.mxu0 0.0
  %1173 = vmatmul.mubr.f32.gmra.mrb[0].mxu0 %v497
  %v1174 = vpop.f32.mrb[0].mxu0
  %v1175 = vadd.f32 %v157, %v1174
  %v1176 = vpop.f32.mrb[0].mxu0
  %1177 = vmatprep.mubr.f32.mxu0 0.0
  %1178 = vmatmul.mubr.f32.gmra.mrb[0].mxu0 %v500
  %v1179 = vpop.f32.mrb[0].mxu0
  %v1180 = vadd.f32 %v157, %v1179
  %v1181 = vpop.f32.mrb[0].mxu0
  %1182 = vmatprep.mubr.f32.mxu0 0.0
  %1183 = vmatmul.mubr.f32.gmra.mrb[0].mxu0 %v503
  %v1184 = vpop.f32.mrb[0].mxu0
  %v1185 = vadd.f32 %v157, %v1184
  %v1186 = vpop.f32.mrb[0].mxu0
  %1187 = vmatprep.mubr.f32.mxu0 0.0
  %1188 = vmatmul.mubr.f32.gmra.mrb[0].mxu0 %v506
  %v1189 = vpop.f32.mrb[0].mxu0
  %v1190 = vadd.f32 %v157, %v1189
  %v1191 = vpop.f32.mrb[0].mxu0
  %1192 = vmatprep.mubr.f32.mxu0 0.0
  %1193 = vmatmul.mubr.f32.gmra.mrb[0].mxu0 %v509
  %v1194 = vpop.f32.mrb[0].mxu0
  %v1195 = vadd.f32 %v157, %v1194
  %v1196 = vpop.f32.mrb[0].mxu0
  %1197 = vmatprep.mubr.f32.mxu0 0.0
  %1198 = vmatmul.mubr.f32.gmra.mrb[0].mxu0 %v512
  %v1199 = vpop.f32.mrb[0].mxu0
  %v1200 = vadd.f32 %v157, %v1199
  %v1201 = vpop.f32.mrb[0].mxu0
  %1202 = vmatprep.mubr.f32.mxu0 0.0
  %1203 = vmatmul.mubr.f32.gmra.mrb[0].mxu0 %v515
  %v1204 = vpop.f32.mrb[0].mxu0
  %v1205 = vadd.f32 %v157, %v1204
  %v1206 = vpop.f32.mrb[0].mxu0
  %1207 = vmatprep.mubr.f32.mxu0 0.0
  %1208 = vmatmul.mubr.f32.gmra.mrb[0].mxu0 %v518
  %v1209 = vpop.f32.mrb[0].mxu0
  %v1210 = vadd.f32 %v157, %v1209
  %v1211 = vpop.f32.mrb[0].mxu0
  %1212 = vmatprep.mubr.f32.mxu0 0.0
  %1213 = vmatmul.mubr.f32.gmra.mrb[0].mxu0 %v521
  %v1214 = vpop.f32.mrb[0].mxu0
  %v1215 = vadd.f32 %v157, %v1214
  %v1216 = vpop.f32.mrb[0].mxu0
  %1217 = vmatprep.mubr.f32.mxu0 0.0
  %1218 = vmatmul.mubr.f32.gmra.mrb[0].mxu0 %v524
  %v1219 = vpop.f32.mrb[0].mxu0
  %v1220 = vadd.f32 %v157, %v1219
  %v1221 = vpop.f32.mrb[0].mxu0
  %1222 = vmatprep.mubr.f32.mxu0 0.0
  %1223 = vmatmul.mubr.f32.gmra.mrb[0].mxu0 %v527
  %v1224 = vpop.f32.mrb[0].mxu0
  %v1225 = vadd.f32 %v157, %v1224
  %v1226 = vpop.f32.mrb[0].mxu0
  %1227 = vmatprep.mubr.f32.mxu0 0.0
  %1228 = vmatmul.mubr.f32.gmra.mrb[0].mxu0 %v530
  %v1229 = vpop.f32.mrb[0].mxu0
  %v1230 = vadd.f32 %v157, %v1229
  %v1231 = vpop.f32.mrb[0].mxu0
  %1232 = vmatprep.mubr.f32.mxu0 0.0
  %1233 = vmatmul.mubr.f32.gmra.mrb[0].mxu0 %v533
  %v1234 = vpop.f32.mrb[0].mxu0
  %v1235 = vadd.f32 %v157, %v1234
  %v1236 = vpop.f32.mrb[0].mxu0
  %1237 = vmatprep.mubr.f32.mxu0 0.0
  %1238 = vmatmul.mubr.f32.gmra.mrb[0].mxu0 %v536
  %v1239 = vpop.f32.mrb[0].mxu0
  %v1240 = vadd.f32 %v157, %v1239
  %v1241 = vpop.f32.mrb[0].mxu0
  %1242 = vmatprep.mubr.f32.mxu0 0.0
  %1243 = vmatmul.mubr.f32.gmra.mrb[0].mxu0 %v539
  %v1244 = vpop.f32.mrb[0].mxu0
  %v1245 = vadd.f32 %v157, %v1244
  %v1246 = vpop.f32.mrb[0].mxu0
  %1247 = vmatprep.mubr.f32.mxu0 0.0
  %1248 = vmatmul.mubr.f32.gmra.mrb[0].mxu0 %v542
  %v1249 = vpop.f32.mrb[0].mxu0
  %v1250 = vadd.f32 %v157, %v1249
  %v1251 = vpop.f32.mrb[0].mxu0
  %1252 = vdwg.mxu0
  %v1253 = vmax.f32 %v615, 0.0
  %v1254 = vmax.f32 %v620, 0.0
  %v1255 = vmax.f32 %v625, 0.0
  %v1256 = vmax.f32 %v630, 0.0
  %v1257 = vmax.f32 %v635, 0.0
  %v1258 = vmax.f32 %v640, 0.0
  %v1259 = vmax.f32 %v645, 0.0
  %v1260 = vmax.f32 %v650, 0.0
  %v1261 = vmax.f32 %v655, 0.0
  %v1262 = vmax.f32 %v660, 0.0
  %v1263 = vmax.f32 %v665, 0.0
  %v1264 = vmax.f32 %v670, 0.0
  %v1265 = vmax.f32 %v675, 0.0
  %v1266 = vmax.f32 %v680, 0.0
  %v1267 = vmax.f32 %v685, 0.0
  %v1268 = vmax.f32 %v690, 0.0
  %v1269 = vmax.f32 %v695, 0.0
  %v1270 = vmax.f32 %v700, 0.0
  %v1271 = vmax.f32 %v705, 0.0
  %v1272 = vmax.f32 %v710, 0.0
  %v1273 = vmax.f32 %v715, 0.0
  %v1274 = vmax.f32 %v720, 0.0
  %v1275 = vmax.f32 %v725, 0.0
  %v1276 = vmax.f32 %v730, 0.0
  %v1277 = vmax.f32 %v735, 0.0
  %v1278 = vmax.f32 %v740, 0.0
  %v1279 = vmax.f32 %v745, 0.0
  %v1280 = vmax.f32 %v750, 0.0
  %v1281 = vmax.f32 %v755, 0.0
  %v1282 = vmax.f32 %v760, 0.0
  %v1283 = vmax.f32 %v765, 0.0
  %v1284 = vmax.f32 %v770, 0.0
  %v1285 = vmax.f32 %v775, 0.0
  %v1286 = vmax.f32 %v780, 0.0
  %v1287 = vmax.f32 %v785, 0.0
  %v1288 = vmax.f32 %v790, 0.0
  %v1289 = vmax.f32 %v795, 0.0
  %v1290 = vmax.f32 %v800, 0.0
  %v1291 = vmax.f32 %v805, 0.0
  %v1292 = vmax.f32 %v810, 0.0
  %v1293 = vmax.f32 %v815, 0.0
  %v1294 = vmax.f32 %v820, 0.0
  %v1295 = vmax.f32 %v825, 0.0
  %v1296 = vmax.f32 %v830, 0.0
  %v1297 = vmax.f32 %v835, 0.0
  %v1298 = vmax.f32 %v840, 0.0
  %v1299 = vmax.f32 %v845, 0.0
  %v1300 = vmax.f32 %v850, 0.0
  %v1301 = vmax.f32 %v855, 0.0
  %v1302 = vmax.f32 %v860, 0.0
  %v1303 = vmax.f32 %v865, 0.0
  %v1304 = vmax.f32 %v870, 0.0
  %v1305 = vmax.f32 %v875, 0.0
  %v1306 = vmax.f32 %v880, 0.0
  %v1307 = vmax.f32 %v885, 0.0
  %v1308 = vmax.f32 %v890, 0.0
  %v1309 = vmax.f32 %v895, 0.0
  %v1310 = vmax.f32 %v900, 0.0
  %v1311 = vmax.f32 %v905, 0.0
  %v1312 = vmax.f32 %v910, 0.0
  %v1313 = vmax.f32 %v915, 0.0
  %v1314 = vmax.f32 %v920, 0.0
  %v1315 = vmax.f32 %v925, 0.0
  %v1316 = vmax.f32 %v930, 0.0
  %v1317 = vmax.f32 %v935, 0.0
  %v1318 = vmax.f32 %v940, 0.0
  %v1319 = vmax.f32 %v945, 0.0
  %v1320 = vmax.f32 %v950, 0.0
  %v1321 = vmax.f32 %v955, 0.0
  %v1322 = vmax.f32 %v960, 0.0
  %v1323 = vmax.f32 %v965, 0.0
  %v1324 = vmax.f32 %v970, 0.0
  %v1325 = vmax.f32 %v975, 0.0
  %v1326 = vmax.f32 %v980, 0.0
  %v1327 = vmax.f32 %v985, 0.0
  %v1328 = vmax.f32 %v990, 0.0
  %v1329 = vmax.f32 %v995, 0.0
  %v1330 = vmax.f32 %v1000, 0.0
  %v1331 = vmax.f32 %v1005, 0.0
  %v1332 = vmax.f32 %v1010, 0.0
  %v1333 = vmax.f32 %v1015, 0.0
  %v1334 = vmax.f32 %v1020, 0.0
  %v1335 = vmax.f32 %v1025, 0.0
  %v1336 = vmax.f32 %v1030, 0.0
  %v1337 = vmax.f32 %v1035, 0.0
  %v1338 = vmax.f32 %v1040, 0.0
  %v1339 = vmax.f32 %v1045, 0.0
  %v1340 = vmax.f32 %v1050, 0.0
  %v1341 = vmax.f32 %v1055, 0.0
  %v1342 = vmax.f32 %v1060, 0.0
  %v1343 = vmax.f32 %v1065, 0.0
  %v1344 = vmax.f32 %v1070, 0.0
  %v1345 = vmax.f32 %v1075, 0.0
  %v1346 = vmax.f32 %v1080, 0.0
  %v1347 = vmax.f32 %v1085, 0.0
  %v1348 = vmax.f32 %v1090, 0.0
  %v1349 = vmax.f32 %v1095, 0.0
  %v1350 = vmax.f32 %v1100, 0.0
  %v1351 = vmax.f32 %v1105, 0.0
  %v1352 = vmax.f32 %v1110, 0.0
  %v1353 = vmax.f32 %v1115, 0.0
  %v1354 = vmax.f32 %v1120, 0.0
  %v1355 = vmax.f32 %v1125, 0.0
  %v1356 = vmax.f32 %v1130, 0.0
  %v1357 = vmax.f32 %v1135, 0.0
  %v1358 = vmax.f32 %v1140, 0.0
  %v1359 = vmax.f32 %v1145, 0.0
  %v1360 = vmax.f32 %v1150, 0.0
  %v1361 = vmax.f32 %v1155, 0.0
  %v1362 = vmax.f32 %v1160, 0.0
  %v1363 = vmax.f32 %v1165, 0.0
  %v1364 = vmax.f32 %v1170, 0.0
  %v1365 = vmax.f32 %v1175, 0.0
  %v1366 = vmax.f32 %v1180, 0.0
  %v1367 = vmax.f32 %v1185, 0.0
  %v1368 = vmax.f32 %v1190, 0.0
  %v1369 = vmax.f32 %v1195, 0.0
  %v1370 = vmax.f32 %v1200, 0.0
  %v1371 = vmax.f32 %v1205, 0.0
  %v1372 = vmax.f32 %v1210, 0.0
  %v1373 = vmax.f32 %v1215, 0.0
  %v1374 = vmax.f32 %v1220, 0.0
  %v1375 = vmax.f32 %v1225, 0.0
  %v1376 = vmax.f32 %v1230, 0.0
  %v1377 = vmax.f32 %v1235, 0.0
  %v1378 = vmax.f32 %v1240, 0.0
  %v1379 = vmax.f32 %v1245, 0.0
  %v1380 = vmax.f32 %v1250, 0.0
  %vm1510 = vcmask 1040384
  %v1511 = vrot.slane 0.0, 7
  %v1512 = vsel %vm1510, %v1511, %v1511
  %v1513 = vrot.slane %v1253, 7
  %v1514 = vrot.slane %v1254, 7
  %v1515 = vsel %vm1510, %v1513, %v1514
  %v1516 = vrot.slane %v1255, 7
  %v1517 = vrot.slane %v1256, 7
  %v1518 = vsel %vm1510, %v1516, %v1517
  %v1519 = vrot.slane %v1257, 7
  %v1520 = vrot.slane %v1258, 7
  %v1521 = vsel %vm1510, %v1519, %v1520
  %v1522 = vrot.slane %v1259, 7
  %v1523 = vrot.slane %v1260, 7
  %v1524 = vsel %vm1510, %v1522, %v1523
  %v1525 = vrot.slane %v1261, 7
  %v1526 = vrot.slane %v1262, 7
  %v1527 = vsel %vm1510, %v1525, %v1526
  %v1528 = vrot.slane %v1263, 7
  %v1529 = vrot.slane %v1264, 7
  %v1530 = vsel %vm1510, %v1528, %v1529
  %v1531 = vrot.slane %v1265, 7
  %v1532 = vrot.slane %v1266, 7
  %v1533 = vsel %vm1510, %v1531, %v1532
  %v1534 = vrot.slane %v1267, 7
  %v1535 = vrot.slane %v1268, 7
  %v1536 = vsel %vm1510, %v1534, %v1535
  %v1537 = vrot.slane %v1269, 7
  %v1538 = vrot.slane %v1270, 7
  %v1539 = vsel %vm1510, %v1537, %v1538
  %v1540 = vrot.slane %v1271, 7
  %v1541 = vrot.slane %v1272, 7
  %v1542 = vsel %vm1510, %v1540, %v1541
  %v1543 = vrot.slane %v1273, 7
  %v1544 = vrot.slane %v1274, 7
  %v1545 = vsel %vm1510, %v1543, %v1544
  %v1546 = vrot.slane %v1275, 7
  %v1547 = vrot.slane %v1276, 7
  %v1548 = vsel %vm1510, %v1546, %v1547
  %v1549 = vrot.slane %v1277, 7
  %v1550 = vrot.slane %v1278, 7
  %v1551 = vsel %vm1510, %v1549, %v1550
  %v1552 = vrot.slane %v1279, 7
  %v1553 = vrot.slane %v1280, 7
  %v1554 = vsel %vm1510, %v1552, %v1553
  %v1555 = vrot.slane %v1281, 7
  %v1556 = vrot.slane %v1282, 7
  %v1557 = vsel %vm1510, %v1555, %v1556
  %v1558 = vrot.slane %v1283, 7
  %v1559 = vrot.slane %v1284, 7
  %v1560 = vsel %vm1510, %v1558, %v1559
  %v1561 = vrot.slane %v1285, 7
  %v1562 = vrot.slane %v1286, 7
  %v1563 = vsel %vm1510, %v1561, %v1562
  %v1564 = vrot.slane %v1287, 7
  %v1565 = vrot.slane %v1288, 7
  %v1566 = vsel %vm1510, %v1564, %v1565
  %v1567 = vrot.slane %v1289, 7
  %v1568 = vrot.slane %v1290, 7
  %v1569 = vsel %vm1510, %v1567, %v1568
  %v1570 = vrot.slane %v1291, 7
  %v1571 = vrot.slane %v1292, 7
  %v1572 = vsel %vm1510, %v1570, %v1571
  %v1573 = vrot.slane %v1293, 7
  %v1574 = vrot.slane %v1294, 7
  %v1575 = vsel %vm1510, %v1573, %v1574
  %v1576 = vrot.slane %v1295, 7
  %v1577 = vrot.slane %v1296, 7
  %v1578 = vsel %vm1510, %v1576, %v1577
  %v1579 = vrot.slane %v1297, 7
  %v1580 = vrot.slane %v1298, 7
  %v1581 = vsel %vm1510, %v1579, %v1580
  %v1582 = vrot.slane %v1299, 7
  %v1583 = vrot.slane %v1300, 7
  %v1584 = vsel %vm1510, %v1582, %v1583
  %v1585 = vrot.slane %v1301, 7
  %v1586 = vrot.slane %v1302, 7
  %v1587 = vsel %vm1510, %v1585, %v1586
  %v1588 = vrot.slane %v1303, 7
  %v1589 = vrot.slane %v1304, 7
  %v1590 = vsel %vm1510, %v1588, %v1589
  %v1591 = vrot.slane %v1305, 7
  %v1592 = vrot.slane %v1306, 7
  %v1593 = vsel %vm1510, %v1591, %v1592
  %v1594 = vrot.slane %v1307, 7
  %v1595 = vrot.slane %v1308, 7
  %v1596 = vsel %vm1510, %v1594, %v1595
  %v1597 = vrot.slane %v1309, 7
  %v1598 = vrot.slane %v1310, 7
  %v1599 = vsel %vm1510, %v1597, %v1598
  %v1600 = vrot.slane %v1311, 7
  %v1601 = vrot.slane %v1312, 7
  %v1602 = vsel %vm1510, %v1600, %v1601
  %v1603 = vrot.slane %v1313, 7
  %v1604 = vrot.slane %v1314, 7
  %v1605 = vsel %vm1510, %v1603, %v1604
  %v1606 = vrot.slane %v1315, 7
  %v1607 = vrot.slane %v1316, 7
  %v1608 = vsel %vm1510, %v1606, %v1607
  %v1609 = vrot.slane %v1317, 7
  %v1610 = vrot.slane %v1318, 7
  %v1611 = vsel %vm1510, %v1609, %v1610
  %v1612 = vrot.slane %v1319, 7
  %v1613 = vrot.slane %v1320, 7
  %v1614 = vsel %vm1510, %v1612, %v1613
  %v1615 = vrot.slane %v1321, 7
  %v1616 = vrot.slane %v1322, 7
  %v1617 = vsel %vm1510, %v1615, %v1616
  %v1618 = vrot.slane %v1323, 7
  %v1619 = vrot.slane %v1324, 7
  %v1620 = vsel %vm1510, %v1618, %v1619
  %v1621 = vrot.slane %v1325, 7
  %v1622 = vrot.slane %v1326, 7
  %v1623 = vsel %vm1510, %v1621, %v1622
  %v1624 = vrot.slane %v1327, 7
  %v1625 = vrot.slane %v1328, 7
  %v1626 = vsel %vm1510, %v1624, %v1625
  %v1627 = vrot.slane %v1329, 7
  %v1628 = vrot.slane %v1330, 7
  %v1629 = vsel %vm1510, %v1627, %v1628
  %v1630 = vrot.slane %v1331, 7
  %v1631 = vrot.slane %v1332, 7
  %v1632 = vsel %vm1510, %v1630, %v1631
  %v1633 = vrot.slane %v1333, 7
  %v1634 = vrot.slane %v1334, 7
  %v1635 = vsel %vm1510, %v1633, %v1634
  %v1636 = vrot.slane %v1335, 7
  %v1637 = vrot.slane %v1336, 7
  %v1638 = vsel %vm1510, %v1636, %v1637
  %v1639 = vrot.slane %v1337, 7
  %v1640 = vrot.slane %v1338, 7
  %v1641 = vsel %vm1510, %v1639, %v1640
  %v1642 = vrot.slane %v1339, 7
  %v1643 = vrot.slane %v1340, 7
  %v1644 = vsel %vm1510, %v1642, %v1643
  %v1645 = vrot.slane %v1341, 7
  %v1646 = vrot.slane %v1342, 7
  %v1647 = vsel %vm1510, %v1645, %v1646
  %v1648 = vrot.slane %v1343, 7
  %v1649 = vrot.slane %v1344, 7
  %v1650 = vsel %vm1510, %v1648, %v1649
  %v1651 = vrot.slane %v1345, 7
  %v1652 = vrot.slane %v1346, 7
  %v1653 = vsel %vm1510, %v1651, %v1652
  %v1654 = vrot.slane %v1347, 7
  %v1655 = vrot.slane %v1348, 7
  %v1656 = vsel %vm1510, %v1654, %v1655
  %v1657 = vrot.slane %v1349, 7
  %v1658 = vrot.slane %v1350, 7
  %v1659 = vsel %vm1510, %v1657, %v1658
  %v1660 = vrot.slane %v1351, 7
  %v1661 = vrot.slane %v1352, 7
  %v1662 = vsel %vm1510, %v1660, %v1661
  %v1663 = vrot.slane %v1353, 7
  %v1664 = vrot.slane %v1354, 7
  %v1665 = vsel %vm1510, %v1663, %v1664
  %v1666 = vrot.slane %v1355, 7
  %v1667 = vrot.slane %v1356, 7
  %v1668 = vsel %vm1510, %v1666, %v1667
  %v1669 = vrot.slane %v1357, 7
  %v1670 = vrot.slane %v1358, 7
  %v1671 = vsel %vm1510, %v1669, %v1670
  %v1672 = vrot.slane %v1359, 7
  %v1673 = vrot.slane %v1360, 7
  %v1674 = vsel %vm1510, %v1672, %v1673
  %v1675 = vrot.slane %v1361, 7
  %v1676 = vrot.slane %v1362, 7
  %v1677 = vsel %vm1510, %v1675, %v1676
  %v1678 = vrot.slane %v1363, 7
  %v1679 = vrot.slane %v1364, 7
  %v1680 = vsel %vm1510, %v1678, %v1679
  %v1681 = vrot.slane %v1365, 7
  %v1682 = vrot.slane %v1366, 7
  %v1683 = vsel %vm1510, %v1681, %v1682
  %v1684 = vrot.slane %v1367, 7
  %v1685 = vrot.slane %v1368, 7
  %v1686 = vsel %vm1510, %v1684, %v1685
  %v1687 = vrot.slane %v1369, 7
  %v1688 = vrot.slane %v1370, 7
  %v1689 = vsel %vm1510, %v1687, %v1688
  %v1690 = vrot.slane %v1371, 7
  %v1691 = vrot.slane %v1372, 7
  %v1692 = vsel %vm1510, %v1690, %v1691
  %v1693 = vrot.slane %v1373, 7
  %v1694 = vrot.slane %v1374, 7
  %v1695 = vsel %vm1510, %v1693, %v1694
  %v1696 = vrot.slane %v1375, 7
  %v1697 = vrot.slane %v1376, 7
  %v1698 = vsel %vm1510, %v1696, %v1697
  %v1699 = vrot.slane %v1377, 7
  %v1700 = vrot.slane %v1378, 7
  %v1701 = vsel %vm1510, %v1699, %v1700
  %v1702 = vrot.slane %v1379, 7
  %v1703 = vrot.slane %v1380, 7
  %v1704 = vsel %vm1510, %v1702, %v1703
  %v1895 = vsel %vm1510, 0.0, %v1511
  %v1896 = vsel %vm1510, 0.0, %v1513
  %v1897 = vsel %vm1510, 0.0, %v1516
  %v1898 = vsel %vm1510, 0.0, %v1519
  %v1899 = vsel %vm1510, 0.0, %v1522
  %v1900 = vsel %vm1510, 0.0, %v1525
  %v1901 = vsel %vm1510, 0.0, %v1528
  %v1902 = vsel %vm1510, 0.0, %v1531
  %v1903 = vsel %vm1510, 0.0, %v1534
  %v1904 = vsel %vm1510, 0.0, %v1537
  %v1905 = vsel %vm1510, 0.0, %v1540
  %v1906 = vsel %vm1510, 0.0, %v1543
  %v1907 = vsel %vm1510, 0.0, %v1546
  %v1908 = vsel %vm1510, 0.0, %v1549
  %v1909 = vsel %vm1510, 0.0, %v1552
  %v1910 = vsel %vm1510, 0.0, %v1555
  %v1911 = vsel %vm1510, 0.0, %v1558
  %v1912 = vsel %vm1510, 0.0, %v1561
  %v1913 = vsel %vm1510, 0.0, %v1564
  %v1914 = vsel %vm1510, 0.0, %v1567
  %v1915 = vsel %vm1510, 0.0, %v1570
  %v1916 = vsel %vm1510, 0.0, %v1573
  %v1917 = vsel %vm1510, 0.0, %v1576
  %v1918 = vsel %vm1510, 0.0, %v1579
  %v1919 = vsel %vm1510, 0.0, %v1582
  %v1920 = vsel %vm1510, 0.0, %v1585
  %v1921 = vsel %vm1510, 0.0, %v1588
  %v1922 = vsel %vm1510, 0.0, %v1591
  %v1923 = vsel %vm1510, 0.0, %v1594
  %v1924 = vsel %vm1510, 0.0, %v1597
  %v1925 = vsel %vm1510, 0.0, %v1600
  %v1926 = vsel %vm1510, 0.0, %v1603
  %v1927 = vsel %vm1510, 0.0, %v1606
  %v1928 = vsel %vm1510, 0.0, %v1609
  %v1929 = vsel %vm1510, 0.0, %v1612
  %v1930 = vsel %vm1510, 0.0, %v1615
  %v1931 = vsel %vm1510, 0.0, %v1618
  %v1932 = vsel %vm1510, 0.0, %v1621
  %v1933 = vsel %vm1510, 0.0, %v1624
  %v1934 = vsel %vm1510, 0.0, %v1627
  %v1935 = vsel %vm1510, 0.0, %v1630
  %v1936 = vsel %vm1510, 0.0, %v1633
  %v1937 = vsel %vm1510, 0.0, %v1636
  %v1938 = vsel %vm1510, 0.0, %v1639
  %v1939 = vsel %vm1510, 0.0, %v1642
  %v1940 = vsel %vm1510, 0.0, %v1645
  %v1941 = vsel %vm1510, 0.0, %v1648
  %v1942 = vsel %vm1510, 0.0, %v1651
  %v1943 = vsel %vm1510, 0.0, %v1654
  %v1944 = vsel %vm1510, 0.0, %v1657
  %v1945 = vsel %vm1510, 0.0, %v1660
  %v1946 = vsel %vm1510, 0.0, %v1663
  %v1947 = vsel %vm1510, 0.0, %v1666
  %v1948 = vsel %vm1510, 0.0, %v1669
  %v1949 = vsel %vm1510, 0.0, %v1672
  %v1950 = vsel %vm1510, 0.0, %v1675
  %v1951 = vsel %vm1510, 0.0, %v1678
  %v1952 = vsel %vm1510, 0.0, %v1681
  %v1953 = vsel %vm1510, 0.0, %v1684
  %v1954 = vsel %vm1510, 0.0, %v1687
  %v1955 = vsel %vm1510, 0.0, %v1690
  %v1956 = vsel %vm1510, 0.0, %v1693
  %v1957 = vsel %vm1510, 0.0, %v1696
  %v1958 = vsel %vm1510, 0.0, %v1699
  %v1959 = vsel %vm1510, 0.0, %v1702
  %v1960 = vsel %vm1510, %v1511, 0.0
  %v1961 = vsel %vm1510, %v1514, 0.0
  %v1962 = vsel %vm1510, %v1517, 0.0
  %v1963 = vsel %vm1510, %v1520, 0.0
  %v1964 = vsel %vm1510, %v1523, 0.0
  %v1965 = vsel %vm1510, %v1526, 0.0
  %v1966 = vsel %vm1510, %v1529, 0.0
  %v1967 = vsel %vm1510, %v1532, 0.0
  %v1968 = vsel %vm1510, %v1535, 0.0
  %v1969 = vsel %vm1510, %v1538, 0.0
  %v1970 = vsel %vm1510, %v1541, 0.0
  %v1971 = vsel %vm1510, %v1544, 0.0
  %v1972 = vsel %vm1510, %v1547, 0.0
  %v1973 = vsel %vm1510, %v1550, 0.0
  %v1974 = vsel %vm1510, %v1553, 0.0
  %v1975 = vsel %vm1510, %v1556, 0.0
  %v1976 = vsel %vm1510, %v1559, 0.0
  %v1977 = vsel %vm1510, %v1562, 0.0
  %v1978 = vsel %vm1510, %v1565, 0.0
  %v1979 = vsel %vm1510, %v1568, 0.0
  %v1980 = vsel %vm1510, %v1571, 0.0
  %v1981 = vsel %vm1510, %v1574, 0.0
  %v1982 = vsel %vm1510, %v1577, 0.0
  %v1983 = vsel %vm1510, %v1580, 0.0
  %v1984 = vsel %vm1510, %v1583, 0.0
  %v1985 = vsel %vm1510, %v1586, 0.0
  %v1986 = vsel %vm1510, %v1589, 0.0
  %v1987 = vsel %vm1510, %v1592, 0.0
  %v1988 = vsel %vm1510, %v1595, 0.0
  %v1989 = vsel %vm1510, %v1598, 0.0
  %v1990 = vsel %vm1510, %v1601, 0.0
  %v1991 = vsel %vm1510, %v1604, 0.0
  %v1992 = vsel %vm1510, %v1607, 0.0
  %v1993 = vsel %vm1510, %v1610, 0.0
  %v1994 = vsel %vm1510, %v1613, 0.0
  %v1995 = vsel %vm1510, %v1616, 0.0
  %v1996 = vsel %vm1510, %v1619, 0.0
  %v1997 = vsel %vm1510, %v1622, 0.0
  %v1998 = vsel %vm1510, %v1625, 0.0
  %v1999 = vsel %vm1510, %v1628, 0.0
  %v2000 = vsel %vm1510, %v1631, 0.0
  %v2001 = vsel %vm1510, %v1634, 0.0
  %v2002 = vsel %vm1510, %v1637, 0.0
  %v2003 = vsel %vm1510, %v1640, 0.0
  %v2004 = vsel %vm1510, %v1643, 0.0
  %v2005 = vsel %vm1510, %v1646, 0.0
  %v2006 = vsel %vm1510, %v1649, 0.0
  %v2007 = vsel %vm1510, %v1652, 0.0
  %v2008 = vsel %vm1510, %v1655, 0.0
  %v2009 = vsel %vm1510, %v1658, 0.0
  %v2010 = vsel %vm1510, %v1661, 0.0
  %v2011 = vsel %vm1510, %v1664, 0.0
  %v2012 = vsel %vm1510, %v1667, 0.0
  %v2013 = vsel %vm1510, %v1670, 0.0
  %v2014 = vsel %vm1510, %v1673, 0.0
  %v2015 = vsel %vm1510, %v1676, 0.0
  %v2016 = vsel %vm1510, %v1679, 0.0
  %v2017 = vsel %vm1510, %v1682, 0.0
  %v2018 = vsel %vm1510, %v1685, 0.0
  %v2019 = vsel %vm1510, %v1688, 0.0
  %v2020 = vsel %vm1510, %v1691, 0.0
  %v2021 = vsel %vm1510, %v1694, 0.0
  %v2022 = vsel %vm1510, %v1697, 0.0
  %v2023 = vsel %vm1510, %v1700, 0.0
  %v2024 = vsel %vm1510, %v1703, 0.0
  %vm2147 = vcmask 1046528
  %v2148 = vrot.slane %v1895, 1
  %v2149 = vrot.slane %v1512, 1
  %v2150 = vsel %vm2147, %v2148, %v2149
  %v2151 = vrot.slane %v1960, 1
  %v2152 = vsel %vm2147, %v2149, %v2151
  %v2153 = vrot.slane %v1896, 1
  %v2154 = vrot.slane %v1515, 1
  %v2155 = vsel %vm2147, %v2153, %v2154
  %v2156 = vrot.slane %v1961, 1
  %v2157 = vsel %vm2147, %v2154, %v2156
  %v2158 = vrot.slane %v1897, 1
  %v2159 = vrot.slane %v1518, 1
  %v2160 = vsel %vm2147, %v2158, %v2159
  %v2161 = vrot.slane %v1962, 1
  %v2162 = vsel %vm2147, %v2159, %v2161
  %v2163 = vrot.slane %v1898, 1
  %v2164 = vrot.slane %v1521, 1
  %v2165 = vsel %vm2147, %v2163, %v2164
  %v2166 = vrot.slane %v1963, 1
  %v2167 = vsel %vm2147, %v2164, %v2166
  %v2168 = vrot.slane %v1899, 1
  %v2169 = vrot.slane %v1524, 1
  %v2170 = vsel %vm2147, %v2168, %v2169
  %v2171 = vrot.slane %v1964, 1
  %v2172 = vsel %vm2147, %v2169, %v2171
  %v2173 = vrot.slane %v1900, 1
  %v2174 = vrot.slane %v1527, 1
  %v2175 = vsel %vm2147, %v2173, %v2174
  %v2176 = vrot.slane %v1965, 1
  %v2177 = vsel %vm2147, %v2174, %v2176
  %v2178 = vrot.slane %v1901, 1
  %v2179 = vrot.slane %v1530, 1
  %v2180 = vsel %vm2147, %v2178, %v2179
  %v2181 = vrot.slane %v1966, 1
  %v2182 = vsel %vm2147, %v2179, %v2181
  %v2183 = vrot.slane %v1902, 1
  %v2184 = vrot.slane %v1533, 1
  %v2185 = vsel %vm2147, %v2183, %v2184
  %v2186 = vrot.slane %v1967, 1
  %v2187 = vsel %vm2147, %v2184, %v2186
  %v2188 = vrot.slane %v1903, 1
  %v2189 = vrot.slane %v1536, 1
  %v2190 = vsel %vm2147, %v2188, %v2189
  %v2191 = vrot.slane %v1968, 1
  %v2192 = vsel %vm2147, %v2189, %v2191
  %v2193 = vrot.slane %v1904, 1
  %v2194 = vrot.slane %v1539, 1
  %v2195 = vsel %vm2147, %v2193, %v2194
  %v2196 = vrot.slane %v1969, 1
  %v2197 = vsel %vm2147, %v2194, %v2196
  %v2198 = vrot.slane %v1905, 1
  %v2199 = vrot.slane %v1542, 1
  %v2200 = vsel %vm2147, %v2198, %v2199
  %v2201 = vrot.slane %v1970, 1
  %v2202 = vsel %vm2147, %v2199, %v2201
  %v2203 = vrot.slane %v1906, 1
  %v2204 = vrot.slane %v1545, 1
  %v2205 = vsel %vm2147, %v2203, %v2204
  %v2206 = vrot.slane %v1971, 1
  %v2207 = vsel %vm2147, %v2204, %v2206
  %v2208 = vrot.slane %v1907, 1
  %v2209 = vrot.slane %v1548, 1
  %v2210 = vsel %vm2147, %v2208, %v2209
  %v2211 = vrot.slane %v1972, 1
  %v2212 = vsel %vm2147, %v2209, %v2211
  %v2213 = vrot.slane %v1908, 1
  %v2214 = vrot.slane %v1551, 1
  %v2215 = vsel %vm2147, %v2213, %v2214
  %v2216 = vrot.slane %v1973, 1
  %v2217 = vsel %vm2147, %v2214, %v2216
  %v2218 = vrot.slane %v1909, 1
  %v2219 = vrot.slane %v1554, 1
  %v2220 = vsel %vm2147, %v2218, %v2219
  %v2221 = vrot.slane %v1974, 1
  %v2222 = vsel %vm2147, %v2219, %v2221
  %v2223 = vrot.slane %v1910, 1
  %v2224 = vrot.slane %v1557, 1
  %v2225 = vsel %vm2147, %v2223, %v2224
  %v2226 = vrot.slane %v1975, 1
  %v2227 = vsel %vm2147, %v2224, %v2226
  %v2228 = vrot.slane %v1912, 1
  %v2229 = vrot.slane %v1563, 1
  %v2230 = vsel %vm2147, %v2228, %v2229
  %v2231 = vrot.slane %v1977, 1
  %v2232 = vsel %vm2147, %v2229, %v2231
  %v2233 = vrot.slane %v1913, 1
  %v2234 = vrot.slane %v1566, 1
  %v2235 = vsel %vm2147, %v2233, %v2234
  %v2236 = vrot.slane %v1978, 1
  %v2237 = vsel %vm2147, %v2234, %v2236
  %v2238 = vrot.slane %v1914, 1
  %v2239 = vrot.slane %v1569, 1
  %v2240 = vsel %vm2147, %v2238, %v2239
  %v2241 = vrot.slane %v1979, 1
  %v2242 = vsel %vm2147, %v2239, %v2241
  %v2243 = vrot.slane %v1915, 1
  %v2244 = vrot.slane %v1572, 1
  %v2245 = vsel %vm2147, %v2243, %v2244
  %v2246 = vrot.slane %v1980, 1
  %v2247 = vsel %vm2147, %v2244, %v2246
  %v2248 = vrot.slane %v1916, 1
  %v2249 = vrot.slane %v1575, 1
  %v2250 = vsel %vm2147, %v2248, %v2249
  %v2251 = vrot.slane %v1981, 1
  %v2252 = vsel %vm2147, %v2249, %v2251
  %v2253 = vrot.slane %v1917, 1
  %v2254 = vrot.slane %v1578, 1
  %v2255 = vsel %vm2147, %v2253, %v2254
  %v2256 = vrot.slane %v1982, 1
  %v2257 = vsel %vm2147, %v2254, %v2256
  %v2258 = vrot.slane %v1918, 1
  %v2259 = vrot.slane %v1581, 1
  %v2260 = vsel %vm2147, %v2258, %v2259
  %v2261 = vrot.slane %v1983, 1
  %v2262 = vsel %vm2147, %v2259, %v2261
  %v2263 = vrot.slane %v1919, 1
  %v2264 = vrot.slane %v1584, 1
  %v2265 = vsel %vm2147, %v2263, %v2264
  %v2266 = vrot.slane %v1984, 1
  %v2267 = vsel %vm2147, %v2264, %v2266
  %v2268 = vrot.slane %v1920, 1
  %v2269 = vrot.slane %v1587, 1
  %v2270 = vsel %vm2147, %v2268, %v2269
  %v2271 = vrot.slane %v1985, 1
  %v2272 = vsel %vm2147, %v2269, %v2271
  %v2273 = vrot.slane %v1921, 1
  %v2274 = vrot.slane %v1590, 1
  %v2275 = vsel %vm2147, %v2273, %v2274
  %v2276 = vrot.slane %v1986, 1
  %v2277 = vsel %vm2147, %v2274, %v2276
  %v2278 = vrot.slane %v1922, 1
  %v2279 = vrot.slane %v1593, 1
  %v2280 = vsel %vm2147, %v2278, %v2279
  %v2281 = vrot.slane %v1987, 1
  %v2282 = vsel %vm2147, %v2279, %v2281
  %v2283 = vrot.slane %v1923, 1
  %v2284 = vrot.slane %v1596, 1
  %v2285 = vsel %vm2147, %v2283, %v2284
  %v2286 = vrot.slane %v1988, 1
  %v2287 = vsel %vm2147, %v2284, %v2286
  %v2288 = vrot.slane %v1924, 1
  %v2289 = vrot.slane %v1599, 1
  %v2290 = vsel %vm2147, %v2288, %v2289
  %v2291 = vrot.slane %v1989, 1
  %v2292 = vsel %vm2147, %v2289, %v2291
  %v2293 = vrot.slane %v1925, 1
  %v2294 = vrot.slane %v1602, 1
  %v2295 = vsel %vm2147, %v2293, %v2294
  %v2296 = vrot.slane %v1990, 1
  %v2297 = vsel %vm2147, %v2294, %v2296
  %v2298 = vrot.slane %v1926, 1
  %v2299 = vrot.slane %v1605, 1
  %v2300 = vsel %vm2147, %v2298, %v2299
  %v2301 = vrot.slane %v1991, 1
  %v2302 = vsel %vm2147, %v2299, %v2301
  %v2303 = vrot.slane %v1928, 1
  %v2304 = vrot.slane %v1611, 1
  %v2305 = vsel %vm2147, %v2303, %v2304
  %v2306 = vrot.slane %v1993, 1
  %v2307 = vsel %vm2147, %v2304, %v2306
  %v2308 = vrot.slane %v1929, 1
  %v2309 = vrot.slane %v1614, 1
  %v2310 = vsel %vm2147, %v2308, %v2309
  %v2311 = vrot.slane %v1994, 1
  %v2312 = vsel %vm2147, %v2309, %v2311
  %v2313 = vrot.slane %v1930, 1
  %v2314 = vrot.slane %v1617, 1
  %v2315 = vsel %vm2147, %v2313, %v2314
  %v2316 = vrot.slane %v1995, 1
  %v2317 = vsel %vm2147, %v2314, %v2316
  %v2318 = vrot.slane %v1931, 1
  %v2319 = vrot.slane %v1620, 1
  %v2320 = vsel %vm2147, %v2318, %v2319
  %v2321 = vrot.slane %v1996, 1
  %v2322 = vsel %vm2147, %v2319, %v2321
  %v2323 = vrot.slane %v1932, 1
  %v2324 = vrot.slane %v1623, 1
  %v2325 = vsel %vm2147, %v2323, %v2324
  %v2326 = vrot.slane %v1997, 1
  %v2327 = vsel %vm2147, %v2324, %v2326
  %v2328 = vrot.slane %v1933, 1
  %v2329 = vrot.slane %v1626, 1
  %v2330 = vsel %vm2147, %v2328, %v2329
  %v2331 = vrot.slane %v1998, 1
  %v2332 = vsel %vm2147, %v2329, %v2331
  %v2333 = vrot.slane %v1934, 1
  %v2334 = vrot.slane %v1629, 1
  %v2335 = vsel %vm2147, %v2333, %v2334
  %v2336 = vrot.slane %v1999, 1
  %v2337 = vsel %vm2147, %v2334, %v2336
  %v2338 = vrot.slane %v1935, 1
  %v2339 = vrot.slane %v1632, 1
  %v2340 = vsel %vm2147, %v2338, %v2339
  %v2341 = vrot.slane %v2000, 1
  %v2342 = vsel %vm2147, %v2339, %v2341
  %v2343 = vrot.slane %v1936, 1
  %v2344 = vrot.slane %v1635, 1
  %v2345 = vsel %vm2147, %v2343, %v2344
  %v2346 = vrot.slane %v2001, 1
  %v2347 = vsel %vm2147, %v2344, %v2346
  %v2348 = vrot.slane %v1937, 1
  %v2349 = vrot.slane %v1638, 1
  %v2350 = vsel %vm2147, %v2348, %v2349
  %v2351 = vrot.slane %v2002, 1
  %v2352 = vsel %vm2147, %v2349, %v2351
  %v2353 = vrot.slane %v1938, 1
  %v2354 = vrot.slane %v1641, 1
  %v2355 = vsel %vm2147, %v2353, %v2354
  %v2356 = vrot.slane %v2003, 1
  %v2357 = vsel %vm2147, %v2354, %v2356
  %v2358 = vrot.slane %v1939, 1
  %v2359 = vrot.slane %v1644, 1
  %v2360 = vsel %vm2147, %v2358, %v2359
  %v2361 = vrot.slane %v2004, 1
  %v2362 = vsel %vm2147, %v2359, %v2361
  %v2363 = vrot.slane %v1940, 1
  %v2364 = vrot.slane %v1647, 1
  %v2365 = vsel %vm2147, %v2363, %v2364
  %v2366 = vrot.slane %v2005, 1
  %v2367 = vsel %vm2147, %v2364, %v2366
  %v2368 = vrot.slane %v1941, 1
  %v2369 = vrot.slane %v1650, 1
  %v2370 = vsel %vm2147, %v2368, %v2369
  %v2371 = vrot.slane %v2006, 1
  %v2372 = vsel %vm2147, %v2369, %v2371
  %v2373 = vrot.slane %v1942, 1
  %v2374 = vrot.slane %v1653, 1
  %v2375 = vsel %vm2147, %v2373, %v2374
  %v2376 = vrot.slane %v2007, 1
  %v2377 = vsel %vm2147, %v2374, %v2376
  %v2378 = vrot.slane %v1944, 1
  %v2379 = vrot.slane %v1659, 1
  %v2380 = vsel %vm2147, %v2378, %v2379
  %v2381 = vrot.slane %v2009, 1
  %v2382 = vsel %vm2147, %v2379, %v2381
  %v2383 = vrot.slane %v1945, 1
  %v2384 = vrot.slane %v1662, 1
  %v2385 = vsel %vm2147, %v2383, %v2384
  %v2386 = vrot.slane %v2010, 1
  %v2387 = vsel %vm2147, %v2384, %v2386
  %v2388 = vrot.slane %v1946, 1
  %v2389 = vrot.slane %v1665, 1
  %v2390 = vsel %vm2147, %v2388, %v2389
  %v2391 = vrot.slane %v2011, 1
  %v2392 = vsel %vm2147, %v2389, %v2391
  %v2393 = vrot.slane %v1947, 1
  %v2394 = vrot.slane %v1668, 1
  %v2395 = vsel %vm2147, %v2393, %v2394
  %v2396 = vrot.slane %v2012, 1
  %v2397 = vsel %vm2147, %v2394, %v2396
  %v2398 = vrot.slane %v1948, 1
  %v2399 = vrot.slane %v1671, 1
  %v2400 = vsel %vm2147, %v2398, %v2399
  %v2401 = vrot.slane %v2013, 1
  %v2402 = vsel %vm2147, %v2399, %v2401
  %v2403 = vrot.slane %v1949, 1
  %v2404 = vrot.slane %v1674, 1
  %v2405 = vsel %vm2147, %v2403, %v2404
  %v2406 = vrot.slane %v2014, 1
  %v2407 = vsel %vm2147, %v2404, %v2406
  %v2408 = vrot.slane %v1950, 1
  %v2409 = vrot.slane %v1677, 1
  %v2410 = vsel %vm2147, %v2408, %v2409
  %v2411 = vrot.slane %v2015, 1
  %v2412 = vsel %vm2147, %v2409, %v2411
  %v2413 = vrot.slane %v1951, 1
  %v2414 = vrot.slane %v1680, 1
  %v2415 = vsel %vm2147, %v2413, %v2414
  %v2416 = vrot.slane %v2016, 1
  %v2417 = vsel %vm2147, %v2414, %v2416
  %v2418 = vrot.slane %v1952, 1
  %v2419 = vrot.slane %v1683, 1
  %v2420 = vsel %vm2147, %v2418, %v2419
  %v2421 = vrot.slane %v2017, 1
  %v2422 = vsel %vm2147, %v2419, %v2421
  %v2423 = vrot.slane %v1953, 1
  %v2424 = vrot.slane %v1686, 1
  %v2425 = vsel %vm2147, %v2423, %v2424
  %v2426 = vrot.slane %v2018, 1
  %v2427 = vsel %vm2147, %v2424, %v2426
  %v2428 = vrot.slane %v1954, 1
  %v2429 = vrot.slane %v1689, 1
  %v2430 = vsel %vm2147, %v2428, %v2429
  %v2431 = vrot.slane %v2019, 1
  %v2432 = vsel %vm2147, %v2429, %v2431
  %v2433 = vrot.slane %v1955, 1
  %v2434 = vrot.slane %v1692, 1
  %v2435 = vsel %vm2147, %v2433, %v2434
  %v2436 = vrot.slane %v2020, 1
  %v2437 = vsel %vm2147, %v2434, %v2436
  %v2438 = vrot.slane %v1956, 1
  %v2439 = vrot.slane %v1695, 1
  %v2440 = vsel %vm2147, %v2438, %v2439
  %v2441 = vrot.slane %v2021, 1
  %v2442 = vsel %vm2147, %v2439, %v2441
  %v2443 = vrot.slane %v1957, 1
  %v2444 = vrot.slane %v1698, 1
  %v2445 = vsel %vm2147, %v2443, %v2444
  %v2446 = vrot.slane %v2022, 1
  %v2447 = vsel %vm2147, %v2444, %v2446
  %v2448 = vrot.slane %v1958, 1
  %v2449 = vrot.slane %v1701, 1
  %v2450 = vsel %vm2147, %v2448, %v2449
  %v2451 = vrot.slane %v2023, 1
  %v2452 = vsel %vm2147, %v2449, %v2451
  %2453 = vrot.lane.b32.xlu0 %v2150, 8
  %v2454 = vpop.permute.xlu0 %2453
  %2455 = vrot.lane.b32.xlu0 %v2152, 8
  %v2456 = vpop.permute.xlu0 %2455
  %2457 = vrot.lane.b32.xlu0 %v2155, 8
  %v2458 = vpop.permute.xlu0 %2457
  %2459 = vrot.lane.b32.xlu0 %v2157, 8
  %v2460 = vpop.permute.xlu0 %2459
  %2461 = vrot.lane.b32.xlu0 %v2160, 8
  %v2462 = vpop.permute.xlu0 %2461
  %2463 = vrot.lane.b32.xlu0 %v2162, 8
  %v2464 = vpop.permute.xlu0 %2463
  %2465 = vrot.lane.b32.xlu0 %v2165, 8
  %v2466 = vpop.permute.xlu0 %2465
  %2467 = vrot.lane.b32.xlu0 %v2167, 8
  %v2468 = vpop.permute.xlu0 %2467
  %2469 = vrot.lane.b32.xlu0 %v2170, 8
  %v2470 = vpop.permute.xlu0 %2469
  %2471 = vrot.lane.b32.xlu0 %v2172, 8
  %v2472 = vpop.permute.xlu0 %2471
  %2473 = vrot.lane.b32.xlu0 %v2175, 8
  %v2474 = vpop.permute.xlu0 %2473
  %2475 = vrot.lane.b32.xlu0 %v2177, 8
  %v2476 = vpop.permute.xlu0 %2475
  %2477 = vrot.lane.b32.xlu0 %v2180, 8
  %v2478 = vpop.permute.xlu0 %2477
  %2479 = vrot.lane.b32.xlu0 %v2182, 8
  %v2480 = vpop.permute.xlu0 %2479
  %2481 = vrot.lane.b32.xlu0 %v2185, 8
  %v2482 = vpop.permute.xlu0 %2481
  %2483 = vrot.lane.b32.xlu0 %v2187, 8
  %v2484 = vpop.permute.xlu0 %2483
  %2485 = vrot.lane.b32.xlu0 %v2190, 8
  %v2486 = vpop.permute.xlu0 %2485
  %2487 = vrot.lane.b32.xlu0 %v2192, 8
  %v2488 = vpop.permute.xlu0 %2487
  %2489 = vrot.lane.b32.xlu0 %v2195, 8
  %v2490 = vpop.permute.xlu0 %2489
  %2491 = vrot.lane.b32.xlu0 %v2197, 8
  %v2492 = vpop.permute.xlu0 %2491
  %2493 = vrot.lane.b32.xlu0 %v2200, 8
  %v2494 = vpop.permute.xlu0 %2493
  %2495 = vrot.lane.b32.xlu0 %v2202, 8
  %v2496 = vpop.permute.xlu0 %2495
  %2497 = vrot.lane.b32.xlu0 %v2205, 8
  %v2498 = vpop.permute.xlu0 %2497
  %2499 = vrot.lane.b32.xlu0 %v2207, 8
  %v2500 = vpop.permute.xlu0 %2499
  %2501 = vrot.lane.b32.xlu0 %v2210, 8
  %v2502 = vpop.permute.xlu0 %2501
  %2503 = vrot.lane.b32.xlu0 %v2212, 8
  %v2504 = vpop.permute.xlu0 %2503
  %2505 = vrot.lane.b32.xlu0 %v2215, 8
  %v2506 = vpop.permute.xlu0 %2505
  %2507 = vrot.lane.b32.xlu0 %v2217, 8
  %v2508 = vpop.permute.xlu0 %2507
  %2509 = vrot.lane.b32.xlu0 %v2220, 8
  %v2510 = vpop.permute.xlu0 %2509
  %2511 = vrot.lane.b32.xlu0 %v2222, 8
  %v2512 = vpop.permute.xlu0 %2511
  %2513 = vrot.lane.b32.xlu0 %v2225, 8
  %v2514 = vpop.permute.xlu0 %2513
  %2515 = vrot.lane.b32.xlu0 %v2227, 8
  %v2516 = vpop.permute.xlu0 %2515
  %2517 = vrot.lane.b32.xlu0 %v2230, 8
  %v2518 = vpop.permute.xlu0 %2517
  %2519 = vrot.lane.b32.xlu0 %v2232, 8
  %v2520 = vpop.permute.xlu0 %2519
  %2521 = vrot.lane.b32.xlu0 %v2235, 8
  %v2522 = vpop.permute.xlu0 %2521
  %2523 = vrot.lane.b32.xlu0 %v2237, 8
  %v2524 = vpop.permute.xlu0 %2523
  %2525 = vrot.lane.b32.xlu0 %v2240, 8
  %v2526 = vpop.permute.xlu0 %2525
  %2527 = vrot.lane.b32.xlu0 %v2242, 8
  %v2528 = vpop.permute.xlu0 %2527
  %2529 = vrot.lane.b32.xlu0 %v2245, 8
  %v2530 = vpop.permute.xlu0 %2529
  %2531 = vrot.lane.b32.xlu0 %v2247, 8
  %v2532 = vpop.permute.xlu0 %2531
  %2533 = vrot.lane.b32.xlu0 %v2250, 8
  %v2534 = vpop.permute.xlu0 %2533
  %2535 = vrot.lane.b32.xlu0 %v2252, 8
  %v2536 = vpop.permute.xlu0 %2535
  %2537 = vrot.lane.b32.xlu0 %v2255, 8
  %v2538 = vpop.permute.xlu0 %2537
  %2539 = vrot.lane.b32.xlu0 %v2257, 8
  %v2540 = vpop.permute.xlu0 %2539
  %2541 = vrot.lane.b32.xlu0 %v2260, 8
  %v2542 = vpop.permute.xlu0 %2541
  %2543 = vrot.lane.b32.xlu0 %v2262, 8
  %v2544 = vpop.permute.xlu0 %2543
  %2545 = vrot.lane.b32.xlu0 %v2265, 8
  %v2546 = vpop.permute.xlu0 %2545
  %2547 = vrot.lane.b32.xlu0 %v2267, 8
  %v2548 = vpop.permute.xlu0 %2547
  %2549 = vrot.lane.b32.xlu0 %v2270, 8
  %v2550 = vpop.permute.xlu0 %2549
  %2551 = vrot.lane.b32.xlu0 %v2272, 8
  %v2552 = vpop.permute.xlu0 %2551
  %2553 = vrot.lane.b32.xlu0 %v2275, 8
  %v2554 = vpop.permute.xlu0 %2553
  %2555 = vrot.lane.b32.xlu0 %v2277, 8
  %v2556 = vpop.permute.xlu0 %2555
  %2557 = vrot.lane.b32.xlu0 %v2280, 8
  %v2558 = vpop.permute.xlu0 %2557
  %2559 = vrot.lane.b32.xlu0 %v2282, 8
  %v2560 = vpop.permute.xlu0 %2559
  %2561 = vrot.lane.b32.xlu0 %v2285, 8
  %v2562 = vpop.permute.xlu0 %2561
  %2563 = vrot.lane.b32.xlu0 %v2287, 8
  %v2564 = vpop.permute.xlu0 %2563
  %2565 = vrot.lane.b32.xlu0 %v2290, 8
  %v2566 = vpop.permute.xlu0 %2565
  %2567 = vrot.lane.b32.xlu0 %v2292, 8
  %v2568 = vpop.permute.xlu0 %2567
  %2569 = vrot.lane.b32.xlu0 %v2295, 8
  %v2570 = vpop.permute.xlu0 %2569
  %2571 = vrot.lane.b32.xlu0 %v2297, 8
  %v2572 = vpop.permute.xlu0 %2571
  %2573 = vrot.lane.b32.xlu0 %v2300, 8
  %v2574 = vpop.permute.xlu0 %2573
  %2575 = vrot.lane.b32.xlu0 %v2302, 8
  %v2576 = vpop.permute.xlu0 %2575
  %2577 = vrot.lane.b32.xlu0 %v2305, 8
  %v2578 = vpop.permute.xlu0 %2577
  %2579 = vrot.lane.b32.xlu0 %v2307, 8
  %v2580 = vpop.permute.xlu0 %2579
  %2581 = vrot.lane.b32.xlu0 %v2310, 8
  %v2582 = vpop.permute.xlu0 %2581
  %2583 = vrot.lane.b32.xlu0 %v2312, 8
  %v2584 = vpop.permute.xlu0 %2583
  %2585 = vrot.lane.b32.xlu0 %v2315, 8
  %v2586 = vpop.permute.xlu0 %2585
  %2587 = vrot.lane.b32.xlu0 %v2317, 8
  %v2588 = vpop.permute.xlu0 %2587
  %2589 = vrot.lane.b32.xlu0 %v2320, 8
  %v2590 = vpop.permute.xlu0 %2589
  %2591 = vrot.lane.b32.xlu0 %v2322, 8
  %v2592 = vpop.permute.xlu0 %2591
  %2593 = vrot.lane.b32.xlu0 %v2325, 8
  %v2594 = vpop.permute.xlu0 %2593
  %2595 = vrot.lane.b32.xlu0 %v2327, 8
  %v2596 = vpop.permute.xlu0 %2595
  %2597 = vrot.lane.b32.xlu0 %v2330, 8
  %v2598 = vpop.permute.xlu0 %2597
  %2599 = vrot.lane.b32.xlu0 %v2332, 8
  %v2600 = vpop.permute.xlu0 %2599
  %2601 = vrot.lane.b32.xlu0 %v2335, 8
  %v2602 = vpop.permute.xlu0 %2601
  %2603 = vrot.lane.b32.xlu0 %v2337, 8
  %v2604 = vpop.permute.xlu0 %2603
  %2605 = vrot.lane.b32.xlu0 %v2340, 8
  %v2606 = vpop.permute.xlu0 %2605
  %2607 = vrot.lane.b32.xlu0 %v2342, 8
  %v2608 = vpop.permute.xlu0 %2607
  %2609 = vrot.lane.b32.xlu0 %v2345, 8
  %v2610 = vpop.permute.xlu0 %2609
  %2611 = vrot.lane.b32.xlu0 %v2347, 8
  %v2612 = vpop.permute.xlu0 %2611
  %2613 = vrot.lane.b32.xlu0 %v2350, 8
  %v2614 = vpop.permute.xlu0 %2613
  %2615 = vrot.lane.b32.xlu0 %v2352, 8
  %v2616 = vpop.permute.xlu0 %2615
  %2617 = vrot.lane.b32.xlu0 %v2355, 8
  %v2618 = vpop.permute.xlu0 %2617
  %2619 = vrot.lane.b32.xlu0 %v2357, 8
  %v2620 = vpop.permute.xlu0 %2619
  %2621 = vrot.lane.b32.xlu0 %v2360, 8
  %v2622 = vpop.permute.xlu0 %2621
  %2623 = vrot.lane.b32.xlu0 %v2362, 8
  %v2624 = vpop.permute.xlu0 %2623
  %2625 = vrot.lane.b32.xlu0 %v2365, 8
  %v2626 = vpop.permute.xlu0 %2625
  %2627 = vrot.lane.b32.xlu0 %v2367, 8
  %v2628 = vpop.permute.xlu0 %2627
  %2629 = vrot.lane.b32.xlu0 %v2370, 8
  %v2630 = vpop.permute.xlu0 %2629
  %2631 = vrot.lane.b32.xlu0 %v2372, 8
  %v2632 = vpop.permute.xlu0 %2631
  %2633 = vrot.lane.b32.xlu0 %v2375, 8
  %v2634 = vpop.permute.xlu0 %2633
  %2635 = vrot.lane.b32.xlu0 %v2377, 8
  %v2636 = vpop.permute.xlu0 %2635
  %2637 = vrot.lane.b32.xlu0 %v2380, 8
  %v2638 = vpop.permute.xlu0 %2637
  %2639 = vrot.lane.b32.xlu0 %v2382, 8
  %v2640 = vpop.permute.xlu0 %2639
  %2641 = vrot.lane.b32.xlu0 %v2385, 8
  %v2642 = vpop.permute.xlu0 %2641
  %2643 = vrot.lane.b32.xlu0 %v2387, 8
  %v2644 = vpop.permute.xlu0 %2643
  %2645 = vrot.lane.b32.xlu0 %v2390, 8
  %v2646 = vpop.permute.xlu0 %2645
  %2647 = vrot.lane.b32.xlu0 %v2392, 8
  %v2648 = vpop.permute.xlu0 %2647
  %2649 = vrot.lane.b32.xlu0 %v2395, 8
  %v2650 = vpop.permute.xlu0 %2649
  %2651 = vrot.lane.b32.xlu0 %v2397, 8
  %v2652 = vpop.permute.xlu0 %2651
  %2653 = vrot.lane.b32.xlu0 %v2400, 8
  %v2654 = vpop.permute.xlu0 %2653
  %2655 = vrot.lane.b32.xlu0 %v2402, 8
  %v2656 = vpop.permute.xlu0 %2655
  %2657 = vrot.lane.b32.xlu0 %v2405, 8
  %v2658 = vpop.permute.xlu0 %2657
  %2659 = vrot.lane.b32.xlu0 %v2407, 8
  %v2660 = vpop.permute.xlu0 %2659
  %2661 = vrot.lane.b32.xlu0 %v2410, 8
  %v2662 = vpop.permute.xlu0 %2661
  %2663 = vrot.lane.b32.xlu0 %v2412, 8
  %v2664 = vpop.permute.xlu0 %2663
  %2665 = vrot.lane.b32.xlu0 %v2415, 8
  %v2666 = vpop.permute.xlu0 %2665
  %2667 = vrot.lane.b32.xlu0 %v2417, 8
  %v2668 = vpop.permute.xlu0 %2667
  %2669 = vrot.lane.b32.xlu0 %v2420, 8
  %v2670 = vpop.permute.xlu0 %2669
  %2671 = vrot.lane.b32.xlu0 %v2422, 8
  %v2672 = vpop.permute.xlu0 %2671
  %2673 = vrot.lane.b32.xlu0 %v2425, 8
  %v2674 = vpop.permute.xlu0 %2673
  %2675 = vrot.lane.b32.xlu0 %v2427, 8
  %v2676 = vpop.permute.xlu0 %2675
  %2677 = vrot.lane.b32.xlu0 %v2430, 8
  %v2678 = vpop.permute.xlu0 %2677
  %2679 = vrot.lane.b32.xlu0 %v2432, 8
  %v2680 = vpop.permute.xlu0 %2679
  %2681 = vrot.lane.b32.xlu0 %v2435, 8
  %v2682 = vpop.permute.xlu0 %2681
  %2683 = vrot.lane.b32.xlu0 %v2437, 8
  %v2684 = vpop.permute.xlu0 %2683
  %2685 = vrot.lane.b32.xlu0 %v2440, 8
  %v2686 = vpop.permute.xlu0 %2685
  %2687 = vrot.lane.b32.xlu0 %v2442, 8
  %v2688 = vpop.permute.xlu0 %2687
  %2689 = vrot.lane.b32.xlu0 %v2445, 8
  %v2690 = vpop.permute.xlu0 %2689
  %2691 = vrot.lane.b32.xlu0 %v2447, 8
  %v2692 = vpop.permute.xlu0 %2691
  %2693 = vrot.lane.b32.xlu0 %v2450, 8
  %v2694 = vpop.permute.xlu0 %2693
  %2695 = vrot.lane.b32.xlu0 %v2452, 8
  %v2696 = vpop.permute.xlu0 %2695
  %vm2819 = vcmask 1045504
  %v2820 = vrot.slane %v1895, 2
  %v2821 = vrot.slane %v1512, 2
  %v2822 = vsel %vm2819, %v2820, %v2821
  %v2823 = vrot.slane %v1960, 2
  %v2824 = vsel %vm2819, %v2821, %v2823
  %v2825 = vrot.slane %v1896, 2
  %v2826 = vrot.slane %v1515, 2
  %v2827 = vsel %vm2819, %v2825, %v2826
  %v2828 = vrot.slane %v1961, 2
  %v2829 = vsel %vm2819, %v2826, %v2828
  %v2830 = vrot.slane %v1897, 2
  %v2831 = vrot.slane %v1518, 2
  %v2832 = vsel %vm2819, %v2830, %v2831
  %v2833 = vrot.slane %v1962, 2
  %v2834 = vsel %vm2819, %v2831, %v2833
  %v2835 = vrot.slane %v1898, 2
  %v2836 = vrot.slane %v1521, 2
  %v2837 = vsel %vm2819, %v2835, %v2836
  %v2838 = vrot.slane %v1963, 2
  %v2839 = vsel %vm2819, %v2836, %v2838
  %v2840 = vrot.slane %v1899, 2
  %v2841 = vrot.slane %v1524, 2
  %v2842 = vsel %vm2819, %v2840, %v2841
  %v2843 = vrot.slane %v1964, 2
  %v2844 = vsel %vm2819, %v2841, %v2843
  %v2845 = vrot.slane %v1900, 2
  %v2846 = vrot.slane %v1527, 2
  %v2847 = vsel %vm2819, %v2845, %v2846
  %v2848 = vrot.slane %v1965, 2
  %v2849 = vsel %vm2819, %v2846, %v2848
  %v2850 = vrot.slane %v1901, 2
  %v2851 = vrot.slane %v1530, 2
  %v2852 = vsel %vm2819, %v2850, %v2851
  %v2853 = vrot.slane %v1966, 2
  %v2854 = vsel %vm2819, %v2851, %v2853
  %v2855 = vrot.slane %v1902, 2
  %v2856 = vrot.slane %v1533, 2
  %v2857 = vsel %vm2819, %v2855, %v2856
  %v2858 = vrot.slane %v1967, 2
  %v2859 = vsel %vm2819, %v2856, %v2858
  %v2860 = vrot.slane %v1903, 2
  %v2861 = vrot.slane %v1536, 2
  %v2862 = vsel %vm2819, %v2860, %v2861
  %v2863 = vrot.slane %v1968, 2
  %v2864 = vsel %vm2819, %v2861, %v2863
  %v2865 = vrot.slane %v1904, 2
  %v2866 = vrot.slane %v1539, 2
  %v2867 = vsel %vm2819, %v2865, %v2866
  %v2868 = vrot.slane %v1969, 2
  %v2869 = vsel %vm2819, %v2866, %v2868
  %v2870 = vrot.slane %v1905, 2
  %v2871 = vrot.slane %v1542, 2
  %v2872 = vsel %vm2819, %v2870, %v2871
  %v2873 = vrot.slane %v1970, 2
  %v2874 = vsel %vm2819, %v2871, %v2873
  %v2875 = vrot.slane %v1906, 2
  %v2876 = vrot.slane %v1545, 2
  %v2877 = vsel %vm2819, %v2875, %v2876
  %v2878 = vrot.slane %v1971, 2
  %v2879 = vsel %vm2819, %v2876, %v2878
  %v2880 = vrot.slane %v1907, 2
  %v2881 = vrot.slane %v1548, 2
  %v2882 = vsel %vm2819, %v2880, %v2881
  %v2883 = vrot.slane %v1972, 2
  %v2884 = vsel %vm2819, %v2881, %v2883
  %v2885 = vrot.slane %v1908, 2
  %v2886 = vrot.slane %v1551, 2
  %v2887 = vsel %vm2819, %v2885, %v2886
  %v2888 = vrot.slane %v1973, 2
  %v2889 = vsel %vm2819, %v2886, %v2888
  %v2890 = vrot.slane %v1909, 2
  %v2891 = vrot.slane %v1554, 2
  %v2892 = vsel %vm2819, %v2890, %v2891
  %v2893 = vrot.slane %v1974, 2
  %v2894 = vsel %vm2819, %v2891, %v2893
  %v2895 = vrot.slane %v1910, 2
  %v2896 = vrot.slane %v1557, 2
  %v2897 = vsel %vm2819, %v2895, %v2896
  %v2898 = vrot.slane %v1975, 2
  %v2899 = vsel %vm2819, %v2896, %v2898
  %v2900 = vrot.slane %v1912, 2
  %v2901 = vrot.slane %v1563, 2
  %v2902 = vsel %vm2819, %v2900, %v2901
  %v2903 = vrot.slane %v1977, 2
  %v2904 = vsel %vm2819, %v2901, %v2903
  %v2905 = vrot.slane %v1913, 2
  %v2906 = vrot.slane %v1566, 2
  %v2907 = vsel %vm2819, %v2905, %v2906
  %v2908 = vrot.slane %v1978, 2
  %v2909 = vsel %vm2819, %v2906, %v2908
  %v2910 = vrot.slane %v1914, 2
  %v2911 = vrot.slane %v1569, 2
  %v2912 = vsel %vm2819, %v2910, %v2911
  %v2913 = vrot.slane %v1979, 2
  %v2914 = vsel %vm2819, %v2911, %v2913
  %v2915 = vrot.slane %v1915, 2
  %v2916 = vrot.slane %v1572, 2
  %v2917 = vsel %vm2819, %v2915, %v2916
  %v2918 = vrot.slane %v1980, 2
  %v2919 = vsel %vm2819, %v2916, %v2918
  %v2920 = vrot.slane %v1916, 2
  %v2921 = vrot.slane %v1575, 2
  %v2922 = vsel %vm2819, %v2920, %v2921
  %v2923 = vrot.slane %v1981, 2
  %v2924 = vsel %vm2819, %v2921, %v2923
  %v2925 = vrot.slane %v1917, 2
  %v2926 = vrot.slane %v1578, 2
  %v2927 = vsel %vm2819, %v2925, %v2926
  %v2928 = vrot.slane %v1982, 2
  %v2929 = vsel %vm2819, %v2926, %v2928
  %v2930 = vrot.slane %v1918, 2
  %v2931 = vrot.slane %v1581, 2
  %v2932 = vsel %vm2819, %v2930, %v2931
  %v2933 = vrot.slane %v1983, 2
  %v2934 = vsel %vm2819, %v2931, %v2933
  %v2935 = vrot.slane %v1919, 2
  %v2936 = vrot.slane %v1584, 2
  %v2937 = vsel %vm2819, %v2935, %v2936
  %v2938 = vrot.slane %v1984, 2
  %v2939 = vsel %vm2819, %v2936, %v2938
  %v2940 = vrot.slane %v1920, 2
  %v2941 = vrot.slane %v1587, 2
  %v2942 = vsel %vm2819, %v2940, %v2941
  %v2943 = vrot.slane %v1985, 2
  %v2944 = vsel %vm2819, %v2941, %v2943
  %v2945 = vrot.slane %v1921, 2
  %v2946 = vrot.slane %v1590, 2
  %v2947 = vsel %vm2819, %v2945, %v2946
  %v2948 = vrot.slane %v1986, 2
  %v2949 = vsel %vm2819, %v2946, %v2948
  %v2950 = vrot.slane %v1922, 2
  %v2951 = vrot.slane %v1593, 2
  %v2952 = vsel %vm2819, %v2950, %v2951
  %v2953 = vrot.slane %v1987, 2
  %v2954 = vsel %vm2819, %v2951, %v2953
  %v2955 = vrot.slane %v1923, 2
  %v2956 = vrot.slane %v1596, 2
  %v2957 = vsel %vm2819, %v2955, %v2956
  %v2958 = vrot.slane %v1988, 2
  %v2959 = vsel %vm2819, %v2956, %v2958
  %v2960 = vrot.slane %v1924, 2
  %v2961 = vrot.slane %v1599, 2
  %v2962 = vsel %vm2819, %v2960, %v2961
  %v2963 = vrot.slane %v1989, 2
  %v2964 = vsel %vm2819, %v2961, %v2963
  %v2965 = vrot.slane %v1925, 2
  %v2966 = vrot.slane %v1602, 2
  %v2967 = vsel %vm2819, %v2965, %v2966
  %v2968 = vrot.slane %v1990, 2
  %v2969 = vsel %vm2819, %v2966, %v2968
  %v2970 = vrot.slane %v1926, 2
  %v2971 = vrot.slane %v1605, 2
  %v2972 = vsel %vm2819, %v2970, %v2971
  %v2973 = vrot.slane %v1991, 2
  %v2974 = vsel %vm2819, %v2971, %v2973
  %v2975 = vrot.slane %v1928, 2
  %v2976 = vrot.slane %v1611, 2
  %v2977 = vsel %vm2819, %v2975, %v2976
  %v2978 = vrot.slane %v1993, 2
  %v2979 = vsel %vm2819, %v2976, %v2978
  %v2980 = vrot.slane %v1929, 2
  %v2981 = vrot.slane %v1614, 2
  %v2982 = vsel %vm2819, %v2980, %v2981
  %v2983 = vrot.slane %v1994, 2
  %v2984 = vsel %vm2819, %v2981, %v2983
  %v2985 = vrot.slane %v1930, 2
  %v2986 = vrot.slane %v1617, 2
  %v2987 = vsel %vm2819, %v2985, %v2986
  %v2988 = vrot.slane %v1995, 2
  %v2989 = vsel %vm2819, %v2986, %v2988
  %v2990 = vrot.slane %v1931, 2
  %v2991 = vrot.slane %v1620, 2
  %v2992 = vsel %vm2819, %v2990, %v2991
  %v2993 = vrot.slane %v1996, 2
  %v2994 = vsel %vm2819, %v2991, %v2993
  %v2995 = vrot.slane %v1932, 2
  %v2996 = vrot.slane %v1623, 2
  %v2997 = vsel %vm2819, %v2995, %v2996
  %v2998 = vrot.slane %v1997, 2
  %v2999 = vsel %vm2819, %v2996, %v2998
  %v3000 = vrot.slane %v1933, 2
  %v3001 = vrot.slane %v1626, 2
  %v3002 = vsel %vm2819, %v3000, %v3001
  %v3003 = vrot.slane %v1998, 2
  %v3004 = vsel %vm2819, %v3001, %v3003
  %v3005 = vrot.slane %v1934, 2
  %v3006 = vrot.slane %v1629, 2
  %v3007 = vsel %vm2819, %v3005, %v3006
  %v3008 = vrot.slane %v1999, 2
  %v3009 = vsel %vm2819, %v3006, %v3008
  %v3010 = vrot.slane %v1935, 2
  %v3011 = vrot.slane %v1632, 2
  %v3012 = vsel %vm2819, %v3010, %v3011
  %v3013 = vrot.slane %v2000, 2
  %v3014 = vsel %vm2819, %v3011, %v3013
  %v3015 = vrot.slane %v1936, 2
  %v3016 = vrot.slane %v1635, 2
  %v3017 = vsel %vm2819, %v3015, %v3016
  %v3018 = vrot.slane %v2001, 2
  %v3019 = vsel %vm2819, %v3016, %v3018
  %v3020 = vrot.slane %v1937, 2
  %v3021 = vrot.slane %v1638, 2
  %v3022 = vsel %vm2819, %v3020, %v3021
  %v3023 = vrot.slane %v2002, 2
  %v3024 = vsel %vm2819, %v3021, %v3023
  %v3025 = vrot.slane %v1938, 2
  %v3026 = vrot.slane %v1641, 2
  %v3027 = vsel %vm2819, %v3025, %v3026
  %v3028 = vrot.slane %v2003, 2
  %v3029 = vsel %vm2819, %v3026, %v3028
  %v3030 = vrot.slane %v1939, 2
  %v3031 = vrot.slane %v1644, 2
  %v3032 = vsel %vm2819, %v3030, %v3031
  %v3033 = vrot.slane %v2004, 2
  %v3034 = vsel %vm2819, %v3031, %v3033
  %v3035 = vrot.slane %v1940, 2
  %v3036 = vrot.slane %v1647, 2
  %v3037 = vsel %vm2819, %v3035, %v3036
  %v3038 = vrot.slane %v2005, 2
  %v3039 = vsel %vm2819, %v3036, %v3038
  %v3040 = vrot.slane %v1941, 2
  %v3041 = vrot.slane %v1650, 2
  %v3042 = vsel %vm2819, %v3040, %v3041
  %v3043 = vrot.slane %v2006, 2
  %v3044 = vsel %vm2819, %v3041, %v3043
  %v3045 = vrot.slane %v1942, 2
  %v3046 = vrot.slane %v1653, 2
  %v3047 = vsel %vm2819, %v3045, %v3046
  %v3048 = vrot.slane %v2007, 2
  %v3049 = vsel %vm2819, %v3046, %v3048
  %v3050 = vrot.slane %v1944, 2
  %v3051 = vrot.slane %v1659, 2
  %v3052 = vsel %vm2819, %v3050, %v3051
  %v3053 = vrot.slane %v2009, 2
  %v3054 = vsel %vm2819, %v3051, %v3053
  %v3055 = vrot.slane %v1945, 2
  %v3056 = vrot.slane %v1662, 2
  %v3057 = vsel %vm2819, %v3055, %v3056
  %v3058 = vrot.slane %v2010, 2
  %v3059 = vsel %vm2819, %v3056, %v3058
  %v3060 = vrot.slane %v1946, 2
  %v3061 = vrot.slane %v1665, 2
  %v3062 = vsel %vm2819, %v3060, %v3061
  %v3063 = vrot.slane %v2011, 2
  %v3064 = vsel %vm2819, %v3061, %v3063
  %v3065 = vrot.slane %v1947, 2
  %v3066 = vrot.slane %v1668, 2
  %v3067 = vsel %vm2819, %v3065, %v3066
  %v3068 = vrot.slane %v2012, 2
  %v3069 = vsel %vm2819, %v3066, %v3068
  %v3070 = vrot.slane %v1948, 2
  %v3071 = vrot.slane %v1671, 2
  %v3072 = vsel %vm2819, %v3070, %v3071
  %v3073 = vrot.slane %v2013, 2
  %v3074 = vsel %vm2819, %v3071, %v3073
  %v3075 = vrot.slane %v1949, 2
  %v3076 = vrot.slane %v1674, 2
  %v3077 = vsel %vm2819, %v3075, %v3076
  %v3078 = vrot.slane %v2014, 2
  %v3079 = vsel %vm2819, %v3076, %v3078
  %v3080 = vrot.slane %v1950, 2
  %v3081 = vrot.slane %v1677, 2
  %v3082 = vsel %vm2819, %v3080, %v3081
  %v3083 = vrot.slane %v2015, 2
  %v3084 = vsel %vm2819, %v3081, %v3083
  %v3085 = vrot.slane %v1951, 2
  %v3086 = vrot.slane %v1680, 2
  %v3087 = vsel %vm2819, %v3085, %v3086
  %v3088 = vrot.slane %v2016, 2
  %v3089 = vsel %vm2819, %v3086, %v3088
  %v3090 = vrot.slane %v1952, 2
  %v3091 = vrot.slane %v1683, 2
  %v3092 = vsel %vm2819, %v3090, %v3091
  %v3093 = vrot.slane %v2017, 2
  %v3094 = vsel %vm2819, %v3091, %v3093
  %v3095 = vrot.slane %v1953, 2
  %v3096 = vrot.slane %v1686, 2
  %v3097 = vsel %vm2819, %v3095, %v3096
  %v3098 = vrot.slane %v2018, 2
  %v3099 = vsel %vm2819, %v3096, %v3098
  %v3100 = vrot.slane %v1954, 2
  %v3101 = vrot.slane %v1689, 2
  %v3102 = vsel %vm2819, %v3100, %v3101
  %v3103 = vrot.slane %v2019, 2
  %v3104 = vsel %vm2819, %v3101, %v3103
  %v3105 = vrot.slane %v1955, 2
  %v3106 = vrot.slane %v1692, 2
  %v3107 = vsel %vm2819, %v3105, %v3106
  %v3108 = vrot.slane %v2020, 2
  %v3109 = vsel %vm2819, %v3106, %v3108
  %v3110 = vrot.slane %v1956, 2
  %v3111 = vrot.slane %v1695, 2
  %v3112 = vsel %vm2819, %v3110, %v3111
  %v3113 = vrot.slane %v2021, 2
  %v3114 = vsel %vm2819, %v3111, %v3113
  %v3115 = vrot.slane %v1957, 2
  %v3116 = vrot.slane %v1698, 2
  %v3117 = vsel %vm2819, %v3115, %v3116
  %v3118 = vrot.slane %v2022, 2
  %v3119 = vsel %vm2819, %v3116, %v3118
  %v3120 = vrot.slane %v1958, 2
  %v3121 = vrot.slane %v1701, 2
  %v3122 = vsel %vm2819, %v3120, %v3121
  %v3123 = vrot.slane %v2023, 2
  %v3124 = vsel %vm2819, %v3121, %v3123
  %3125 = vrot.lane.b32.xlu0 %v2822, 16
  %v3126 = vpop.permute.xlu0 %3125
  %3127 = vrot.lane.b32.xlu0 %v2824, 16
  %v3128 = vpop.permute.xlu0 %3127
  %3129 = vrot.lane.b32.xlu0 %v2827, 16
  %v3130 = vpop.permute.xlu0 %3129
  %3131 = vrot.lane.b32.xlu0 %v2829, 16
  %v3132 = vpop.permute.xlu0 %3131
  %3133 = vrot.lane.b32.xlu0 %v2832, 16
  %v3134 = vpop.permute.xlu0 %3133
  %3135 = vrot.lane.b32.xlu0 %v2834, 16
  %v3136 = vpop.permute.xlu0 %3135
  %3137 = vrot.lane.b32.xlu0 %v2837, 16
  %v3138 = vpop.permute.xlu0 %3137
  %3139 = vrot.lane.b32.xlu0 %v2839, 16
  %v3140 = vpop.permute.xlu0 %3139
  %3141 = vrot.lane.b32.xlu0 %v2842, 16
  %v3142 = vpop.permute.xlu0 %3141
  %3143 = vrot.lane.b32.xlu0 %v2844, 16
  %v3144 = vpop.permute.xlu0 %3143
  %3145 = vrot.lane.b32.xlu0 %v2847, 16
  %v3146 = vpop.permute.xlu0 %3145
  %3147 = vrot.lane.b32.xlu0 %v2849, 16
  %v3148 = vpop.permute.xlu0 %3147
  %3149 = vrot.lane.b32.xlu0 %v2852, 16
  %v3150 = vpop.permute.xlu0 %3149
  %3151 = vrot.lane.b32.xlu0 %v2854, 16
  %v3152 = vpop.permute.xlu0 %3151
  %3153 = vrot.lane.b32.xlu0 %v2857, 16
  %v3154 = vpop.permute.xlu0 %3153
  %3155 = vrot.lane.b32.xlu0 %v2859, 16
  %v3156 = vpop.permute.xlu0 %3155
  %3157 = vrot.lane.b32.xlu0 %v2862, 16
  %v3158 = vpop.permute.xlu0 %3157
  %3159 = vrot.lane.b32.xlu0 %v2864, 16
  %v3160 = vpop.permute.xlu0 %3159
  %3161 = vrot.lane.b32.xlu0 %v2867, 16
  %v3162 = vpop.permute.xlu0 %3161
  %3163 = vrot.lane.b32.xlu0 %v2869, 16
  %v3164 = vpop.permute.xlu0 %3163
  %3165 = vrot.lane.b32.xlu0 %v2872, 16
  %v3166 = vpop.permute.xlu0 %3165
  %3167 = vrot.lane.b32.xlu0 %v2874, 16
  %v3168 = vpop.permute.xlu0 %3167
  %3169 = vrot.lane.b32.xlu0 %v2877, 16
  %v3170 = vpop.permute.xlu0 %3169
  %3171 = vrot.lane.b32.xlu0 %v2879, 16
  %v3172 = vpop.permute.xlu0 %3171
  %3173 = vrot.lane.b32.xlu0 %v2882, 16
  %v3174 = vpop.permute.xlu0 %3173
  %3175 = vrot.lane.b32.xlu0 %v2884, 16
  %v3176 = vpop.permute.xlu0 %3175
  %3177 = vrot.lane.b32.xlu0 %v2887, 16
  %v3178 = vpop.permute.xlu0 %3177
  %3179 = vrot.lane.b32.xlu0 %v2889, 16
  %v3180 = vpop.permute.xlu0 %3179
  %3181 = vrot.lane.b32.xlu0 %v2892, 16
  %v3182 = vpop.permute.xlu0 %3181
  %3183 = vrot.lane.b32.xlu0 %v2894, 16
  %v3184 = vpop.permute.xlu0 %3183
  %3185 = vrot.lane.b32.xlu0 %v2897, 16
  %v3186 = vpop.permute.xlu0 %3185
  %3187 = vrot.lane.b32.xlu0 %v2899, 16
  %v3188 = vpop.permute.xlu0 %3187
  %3189 = vrot.lane.b32.xlu0 %v2902, 16
  %v3190 = vpop.permute.xlu0 %3189
  %3191 = vrot.lane.b32.xlu0 %v2904, 16
  %v3192 = vpop.permute.xlu0 %3191
  %3193 = vrot.lane.b32.xlu0 %v2907, 16
  %v3194 = vpop.permute.xlu0 %3193
  %3195 = vrot.lane.b32.xlu0 %v2909, 16
  %v3196 = vpop.permute.xlu0 %3195
  %3197 = vrot.lane.b32.xlu0 %v2912, 16
  %v3198 = vpop.permute.xlu0 %3197
  %3199 = vrot.lane.b32.xlu0 %v2914, 16
  %v3200 = vpop.permute.xlu0 %3199
  %3201 = vrot.lane.b32.xlu0 %v2917, 16
  %v3202 = vpop.permute.xlu0 %3201
  %3203 = vrot.lane.b32.xlu0 %v2919, 16
  %v3204 = vpop.permute.xlu0 %3203
  %3205 = vrot.lane.b32.xlu0 %v2922, 16
  %v3206 = vpop.permute.xlu0 %3205
  %3207 = vrot.lane.b32.xlu0 %v2924, 16
  %v3208 = vpop.permute.xlu0 %3207
  %3209 = vrot.lane.b32.xlu0 %v2927, 16
  %v3210 = vpop.permute.xlu0 %3209
  %3211 = vrot.lane.b32.xlu0 %v2929, 16
  %v3212 = vpop.permute.xlu0 %3211
  %3213 = vrot.lane.b32.xlu0 %v2932, 16
  %v3214 = vpop.permute.xlu0 %3213
  %3215 = vrot.lane.b32.xlu0 %v2934, 16
  %v3216 = vpop.permute.xlu0 %3215
  %3217 = vrot.lane.b32.xlu0 %v2937, 16
  %v3218 = vpop.permute.xlu0 %3217
  %3219 = vrot.lane.b32.xlu0 %v2939, 16
  %v3220 = vpop.permute.xlu0 %3219
  %3221 = vrot.lane.b32.xlu0 %v2942, 16
  %v3222 = vpop.permute.xlu0 %3221
  %3223 = vrot.lane.b32.xlu0 %v2944, 16
  %v3224 = vpop.permute.xlu0 %3223
  %3225 = vrot.lane.b32.xlu0 %v2947, 16
  %v3226 = vpop.permute.xlu0 %3225
  %3227 = vrot.lane.b32.xlu0 %v2949, 16
  %v3228 = vpop.permute.xlu0 %3227
  %3229 = vrot.lane.b32.xlu0 %v2952, 16
  %v3230 = vpop.permute.xlu0 %3229
  %3231 = vrot.lane.b32.xlu0 %v2954, 16
  %v3232 = vpop.permute.xlu0 %3231
  %3233 = vrot.lane.b32.xlu0 %v2957, 16
  %v3234 = vpop.permute.xlu0 %3233
  %3235 = vrot.lane.b32.xlu0 %v2959, 16
  %v3236 = vpop.permute.xlu0 %3235
  %3237 = vrot.lane.b32.xlu0 %v2962, 16
  %v3238 = vpop.permute.xlu0 %3237
  %3239 = vrot.lane.b32.xlu0 %v2964, 16
  %v3240 = vpop.permute.xlu0 %3239
  %3241 = vrot.lane.b32.xlu0 %v2967, 16
  %v3242 = vpop.permute.xlu0 %3241
  %3243 = vrot.lane.b32.xlu0 %v2969, 16
  %v3244 = vpop.permute.xlu0 %3243
  %3245 = vrot.lane.b32.xlu0 %v2972, 16
  %v3246 = vpop.permute.xlu0 %3245
  %3247 = vrot.lane.b32.xlu0 %v2974, 16
  %v3248 = vpop.permute.xlu0 %3247
  %3249 = vrot.lane.b32.xlu0 %v2977, 16
  %v3250 = vpop.permute.xlu0 %3249
  %3251 = vrot.lane.b32.xlu0 %v2979, 16
  %v3252 = vpop.permute.xlu0 %3251
  %3253 = vrot.lane.b32.xlu0 %v2982, 16
  %v3254 = vpop.permute.xlu0 %3253
  %3255 = vrot.lane.b32.xlu0 %v2984, 16
  %v3256 = vpop.permute.xlu0 %3255
  %3257 = vrot.lane.b32.xlu0 %v2987, 16
  %v3258 = vpop.permute.xlu0 %3257
  %3259 = vrot.lane.b32.xlu0 %v2989, 16
  %v3260 = vpop.permute.xlu0 %3259
  %3261 = vrot.lane.b32.xlu0 %v2992, 16
  %v3262 = vpop.permute.xlu0 %3261
  %3263 = vrot.lane.b32.xlu0 %v2994, 16
  %v3264 = vpop.permute.xlu0 %3263
  %3265 = vrot.lane.b32.xlu0 %v2997, 16
  %v3266 = vpop.permute.xlu0 %3265
  %3267 = vrot.lane.b32.xlu0 %v2999, 16
  %v3268 = vpop.permute.xlu0 %3267
  %3269 = vrot.lane.b32.xlu0 %v3002, 16
  %v3270 = vpop.permute.xlu0 %3269
  %3271 = vrot.lane.b32.xlu0 %v3004, 16
  %v3272 = vpop.permute.xlu0 %3271
  %3273 = vrot.lane.b32.xlu0 %v3007, 16
  %v3274 = vpop.permute.xlu0 %3273
  %3275 = vrot.lane.b32.xlu0 %v3009, 16
  %v3276 = vpop.permute.xlu0 %3275
  %3277 = vrot.lane.b32.xlu0 %v3012, 16
  %v3278 = vpop.permute.xlu0 %3277
  %3279 = vrot.lane.b32.xlu0 %v3014, 16
  %v3280 = vpop.permute.xlu0 %3279
  %3281 = vrot.lane.b32.xlu0 %v3017, 16
  %v3282 = vpop.permute.xlu0 %3281
  %3283 = vrot.lane.b32.xlu0 %v3019, 16
  %v3284 = vpop.permute.xlu0 %3283
  %3285 = vrot.lane.b32.xlu0 %v3022, 16
  %v3286 = vpop.permute.xlu0 %3285
  %3287 = vrot.lane.b32.xlu0 %v3024, 16
  %v3288 = vpop.permute.xlu0 %3287
  %3289 = vrot.lane.b32.xlu0 %v3027, 16
  %v3290 = vpop.permute.xlu0 %3289
  %3291 = vrot.lane.b32.xlu0 %v3029, 16
  %v3292 = vpop.permute.xlu0 %3291
  %3293 = vrot.lane.b32.xlu0 %v3032, 16
  %v3294 = vpop.permute.xlu0 %3293
  %3295 = vrot.lane.b32.xlu0 %v3034, 16
  %v3296 = vpop.permute.xlu0 %3295
  %3297 = vrot.lane.b32.xlu0 %v3037, 16
  %v3298 = vpop.permute.xlu0 %3297
  %3299 = vrot.lane.b32.xlu0 %v3039, 16
  %v3300 = vpop.permute.xlu0 %3299
  %3301 = vrot.lane.b32.xlu0 %v3042, 16
  %v3302 = vpop.permute.xlu0 %3301
  %3303 = vrot.lane.b32.xlu0 %v3044, 16
  %v3304 = vpop.permute.xlu0 %3303
  %3305 = vrot.lane.b32.xlu0 %v3047, 16
  %v3306 = vpop.permute.xlu0 %3305
  %3307 = vrot.lane.b32.xlu0 %v3049, 16
  %v3308 = vpop.permute.xlu0 %3307
  %3309 = vrot.lane.b32.xlu0 %v3052, 16
  %v3310 = vpop.permute.xlu0 %3309
  %3311 = vrot.lane.b32.xlu0 %v3054, 16
  %v3312 = vpop.permute.xlu0 %3311
  %3313 = vrot.lane.b32.xlu0 %v3057, 16
  %v3314 = vpop.permute.xlu0 %3313
  %3315 = vrot.lane.b32.xlu0 %v3059, 16
  %v3316 = vpop.permute.xlu0 %3315
  %3317 = vrot.lane.b32.xlu0 %v3062, 16
  %v3318 = vpop.permute.xlu0 %3317
  %3319 = vrot.lane.b32.xlu0 %v3064, 16
  %v3320 = vpop.permute.xlu0 %3319
  %3321 = vrot.lane.b32.xlu0 %v3067, 16
  %v3322 = vpop.permute.xlu0 %3321
  %3323 = vrot.lane.b32.xlu0 %v3069, 16
  %v3324 = vpop.permute.xlu0 %3323
  %3325 = vrot.lane.b32.xlu0 %v3072, 16
  %v3326 = vpop.permute.xlu0 %3325
  %3327 = vrot.lane.b32.xlu0 %v3074, 16
  %v3328 = vpop.permute.xlu0 %3327
  %3329 = vrot.lane.b32.xlu0 %v3077, 16
  %v3330 = vpop.permute.xlu0 %3329
  %3331 = vrot.lane.b32.xlu0 %v3079, 16
  %v3332 = vpop.permute.xlu0 %3331
  %3333 = vrot.lane.b32.xlu0 %v3082, 16
  %v3334 = vpop.permute.xlu0 %3333
  %3335 = vrot.lane.b32.xlu0 %v3084, 16
  %v3336 = vpop.permute.xlu0 %3335
  %3337 = vrot.lane.b32.xlu0 %v3087, 16
  %v3338 = vpop.permute.xlu0 %3337
  %3339 = vrot.lane.b32.xlu0 %v3089, 16
  %v3340 = vpop.permute.xlu0 %3339
  %3341 = vrot.lane.b32.xlu0 %v3092, 16
  %v3342 = vpop.permute.xlu0 %3341
  %3343 = vrot.lane.b32.xlu0 %v3094, 16
  %v3344 = vpop.permute.xlu0 %3343
  %3345 = vrot.lane.b32.xlu0 %v3097, 16
  %v3346 = vpop.permute.xlu0 %3345
  %3347 = vrot.lane.b32.xlu0 %v3099, 16
  %v3348 = vpop.permute.xlu0 %3347
  %3349 = vrot.lane.b32.xlu0 %v3102, 16
  %v3350 = vpop.permute.xlu0 %3349
  %3351 = vrot.lane.b32.xlu0 %v3104, 16
  %v3352 = vpop.permute.xlu0 %3351
  %3353 = vrot.lane.b32.xlu0 %v3107, 16
  %v3354 = vpop.permute.xlu0 %3353
  %3355 = vrot.lane.b32.xlu0 %v3109, 16
  %v3356 = vpop.permute.xlu0 %3355
  %3357 = vrot.lane.b32.xlu0 %v3112, 16
  %v3358 = vpop.permute.xlu0 %3357
  %3359 = vrot.lane.b32.xlu0 %v3114, 16
  %v3360 = vpop.permute.xlu0 %3359
  %3361 = vrot.lane.b32.xlu0 %v3117, 16
  %v3362 = vpop.permute.xlu0 %3361
  %3363 = vrot.lane.b32.xlu0 %v3119, 16
  %v3364 = vpop.permute.xlu0 %3363
  %3365 = vrot.lane.b32.xlu0 %v3122, 16
  %v3366 = vpop.permute.xlu0 %3365
  %3367 = vrot.lane.b32.xlu0 %v3124, 16
  %v3368 = vpop.permute.xlu0 %3367
  %3495 = vrot.lane.b32.xlu0 %v1896, 24
  %v3496 = vpop.permute.xlu0 %3495
  %3497 = vrot.lane.b32.xlu0 %v1515, 24
  %v3498 = vpop.permute.xlu0 %3497
  %3499 = vrot.lane.b32.xlu0 %v1897, 24
  %v3500 = vpop.permute.xlu0 %3499
  %3501 = vrot.lane.b32.xlu0 %v1518, 24
  %v3502 = vpop.permute.xlu0 %3501
  %3503 = vrot.lane.b32.xlu0 %v1898, 24
  %v3504 = vpop.permute.xlu0 %3503
  %3505 = vrot.lane.b32.xlu0 %v1521, 24
  %v3506 = vpop.permute.xlu0 %3505
  %3507 = vrot.lane.b32.xlu0 %v1899, 24
  %v3508 = vpop.permute.xlu0 %3507
  %3509 = vrot.lane.b32.xlu0 %v1524, 24
  %v3510 = vpop.permute.xlu0 %3509
  %3511 = vrot.lane.b32.xlu0 %v1900, 24
  %v3512 = vpop.permute.xlu0 %3511
  %3513 = vrot.lane.b32.xlu0 %v1527, 24
  %v3514 = vpop.permute.xlu0 %3513
  %3515 = vrot.lane.b32.xlu0 %v1901, 24
  %v3516 = vpop.permute.xlu0 %3515
  %3517 = vrot.lane.b32.xlu0 %v1530, 24
  %v3518 = vpop.permute.xlu0 %3517
  %3519 = vrot.lane.b32.xlu0 %v1902, 24
  %v3520 = vpop.permute.xlu0 %3519
  %3521 = vrot.lane.b32.xlu0 %v1533, 24
  %v3522 = vpop.permute.xlu0 %3521
  %3523 = vrot.lane.b32.xlu0 %v1903, 24
  %v3524 = vpop.permute.xlu0 %3523
  %3525 = vrot.lane.b32.xlu0 %v1536, 24
  %v3526 = vpop.permute.xlu0 %3525
  %3527 = vrot.lane.b32.xlu0 %v1904, 24
  %v3528 = vpop.permute.xlu0 %3527
  %3529 = vrot.lane.b32.xlu0 %v1539, 24
  %v3530 = vpop.permute.xlu0 %3529
  %3531 = vrot.lane.b32.xlu0 %v1905, 24
  %v3532 = vpop.permute.xlu0 %3531
  %3533 = vrot.lane.b32.xlu0 %v1542, 24
  %v3534 = vpop.permute.xlu0 %3533
  %3535 = vrot.lane.b32.xlu0 %v1906, 24
  %v3536 = vpop.permute.xlu0 %3535
  %3537 = vrot.lane.b32.xlu0 %v1545, 24
  %v3538 = vpop.permute.xlu0 %3537
  %3539 = vrot.lane.b32.xlu0 %v1907, 24
  %v3540 = vpop.permute.xlu0 %3539
  %3541 = vrot.lane.b32.xlu0 %v1548, 24
  %v3542 = vpop.permute.xlu0 %3541
  %3543 = vrot.lane.b32.xlu0 %v1908, 24
  %v3544 = vpop.permute.xlu0 %3543
  %3545 = vrot.lane.b32.xlu0 %v1551, 24
  %v3546 = vpop.permute.xlu0 %3545
  %3547 = vrot.lane.b32.xlu0 %v1909, 24
  %v3548 = vpop.permute.xlu0 %3547
  %3549 = vrot.lane.b32.xlu0 %v1554, 24
  %v3550 = vpop.permute.xlu0 %3549
  %3551 = vrot.lane.b32.xlu0 %v1910, 24
  %v3552 = vpop.permute.xlu0 %3551
  %3553 = vrot.lane.b32.xlu0 %v1557, 24
  %v3554 = vpop.permute.xlu0 %3553
  %3555 = vrot.lane.b32.xlu0 %v1911, 24
  %v3556 = vpop.permute.xlu0 %3555
  %3557 = vrot.lane.b32.xlu0 %v1560, 24
  %v3558 = vpop.permute.xlu0 %3557
  %3559 = vrot.lane.b32.xlu0 %v1912, 24
  %v3560 = vpop.permute.xlu0 %3559
  %3561 = vrot.lane.b32.xlu0 %v1563, 24
  %v3562 = vpop.permute.xlu0 %3561
  %3563 = vrot.lane.b32.xlu0 %v1913, 24
  %v3564 = vpop.permute.xlu0 %3563
  %3565 = vrot.lane.b32.xlu0 %v1566, 24
  %v3566 = vpop.permute.xlu0 %3565
  %3567 = vrot.lane.b32.xlu0 %v1914, 24
  %v3568 = vpop.permute.xlu0 %3567
  %3569 = vrot.lane.b32.xlu0 %v1569, 24
  %v3570 = vpop.permute.xlu0 %3569
  %3571 = vrot.lane.b32.xlu0 %v1915, 24
  %v3572 = vpop.permute.xlu0 %3571
  %3573 = vrot.lane.b32.xlu0 %v1572, 24
  %v3574 = vpop.permute.xlu0 %3573
  %3575 = vrot.lane.b32.xlu0 %v1916, 24
  %v3576 = vpop.permute.xlu0 %3575
  %3577 = vrot.lane.b32.xlu0 %v1575, 24
  %v3578 = vpop.permute.xlu0 %3577
  %3579 = vrot.lane.b32.xlu0 %v1917, 24
  %v3580 = vpop.permute.xlu0 %3579
  %3581 = vrot.lane.b32.xlu0 %v1578, 24
  %v3582 = vpop.permute.xlu0 %3581
  %3583 = vrot.lane.b32.xlu0 %v1918, 24
  %v3584 = vpop.permute.xlu0 %3583
  %3585 = vrot.lane.b32.xlu0 %v1581, 24
  %v3586 = vpop.permute.xlu0 %3585
  %3587 = vrot.lane.b32.xlu0 %v1919, 24
  %v3588 = vpop.permute.xlu0 %3587
  %3589 = vrot.lane.b32.xlu0 %v1584, 24
  %v3590 = vpop.permute.xlu0 %3589
  %3591 = vrot.lane.b32.xlu0 %v1920, 24
  %v3592 = vpop.permute.xlu0 %3591
  %3593 = vrot.lane.b32.xlu0 %v1587, 24
  %v3594 = vpop.permute.xlu0 %3593
  %3595 = vrot.lane.b32.xlu0 %v1921, 24
  %v3596 = vpop.permute.xlu0 %3595
  %3597 = vrot.lane.b32.xlu0 %v1590, 24
  %v3598 = vpop.permute.xlu0 %3597
  %3599 = vrot.lane.b32.xlu0 %v1922, 24
  %v3600 = vpop.permute.xlu0 %3599
  %3601 = vrot.lane.b32.xlu0 %v1593, 24
  %v3602 = vpop.permute.xlu0 %3601
  %3603 = vrot.lane.b32.xlu0 %v1923, 24
  %v3604 = vpop.permute.xlu0 %3603
  %3605 = vrot.lane.b32.xlu0 %v1596, 24
  %v3606 = vpop.permute.xlu0 %3605
  %3607 = vrot.lane.b32.xlu0 %v1924, 24
  %v3608 = vpop.permute.xlu0 %3607
  %3609 = vrot.lane.b32.xlu0 %v1599, 24
  %v3610 = vpop.permute.xlu0 %3609
  %3611 = vrot.lane.b32.xlu0 %v1925, 24
  %v3612 = vpop.permute.xlu0 %3611
  %3613 = vrot.lane.b32.xlu0 %v1602, 24
  %v3614 = vpop.permute.xlu0 %3613
  %3615 = vrot.lane.b32.xlu0 %v1926, 24
  %v3616 = vpop.permute.xlu0 %3615
  %3617 = vrot.lane.b32.xlu0 %v1605, 24
  %v3618 = vpop.permute.xlu0 %3617
  %3619 = vrot.lane.b32.xlu0 %v1927, 24
  %v3620 = vpop.permute.xlu0 %3619
  %3621 = vrot.lane.b32.xlu0 %v1608, 24
  %v3622 = vpop.permute.xlu0 %3621
  %3623 = vrot.lane.b32.xlu0 %v1928, 24
  %v3624 = vpop.permute.xlu0 %3623
  %3625 = vrot.lane.b32.xlu0 %v1611, 24
  %v3626 = vpop.permute.xlu0 %3625
  %3627 = vrot.lane.b32.xlu0 %v1929, 24
  %v3628 = vpop.permute.xlu0 %3627
  %3629 = vrot.lane.b32.xlu0 %v1614, 24
  %v3630 = vpop.permute.xlu0 %3629
  %3631 = vrot.lane.b32.xlu0 %v1930, 24
  %v3632 = vpop.permute.xlu0 %3631
  %3633 = vrot.lane.b32.xlu0 %v1617, 24
  %v3634 = vpop.permute.xlu0 %3633
  %3635 = vrot.lane.b32.xlu0 %v1931, 24
  %v3636 = vpop.permute.xlu0 %3635
  %3637 = vrot.lane.b32.xlu0 %v1620, 24
  %v3638 = vpop.permute.xlu0 %3637
  %3639 = vrot.lane.b32.xlu0 %v1932, 24
  %v3640 = vpop.permute.xlu0 %3639
  %3641 = vrot.lane.b32.xlu0 %v1623, 24
  %v3642 = vpop.permute.xlu0 %3641
  %3643 = vrot.lane.b32.xlu0 %v1933, 24
  %v3644 = vpop.permute.xlu0 %3643
  %3645 = vrot.lane.b32.xlu0 %v1626, 24
  %v3646 = vpop.permute.xlu0 %3645
  %3647 = vrot.lane.b32.xlu0 %v1934, 24
  %v3648 = vpop.permute.xlu0 %3647
  %3649 = vrot.lane.b32.xlu0 %v1629, 24
  %v3650 = vpop.permute.xlu0 %3649
  %3651 = vrot.lane.b32.xlu0 %v1935, 24
  %v3652 = vpop.permute.xlu0 %3651
  %3653 = vrot.lane.b32.xlu0 %v1632, 24
  %v3654 = vpop.permute.xlu0 %3653
  %3655 = vrot.lane.b32.xlu0 %v1936, 24
  %v3656 = vpop.permute.xlu0 %3655
  %3657 = vrot.lane.b32.xlu0 %v1635, 24
  %v3658 = vpop.permute.xlu0 %3657
  %3659 = vrot.lane.b32.xlu0 %v1937, 24
  %v3660 = vpop.permute.xlu0 %3659
  %3661 = vrot.lane.b32.xlu0 %v1638, 24
  %v3662 = vpop.permute.xlu0 %3661
  %3663 = vrot.lane.b32.xlu0 %v1938, 24
  %v3664 = vpop.permute.xlu0 %3663
  %3665 = vrot.lane.b32.xlu0 %v1641, 24
  %v3666 = vpop.permute.xlu0 %3665
  %3667 = vrot.lane.b32.xlu0 %v1939, 24
  %v3668 = vpop.permute.xlu0 %3667
  %3669 = vrot.lane.b32.xlu0 %v1644, 24
  %v3670 = vpop.permute.xlu0 %3669
  %3671 = vrot.lane.b32.xlu0 %v1940, 24
  %v3672 = vpop.permute.xlu0 %3671
  %3673 = vrot.lane.b32.xlu0 %v1647, 24
  %v3674 = vpop.permute.xlu0 %3673
  %3675 = vrot.lane.b32.xlu0 %v1941, 24
  %v3676 = vpop.permute.xlu0 %3675
  %3677 = vrot.lane.b32.xlu0 %v1650, 24
  %v3678 = vpop.permute.xlu0 %3677
  %3679 = vrot.lane.b32.xlu0 %v1942, 24
  %v3680 = vpop.permute.xlu0 %3679
  %3681 = vrot.lane.b32.xlu0 %v1653, 24
  %v3682 = vpop.permute.xlu0 %3681
  %3683 = vrot.lane.b32.xlu0 %v1943, 24
  %v3684 = vpop.permute.xlu0 %3683
  %3685 = vrot.lane.b32.xlu0 %v1656, 24
  %v3686 = vpop.permute.xlu0 %3685
  %3687 = vrot.lane.b32.xlu0 %v1944, 24
  %v3688 = vpop.permute.xlu0 %3687
  %3689 = vrot.lane.b32.xlu0 %v1659, 24
  %v3690 = vpop.permute.xlu0 %3689
  %3691 = vrot.lane.b32.xlu0 %v1945, 24
  %v3692 = vpop.permute.xlu0 %3691
  %3693 = vrot.lane.b32.xlu0 %v1662, 24
  %v3694 = vpop.permute.xlu0 %3693
  %3695 = vrot.lane.b32.xlu0 %v1946, 24
  %v3696 = vpop.permute.xlu0 %3695
  %3697 = vrot.lane.b32.xlu0 %v1665, 24
  %v3698 = vpop.permute.xlu0 %3697
  %3699 = vrot.lane.b32.xlu0 %v1947, 24
  %v3700 = vpop.permute.xlu0 %3699
  %3701 = vrot.lane.b32.xlu0 %v1668, 24
  %v3702 = vpop.permute.xlu0 %3701
  %3703 = vrot.lane.b32.xlu0 %v1948, 24
  %v3704 = vpop.permute.xlu0 %3703
  %3705 = vrot.lane.b32.xlu0 %v1671, 24
  %v3706 = vpop.permute.xlu0 %3705
  %3707 = vrot.lane.b32.xlu0 %v1949, 24
  %v3708 = vpop.permute.xlu0 %3707
  %3709 = vrot.lane.b32.xlu0 %v1674, 24
  %v3710 = vpop.permute.xlu0 %3709
  %3711 = vrot.lane.b32.xlu0 %v1950, 24
  %v3712 = vpop.permute.xlu0 %3711
  %3713 = vrot.lane.b32.xlu0 %v1677, 24
  %v3714 = vpop.permute.xlu0 %3713
  %3715 = vrot.lane.b32.xlu0 %v1951, 24
  %v3716 = vpop.permute.xlu0 %3715
  %3717 = vrot.lane.b32.xlu0 %v1680, 24
  %v3718 = vpop.permute.xlu0 %3717
  %3719 = vrot.lane.b32.xlu0 %v1952, 24
  %v3720 = vpop.permute.xlu0 %3719
  %3721 = vrot.lane.b32.xlu0 %v1683, 24
  %v3722 = vpop.permute.xlu0 %3721
  %3723 = vrot.lane.b32.xlu0 %v1953, 24
  %v3724 = vpop.permute.xlu0 %3723
  %3725 = vrot.lane.b32.xlu0 %v1686, 24
  %v3726 = vpop.permute.xlu0 %3725
  %3727 = vrot.lane.b32.xlu0 %v1954, 24
  %v3728 = vpop.permute.xlu0 %3727
  %3729 = vrot.lane.b32.xlu0 %v1689, 24
  %v3730 = vpop.permute.xlu0 %3729
  %3731 = vrot.lane.b32.xlu0 %v1955, 24
  %v3732 = vpop.permute.xlu0 %3731
  %3733 = vrot.lane.b32.xlu0 %v1692, 24
  %v3734 = vpop.permute.xlu0 %3733
  %3735 = vrot.lane.b32.xlu0 %v1956, 24
  %v3736 = vpop.permute.xlu0 %3735
  %3737 = vrot.lane.b32.xlu0 %v1695, 24
  %v3738 = vpop.permute.xlu0 %3737
  %3739 = vrot.lane.b32.xlu0 %v1957, 24
  %v3740 = vpop.permute.xlu0 %3739
  %3741 = vrot.lane.b32.xlu0 %v1698, 24
  %v3742 = vpop.permute.xlu0 %3741
  %3743 = vrot.lane.b32.xlu0 %v1958, 24
  %v3744 = vpop.permute.xlu0 %3743
  %3745 = vrot.lane.b32.xlu0 %v1701, 24
  %v3746 = vpop.permute.xlu0 %3745
  %3747 = vrot.lane.b32.xlu0 %v1959, 24
  %v3748 = vpop.permute.xlu0 %3747
  %3749 = vrot.lane.b32.xlu0 %v1704, 24
  %v3750 = vpop.permute.xlu0 %3749
  %v3883 = vrot.slane %v1911, 1
  %v3884 = vrot.slane %v1560, 1
  %v3885 = vsel %vm2147, %v3883, %v3884
  %v3886 = vrot.slane %v1976, 1
  %v3887 = vsel %vm2147, %v3884, %v3886
  %v3888 = vrot.slane %v1927, 1
  %v3889 = vrot.slane %v1608, 1
  %v3890 = vsel %vm2147, %v3888, %v3889
  %v3891 = vrot.slane %v1992, 1
  %v3892 = vsel %vm2147, %v3889, %v3891
  %v3893 = vrot.slane %v1943, 1
  %v3894 = vrot.slane %v1656, 1
  %v3895 = vsel %vm2147, %v3893, %v3894
  %v3896 = vrot.slane %v2008, 1
  %v3897 = vsel %vm2147, %v3894, %v3896
  %v3898 = vrot.slane %v1959, 1
  %v3899 = vrot.slane %v1704, 1
  %v3900 = vsel %vm2147, %v3898, %v3899
  %v3901 = vrot.slane %v2024, 1
  %v3902 = vsel %vm2147, %v3899, %v3901
  %3903 = vrot.lane.b32.xlu0 %v2155, 32
  %v3904 = vpop.permute.xlu0 %3903
  %3905 = vrot.lane.b32.xlu0 %v2157, 32
  %v3906 = vpop.permute.xlu0 %3905
  %3907 = vrot.lane.b32.xlu0 %v2160, 32
  %v3908 = vpop.permute.xlu0 %3907
  %3909 = vrot.lane.b32.xlu0 %v2162, 32
  %v3910 = vpop.permute.xlu0 %3909
  %3911 = vrot.lane.b32.xlu0 %v2165, 32
  %v3912 = vpop.permute.xlu0 %3911
  %3913 = vrot.lane.b32.xlu0 %v2167, 32
  %v3914 = vpop.permute.xlu0 %3913
  %3915 = vrot.lane.b32.xlu0 %v2170, 32
  %v3916 = vpop.permute.xlu0 %3915
  %3917 = vrot.lane.b32.xlu0 %v2172, 32
  %v3918 = vpop.permute.xlu0 %3917
  %3919 = vrot.lane.b32.xlu0 %v2175, 32
  %v3920 = vpop.permute.xlu0 %3919
  %3921 = vrot.lane.b32.xlu0 %v2177, 32
  %v3922 = vpop.permute.xlu0 %3921
  %3923 = vrot.lane.b32.xlu0 %v2180, 32
  %v3924 = vpop.permute.xlu0 %3923
  %3925 = vrot.lane.b32.xlu0 %v2182, 32
  %v3926 = vpop.permute.xlu0 %3925
  %3927 = vrot.lane.b32.xlu0 %v2185, 32
  %v3928 = vpop.permute.xlu0 %3927
  %3929 = vrot.lane.b32.xlu0 %v2187, 32
  %v3930 = vpop.permute.xlu0 %3929
  %3931 = vrot.lane.b32.xlu0 %v2190, 32
  %v3932 = vpop.permute.xlu0 %3931
  %3933 = vrot.lane.b32.xlu0 %v2192, 32
  %v3934 = vpop.permute.xlu0 %3933
  %3935 = vrot.lane.b32.xlu0 %v2195, 32
  %v3936 = vpop.permute.xlu0 %3935
  %3937 = vrot.lane.b32.xlu0 %v2197, 32
  %v3938 = vpop.permute.xlu0 %3937
  %3939 = vrot.lane.b32.xlu0 %v2200, 32
  %v3940 = vpop.permute.xlu0 %3939
  %3941 = vrot.lane.b32.xlu0 %v2202, 32
  %v3942 = vpop.permute.xlu0 %3941
  %3943 = vrot.lane.b32.xlu0 %v2205, 32
  %v3944 = vpop.permute.xlu0 %3943
  %3945 = vrot.lane.b32.xlu0 %v2207, 32
  %v3946 = vpop.permute.xlu0 %3945
  %3947 = vrot.lane.b32.xlu0 %v2210, 32
  %v3948 = vpop.permute.xlu0 %3947
  %3949 = vrot.lane.b32.xlu0 %v2212, 32
  %v3950 = vpop.permute.xlu0 %3949
  %3951 = vrot.lane.b32.xlu0 %v2215, 32
  %v3952 = vpop.permute.xlu0 %3951
  %3953 = vrot.lane.b32.xlu0 %v2217, 32
  %v3954 = vpop.permute.xlu0 %3953
  %3955 = vrot.lane.b32.xlu0 %v2220, 32
  %v3956 = vpop.permute.xlu0 %3955
  %3957 = vrot.lane.b32.xlu0 %v2222, 32
  %v3958 = vpop.permute.xlu0 %3957
  %3959 = vrot.lane.b32.xlu0 %v2225, 32
  %v3960 = vpop.permute.xlu0 %3959
  %3961 = vrot.lane.b32.xlu0 %v2227, 32
  %v3962 = vpop.permute.xlu0 %3961
  %3963 = vrot.lane.b32.xlu0 %v3885, 32
  %v3964 = vpop.permute.xlu0 %3963
  %3965 = vrot.lane.b32.xlu0 %v3887, 32
  %v3966 = vpop.permute.xlu0 %3965
  %3967 = vrot.lane.b32.xlu0 %v2230, 32
  %v3968 = vpop.permute.xlu0 %3967
  %3969 = vrot.lane.b32.xlu0 %v2232, 32
  %v3970 = vpop.permute.xlu0 %3969
  %3971 = vrot.lane.b32.xlu0 %v2235, 32
  %v3972 = vpop.permute.xlu0 %3971
  %3973 = vrot.lane.b32.xlu0 %v2237, 32
  %v3974 = vpop.permute.xlu0 %3973
  %3975 = vrot.lane.b32.xlu0 %v2240, 32
  %v3976 = vpop.permute.xlu0 %3975
  %3977 = vrot.lane.b32.xlu0 %v2242, 32
  %v3978 = vpop.permute.xlu0 %3977
  %3979 = vrot.lane.b32.xlu0 %v2245, 32
  %v3980 = vpop.permute.xlu0 %3979
  %3981 = vrot.lane.b32.xlu0 %v2247, 32
  %v3982 = vpop.permute.xlu0 %3981
  %3983 = vrot.lane.b32.xlu0 %v2250, 32
  %v3984 = vpop.permute.xlu0 %3983
  %3985 = vrot.lane.b32.xlu0 %v2252, 32
  %v3986 = vpop.permute.xlu0 %3985
  %3987 = vrot.lane.b32.xlu0 %v2255, 32
  %v3988 = vpop.permute.xlu0 %3987
  %3989 = vrot.lane.b32.xlu0 %v2257, 32
  %v3990 = vpop.permute.xlu0 %3989
  %3991 = vrot.lane.b32.xlu0 %v2260, 32
  %v3992 = vpop.permute.xlu0 %3991
  %3993 = vrot.lane.b32.xlu0 %v2262, 32
  %v3994 = vpop.permute.xlu0 %3993
  %3995 = vrot.lane.b32.xlu0 %v2265, 32
  %v3996 = vpop.permute.xlu0 %3995
  %3997 = vrot.lane.b32.xlu0 %v2267, 32
  %v3998 = vpop.permute.xlu0 %3997
  %3999 = vrot.lane.b32.xlu0 %v2270, 32
  %v4000 = vpop.permute.xlu0 %3999
  %4001 = vrot.lane.b32.xlu0 %v2272, 32
  %v4002 = vpop.permute.xlu0 %4001
  %4003 = vrot.lane.b32.xlu0 %v2275, 32
  %v4004 = vpop.permute.xlu0 %4003
  %4005 = vrot.lane.b32.xlu0 %v2277, 32
  %v4006 = vpop.permute.xlu0 %4005
  %4007 = vrot.lane.b32.xlu0 %v2280, 32
  %v4008 = vpop.permute.xlu0 %4007
  %4009 = vrot.lane.b32.xlu0 %v2282, 32
  %v4010 = vpop.permute.xlu0 %4009
  %4011 = vrot.lane.b32.xlu0 %v2285, 32
  %v4012 = vpop.permute.xlu0 %4011
  %4013 = vrot.lane.b32.xlu0 %v2287, 32
  %v4014 = vpop.permute.xlu0 %4013
  %4015 = vrot.lane.b32.xlu0 %v2290, 32
  %v4016 = vpop.permute.xlu0 %4015
  %4017 = vrot.lane.b32.xlu0 %v2292, 32
  %v4018 = vpop.permute.xlu0 %4017
  %4019 = vrot.lane.b32.xlu0 %v2295, 32
  %v4020 = vpop.permute.xlu0 %4019
  %4021 = vrot.lane.b32.xlu0 %v2297, 32
  %v4022 = vpop.permute.xlu0 %4021
  %4023 = vrot.lane.b32.xlu0 %v2300, 32
  %v4024 = vpop.permute.xlu0 %4023
  %4025 = vrot.lane.b32.xlu0 %v2302, 32
  %v4026 = vpop.permute.xlu0 %4025
  %4027 = vrot.lane.b32.xlu0 %v3890, 32
  %v4028 = vpop.permute.xlu0 %4027
  %4029 = vrot.lane.b32.xlu0 %v3892, 32
  %v4030 = vpop.permute.xlu0 %4029
  %4031 = vrot.lane.b32.xlu0 %v2305, 32
  %v4032 = vpop.permute.xlu0 %4031
  %4033 = vrot.lane.b32.xlu0 %v2307, 32
  %v4034 = vpop.permute.xlu0 %4033
  %4035 = vrot.lane.b32.xlu0 %v2310, 32
  %v4036 = vpop.permute.xlu0 %4035
  %4037 = vrot.lane.b32.xlu0 %v2312, 32
  %v4038 = vpop.permute.xlu0 %4037
  %4039 = vrot.lane.b32.xlu0 %v2315, 32
  %v4040 = vpop.permute.xlu0 %4039
  %4041 = vrot.lane.b32.xlu0 %v2317, 32
  %v4042 = vpop.permute.xlu0 %4041
  %4043 = vrot.lane.b32.xlu0 %v2320, 32
  %v4044 = vpop.permute.xlu0 %4043
  %4045 = vrot.lane.b32.xlu0 %v2322, 32
  %v4046 = vpop.permute.xlu0 %4045
  %4047 = vrot.lane.b32.xlu0 %v2325, 32
  %v4048 = vpop.permute.xlu0 %4047
  %4049 = vrot.lane.b32.xlu0 %v2327, 32
  %v4050 = vpop.permute.xlu0 %4049
  %4051 = vrot.lane.b32.xlu0 %v2330, 32
  %v4052 = vpop.permute.xlu0 %4051
  %4053 = vrot.lane.b32.xlu0 %v2332, 32
  %v4054 = vpop.permute.xlu0 %4053
  %4055 = vrot.lane.b32.xlu0 %v2335, 32
  %v4056 = vpop.permute.xlu0 %4055
  %4057 = vrot.lane.b32.xlu0 %v2337, 32
  %v4058 = vpop.permute.xlu0 %4057
  %4059 = vrot.lane.b32.xlu0 %v2340, 32
  %v4060 = vpop.permute.xlu0 %4059
  %4061 = vrot.lane.b32.xlu0 %v2342, 32
  %v4062 = vpop.permute.xlu0 %4061
  %4063 = vrot.lane.b32.xlu0 %v2345, 32
  %v4064 = vpop.permute.xlu0 %4063
  %4065 = vrot.lane.b32.xlu0 %v2347, 32
  %v4066 = vpop.permute.xlu0 %4065
  %4067 = vrot.lane.b32.xlu0 %v2350, 32
  %v4068 = vpop.permute.xlu0 %4067
  %4069 = vrot.lane.b32.xlu0 %v2352, 32
  %v4070 = vpop.permute.xlu0 %4069
  %4071 = vrot.lane.b32.xlu0 %v2355, 32
  %v4072 = vpop.permute.xlu0 %4071
  %4073 = vrot.lane.b32.xlu0 %v2357, 32
  %v4074 = vpop.permute.xlu0 %4073
  %4075 = vrot.lane.b32.xlu0 %v2360, 32
  %v4076 = vpop.permute.xlu0 %4075
  %4077 = vrot.lane.b32.xlu0 %v2362, 32
  %v4078 = vpop.permute.xlu0 %4077
  %4079 = vrot.lane.b32.xlu0 %v2365, 32
  %v4080 = vpop.permute.xlu0 %4079
  %4081 = vrot.lane.b32.xlu0 %v2367, 32
  %v4082 = vpop.permute.xlu0 %4081
  %4083 = vrot.lane.b32.xlu0 %v2370, 32
  %v4084 = vpop.permute.xlu0 %4083
  %4085 = vrot.lane.b32.xlu0 %v2372, 32
  %v4086 = vpop.permute.xlu0 %4085
  %4087 = vrot.lane.b32.xlu0 %v2375, 32
  %v4088 = vpop.permute.xlu0 %4087
  %4089 = vrot.lane.b32.xlu0 %v2377, 32
  %v4090 = vpop.permute.xlu0 %4089
  %4091 = vrot.lane.b32.xlu0 %v3895, 32
  %v4092 = vpop.permute.xlu0 %4091
  %4093 = vrot.lane.b32.xlu0 %v3897, 32
  %v4094 = vpop.permute.xlu0 %4093
  %4095 = vrot.lane.b32.xlu0 %v2380, 32
  %v4096 = vpop.permute.xlu0 %4095
  %4097 = vrot.lane.b32.xlu0 %v2382, 32
  %v4098 = vpop.permute.xlu0 %4097
  %4099 = vrot.lane.b32.xlu0 %v2385, 32
  %v4100 = vpop.permute.xlu0 %4099
  %4101 = vrot.lane.b32.xlu0 %v2387, 32
  %v4102 = vpop.permute.xlu0 %4101
  %4103 = vrot.lane.b32.xlu0 %v2390, 32
  %v4104 = vpop.permute.xlu0 %4103
  %4105 = vrot.lane.b32.xlu0 %v2392, 32
  %v4106 = vpop.permute.xlu0 %4105
  %4107 = vrot.lane.b32.xlu0 %v2395, 32
  %v4108 = vpop.permute.xlu0 %4107
  %4109 = vrot.lane.b32.xlu0 %v2397, 32
  %v4110 = vpop.permute.xlu0 %4109
  %4111 = vrot.lane.b32.xlu0 %v2400, 32
  %v4112 = vpop.permute.xlu0 %4111
  %4113 = vrot.lane.b32.xlu0 %v2402, 32
  %v4114 = vpop.permute.xlu0 %4113
  %4115 = vrot.lane.b32.xlu0 %v2405, 32
  %v4116 = vpop.permute.xlu0 %4115
  %4117 = vrot.lane.b32.xlu0 %v2407, 32
  %v4118 = vpop.permute.xlu0 %4117
  %4119 = vrot.lane.b32.xlu0 %v2410, 32
  %v4120 = vpop.permute.xlu0 %4119
  %4121 = vrot.lane.b32.xlu0 %v2412, 32
  %v4122 = vpop.permute.xlu0 %4121
  %4123 = vrot.lane.b32.xlu0 %v2415, 32
  %v4124 = vpop.permute.xlu0 %4123
  %4125 = vrot.lane.b32.xlu0 %v2417, 32
  %v4126 = vpop.permute.xlu0 %4125
  %4127 = vrot.lane.b32.xlu0 %v2420, 32
  %v4128 = vpop.permute.xlu0 %4127
  %4129 = vrot.lane.b32.xlu0 %v2422, 32
  %v4130 = vpop.permute.xlu0 %4129
  %4131 = vrot.lane.b32.xlu0 %v2425, 32
  %v4132 = vpop.permute.xlu0 %4131
  %4133 = vrot.lane.b32.xlu0 %v2427, 32
  %v4134 = vpop.permute.xlu0 %4133
  %4135 = vrot.lane.b32.xlu0 %v2430, 32
  %v4136 = vpop.permute.xlu0 %4135
  %4137 = vrot.lane.b32.xlu0 %v2432, 32
  %v4138 = vpop.permute.xlu0 %4137
  %4139 = vrot.lane.b32.xlu0 %v2435, 32
  %v4140 = vpop.permute.xlu0 %4139
  %4141 = vrot.lane.b32.xlu0 %v2437, 32
  %v4142 = vpop.permute.xlu0 %4141
  %4143 = vrot.lane.b32.xlu0 %v2440, 32
  %v4144 = vpop.permute.xlu0 %4143
  %4145 = vrot.lane.b32.xlu0 %v2442, 32
  %v4146 = vpop.permute.xlu0 %4145
  %4147 = vrot.lane.b32.xlu0 %v2445, 32
  %v4148 = vpop.permute.xlu0 %4147
  %4149 = vrot.lane.b32.xlu0 %v2447, 32
  %v4150 = vpop.permute.xlu0 %4149
  %4151 = vrot.lane.b32.xlu0 %v2450, 32
  %v4152 = vpop.permute.xlu0 %4151
  %4153 = vrot.lane.b32.xlu0 %v2452, 32
  %v4154 = vpop.permute.xlu0 %4153
  %4155 = vrot.lane.b32.xlu0 %v3900, 32
  %v4156 = vpop.permute.xlu0 %4155
  %4157 = vrot.lane.b32.xlu0 %v3902, 32
  %v4158 = vpop.permute.xlu0 %4157
  %v4287 = vrot.slane %v1911, 2
  %v4288 = vrot.slane %v1560, 2
  %v4289 = vsel %vm2819, %v4287, %v4288
  %v4290 = vrot.slane %v1976, 2
  %v4291 = vsel %vm2819, %v4288, %v4290
  %v4292 = vrot.slane %v1927, 2
  %v4293 = vrot.slane %v1608, 2
  %v4294 = vsel %vm2819, %v4292, %v4293
  %v4295 = vrot.slane %v1992, 2
  %v4296 = vsel %vm2819, %v4293, %v4295
  %v4297 = vrot.slane %v1943, 2
  %v4298 = vrot.slane %v1656, 2
  %v4299 = vsel %vm2819, %v4297, %v4298
  %v4300 = vrot.slane %v2008, 2
  %v4301 = vsel %vm2819, %v4298, %v4300
  %v4302 = vrot.slane %v1959, 2
  %v4303 = vrot.slane %v1704, 2
  %v4304 = vsel %vm2819, %v4302, %v4303
  %v4305 = vrot.slane %v2024, 2
  %v4306 = vsel %vm2819, %v4303, %v4305
  %4307 = vrot.lane.b32.xlu0 %v2827, 40
  %v4308 = vpop.permute.xlu0 %4307
  %4309 = vrot.lane.b32.xlu0 %v2829, 40
  %v4310 = vpop.permute.xlu0 %4309
  %4311 = vrot.lane.b32.xlu0 %v2832, 40
  %v4312 = vpop.permute.xlu0 %4311
  %4313 = vrot.lane.b32.xlu0 %v2834, 40
  %v4314 = vpop.permute.xlu0 %4313
  %4315 = vrot.lane.b32.xlu0 %v2837, 40
  %v4316 = vpop.permute.xlu0 %4315
  %4317 = vrot.lane.b32.xlu0 %v2839, 40
  %v4318 = vpop.permute.xlu0 %4317
  %4319 = vrot.lane.b32.xlu0 %v2842, 40
  %v4320 = vpop.permute.xlu0 %4319
  %4321 = vrot.lane.b32.xlu0 %v2844, 40
  %v4322 = vpop.permute.xlu0 %4321
  %4323 = vrot.lane.b32.xlu0 %v2847, 40
  %v4324 = vpop.permute.xlu0 %4323
  %4325 = vrot.lane.b32.xlu0 %v2849, 40
  %v4326 = vpop.permute.xlu0 %4325
  %4327 = vrot.lane.b32.xlu0 %v2852, 40
  %v4328 = vpop.permute.xlu0 %4327
  %4329 = vrot.lane.b32.xlu0 %v2854, 40
  %v4330 = vpop.permute.xlu0 %4329
  %4331 = vrot.lane.b32.xlu0 %v2857, 40
  %v4332 = vpop.permute.xlu0 %4331
  %4333 = vrot.lane.b32.xlu0 %v2859, 40
  %v4334 = vpop.permute.xlu0 %4333
  %4335 = vrot.lane.b32.xlu0 %v2862, 40
  %v4336 = vpop.permute.xlu0 %4335
  %4337 = vrot.lane.b32.xlu0 %v2864, 40
  %v4338 = vpop.permute.xlu0 %4337
  %4339 = vrot.lane.b32.xlu0 %v2867, 40
  %v4340 = vpop.permute.xlu0 %4339
  %4341 = vrot.lane.b32.xlu0 %v2869, 40
  %v4342 = vpop.permute.xlu0 %4341
  %4343 = vrot.lane.b32.xlu0 %v2872, 40
  %v4344 = vpop.permute.xlu0 %4343
  %4345 = vrot.lane.b32.xlu0 %v2874, 40
  %v4346 = vpop.permute.xlu0 %4345
  %4347 = vrot.lane.b32.xlu0 %v2877, 40
  %v4348 = vpop.permute.xlu0 %4347
  %4349 = vrot.lane.b32.xlu0 %v2879, 40
  %v4350 = vpop.permute.xlu0 %4349
  %4351 = vrot.lane.b32.xlu0 %v2882, 40
  %v4352 = vpop.permute.xlu0 %4351
  %4353 = vrot.lane.b32.xlu0 %v2884, 40
  %v4354 = vpop.permute.xlu0 %4353
  %4355 = vrot.lane.b32.xlu0 %v2887, 40
  %v4356 = vpop.permute.xlu0 %4355
  %4357 = vrot.lane.b32.xlu0 %v2889, 40
  %v4358 = vpop.permute.xlu0 %4357
  %4359 = vrot.lane.b32.xlu0 %v2892, 40
  %v4360 = vpop.permute.xlu0 %4359
  %4361 = vrot.lane.b32.xlu0 %v2894, 40
  %v4362 = vpop.permute.xlu0 %4361
  %4363 = vrot.lane.b32.xlu0 %v2897, 40
  %v4364 = vpop.permute.xlu0 %4363
  %4365 = vrot.lane.b32.xlu0 %v2899, 40
  %v4366 = vpop.permute.xlu0 %4365
  %4367 = vrot.lane.b32.xlu0 %v4289, 40
  %v4368 = vpop.permute.xlu0 %4367
  %4369 = vrot.lane.b32.xlu0 %v4291, 40
  %v4370 = vpop.permute.xlu0 %4369
  %4371 = vrot.lane.b32.xlu0 %v2902, 40
  %v4372 = vpop.permute.xlu0 %4371
  %4373 = vrot.lane.b32.xlu0 %v2904, 40
  %v4374 = vpop.permute.xlu0 %4373
  %4375 = vrot.lane.b32.xlu0 %v2907, 40
  %v4376 = vpop.permute.xlu0 %4375
  %4377 = vrot.lane.b32.xlu0 %v2909, 40
  %v4378 = vpop.permute.xlu0 %4377
  %4379 = vrot.lane.b32.xlu0 %v2912, 40
  %v4380 = vpop.permute.xlu0 %4379
  %4381 = vrot.lane.b32.xlu0 %v2914, 40
  %v4382 = vpop.permute.xlu0 %4381
  %4383 = vrot.lane.b32.xlu0 %v2917, 40
  %v4384 = vpop.permute.xlu0 %4383
  %4385 = vrot.lane.b32.xlu0 %v2919, 40
  %v4386 = vpop.permute.xlu0 %4385
  %4387 = vrot.lane.b32.xlu0 %v2922, 40
  %v4388 = vpop.permute.xlu0 %4387
  %4389 = vrot.lane.b32.xlu0 %v2924, 40
  %v4390 = vpop.permute.xlu0 %4389
  %4391 = vrot.lane.b32.xlu0 %v2927, 40
  %v4392 = vpop.permute.xlu0 %4391
  %4393 = vrot.lane.b32.xlu0 %v2929, 40
  %v4394 = vpop.permute.xlu0 %4393
  %4395 = vrot.lane.b32.xlu0 %v2932, 40
  %v4396 = vpop.permute.xlu0 %4395
  %4397 = vrot.lane.b32.xlu0 %v2934, 40
  %v4398 = vpop.permute.xlu0 %4397
  %4399 = vrot.lane.b32.xlu0 %v2937, 40
  %v4400 = vpop.permute.xlu0 %4399
  %4401 = vrot.lane.b32.xlu0 %v2939, 40
  %v4402 = vpop.permute.xlu0 %4401
  %4403 = vrot.lane.b32.xlu0 %v2942, 40
  %v4404 = vpop.permute.xlu0 %4403
  %4405 = vrot.lane.b32.xlu0 %v2944, 40
  %v4406 = vpop.permute.xlu0 %4405
  %4407 = vrot.lane.b32.xlu0 %v2947, 40
  %v4408 = vpop.permute.xlu0 %4407
  %4409 = vrot.lane.b32.xlu0 %v2949, 40
  %v4410 = vpop.permute.xlu0 %4409
  %4411 = vrot.lane.b32.xlu0 %v2952, 40
  %v4412 = vpop.permute.xlu0 %4411
  %4413 = vrot.lane.b32.xlu0 %v2954, 40
  %v4414 = vpop.permute.xlu0 %4413
  %4415 = vrot.lane.b32.xlu0 %v2957, 40
  %v4416 = vpop.permute.xlu0 %4415
  %4417 = vrot.lane.b32.xlu0 %v2959, 40
  %v4418 = vpop.permute.xlu0 %4417
  %4419 = vrot.lane.b32.xlu0 %v2962, 40
  %v4420 = vpop.permute.xlu0 %4419
  %4421 = vrot.lane.b32.xlu0 %v2964, 40
  %v4422 = vpop.permute.xlu0 %4421
  %4423 = vrot.lane.b32.xlu0 %v2967, 40
  %v4424 = vpop.permute.xlu0 %4423
  %4425 = vrot.lane.b32.xlu0 %v2969, 40
  %v4426 = vpop.permute.xlu0 %4425
  %4427 = vrot.lane.b32.xlu0 %v2972, 40
  %v4428 = vpop.permute.xlu0 %4427
  %4429 = vrot.lane.b32.xlu0 %v2974, 40
  %v4430 = vpop.permute.xlu0 %4429
  %4431 = vrot.lane.b32.xlu0 %v4294, 40
  %v4432 = vpop.permute.xlu0 %4431
  %4433 = vrot.lane.b32.xlu0 %v4296, 40
  %v4434 = vpop.permute.xlu0 %4433
  %4435 = vrot.lane.b32.xlu0 %v2977, 40
  %v4436 = vpop.permute.xlu0 %4435
  %4437 = vrot.lane.b32.xlu0 %v2979, 40
  %v4438 = vpop.permute.xlu0 %4437
  %4439 = vrot.lane.b32.xlu0 %v2982, 40
  %v4440 = vpop.permute.xlu0 %4439
  %4441 = vrot.lane.b32.xlu0 %v2984, 40
  %v4442 = vpop.permute.xlu0 %4441
  %4443 = vrot.lane.b32.xlu0 %v2987, 40
  %v4444 = vpop.permute.xlu0 %4443
  %4445 = vrot.lane.b32.xlu0 %v2989, 40
  %v4446 = vpop.permute.xlu0 %4445
  %4447 = vrot.lane.b32.xlu0 %v2992, 40
  %v4448 = vpop.permute.xlu0 %4447
  %4449 = vrot.lane.b32.xlu0 %v2994, 40
  %v4450 = vpop.permute.xlu0 %4449
  %4451 = vrot.lane.b32.xlu0 %v2997, 40
  %v4452 = vpop.permute.xlu0 %4451
  %4453 = vrot.lane.b32.xlu0 %v2999, 40
  %v4454 = vpop.permute.xlu0 %4453
  %4455 = vrot.lane.b32.xlu0 %v3002, 40
  %v4456 = vpop.permute.xlu0 %4455
  %4457 = vrot.lane.b32.xlu0 %v3004, 40
  %v4458 = vpop.permute.xlu0 %4457
  %4459 = vrot.lane.b32.xlu0 %v3007, 40
  %v4460 = vpop.permute.xlu0 %4459
  %4461 = vrot.lane.b32.xlu0 %v3009, 40
  %v4462 = vpop.permute.xlu0 %4461
  %4463 = vrot.lane.b32.xlu0 %v3012, 40
  %v4464 = vpop.permute.xlu0 %4463
  %4465 = vrot.lane.b32.xlu0 %v3014, 40
  %v4466 = vpop.permute.xlu0 %4465
  %4467 = vrot.lane.b32.xlu0 %v3017, 40
  %v4468 = vpop.permute.xlu0 %4467
  %4469 = vrot.lane.b32.xlu0 %v3019, 40
  %v4470 = vpop.permute.xlu0 %4469
  %4471 = vrot.lane.b32.xlu0 %v3022, 40
  %v4472 = vpop.permute.xlu0 %4471
  %4473 = vrot.lane.b32.xlu0 %v3024, 40
  %v4474 = vpop.permute.xlu0 %4473
  %4475 = vrot.lane.b32.xlu0 %v3027, 40
  %v4476 = vpop.permute.xlu0 %4475
  %4477 = vrot.lane.b32.xlu0 %v3029, 40
  %v4478 = vpop.permute.xlu0 %4477
  %4479 = vrot.lane.b32.xlu0 %v3032, 40
  %v4480 = vpop.permute.xlu0 %4479
  %4481 = vrot.lane.b32.xlu0 %v3034, 40
  %v4482 = vpop.permute.xlu0 %4481
  %4483 = vrot.lane.b32.xlu0 %v3037, 40
  %v4484 = vpop.permute.xlu0 %4483
  %4485 = vrot.lane.b32.xlu0 %v3039, 40
  %v4486 = vpop.permute.xlu0 %4485
  %4487 = vrot.lane.b32.xlu0 %v3042, 40
  %v4488 = vpop.permute.xlu0 %4487
  %4489 = vrot.lane.b32.xlu0 %v3044, 40
  %v4490 = vpop.permute.xlu0 %4489
  %4491 = vrot.lane.b32.xlu0 %v3047, 40
  %v4492 = vpop.permute.xlu0 %4491
  %4493 = vrot.lane.b32.xlu0 %v3049, 40
  %v4494 = vpop.permute.xlu0 %4493
  %4495 = vrot.lane.b32.xlu0 %v4299, 40
  %v4496 = vpop.permute.xlu0 %4495
  %4497 = vrot.lane.b32.xlu0 %v4301, 40
  %v4498 = vpop.permute.xlu0 %4497
  %4499 = vrot.lane.b32.xlu0 %v3052, 40
  %v4500 = vpop.permute.xlu0 %4499
  %4501 = vrot.lane.b32.xlu0 %v3054, 40
  %v4502 = vpop.permute.xlu0 %4501
  %4503 = vrot.lane.b32.xlu0 %v3057, 40
  %v4504 = vpop.permute.xlu0 %4503
  %4505 = vrot.lane.b32.xlu0 %v3059, 40
  %v4506 = vpop.permute.xlu0 %4505
  %4507 = vrot.lane.b32.xlu0 %v3062, 40
  %v4508 = vpop.permute.xlu0 %4507
  %4509 = vrot.lane.b32.xlu0 %v3064, 40
  %v4510 = vpop.permute.xlu0 %4509
  %4511 = vrot.lane.b32.xlu0 %v3067, 40
  %v4512 = vpop.permute.xlu0 %4511
  %4513 = vrot.lane.b32.xlu0 %v3069, 40
  %v4514 = vpop.permute.xlu0 %4513
  %4515 = vrot.lane.b32.xlu0 %v3072, 40
  %v4516 = vpop.permute.xlu0 %4515
  %4517 = vrot.lane.b32.xlu0 %v3074, 40
  %v4518 = vpop.permute.xlu0 %4517
  %4519 = vrot.lane.b32.xlu0 %v3077, 40
  %v4520 = vpop.permute.xlu0 %4519
  %4521 = vrot.lane.b32.xlu0 %v3079, 40
  %v4522 = vpop.permute.xlu0 %4521
  %4523 = vrot.lane.b32.xlu0 %v3082, 40
  %v4524 = vpop.permute.xlu0 %4523
  %4525 = vrot.lane.b32.xlu0 %v3084, 40
  %v4526 = vpop.permute.xlu0 %4525
  %4527 = vrot.lane.b32.xlu0 %v3087, 40
  %v4528 = vpop.permute.xlu0 %4527
  %4529 = vrot.lane.b32.xlu0 %v3089, 40
  %v4530 = vpop.permute.xlu0 %4529
  %4531 = vrot.lane.b32.xlu0 %v3092, 40
  %v4532 = vpop.permute.xlu0 %4531
  %4533 = vrot.lane.b32.xlu0 %v3094, 40
  %v4534 = vpop.permute.xlu0 %4533
  %4535 = vrot.lane.b32.xlu0 %v3097, 40
  %v4536 = vpop.permute.xlu0 %4535
  %4537 = vrot.lane.b32.xlu0 %v3099, 40
  %v4538 = vpop.permute.xlu0 %4537
  %4539 = vrot.lane.b32.xlu0 %v3102, 40
  %v4540 = vpop.permute.xlu0 %4539
  %4541 = vrot.lane.b32.xlu0 %v3104, 40
  %v4542 = vpop.permute.xlu0 %4541
  %4543 = vrot.lane.b32.xlu0 %v3107, 40
  %v4544 = vpop.permute.xlu0 %4543
  %4545 = vrot.lane.b32.xlu0 %v3109, 40
  %v4546 = vpop.permute.xlu0 %4545
  %4547 = vrot.lane.b32.xlu0 %v3112, 40
  %v4548 = vpop.permute.xlu0 %4547
  %4549 = vrot.lane.b32.xlu0 %v3114, 40
  %v4550 = vpop.permute.xlu0 %4549
  %4551 = vrot.lane.b32.xlu0 %v3117, 40
  %v4552 = vpop.permute.xlu0 %4551
  %4553 = vrot.lane.b32.xlu0 %v3119, 40
  %v4554 = vpop.permute.xlu0 %4553
  %4555 = vrot.lane.b32.xlu0 %v3122, 40
  %v4556 = vpop.permute.xlu0 %4555
  %4557 = vrot.lane.b32.xlu0 %v3124, 40
  %v4558 = vpop.permute.xlu0 %4557
  %4559 = vrot.lane.b32.xlu0 %v4304, 40
  %v4560 = vpop.permute.xlu0 %4559
  %4561 = vrot.lane.b32.xlu0 %v4306, 40
  %v4562 = vpop.permute.xlu0 %4561
  %4691 = vrot.lane.b32.xlu0 %v1897, 48
  %v4692 = vpop.permute.xlu0 %4691
  %4693 = vrot.lane.b32.xlu0 %v1518, 48
  %v4694 = vpop.permute.xlu0 %4693
  %4695 = vrot.lane.b32.xlu0 %v1898, 48
  %v4696 = vpop.permute.xlu0 %4695
  %4697 = vrot.lane.b32.xlu0 %v1521, 48
  %v4698 = vpop.permute.xlu0 %4697
  %4699 = vrot.lane.b32.xlu0 %v1899, 48
  %v4700 = vpop.permute.xlu0 %4699
  %4701 = vrot.lane.b32.xlu0 %v1524, 48
  %v4702 = vpop.permute.xlu0 %4701
  %4703 = vrot.lane.b32.xlu0 %v1900, 48
  %v4704 = vpop.permute.xlu0 %4703
  %4705 = vrot.lane.b32.xlu0 %v1527, 48
  %v4706 = vpop.permute.xlu0 %4705
  %4707 = vrot.lane.b32.xlu0 %v1901, 48
  %v4708 = vpop.permute.xlu0 %4707
  %4709 = vrot.lane.b32.xlu0 %v1530, 48
  %v4710 = vpop.permute.xlu0 %4709
  %4711 = vrot.lane.b32.xlu0 %v1902, 48
  %v4712 = vpop.permute.xlu0 %4711
  %4713 = vrot.lane.b32.xlu0 %v1533, 48
  %v4714 = vpop.permute.xlu0 %4713
  %4715 = vrot.lane.b32.xlu0 %v1903, 48
  %v4716 = vpop.permute.xlu0 %4715
  %4717 = vrot.lane.b32.xlu0 %v1536, 48
  %v4718 = vpop.permute.xlu0 %4717
  %4719 = vrot.lane.b32.xlu0 %v1904, 48
  %v4720 = vpop.permute.xlu0 %4719
  %4721 = vrot.lane.b32.xlu0 %v1539, 48
  %v4722 = vpop.permute.xlu0 %4721
  %4723 = vrot.lane.b32.xlu0 %v1905, 48
  %v4724 = vpop.permute.xlu0 %4723
  %4725 = vrot.lane.b32.xlu0 %v1542, 48
  %v4726 = vpop.permute.xlu0 %4725
  %4727 = vrot.lane.b32.xlu0 %v1906, 48
  %v4728 = vpop.permute.xlu0 %4727
  %4729 = vrot.lane.b32.xlu0 %v1545, 48
  %v4730 = vpop.permute.xlu0 %4729
  %4731 = vrot.lane.b32.xlu0 %v1907, 48
  %v4732 = vpop.permute.xlu0 %4731
  %4733 = vrot.lane.b32.xlu0 %v1548, 48
  %v4734 = vpop.permute.xlu0 %4733
  %4735 = vrot.lane.b32.xlu0 %v1908, 48
  %v4736 = vpop.permute.xlu0 %4735
  %4737 = vrot.lane.b32.xlu0 %v1551, 48
  %v4738 = vpop.permute.xlu0 %4737
  %4739 = vrot.lane.b32.xlu0 %v1909, 48
  %v4740 = vpop.permute.xlu0 %4739
  %4741 = vrot.lane.b32.xlu0 %v1554, 48
  %v4742 = vpop.permute.xlu0 %4741
  %4743 = vrot.lane.b32.xlu0 %v1910, 48
  %v4744 = vpop.permute.xlu0 %4743
  %4745 = vrot.lane.b32.xlu0 %v1557, 48
  %v4746 = vpop.permute.xlu0 %4745
  %4747 = vrot.lane.b32.xlu0 %v1911, 48
  %v4748 = vpop.permute.xlu0 %4747
  %4749 = vrot.lane.b32.xlu0 %v1560, 48
  %v4750 = vpop.permute.xlu0 %4749
  %4751 = vrot.lane.b32.xlu0 %v1895, 48
  %v4752 = vpop.permute.xlu0 %4751
  %4753 = vrot.lane.b32.xlu0 %v1512, 48
  %v4754 = vpop.permute.xlu0 %4753
  %4755 = vrot.lane.b32.xlu0 %v1913, 48
  %v4756 = vpop.permute.xlu0 %4755
  %4757 = vrot.lane.b32.xlu0 %v1566, 48
  %v4758 = vpop.permute.xlu0 %4757
  %4759 = vrot.lane.b32.xlu0 %v1914, 48
  %v4760 = vpop.permute.xlu0 %4759
  %4761 = vrot.lane.b32.xlu0 %v1569, 48
  %v4762 = vpop.permute.xlu0 %4761
  %4763 = vrot.lane.b32.xlu0 %v1915, 48
  %v4764 = vpop.permute.xlu0 %4763
  %4765 = vrot.lane.b32.xlu0 %v1572, 48
  %v4766 = vpop.permute.xlu0 %4765
  %4767 = vrot.lane.b32.xlu0 %v1916, 48
  %v4768 = vpop.permute.xlu0 %4767
  %4769 = vrot.lane.b32.xlu0 %v1575, 48
  %v4770 = vpop.permute.xlu0 %4769
  %4771 = vrot.lane.b32.xlu0 %v1917, 48
  %v4772 = vpop.permute.xlu0 %4771
  %4773 = vrot.lane.b32.xlu0 %v1578, 48
  %v4774 = vpop.permute.xlu0 %4773
  %4775 = vrot.lane.b32.xlu0 %v1918, 48
  %v4776 = vpop.permute.xlu0 %4775
  %4777 = vrot.lane.b32.xlu0 %v1581, 48
  %v4778 = vpop.permute.xlu0 %4777
  %4779 = vrot.lane.b32.xlu0 %v1919, 48
  %v4780 = vpop.permute.xlu0 %4779
  %4781 = vrot.lane.b32.xlu0 %v1584, 48
  %v4782 = vpop.permute.xlu0 %4781
  %4783 = vrot.lane.b32.xlu0 %v1920, 48
  %v4784 = vpop.permute.xlu0 %4783
  %4785 = vrot.lane.b32.xlu0 %v1587, 48
  %v4786 = vpop.permute.xlu0 %4785
  %4787 = vrot.lane.b32.xlu0 %v1921, 48
  %v4788 = vpop.permute.xlu0 %4787
  %4789 = vrot.lane.b32.xlu0 %v1590, 48
  %v4790 = vpop.permute.xlu0 %4789
  %4791 = vrot.lane.b32.xlu0 %v1922, 48
  %v4792 = vpop.permute.xlu0 %4791
  %4793 = vrot.lane.b32.xlu0 %v1593, 48
  %v4794 = vpop.permute.xlu0 %4793
  %4795 = vrot.lane.b32.xlu0 %v1923, 48
  %v4796 = vpop.permute.xlu0 %4795
  %4797 = vrot.lane.b32.xlu0 %v1596, 48
  %v4798 = vpop.permute.xlu0 %4797
  %4799 = vrot.lane.b32.xlu0 %v1924, 48
  %v4800 = vpop.permute.xlu0 %4799
  %4801 = vrot.lane.b32.xlu0 %v1599, 48
  %v4802 = vpop.permute.xlu0 %4801
  %4803 = vrot.lane.b32.xlu0 %v1925, 48
  %v4804 = vpop.permute.xlu0 %4803
  %4805 = vrot.lane.b32.xlu0 %v1602, 48
  %v4806 = vpop.permute.xlu0 %4805
  %4807 = vrot.lane.b32.xlu0 %v1926, 48
  %v4808 = vpop.permute.xlu0 %4807
  %4809 = vrot.lane.b32.xlu0 %v1605, 48
  %v4810 = vpop.permute.xlu0 %4809
  %4811 = vrot.lane.b32.xlu0 %v1927, 48
  %v4812 = vpop.permute.xlu0 %4811
  %4813 = vrot.lane.b32.xlu0 %v1608, 48
  %v4814 = vpop.permute.xlu0 %4813
  %4815 = vrot.lane.b32.xlu0 %v1929, 48
  %v4816 = vpop.permute.xlu0 %4815
  %4817 = vrot.lane.b32.xlu0 %v1614, 48
  %v4818 = vpop.permute.xlu0 %4817
  %4819 = vrot.lane.b32.xlu0 %v1930, 48
  %v4820 = vpop.permute.xlu0 %4819
  %4821 = vrot.lane.b32.xlu0 %v1617, 48
  %v4822 = vpop.permute.xlu0 %4821
  %4823 = vrot.lane.b32.xlu0 %v1931, 48
  %v4824 = vpop.permute.xlu0 %4823
  %4825 = vrot.lane.b32.xlu0 %v1620, 48
  %v4826 = vpop.permute.xlu0 %4825
  %4827 = vrot.lane.b32.xlu0 %v1932, 48
  %v4828 = vpop.permute.xlu0 %4827
  %4829 = vrot.lane.b32.xlu0 %v1623, 48
  %v4830 = vpop.permute.xlu0 %4829
  %4831 = vrot.lane.b32.xlu0 %v1933, 48
  %v4832 = vpop.permute.xlu0 %4831
  %4833 = vrot.lane.b32.xlu0 %v1626, 48
  %v4834 = vpop.permute.xlu0 %4833
  %4835 = vrot.lane.b32.xlu0 %v1934, 48
  %v4836 = vpop.permute.xlu0 %4835
  %4837 = vrot.lane.b32.xlu0 %v1629, 48
  %v4838 = vpop.permute.xlu0 %4837
  %4839 = vrot.lane.b32.xlu0 %v1935, 48
  %v4840 = vpop.permute.xlu0 %4839
  %4841 = vrot.lane.b32.xlu0 %v1632, 48
  %v4842 = vpop.permute.xlu0 %4841
  %4843 = vrot.lane.b32.xlu0 %v1936, 48
  %v4844 = vpop.permute.xlu0 %4843
  %4845 = vrot.lane.b32.xlu0 %v1635, 48
  %v4846 = vpop.permute.xlu0 %4845
  %4847 = vrot.lane.b32.xlu0 %v1937, 48
  %v4848 = vpop.permute.xlu0 %4847
  %4849 = vrot.lane.b32.xlu0 %v1638, 48
  %v4850 = vpop.permute.xlu0 %4849
  %4851 = vrot.lane.b32.xlu0 %v1938, 48
  %v4852 = vpop.permute.xlu0 %4851
  %4853 = vrot.lane.b32.xlu0 %v1641, 48
  %v4854 = vpop.permute.xlu0 %4853
  %4855 = vrot.lane.b32.xlu0 %v1939, 48
  %v4856 = vpop.permute.xlu0 %4855
  %4857 = vrot.lane.b32.xlu0 %v1644, 48
  %v4858 = vpop.permute.xlu0 %4857
  %4859 = vrot.lane.b32.xlu0 %v1940, 48
  %v4860 = vpop.permute.xlu0 %4859
  %4861 = vrot.lane.b32.xlu0 %v1647, 48
  %v4862 = vpop.permute.xlu0 %4861
  %4863 = vrot.lane.b32.xlu0 %v1941, 48
  %v4864 = vpop.permute.xlu0 %4863
  %4865 = vrot.lane.b32.xlu0 %v1650, 48
  %v4866 = vpop.permute.xlu0 %4865
  %4867 = vrot.lane.b32.xlu0 %v1942, 48
  %v4868 = vpop.permute.xlu0 %4867
  %4869 = vrot.lane.b32.xlu0 %v1653, 48
  %v4870 = vpop.permute.xlu0 %4869
  %4871 = vrot.lane.b32.xlu0 %v1943, 48
  %v4872 = vpop.permute.xlu0 %4871
  %4873 = vrot.lane.b32.xlu0 %v1656, 48
  %v4874 = vpop.permute.xlu0 %4873
  %4875 = vrot.lane.b32.xlu0 %v1945, 48
  %v4876 = vpop.permute.xlu0 %4875
  %4877 = vrot.lane.b32.xlu0 %v1662, 48
  %v4878 = vpop.permute.xlu0 %4877
  %4879 = vrot.lane.b32.xlu0 %v1946, 48
  %v4880 = vpop.permute.xlu0 %4879
  %4881 = vrot.lane.b32.xlu0 %v1665, 48
  %v4882 = vpop.permute.xlu0 %4881
  %4883 = vrot.lane.b32.xlu0 %v1947, 48
  %v4884 = vpop.permute.xlu0 %4883
  %4885 = vrot.lane.b32.xlu0 %v1668, 48
  %v4886 = vpop.permute.xlu0 %4885
  %4887 = vrot.lane.b32.xlu0 %v1948, 48
  %v4888 = vpop.permute.xlu0 %4887
  %4889 = vrot.lane.b32.xlu0 %v1671, 48
  %v4890 = vpop.permute.xlu0 %4889
  %4891 = vrot.lane.b32.xlu0 %v1949, 48
  %v4892 = vpop.permute.xlu0 %4891
  %4893 = vrot.lane.b32.xlu0 %v1674, 48
  %v4894 = vpop.permute.xlu0 %4893
  %4895 = vrot.lane.b32.xlu0 %v1950, 48
  %v4896 = vpop.permute.xlu0 %4895
  %4897 = vrot.lane.b32.xlu0 %v1677, 48
  %v4898 = vpop.permute.xlu0 %4897
  %4899 = vrot.lane.b32.xlu0 %v1951, 48
  %v4900 = vpop.permute.xlu0 %4899
  %4901 = vrot.lane.b32.xlu0 %v1680, 48
  %v4902 = vpop.permute.xlu0 %4901
  %4903 = vrot.lane.b32.xlu0 %v1952, 48
  %v4904 = vpop.permute.xlu0 %4903
  %4905 = vrot.lane.b32.xlu0 %v1683, 48
  %v4906 = vpop.permute.xlu0 %4905
  %4907 = vrot.lane.b32.xlu0 %v1953, 48
  %v4908 = vpop.permute.xlu0 %4907
  %4909 = vrot.lane.b32.xlu0 %v1686, 48
  %v4910 = vpop.permute.xlu0 %4909
  %4911 = vrot.lane.b32.xlu0 %v1954, 48
  %v4912 = vpop.permute.xlu0 %4911
  %4913 = vrot.lane.b32.xlu0 %v1689, 48
  %v4914 = vpop.permute.xlu0 %4913
  %4915 = vrot.lane.b32.xlu0 %v1955, 48
  %v4916 = vpop.permute.xlu0 %4915
  %4917 = vrot.lane.b32.xlu0 %v1692, 48
  %v4918 = vpop.permute.xlu0 %4917
  %4919 = vrot.lane.b32.xlu0 %v1956, 48
  %v4920 = vpop.permute.xlu0 %4919
  %4921 = vrot.lane.b32.xlu0 %v1695, 48
  %v4922 = vpop.permute.xlu0 %4921
  %4923 = vrot.lane.b32.xlu0 %v1957, 48
  %v4924 = vpop.permute.xlu0 %4923
  %4925 = vrot.lane.b32.xlu0 %v1698, 48
  %v4926 = vpop.permute.xlu0 %4925
  %4927 = vrot.lane.b32.xlu0 %v1958, 48
  %v4928 = vpop.permute.xlu0 %4927
  %4929 = vrot.lane.b32.xlu0 %v1701, 48
  %v4930 = vpop.permute.xlu0 %4929
  %4931 = vrot.lane.b32.xlu0 %v1959, 48
  %v4932 = vpop.permute.xlu0 %4931
  %4933 = vrot.lane.b32.xlu0 %v1704, 48
  %v4934 = vpop.permute.xlu0 %4933
  %5057 = vrot.lane.b32.xlu0 %v2160, 56
  %v5058 = vpop.permute.xlu0 %5057
  %5059 = vrot.lane.b32.xlu0 %v2162, 56
  %v5060 = vpop.permute.xlu0 %5059
  %5061 = vrot.lane.b32.xlu0 %v2165, 56
  %v5062 = vpop.permute.xlu0 %5061
  %5063 = vrot.lane.b32.xlu0 %v2167, 56
  %v5064 = vpop.permute.xlu0 %5063
  %5065 = vrot.lane.b32.xlu0 %v2170, 56
  %v5066 = vpop.permute.xlu0 %5065
  %5067 = vrot.lane.b32.xlu0 %v2172, 56
  %v5068 = vpop.permute.xlu0 %5067
  %5069 = vrot.lane.b32.xlu0 %v2175, 56
  %v5070 = vpop.permute.xlu0 %5069
  %5071 = vrot.lane.b32.xlu0 %v2177, 56
  %v5072 = vpop.permute.xlu0 %5071
  %5073 = vrot.lane.b32.xlu0 %v2180, 56
  %v5074 = vpop.permute.xlu0 %5073
  %5075 = vrot.lane.b32.xlu0 %v2182, 56
  %v5076 = vpop.permute.xlu0 %5075
  %5077 = vrot.lane.b32.xlu0 %v2185, 56
  %v5078 = vpop.permute.xlu0 %5077
  %5079 = vrot.lane.b32.xlu0 %v2187, 56
  %v5080 = vpop.permute.xlu0 %5079
  %5081 = vrot.lane.b32.xlu0 %v2190, 56
  %v5082 = vpop.permute.xlu0 %5081
  %5083 = vrot.lane.b32.xlu0 %v2192, 56
  %v5084 = vpop.permute.xlu0 %5083
  %5085 = vrot.lane.b32.xlu0 %v2195, 56
  %v5086 = vpop.permute.xlu0 %5085
  %5087 = vrot.lane.b32.xlu0 %v2197, 56
  %v5088 = vpop.permute.xlu0 %5087
  %5089 = vrot.lane.b32.xlu0 %v2200, 56
  %v5090 = vpop.permute.xlu0 %5089
  %5091 = vrot.lane.b32.xlu0 %v2202, 56
  %v5092 = vpop.permute.xlu0 %5091
  %5093 = vrot.lane.b32.xlu0 %v2205, 56
  %v5094 = vpop.permute.xlu0 %5093
  %5095 = vrot.lane.b32.xlu0 %v2207, 56
  %v5096 = vpop.permute.xlu0 %5095
  %5097 = vrot.lane.b32.xlu0 %v2210, 56
  %v5098 = vpop.permute.xlu0 %5097
  %5099 = vrot.lane.b32.xlu0 %v2212, 56
  %v5100 = vpop.permute.xlu0 %5099
  %5101 = vrot.lane.b32.xlu0 %v2215, 56
  %v5102 = vpop.permute.xlu0 %5101
  %5103 = vrot.lane.b32.xlu0 %v2217, 56
  %v5104 = vpop.permute.xlu0 %5103
  %5105 = vrot.lane.b32.xlu0 %v2220, 56
  %v5106 = vpop.permute.xlu0 %5105
  %5107 = vrot.lane.b32.xlu0 %v2222, 56
  %v5108 = vpop.permute.xlu0 %5107
  %5109 = vrot.lane.b32.xlu0 %v2225, 56
  %v5110 = vpop.permute.xlu0 %5109
  %5111 = vrot.lane.b32.xlu0 %v2227, 56
  %v5112 = vpop.permute.xlu0 %5111
  %5113 = vrot.lane.b32.xlu0 %v3885, 56
  %v5114 = vpop.permute.xlu0 %5113
  %5115 = vrot.lane.b32.xlu0 %v3887, 56
  %v5116 = vpop.permute.xlu0 %5115
  %5117 = vrot.lane.b32.xlu0 %v2150, 56
  %v5118 = vpop.permute.xlu0 %5117
  %5119 = vrot.lane.b32.xlu0 %v2152, 56
  %v5120 = vpop.permute.xlu0 %5119
  %5121 = vrot.lane.b32.xlu0 %v2235, 56
  %v5122 = vpop.permute.xlu0 %5121
  %5123 = vrot.lane.b32.xlu0 %v2237, 56
  %v5124 = vpop.permute.xlu0 %5123
  %5125 = vrot.lane.b32.xlu0 %v2240, 56
  %v5126 = vpop.permute.xlu0 %5125
  %5127 = vrot.lane.b32.xlu0 %v2242, 56
  %v5128 = vpop.permute.xlu0 %5127
  %5129 = vrot.lane.b32.xlu0 %v2245, 56
  %v5130 = vpop.permute.xlu0 %5129
  %5131 = vrot.lane.b32.xlu0 %v2247, 56
  %v5132 = vpop.permute.xlu0 %5131
  %5133 = vrot.lane.b32.xlu0 %v2250, 56
  %v5134 = vpop.permute.xlu0 %5133
  %5135 = vrot.lane.b32.xlu0 %v2252, 56
  %v5136 = vpop.permute.xlu0 %5135
  %5137 = vrot.lane.b32.xlu0 %v2255, 56
  %v5138 = vpop.permute.xlu0 %5137
  %5139 = vrot.lane.b32.xlu0 %v2257, 56
  %v5140 = vpop.permute.xlu0 %5139
  %5141 = vrot.lane.b32.xlu0 %v2260, 56
  %v5142 = vpop.permute.xlu0 %5141
  %5143 = vrot.lane.b32.xlu0 %v2262, 56
  %v5144 = vpop.permute.xlu0 %5143
  %5145 = vrot.lane.b32.xlu0 %v2265, 56
  %v5146 = vpop.permute.xlu0 %5145
  %5147 = vrot.lane.b32.xlu0 %v2267, 56
  %v5148 = vpop.permute.xlu0 %5147
  %5149 = vrot.lane.b32.xlu0 %v2270, 56
  %v5150 = vpop.permute.xlu0 %5149
  %5151 = vrot.lane.b32.xlu0 %v2272, 56
  %v5152 = vpop.permute.xlu0 %5151
  %5153 = vrot.lane.b32.xlu0 %v2275, 56
  %v5154 = vpop.permute.xlu0 %5153
  %5155 = vrot.lane.b32.xlu0 %v2277, 56
  %v5156 = vpop.permute.xlu0 %5155
  %5157 = vrot.lane.b32.xlu0 %v2280, 56
  %v5158 = vpop.permute.xlu0 %5157
  %5159 = vrot.lane.b32.xlu0 %v2282, 56
  %v5160 = vpop.permute.xlu0 %5159
  %5161 = vrot.lane.b32.xlu0 %v2285, 56
  %v5162 = vpop.permute.xlu0 %5161
  %5163 = vrot.lane.b32.xlu0 %v2287, 56
  %v5164 = vpop.permute.xlu0 %5163
  %5165 = vrot.lane.b32.xlu0 %v2290, 56
  %v5166 = vpop.permute.xlu0 %5165
  %5167 = vrot.lane.b32.xlu0 %v2292, 56
  %v5168 = vpop.permute.xlu0 %5167
  %5169 = vrot.lane.b32.xlu0 %v2295, 56
  %v5170 = vpop.permute.xlu0 %5169
  %5171 = vrot.lane.b32.xlu0 %v2297, 56
  %v5172 = vpop.permute.xlu0 %5171
  %5173 = vrot.lane.b32.xlu0 %v2300, 56
  %v5174 = vpop.permute.xlu0 %5173
  %5175 = vrot.lane.b32.xlu0 %v2302, 56
  %v5176 = vpop.permute.xlu0 %5175
  %5177 = vrot.lane.b32.xlu0 %v3890, 56
  %v5178 = vpop.permute.xlu0 %5177
  %5179 = vrot.lane.b32.xlu0 %v3892, 56
  %v5180 = vpop.permute.xlu0 %5179
  %5181 = vrot.lane.b32.xlu0 %v2310, 56
  %v5182 = vpop.permute.xlu0 %5181
  %5183 = vrot.lane.b32.xlu0 %v2312, 56
  %v5184 = vpop.permute.xlu0 %5183
  %5185 = vrot.lane.b32.xlu0 %v2315, 56
  %v5186 = vpop.permute.xlu0 %5185
  %5187 = vrot.lane.b32.xlu0 %v2317, 56
  %v5188 = vpop.permute.xlu0 %5187
  %5189 = vrot.lane.b32.xlu0 %v2320, 56
  %v5190 = vpop.permute.xlu0 %5189
  %5191 = vrot.lane.b32.xlu0 %v2322, 56
  %v5192 = vpop.permute.xlu0 %5191
  %5193 = vrot.lane.b32.xlu0 %v2325, 56
  %v5194 = vpop.permute.xlu0 %5193
  %5195 = vrot.lane.b32.xlu0 %v2327, 56
  %v5196 = vpop.permute.xlu0 %5195
  %5197 = vrot.lane.b32.xlu0 %v2330, 56
  %v5198 = vpop.permute.xlu0 %5197
  %5199 = vrot.lane.b32.xlu0 %v2332, 56
  %v5200 = vpop.permute.xlu0 %5199
  %5201 = vrot.lane.b32.xlu0 %v2335, 56
  %v5202 = vpop.permute.xlu0 %5201
  %5203 = vrot.lane.b32.xlu0 %v2337, 56
  %v5204 = vpop.permute.xlu0 %5203
  %5205 = vrot.lane.b32.xlu0 %v2340, 56
  %v5206 = vpop.permute.xlu0 %5205
  %5207 = vrot.lane.b32.xlu0 %v2342, 56
  %v5208 = vpop.permute.xlu0 %5207
  %5209 = vrot.lane.b32.xlu0 %v2345, 56
  %v5210 = vpop.permute.xlu0 %5209
  %5211 = vrot.lane.b32.xlu0 %v2347, 56
  %v5212 = vpop.permute.xlu0 %5211
  %5213 = vrot.lane.b32.xlu0 %v2350, 56
  %v5214 = vpop.permute.xlu0 %5213
  %5215 = vrot.lane.b32.xlu0 %v2352, 56
  %v5216 = vpop.permute.xlu0 %5215
  %5217 = vrot.lane.b32.xlu0 %v2355, 56
  %v5218 = vpop.permute.xlu0 %5217
  %5219 = vrot.lane.b32.xlu0 %v2357, 56
  %v5220 = vpop.permute.xlu0 %5219
  %5221 = vrot.lane.b32.xlu0 %v2360, 56
  %v5222 = vpop.permute.xlu0 %5221
  %5223 = vrot.lane.b32.xlu0 %v2362, 56
  %v5224 = vpop.permute.xlu0 %5223
  %5225 = vrot.lane.b32.xlu0 %v2365, 56
  %v5226 = vpop.permute.xlu0 %5225
  %5227 = vrot.lane.b32.xlu0 %v2367, 56
  %v5228 = vpop.permute.xlu0 %5227
  %5229 = vrot.lane.b32.xlu0 %v2370, 56
  %v5230 = vpop.permute.xlu0 %5229
  %5231 = vrot.lane.b32.xlu0 %v2372, 56
  %v5232 = vpop.permute.xlu0 %5231
  %5233 = vrot.lane.b32.xlu0 %v2375, 56
  %v5234 = vpop.permute.xlu0 %5233
  %5235 = vrot.lane.b32.xlu0 %v2377, 56
  %v5236 = vpop.permute.xlu0 %5235
  %5237 = vrot.lane.b32.xlu0 %v3895, 56
  %v5238 = vpop.permute.xlu0 %5237
  %5239 = vrot.lane.b32.xlu0 %v3897, 56
  %v5240 = vpop.permute.xlu0 %5239
  %5241 = vrot.lane.b32.xlu0 %v2385, 56
  %v5242 = vpop.permute.xlu0 %5241
  %5243 = vrot.lane.b32.xlu0 %v2387, 56
  %v5244 = vpop.permute.xlu0 %5243
  %5245 = vrot.lane.b32.xlu0 %v2390, 56
  %v5246 = vpop.permute.xlu0 %5245
  %5247 = vrot.lane.b32.xlu0 %v2392, 56
  %v5248 = vpop.permute.xlu0 %5247
  %5249 = vrot.lane.b32.xlu0 %v2395, 56
  %v5250 = vpop.permute.xlu0 %5249
  %5251 = vrot.lane.b32.xlu0 %v2397, 56
  %v5252 = vpop.permute.xlu0 %5251
  %5253 = vrot.lane.b32.xlu0 %v2400, 56
  %v5254 = vpop.permute.xlu0 %5253
  %5255 = vrot.lane.b32.xlu0 %v2402, 56
  %v5256 = vpop.permute.xlu0 %5255
  %5257 = vrot.lane.b32.xlu0 %v2405, 56
  %v5258 = vpop.permute.xlu0 %5257
  %5259 = vrot.lane.b32.xlu0 %v2407, 56
  %v5260 = vpop.permute.xlu0 %5259
  %5261 = vrot.lane.b32.xlu0 %v2410, 56
  %v5262 = vpop.permute.xlu0 %5261
  %5263 = vrot.lane.b32.xlu0 %v2412, 56
  %v5264 = vpop.permute.xlu0 %5263
  %5265 = vrot.lane.b32.xlu0 %v2415, 56
  %v5266 = vpop.permute.xlu0 %5265
  %5267 = vrot.lane.b32.xlu0 %v2417, 56
  %v5268 = vpop.permute.xlu0 %5267
  %5269 = vrot.lane.b32.xlu0 %v2420, 56
  %v5270 = vpop.permute.xlu0 %5269
  %5271 = vrot.lane.b32.xlu0 %v2422, 56
  %v5272 = vpop.permute.xlu0 %5271
  %5273 = vrot.lane.b32.xlu0 %v2425, 56
  %v5274 = vpop.permute.xlu0 %5273
  %5275 = vrot.lane.b32.xlu0 %v2427, 56
  %v5276 = vpop.permute.xlu0 %5275
  %5277 = vrot.lane.b32.xlu0 %v2430, 56
  %v5278 = vpop.permute.xlu0 %5277
  %5279 = vrot.lane.b32.xlu0 %v2432, 56
  %v5280 = vpop.permute.xlu0 %5279
  %5281 = vrot.lane.b32.xlu0 %v2435, 56
  %v5282 = vpop.permute.xlu0 %5281
  %5283 = vrot.lane.b32.xlu0 %v2437, 56
  %v5284 = vpop.permute.xlu0 %5283
  %5285 = vrot.lane.b32.xlu0 %v2440, 56
  %v5286 = vpop.permute.xlu0 %5285
  %5287 = vrot.lane.b32.xlu0 %v2442, 56
  %v5288 = vpop.permute.xlu0 %5287
  %5289 = vrot.lane.b32.xlu0 %v2445, 56
  %v5290 = vpop.permute.xlu0 %5289
  %5291 = vrot.lane.b32.xlu0 %v2447, 56
  %v5292 = vpop.permute.xlu0 %5291
  %5293 = vrot.lane.b32.xlu0 %v2450, 56
  %v5294 = vpop.permute.xlu0 %5293
  %5295 = vrot.lane.b32.xlu0 %v2452, 56
  %v5296 = vpop.permute.xlu0 %5295
  %5297 = vrot.lane.b32.xlu0 %v3900, 56
  %v5298 = vpop.permute.xlu0 %5297
  %5299 = vrot.lane.b32.xlu0 %v3902, 56
  %v5300 = vpop.permute.xlu0 %5299
  %5423 = vrot.lane.b32.xlu0 %v2832, 64
  %v5424 = vpop.permute.xlu0 %5423
  %5425 = vrot.lane.b32.xlu0 %v2834, 64
  %v5426 = vpop.permute.xlu0 %5425
  %5427 = vrot.lane.b32.xlu0 %v2837, 64
  %v5428 = vpop.permute.xlu0 %5427
  %5429 = vrot.lane.b32.xlu0 %v2839, 64
  %v5430 = vpop.permute.xlu0 %5429
  %5431 = vrot.lane.b32.xlu0 %v2842, 64
  %v5432 = vpop.permute.xlu0 %5431
  %5433 = vrot.lane.b32.xlu0 %v2844, 64
  %v5434 = vpop.permute.xlu0 %5433
  %5435 = vrot.lane.b32.xlu0 %v2847, 64
  %v5436 = vpop.permute.xlu0 %5435
  %5437 = vrot.lane.b32.xlu0 %v2849, 64
  %v5438 = vpop.permute.xlu0 %5437
  %5439 = vrot.lane.b32.xlu0 %v2852, 64
  %v5440 = vpop.permute.xlu0 %5439
  %5441 = vrot.lane.b32.xlu0 %v2854, 64
  %v5442 = vpop.permute.xlu0 %5441
  %5443 = vrot.lane.b32.xlu0 %v2857, 64
  %v5444 = vpop.permute.xlu0 %5443
  %5445 = vrot.lane.b32.xlu0 %v2859, 64
  %v5446 = vpop.permute.xlu0 %5445
  %5447 = vrot.lane.b32.xlu0 %v2862, 64
  %v5448 = vpop.permute.xlu0 %5447
  %5449 = vrot.lane.b32.xlu0 %v2864, 64
  %v5450 = vpop.permute.xlu0 %5449
  %5451 = vrot.lane.b32.xlu0 %v2867, 64
  %v5452 = vpop.permute.xlu0 %5451
  %5453 = vrot.lane.b32.xlu0 %v2869, 64
  %v5454 = vpop.permute.xlu0 %5453
  %5455 = vrot.lane.b32.xlu0 %v2872, 64
  %v5456 = vpop.permute.xlu0 %5455
  %5457 = vrot.lane.b32.xlu0 %v2874, 64
  %v5458 = vpop.permute.xlu0 %5457
  %5459 = vrot.lane.b32.xlu0 %v2877, 64
  %v5460 = vpop.permute.xlu0 %5459
  %5461 = vrot.lane.b32.xlu0 %v2879, 64
  %v5462 = vpop.permute.xlu0 %5461
  %5463 = vrot.lane.b32.xlu0 %v2882, 64
  %v5464 = vpop.permute.xlu0 %5463
  %5465 = vrot.lane.b32.xlu0 %v2884, 64
  %v5466 = vpop.permute.xlu0 %5465
  %5467 = vrot.lane.b32.xlu0 %v2887, 64
  %v5468 = vpop.permute.xlu0 %5467
  %5469 = vrot.lane.b32.xlu0 %v2889, 64
  %v5470 = vpop.permute.xlu0 %5469
  %5471 = vrot.lane.b32.xlu0 %v2892, 64
  %v5472 = vpop.permute.xlu0 %5471
  %5473 = vrot.lane.b32.xlu0 %v2894, 64
  %v5474 = vpop.permute.xlu0 %5473
  %5475 = vrot.lane.b32.xlu0 %v2897, 64
  %v5476 = vpop.permute.xlu0 %5475
  %5477 = vrot.lane.b32.xlu0 %v2899, 64
  %v5478 = vpop.permute.xlu0 %5477
  %5479 = vrot.lane.b32.xlu0 %v4289, 64
  %v5480 = vpop.permute.xlu0 %5479
  %5481 = vrot.lane.b32.xlu0 %v4291, 64
  %v5482 = vpop.permute.xlu0 %5481
  %5483 = vrot.lane.b32.xlu0 %v2822, 64
  %v5484 = vpop.permute.xlu0 %5483
  %5485 = vrot.lane.b32.xlu0 %v2824, 64
  %v5486 = vpop.permute.xlu0 %5485
  %5487 = vrot.lane.b32.xlu0 %v2907, 64
  %v5488 = vpop.permute.xlu0 %5487
  %5489 = vrot.lane.b32.xlu0 %v2909, 64
  %v5490 = vpop.permute.xlu0 %5489
  %5491 = vrot.lane.b32.xlu0 %v2912, 64
  %v5492 = vpop.permute.xlu0 %5491
  %5493 = vrot.lane.b32.xlu0 %v2914, 64
  %v5494 = vpop.permute.xlu0 %5493
  %5495 = vrot.lane.b32.xlu0 %v2917, 64
  %v5496 = vpop.permute.xlu0 %5495
  %5497 = vrot.lane.b32.xlu0 %v2919, 64
  %v5498 = vpop.permute.xlu0 %5497
  %5499 = vrot.lane.b32.xlu0 %v2922, 64
  %v5500 = vpop.permute.xlu0 %5499
  %5501 = vrot.lane.b32.xlu0 %v2924, 64
  %v5502 = vpop.permute.xlu0 %5501
  %5503 = vrot.lane.b32.xlu0 %v2927, 64
  %v5504 = vpop.permute.xlu0 %5503
  %5505 = vrot.lane.b32.xlu0 %v2929, 64
  %v5506 = vpop.permute.xlu0 %5505
  %5507 = vrot.lane.b32.xlu0 %v2932, 64
  %v5508 = vpop.permute.xlu0 %5507
  %5509 = vrot.lane.b32.xlu0 %v2934, 64
  %v5510 = vpop.permute.xlu0 %5509
  %5511 = vrot.lane.b32.xlu0 %v2937, 64
  %v5512 = vpop.permute.xlu0 %5511
  %5513 = vrot.lane.b32.xlu0 %v2939, 64
  %v5514 = vpop.permute.xlu0 %5513
  %5515 = vrot.lane.b32.xlu0 %v2942, 64
  %v5516 = vpop.permute.xlu0 %5515
  %5517 = vrot.lane.b32.xlu0 %v2944, 64
  %v5518 = vpop.permute.xlu0 %5517
  %5519 = vrot.lane.b32.xlu0 %v2947, 64
  %v5520 = vpop.permute.xlu0 %5519
  %5521 = vrot.lane.b32.xlu0 %v2949, 64
  %v5522 = vpop.permute.xlu0 %5521
  %5523 = vrot.lane.b32.xlu0 %v2952, 64
  %v5524 = vpop.permute.xlu0 %5523
  %5525 = vrot.lane.b32.xlu0 %v2954, 64
  %v5526 = vpop.permute.xlu0 %5525
  %5527 = vrot.lane.b32.xlu0 %v2957, 64
  %v5528 = vpop.permute.xlu0 %5527
  %5529 = vrot.lane.b32.xlu0 %v2959, 64
  %v5530 = vpop.permute.xlu0 %5529
  %5531 = vrot.lane.b32.xlu0 %v2962, 64
  %v5532 = vpop.permute.xlu0 %5531
  %5533 = vrot.lane.b32.xlu0 %v2964, 64
  %v5534 = vpop.permute.xlu0 %5533
  %5535 = vrot.lane.b32.xlu0 %v2967, 64
  %v5536 = vpop.permute.xlu0 %5535
  %5537 = vrot.lane.b32.xlu0 %v2969, 64
  %v5538 = vpop.permute.xlu0 %5537
  %5539 = vrot.lane.b32.xlu0 %v2972, 64
  %v5540 = vpop.permute.xlu0 %5539
  %5541 = vrot.lane.b32.xlu0 %v2974, 64
  %v5542 = vpop.permute.xlu0 %5541
  %5543 = vrot.lane.b32.xlu0 %v4294, 64
  %v5544 = vpop.permute.xlu0 %5543
  %5545 = vrot.lane.b32.xlu0 %v4296, 64
  %v5546 = vpop.permute.xlu0 %5545
  %5547 = vrot.lane.b32.xlu0 %v2982, 64
  %v5548 = vpop.permute.xlu0 %5547
  %5549 = vrot.lane.b32.xlu0 %v2984, 64
  %v5550 = vpop.permute.xlu0 %5549
  %5551 = vrot.lane.b32.xlu0 %v2987, 64
  %v5552 = vpop.permute.xlu0 %5551
  %5553 = vrot.lane.b32.xlu0 %v2989, 64
  %v5554 = vpop.permute.xlu0 %5553
  %5555 = vrot.lane.b32.xlu0 %v2992, 64
  %v5556 = vpop.permute.xlu0 %5555
  %5557 = vrot.lane.b32.xlu0 %v2994, 64
  %v5558 = vpop.permute.xlu0 %5557
  %5559 = vrot.lane.b32.xlu0 %v2997, 64
  %v5560 = vpop.permute.xlu0 %5559
  %5561 = vrot.lane.b32.xlu0 %v2999, 64
  %v5562 = vpop.permute.xlu0 %5561
  %5563 = vrot.lane.b32.xlu0 %v3002, 64
  %v5564 = vpop.permute.xlu0 %5563
  %5565 = vrot.lane.b32.xlu0 %v3004, 64
  %v5566 = vpop.permute.xlu0 %5565
  %5567 = vrot.lane.b32.xlu0 %v3007, 64
  %v5568 = vpop.permute.xlu0 %5567
  %5569 = vrot.lane.b32.xlu0 %v3009, 64
  %v5570 = vpop.permute.xlu0 %5569
  %5571 = vrot.lane.b32.xlu0 %v3012, 64
  %v5572 = vpop.permute.xlu0 %5571
  %5573 = vrot.lane.b32.xlu0 %v3014, 64
  %v5574 = vpop.permute.xlu0 %5573
  %5575 = vrot.lane.b32.xlu0 %v3017, 64
  %v5576 = vpop.permute.xlu0 %5575
  %5577 = vrot.lane.b32.xlu0 %v3019, 64
  %v5578 = vpop.permute.xlu0 %5577
  %5579 = vrot.lane.b32.xlu0 %v3022, 64
  %v5580 = vpop.permute.xlu0 %5579
  %5581 = vrot.lane.b32.xlu0 %v3024, 64
  %v5582 = vpop.permute.xlu0 %5581
  %5583 = vrot.lane.b32.xlu0 %v3027, 64
  %v5584 = vpop.permute.xlu0 %5583
  %5585 = vrot.lane.b32.xlu0 %v3029, 64
  %v5586 = vpop.permute.xlu0 %5585
  %5587 = vrot.lane.b32.xlu0 %v3032, 64
  %v5588 = vpop.permute.xlu0 %5587
  %5589 = vrot.lane.b32.xlu0 %v3034, 64
  %v5590 = vpop.permute.xlu0 %5589
  %5591 = vrot.lane.b32.xlu0 %v3037, 64
  %v5592 = vpop.permute.xlu0 %5591
  %5593 = vrot.lane.b32.xlu0 %v3039, 64
  %v5594 = vpop.permute.xlu0 %5593
  %5595 = vrot.lane.b32.xlu0 %v3042, 64
  %v5596 = vpop.permute.xlu0 %5595
  %5597 = vrot.lane.b32.xlu0 %v3044, 64
  %v5598 = vpop.permute.xlu0 %5597
  %5599 = vrot.lane.b32.xlu0 %v3047, 64
  %v5600 = vpop.permute.xlu0 %5599
  %5601 = vrot.lane.b32.xlu0 %v3049, 64
  %v5602 = vpop.permute.xlu0 %5601
  %5603 = vrot.lane.b32.xlu0 %v4299, 64
  %v5604 = vpop.permute.xlu0 %5603
  %5605 = vrot.lane.b32.xlu0 %v4301, 64
  %v5606 = vpop.permute.xlu0 %5605
  %5607 = vrot.lane.b32.xlu0 %v3057, 64
  %v5608 = vpop.permute.xlu0 %5607
  %5609 = vrot.lane.b32.xlu0 %v3059, 64
  %v5610 = vpop.permute.xlu0 %5609
  %5611 = vrot.lane.b32.xlu0 %v3062, 64
  %v5612 = vpop.permute.xlu0 %5611
  %5613 = vrot.lane.b32.xlu0 %v3064, 64
  %v5614 = vpop.permute.xlu0 %5613
  %5615 = vrot.lane.b32.xlu0 %v3067, 64
  %v5616 = vpop.permute.xlu0 %5615
  %5617 = vrot.lane.b32.xlu0 %v3069, 64
  %v5618 = vpop.permute.xlu0 %5617
  %5619 = vrot.lane.b32.xlu0 %v3072, 64
  %v5620 = vpop.permute.xlu0 %5619
  %5621 = vrot.lane.b32.xlu0 %v3074, 64
  %v5622 = vpop.permute.xlu0 %5621
  %5623 = vrot.lane.b32.xlu0 %v3077, 64
  %v5624 = vpop.permute.xlu0 %5623
  %5625 = vrot.lane.b32.xlu0 %v3079, 64
  %v5626 = vpop.permute.xlu0 %5625
  %5627 = vrot.lane.b32.xlu0 %v3082, 64
  %v5628 = vpop.permute.xlu0 %5627
  %5629 = vrot.lane.b32.xlu0 %v3084, 64
  %v5630 = vpop.permute.xlu0 %5629
  %5631 = vrot.lane.b32.xlu0 %v3087, 64
  %v5632 = vpop.permute.xlu0 %5631
  %5633 = vrot.lane.b32.xlu0 %v3089, 64
  %v5634 = vpop.permute.xlu0 %5633
  %5635 = vrot.lane.b32.xlu0 %v3092, 64
  %v5636 = vpop.permute.xlu0 %5635
  %5637 = vrot.lane.b32.xlu0 %v3094, 64
  %v5638 = vpop.permute.xlu0 %5637
  %5639 = vrot.lane.b32.xlu0 %v3097, 64
  %v5640 = vpop.permute.xlu0 %5639
  %5641 = vrot.lane.b32.xlu0 %v3099, 64
  %v5642 = vpop.permute.xlu0 %5641
  %5643 = vrot.lane.b32.xlu0 %v3102, 64
  %v5644 = vpop.permute.xlu0 %5643
  %5645 = vrot.lane.b32.xlu0 %v3104, 64
  %v5646 = vpop.permute.xlu0 %5645
  %5647 = vrot.lane.b32.xlu0 %v3107, 64
  %v5648 = vpop.permute.xlu0 %5647
  %5649 = vrot.lane.b32.xlu0 %v3109, 64
  %v5650 = vpop.permute.xlu0 %5649
  %5651 = vrot.lane.b32.xlu0 %v3112, 64
  %v5652 = vpop.permute.xlu0 %5651
  %5653 = vrot.lane.b32.xlu0 %v3114, 64
  %v5654 = vpop.permute.xlu0 %5653
  %5655 = vrot.lane.b32.xlu0 %v3117, 64
  %v5656 = vpop.permute.xlu0 %5655
  %5657 = vrot.lane.b32.xlu0 %v3119, 64
  %v5658 = vpop.permute.xlu0 %5657
  %5659 = vrot.lane.b32.xlu0 %v3122, 64
  %v5660 = vpop.permute.xlu0 %5659
  %5661 = vrot.lane.b32.xlu0 %v3124, 64
  %v5662 = vpop.permute.xlu0 %5661
  %5663 = vrot.lane.b32.xlu0 %v4304, 64
  %v5664 = vpop.permute.xlu0 %5663
  %5665 = vrot.lane.b32.xlu0 %v4306, 64
  %v5666 = vpop.permute.xlu0 %5665
  %vm5789 = vcmask 64512
  %v5790 = vsel %vm5789, %v1895, %v2454
  %v5791 = vsel %vm5789, %v1512, %v2456
  %v5792 = vsel %vm5789, %v1896, %v2458
  %v5793 = vsel %vm5789, %v1515, %v2460
  %v5794 = vsel %vm5789, %v1897, %v2462
  %v5795 = vsel %vm5789, %v1518, %v2464
  %v5796 = vsel %vm5789, %v1898, %v2466
  %v5797 = vsel %vm5789, %v1521, %v2468
  %v5798 = vsel %vm5789, %v1899, %v2470
  %v5799 = vsel %vm5789, %v1524, %v2472
  %v5800 = vsel %vm5789, %v1900, %v2474
  %v5801 = vsel %vm5789, %v1527, %v2476
  %v5802 = vsel %vm5789, %v1901, %v2478
  %v5803 = vsel %vm5789, %v1530, %v2480
  %v5804 = vsel %vm5789, %v1902, %v2482
  %v5805 = vsel %vm5789, %v1533, %v2484
  %v5806 = vsel %vm5789, %v1903, %v2486
  %v5807 = vsel %vm5789, %v1536, %v2488
  %v5808 = vsel %vm5789, %v1904, %v2490
  %v5809 = vsel %vm5789, %v1539, %v2492
  %v5810 = vsel %vm5789, %v1905, %v2494
  %v5811 = vsel %vm5789, %v1542, %v2496
  %v5812 = vsel %vm5789, %v1906, %v2498
  %v5813 = vsel %vm5789, %v1545, %v2500
  %v5814 = vsel %vm5789, %v1907, %v2502
  %v5815 = vsel %vm5789, %v1548, %v2504
  %v5816 = vsel %vm5789, %v1908, %v2506
  %v5817 = vsel %vm5789, %v1551, %v2508
  %v5818 = vsel %vm5789, %v1909, %v2510
  %v5819 = vsel %vm5789, %v1554, %v2512
  %v5820 = vsel %vm5789, %v1910, %v2514
  %v5821 = vsel %vm5789, %v1557, %v2516
  %v5822 = vsel %vm5789, %v1912, %v2518
  %v5823 = vsel %vm5789, %v1563, %v2520
  %v5824 = vsel %vm5789, %v1913, %v2522
  %v5825 = vsel %vm5789, %v1566, %v2524
  %v5826 = vsel %vm5789, %v1914, %v2526
  %v5827 = vsel %vm5789, %v1569, %v2528
  %v5828 = vsel %vm5789, %v1915, %v2530
  %v5829 = vsel %vm5789, %v1572, %v2532
  %v5830 = vsel %vm5789, %v1916, %v2534
  %v5831 = vsel %vm5789, %v1575, %v2536
  %v5832 = vsel %vm5789, %v1917, %v2538
  %v5833 = vsel %vm5789, %v1578, %v2540
  %v5834 = vsel %vm5789, %v1918, %v2542
  %v5835 = vsel %vm5789, %v1581, %v2544
  %v5836 = vsel %vm5789, %v1919, %v2546
  %v5837 = vsel %vm5789, %v1584, %v2548
  %v5838 = vsel %vm5789, %v1920, %v2550
  %v5839 = vsel %vm5789, %v1587, %v2552
  %v5840 = vsel %vm5789, %v1921, %v2554
  %v5841 = vsel %vm5789, %v1590, %v2556
  %v5842 = vsel %vm5789, %v1922, %v2558
  %v5843 = vsel %vm5789, %v1593, %v2560
  %v5844 = vsel %vm5789, %v1923, %v2562
  %v5845 = vsel %vm5789, %v1596, %v2564
  %v5846 = vsel %vm5789, %v1924, %v2566
  %v5847 = vsel %vm5789, %v1599, %v2568
  %v5848 = vsel %vm5789, %v1925, %v2570
  %v5849 = vsel %vm5789, %v1602, %v2572
  %v5850 = vsel %vm5789, %v1926, %v2574
  %v5851 = vsel %vm5789, %v1605, %v2576
  %v5852 = vsel %vm5789, %v1928, %v2578
  %v5853 = vsel %vm5789, %v1611, %v2580
  %v5854 = vsel %vm5789, %v1929, %v2582
  %v5855 = vsel %vm5789, %v1614, %v2584
  %v5856 = vsel %vm5789, %v1930, %v2586
  %v5857 = vsel %vm5789, %v1617, %v2588
  %v5858 = vsel %vm5789, %v1931, %v2590
  %v5859 = vsel %vm5789, %v1620, %v2592
  %v5860 = vsel %vm5789, %v1932, %v2594
  %v5861 = vsel %vm5789, %v1623, %v2596
  %v5862 = vsel %vm5789, %v1933, %v2598
  %v5863 = vsel %vm5789, %v1626, %v2600
  %v5864 = vsel %vm5789, %v1934, %v2602
  %v5865 = vsel %vm5789, %v1629, %v2604
  %v5866 = vsel %vm5789, %v1935, %v2606
  %v5867 = vsel %vm5789, %v1632, %v2608
  %v5868 = vsel %vm5789, %v1936, %v2610
  %v5869 = vsel %vm5789, %v1635, %v2612
  %v5870 = vsel %vm5789, %v1937, %v2614
  %v5871 = vsel %vm5789, %v1638, %v2616
  %v5872 = vsel %vm5789, %v1938, %v2618
  %v5873 = vsel %vm5789, %v1641, %v2620
  %v5874 = vsel %vm5789, %v1939, %v2622
  %v5875 = vsel %vm5789, %v1644, %v2624
  %v5876 = vsel %vm5789, %v1940, %v2626
  %v5877 = vsel %vm5789, %v1647, %v2628
  %v5878 = vsel %vm5789, %v1941, %v2630
  %v5879 = vsel %vm5789, %v1650, %v2632
  %v5880 = vsel %vm5789, %v1942, %v2634
  %v5881 = vsel %vm5789, %v1653, %v2636
  %v5882 = vsel %vm5789, %v1944, %v2638
  %v5883 = vsel %vm5789, %v1659, %v2640
  %v5884 = vsel %vm5789, %v1945, %v2642
  %v5885 = vsel %vm5789, %v1662, %v2644
  %v5886 = vsel %vm5789, %v1946, %v2646
  %v5887 = vsel %vm5789, %v1665, %v2648
  %v5888 = vsel %vm5789, %v1947, %v2650
  %v5889 = vsel %vm5789, %v1668, %v2652
  %v5890 = vsel %vm5789, %v1948, %v2654
  %v5891 = vsel %vm5789, %v1671, %v2656
  %v5892 = vsel %vm5789, %v1949, %v2658
  %v5893 = vsel %vm5789, %v1674, %v2660
  %v5894 = vsel %vm5789, %v1950, %v2662
  %v5895 = vsel %vm5789, %v1677, %v2664
  %v5896 = vsel %vm5789, %v1951, %v2666
  %v5897 = vsel %vm5789, %v1680, %v2668
  %v5898 = vsel %vm5789, %v1952, %v2670
  %v5899 = vsel %vm5789, %v1683, %v2672
  %v5900 = vsel %vm5789, %v1953, %v2674
  %v5901 = vsel %vm5789, %v1686, %v2676
  %v5902 = vsel %vm5789, %v1954, %v2678
  %v5903 = vsel %vm5789, %v1689, %v2680
  %v5904 = vsel %vm5789, %v1955, %v2682
  %v5905 = vsel %vm5789, %v1692, %v2684
  %v5906 = vsel %vm5789, %v1956, %v2686
  %v5907 = vsel %vm5789, %v1695, %v2688
  %v5908 = vsel %vm5789, %v1957, %v2690
  %v5909 = vsel %vm5789, %v1698, %v2692
  %v5910 = vsel %vm5789, %v1958, %v2694
  %v5911 = vsel %vm5789, %v1701, %v2696
  %vm5912 = vcmask 130048
  %v5913 = vsel %vm5912, %v5790, %v3126
  %v5914 = vsel %vm5912, %v5791, %v3128
  %v5915 = vsel %vm5912, %v5792, %v3130
  %v5916 = vsel %vm5912, %v5793, %v3132
  %v5917 = vsel %vm5912, %v5794, %v3134
  %v5918 = vsel %vm5912, %v5795, %v3136
  %v5919 = vsel %vm5912, %v5796, %v3138
  %v5920 = vsel %vm5912, %v5797, %v3140
  %v5921 = vsel %vm5912, %v5798, %v3142
  %v5922 = vsel %vm5912, %v5799, %v3144
  %v5923 = vsel %vm5912, %v5800, %v3146
  %v5924 = vsel %vm5912, %v5801, %v3148
  %v5925 = vsel %vm5912, %v5802, %v3150
  %v5926 = vsel %vm5912, %v5803, %v3152
  %v5927 = vsel %vm5912, %v5804, %v3154
  %v5928 = vsel %vm5912, %v5805, %v3156
  %v5929 = vsel %vm5912, %v5806, %v3158
  %v5930 = vsel %vm5912, %v5807, %v3160
  %v5931 = vsel %vm5912, %v5808, %v3162
  %v5932 = vsel %vm5912, %v5809, %v3164
  %v5933 = vsel %vm5912, %v5810, %v3166
  %v5934 = vsel %vm5912, %v5811, %v3168
  %v5935 = vsel %vm5912, %v5812, %v3170
  %v5936 = vsel %vm5912, %v5813, %v3172
  %v5937 = vsel %vm5912, %v5814, %v3174
  %v5938 = vsel %vm5912, %v5815, %v3176
  %v5939 = vsel %vm5912, %v5816, %v3178
  %v5940 = vsel %vm5912, %v5817, %v3180
  %v5941 = vsel %vm5912, %v5818, %v3182
  %v5942 = vsel %vm5912, %v5819, %v3184
  %v5943 = vsel %vm5912, %v5820, %v3186
  %v5944 = vsel %vm5912, %v5821, %v3188
  %v5945 = vsel %vm5912, %v5822, %v3190
  %v5946 = vsel %vm5912, %v5823, %v3192
  %v5947 = vsel %vm5912, %v5824, %v3194
  %v5948 = vsel %vm5912, %v5825, %v3196
  %v5949 = vsel %vm5912, %v5826, %v3198
  %v5950 = vsel %vm5912, %v5827, %v3200
  %v5951 = vsel %vm5912, %v5828, %v3202
  %v5952 = vsel %vm5912, %v5829, %v3204
  %v5953 = vsel %vm5912, %v5830, %v3206
  %v5954 = vsel %vm5912, %v5831, %v3208
  %v5955 = vsel %vm5912, %v5832, %v3210
  %v5956 = vsel %vm5912, %v5833, %v3212
  %v5957 = vsel %vm5912, %v5834, %v3214
  %v5958 = vsel %vm5912, %v5835, %v3216
  %v5959 = vsel %vm5912, %v5836, %v3218
  %v5960 = vsel %vm5912, %v5837, %v3220
  %v5961 = vsel %vm5912, %v5838, %v3222
  %v5962 = vsel %vm5912, %v5839, %v3224
  %v5963 = vsel %vm5912, %v5840, %v3226
  %v5964 = vsel %vm5912, %v5841, %v3228
  %v5965 = vsel %vm5912, %v5842, %v3230
  %v5966 = vsel %vm5912, %v5843, %v3232
  %v5967 = vsel %vm5912, %v5844, %v3234
  %v5968 = vsel %vm5912, %v5845, %v3236
  %v5969 = vsel %vm5912, %v5846, %v3238
  %v5970 = vsel %vm5912, %v5847, %v3240
  %v5971 = vsel %vm5912, %v5848, %v3242
  %v5972 = vsel %vm5912, %v5849, %v3244
  %v5973 = vsel %vm5912, %v5850, %v3246
  %v5974 = vsel %vm5912, %v5851, %v3248
  %v5975 = vsel %vm5912, %v5852, %v3250
  %v5976 = vsel %vm5912, %v5853, %v3252
  %v5977 = vsel %vm5912, %v5854, %v3254
  %v5978 = vsel %vm5912, %v5855, %v3256
  %v5979 = vsel %vm5912, %v5856, %v3258
  %v5980 = vsel %vm5912, %v5857, %v3260
  %v5981 = vsel %vm5912, %v5858, %v3262
  %v5982 = vsel %vm5912, %v5859, %v3264
  %v5983 = vsel %vm5912, %v5860, %v3266
  %v5984 = vsel %vm5912, %v5861, %v3268
  %v5985 = vsel %vm5912, %v5862, %v3270
  %v5986 = vsel %vm5912, %v5863, %v3272
  %v5987 = vsel %vm5912, %v5864, %v3274
  %v5988 = vsel %vm5912, %v5865, %v3276
  %v5989 = vsel %vm5912, %v5866, %v3278
  %v5990 = vsel %vm5912, %v5867, %v3280
  %v5991 = vsel %vm5912, %v5868, %v3282
  %v5992 = vsel %vm5912, %v5869, %v3284
  %v5993 = vsel %vm5912, %v5870, %v3286
  %v5994 = vsel %vm5912, %v5871, %v3288
  %v5995 = vsel %vm5912, %v5872, %v3290
  %v5996 = vsel %vm5912, %v5873, %v3292
  %v5997 = vsel %vm5912, %v5874, %v3294
  %v5998 = vsel %vm5912, %v5875, %v3296
  %v5999 = vsel %vm5912, %v5876, %v3298
  %v6000 = vsel %vm5912, %v5877, %v3300
  %v6001 = vsel %vm5912, %v5878, %v3302
  %v6002 = vsel %vm5912, %v5879, %v3304
  %v6003 = vsel %vm5912, %v5880, %v3306
  %v6004 = vsel %vm5912, %v5881, %v3308
  %v6005 = vsel %vm5912, %v5882, %v3310
  %v6006 = vsel %vm5912, %v5883, %v3312
  %v6007 = vsel %vm5912, %v5884, %v3314
  %v6008 = vsel %vm5912, %v5885, %v3316
  %v6009 = vsel %vm5912, %v5886, %v3318
  %v6010 = vsel %vm5912, %v5887, %v3320
  %v6011 = vsel %vm5912, %v5888, %v3322
  %v6012 = vsel %vm5912, %v5889, %v3324
  %v6013 = vsel %vm5912, %v5890, %v3326
  %v6014 = vsel %vm5912, %v5891, %v3328
  %v6015 = vsel %vm5912, %v5892, %v3330
  %v6016 = vsel %vm5912, %v5893, %v3332
  %v6017 = vsel %vm5912, %v5894, %v3334
  %v6018 = vsel %vm5912, %v5895, %v3336
  %v6019 = vsel %vm5912, %v5896, %v3338
  %v6020 = vsel %vm5912, %v5897, %v3340
  %v6021 = vsel %vm5912, %v5898, %v3342
  %v6022 = vsel %vm5912, %v5899, %v3344
  %v6023 = vsel %vm5912, %v5900, %v3346
  %v6024 = vsel %vm5912, %v5901, %v3348
  %v6025 = vsel %vm5912, %v5902, %v3350
  %v6026 = vsel %vm5912, %v5903, %v3352
  %v6027 = vsel %vm5912, %v5904, %v3354
  %v6028 = vsel %vm5912, %v5905, %v3356
  %v6029 = vsel %vm5912, %v5906, %v3358
  %v6030 = vsel %vm5912, %v5907, %v3360
  %v6031 = vsel %vm5912, %v5908, %v3362
  %v6032 = vsel %vm5912, %v5909, %v3364
  %v6033 = vsel %vm5912, %v5910, %v3366
  %v6034 = vsel %vm5912, %v5911, %v3368
  %vm6035 = vcmask 195584
  %v6036 = vsel %vm6035, %v5913, %v3496
  %v6037 = vsel %vm6035, %v5914, %v3498
  %v6038 = vsel %vm6035, %v5915, %v3500
  %v6039 = vsel %vm6035, %v5916, %v3502
  %v6040 = vsel %vm6035, %v5917, %v3504
  %v6041 = vsel %vm6035, %v5918, %v3506
  %v6042 = vsel %vm6035, %v5919, %v3508
  %v6043 = vsel %vm6035, %v5920, %v3510
  %v6044 = vsel %vm6035, %v5921, %v3512
  %v6045 = vsel %vm6035, %v5922, %v3514
  %v6046 = vsel %vm6035, %v5923, %v3516
  %v6047 = vsel %vm6035, %v5924, %v3518
  %v6048 = vsel %vm6035, %v5925, %v3520
  %v6049 = vsel %vm6035, %v5926, %v3522
  %v6050 = vsel %vm6035, %v5927, %v3524
  %v6051 = vsel %vm6035, %v5928, %v3526
  %v6052 = vsel %vm6035, %v5929, %v3528
  %v6053 = vsel %vm6035, %v5930, %v3530
  %v6054 = vsel %vm6035, %v5931, %v3532
  %v6055 = vsel %vm6035, %v5932, %v3534
  %v6056 = vsel %vm6035, %v5933, %v3536
  %v6057 = vsel %vm6035, %v5934, %v3538
  %v6058 = vsel %vm6035, %v5935, %v3540
  %v6059 = vsel %vm6035, %v5936, %v3542
  %v6060 = vsel %vm6035, %v5937, %v3544
  %v6061 = vsel %vm6035, %v5938, %v3546
  %v6062 = vsel %vm6035, %v5939, %v3548
  %v6063 = vsel %vm6035, %v5940, %v3550
  %v6064 = vsel %vm6035, %v5941, %v3552
  %v6065 = vsel %vm6035, %v5942, %v3554
  %v6066 = vsel %vm6035, %v5943, %v3556
  %v6067 = vsel %vm6035, %v5944, %v3558
  %v6068 = vsel %vm6035, %v5913, %v3560
  %v6069 = vsel %vm6035, %v5914, %v3562
  %v6070 = vsel %vm6035, %v5945, %v3564
  %v6071 = vsel %vm6035, %v5946, %v3566
  %v6072 = vsel %vm6035, %v5947, %v3568
  %v6073 = vsel %vm6035, %v5948, %v3570
  %v6074 = vsel %vm6035, %v5949, %v3572
  %v6075 = vsel %vm6035, %v5950, %v3574
  %v6076 = vsel %vm6035, %v5951, %v3576
  %v6077 = vsel %vm6035, %v5952, %v3578
  %v6078 = vsel %vm6035, %v5953, %v3580
  %v6079 = vsel %vm6035, %v5954, %v3582
  %v6080 = vsel %vm6035, %v5955, %v3584
  %v6081 = vsel %vm6035, %v5956, %v3586
  %v6082 = vsel %vm6035, %v5957, %v3588
  %v6083 = vsel %vm6035, %v5958, %v3590
  %v6084 = vsel %vm6035, %v5959, %v3592
  %v6085 = vsel %vm6035, %v5960, %v3594
  %v6086 = vsel %vm6035, %v5961, %v3596
  %v6087 = vsel %vm6035, %v5962, %v3598
  %v6088 = vsel %vm6035, %v5963, %v3600
  %v6089 = vsel %vm6035, %v5964, %v3602
  %v6090 = vsel %vm6035, %v5965, %v3604
  %v6091 = vsel %vm6035, %v5966, %v3606
  %v6092 = vsel %vm6035, %v5967, %v3608
  %v6093 = vsel %vm6035, %v5968, %v3610
  %v6094 = vsel %vm6035, %v5969, %v3612
  %v6095 = vsel %vm6035, %v5970, %v3614
  %v6096 = vsel %vm6035, %v5971, %v3616
  %v6097 = vsel %vm6035, %v5972, %v3618
  %v6098 = vsel %vm6035, %v5973, %v3620
  %v6099 = vsel %vm6035, %v5974, %v3622
  %v6100 = vsel %vm6035, %v5913, %v3624
  %v6101 = vsel %vm6035, %v5914, %v3626
  %v6102 = vsel %vm6035, %v5975, %v3628
  %v6103 = vsel %vm6035, %v5976, %v3630
  %v6104 = vsel %vm6035, %v5977, %v3632
  %v6105 = vsel %vm6035, %v5978, %v3634
  %v6106 = vsel %vm6035, %v5979, %v3636
  %v6107 = vsel %vm6035, %v5980, %v3638
  %v6108 = vsel %vm6035, %v5981, %v3640
  %v6109 = vsel %vm6035, %v5982, %v3642
  %v6110 = vsel %vm6035, %v5983, %v3644
  %v6111 = vsel %vm6035, %v5984, %v3646
  %v6112 = vsel %vm6035, %v5985, %v3648
  %v6113 = vsel %vm6035, %v5986, %v3650
  %v6114 = vsel %vm6035, %v5987, %v3652
  %v6115 = vsel %vm6035, %v5988, %v3654
  %v6116 = vsel %vm6035, %v5989, %v3656
  %v6117 = vsel %vm6035, %v5990, %v3658
  %v6118 = vsel %vm6035, %v5991, %v3660
  %v6119 = vsel %vm6035, %v5992, %v3662
  %v6120 = vsel %vm6035, %v5993, %v3664
  %v6121 = vsel %vm6035, %v5994, %v3666
  %v6122 = vsel %vm6035, %v5995, %v3668
  %v6123 = vsel %vm6035, %v5996, %v3670
  %v6124 = vsel %vm6035, %v5997, %v3672
  %v6125 = vsel %vm6035, %v5998, %v3674
  %v6126 = vsel %vm6035, %v5999, %v3676
  %v6127 = vsel %vm6035, %v6000, %v3678
  %v6128 = vsel %vm6035, %v6001, %v3680
  %v6129 = vsel %vm6035, %v6002, %v3682
  %v6130 = vsel %vm6035, %v6003, %v3684
  %v6131 = vsel %vm6035, %v6004, %v3686
  %v6132 = vsel %vm6035, %v5913, %v3688
  %v6133 = vsel %vm6035, %v5914, %v3690
  %v6134 = vsel %vm6035, %v6005, %v3692
  %v6135 = vsel %vm6035, %v6006, %v3694
  %v6136 = vsel %vm6035, %v6007, %v3696
  %v6137 = vsel %vm6035, %v6008, %v3698
  %v6138 = vsel %vm6035, %v6009, %v3700
  %v6139 = vsel %vm6035, %v6010, %v3702
  %v6140 = vsel %vm6035, %v6011, %v3704
  %v6141 = vsel %vm6035, %v6012, %v3706
  %v6142 = vsel %vm6035, %v6013, %v3708
  %v6143 = vsel %vm6035, %v6014, %v3710
  %v6144 = vsel %vm6035, %v6015, %v3712
  %v6145 = vsel %vm6035, %v6016, %v3714
  %v6146 = vsel %vm6035, %v6017, %v3716
  %v6147 = vsel %vm6035, %v6018, %v3718
  %v6148 = vsel %vm6035, %v6019, %v3720
  %v6149 = vsel %vm6035, %v6020, %v3722
  %v6150 = vsel %vm6035, %v6021, %v3724
  %v6151 = vsel %vm6035, %v6022, %v3726
  %v6152 = vsel %vm6035, %v6023, %v3728
  %v6153 = vsel %vm6035, %v6024, %v3730
  %v6154 = vsel %vm6035, %v6025, %v3732
  %v6155 = vsel %vm6035, %v6026, %v3734
  %v6156 = vsel %vm6035, %v6027, %v3736
  %v6157 = vsel %vm6035, %v6028, %v3738
  %v6158 = vsel %vm6035, %v6029, %v3740
  %v6159 = vsel %vm6035, %v6030, %v3742
  %v6160 = vsel %vm6035, %v6031, %v3744
  %v6161 = vsel %vm6035, %v6032, %v3746
  %v6162 = vsel %vm6035, %v6033, %v3748
  %v6163 = vsel %vm6035, %v6034, %v3750
  %vm6164 = vcmask 261120
  %v6165 = vsel %vm6164, %v6036, %v3904
  %v6166 = vsel %vm6164, %v6037, %v3906
  %v6167 = vsel %vm6164, %v6038, %v3908
  %v6168 = vsel %vm6164, %v6039, %v3910
  %v6169 = vsel %vm6164, %v6040, %v3912
  %v6170 = vsel %vm6164, %v6041, %v3914
  %v6171 = vsel %vm6164, %v6042, %v3916
  %v6172 = vsel %vm6164, %v6043, %v3918
  %v6173 = vsel %vm6164, %v6044, %v3920
  %v6174 = vsel %vm6164, %v6045, %v3922
  %v6175 = vsel %vm6164, %v6046, %v3924
  %v6176 = vsel %vm6164, %v6047, %v3926
  %v6177 = vsel %vm6164, %v6048, %v3928
  %v6178 = vsel %vm6164, %v6049, %v3930
  %v6179 = vsel %vm6164, %v6050, %v3932
  %v6180 = vsel %vm6164, %v6051, %v3934
  %v6181 = vsel %vm6164, %v6052, %v3936
  %v6182 = vsel %vm6164, %v6053, %v3938
  %v6183 = vsel %vm6164, %v6054, %v3940
  %v6184 = vsel %vm6164, %v6055, %v3942
  %v6185 = vsel %vm6164, %v6056, %v3944
  %v6186 = vsel %vm6164, %v6057, %v3946
  %v6187 = vsel %vm6164, %v6058, %v3948
  %v6188 = vsel %vm6164, %v6059, %v3950
  %v6189 = vsel %vm6164, %v6060, %v3952
  %v6190 = vsel %vm6164, %v6061, %v3954
  %v6191 = vsel %vm6164, %v6062, %v3956
  %v6192 = vsel %vm6164, %v6063, %v3958
  %v6193 = vsel %vm6164, %v6064, %v3960
  %v6194 = vsel %vm6164, %v6065, %v3962
  %v6195 = vsel %vm6164, %v6066, %v3964
  %v6196 = vsel %vm6164, %v6067, %v3966
  %v6197 = vsel %vm6164, %v6068, %v3968
  %v6198 = vsel %vm6164, %v6069, %v3970
  %v6199 = vsel %vm6164, %v6070, %v3972
  %v6200 = vsel %vm6164, %v6071, %v3974
  %v6201 = vsel %vm6164, %v6072, %v3976
  %v6202 = vsel %vm6164, %v6073, %v3978
  %v6203 = vsel %vm6164, %v6074, %v3980
  %v6204 = vsel %vm6164, %v6075, %v3982
  %v6205 = vsel %vm6164, %v6076, %v3984
  %v6206 = vsel %vm6164, %v6077, %v3986
  %v6207 = vsel %vm6164, %v6078, %v3988
  %v6208 = vsel %vm6164, %v6079, %v3990
  %v6209 = vsel %vm6164, %v6080, %v3992
  %v6210 = vsel %vm6164, %v6081, %v3994
  %v6211 = vsel %vm6164, %v6082, %v3996
  %v6212 = vsel %vm6164, %v6083, %v3998
  %v6213 = vsel %vm6164, %v6084, %v4000
  %v6214 = vsel %vm6164, %v6085, %v4002
  %v6215 = vsel %vm6164, %v6086, %v4004
  %v6216 = vsel %vm6164, %v6087, %v4006
  %v6217 = vsel %vm6164, %v6088, %v4008
  %v6218 = vsel %vm6164, %v6089, %v4010
  %v6219 = vsel %vm6164, %v6090, %v4012
  %v6220 = vsel %vm6164, %v6091, %v4014
  %v6221 = vsel %vm6164, %v6092, %v4016
  %v6222 = vsel %vm6164, %v6093, %v4018
  %v6223 = vsel %vm6164, %v6094, %v4020
  %v6224 = vsel %vm6164, %v6095, %v4022
  %v6225 = vsel %vm6164, %v6096, %v4024
  %v6226 = vsel %vm6164, %v6097, %v4026
  %v6227 = vsel %vm6164, %v6098, %v4028
  %v6228 = vsel %vm6164, %v6099, %v4030
  %v6229 = vsel %vm6164, %v6100, %v4032
  %v6230 = vsel %vm6164, %v6101, %v4034
  %v6231 = vsel %vm6164, %v6102, %v4036
  %v6232 = vsel %vm6164, %v6103, %v4038
  %v6233 = vsel %vm6164, %v6104, %v4040
  %v6234 = vsel %vm6164, %v6105, %v4042
  %v6235 = vsel %vm6164, %v6106, %v4044
  %v6236 = vsel %vm6164, %v6107, %v4046
  %v6237 = vsel %vm6164, %v6108, %v4048
  %v6238 = vsel %vm6164, %v6109, %v4050
  %v6239 = vsel %vm6164, %v6110, %v4052
  %v6240 = vsel %vm6164, %v6111, %v4054
  %v6241 = vsel %vm6164, %v6112, %v4056
  %v6242 = vsel %vm6164, %v6113, %v4058
  %v6243 = vsel %vm6164, %v6114, %v4060
  %v6244 = vsel %vm6164, %v6115, %v4062
  %v6245 = vsel %vm6164, %v6116, %v4064
  %v6246 = vsel %vm6164, %v6117, %v4066
  %v6247 = vsel %vm6164, %v6118, %v4068
  %v6248 = vsel %vm6164, %v6119, %v4070
  %v6249 = vsel %vm6164, %v6120, %v4072
  %v6250 = vsel %vm6164, %v6121, %v4074
  %v6251 = vsel %vm6164, %v6122, %v4076
  %v6252 = vsel %vm6164, %v6123, %v4078
  %v6253 = vsel %vm6164, %v6124, %v4080
  %v6254 = vsel %vm6164, %v6125, %v4082
  %v6255 = vsel %vm6164, %v6126, %v4084
  %v6256 = vsel %vm6164, %v6127, %v4086
  %v6257 = vsel %vm6164, %v6128, %v4088
  %v6258 = vsel %vm6164, %v6129, %v4090
  %v6259 = vsel %vm6164, %v6130, %v4092
  %v6260 = vsel %vm6164, %v6131, %v4094
  %v6261 = vsel %vm6164, %v6132, %v4096
  %v6262 = vsel %vm6164, %v6133, %v4098
  %v6263 = vsel %vm6164, %v6134, %v4100
  %v6264 = vsel %vm6164, %v6135, %v4102
  %v6265 = vsel %vm6164, %v6136, %v4104
  %v6266 = vsel %vm6164, %v6137, %v4106
  %v6267 = vsel %vm6164, %v6138, %v4108
  %v6268 = vsel %vm6164, %v6139, %v4110
  %v6269 = vsel %vm6164, %v6140, %v4112
  %v6270 = vsel %vm6164, %v6141, %v4114
  %v6271 = vsel %vm6164, %v6142, %v4116
  %v6272 = vsel %vm6164, %v6143, %v4118
  %v6273 = vsel %vm6164, %v6144, %v4120
  %v6274 = vsel %vm6164, %v6145, %v4122
  %v6275 = vsel %vm6164, %v6146, %v4124
  %v6276 = vsel %vm6164, %v6147, %v4126
  %v6277 = vsel %vm6164, %v6148, %v4128
  %v6278 = vsel %vm6164, %v6149, %v4130
  %v6279 = vsel %vm6164, %v6150, %v4132
  %v6280 = vsel %vm6164, %v6151, %v4134
  %v6281 = vsel %vm6164, %v6152, %v4136
  %v6282 = vsel %vm6164, %v6153, %v4138
  %v6283 = vsel %vm6164, %v6154, %v4140
  %v6284 = vsel %vm6164, %v6155, %v4142
  %v6285 = vsel %vm6164, %v6156, %v4144
  %v6286 = vsel %vm6164, %v6157, %v4146
  %v6287 = vsel %vm6164, %v6158, %v4148
  %v6288 = vsel %vm6164, %v6159, %v4150
  %v6289 = vsel %vm6164, %v6160, %v4152
  %v6290 = vsel %vm6164, %v6161, %v4154
  %v6291 = vsel %vm6164, %v6162, %v4156
  %v6292 = vsel %vm6164, %v6163, %v4158
  %vm6293 = vcmask 326656
  %v6294 = vsel %vm6293, %v6165, %v4308
  %v6295 = vsel %vm6293, %v6166, %v4310
  %v6296 = vsel %vm6293, %v6167, %v4312
  %v6297 = vsel %vm6293, %v6168, %v4314
  %v6298 = vsel %vm6293, %v6169, %v4316
  %v6299 = vsel %vm6293, %v6170, %v4318
  %v6300 = vsel %vm6293, %v6171, %v4320
  %v6301 = vsel %vm6293, %v6172, %v4322
  %v6302 = vsel %vm6293, %v6173, %v4324
  %v6303 = vsel %vm6293, %v6174, %v4326
  %v6304 = vsel %vm6293, %v6175, %v4328
  %v6305 = vsel %vm6293, %v6176, %v4330
  %v6306 = vsel %vm6293, %v6177, %v4332
  %v6307 = vsel %vm6293, %v6178, %v4334
  %v6308 = vsel %vm6293, %v6179, %v4336
  %v6309 = vsel %vm6293, %v6180, %v4338
  %v6310 = vsel %vm6293, %v6181, %v4340
  %v6311 = vsel %vm6293, %v6182, %v4342
  %v6312 = vsel %vm6293, %v6183, %v4344
  %v6313 = vsel %vm6293, %v6184, %v4346
  %v6314 = vsel %vm6293, %v6185, %v4348
  %v6315 = vsel %vm6293, %v6186, %v4350
  %v6316 = vsel %vm6293, %v6187, %v4352
  %v6317 = vsel %vm6293, %v6188, %v4354
  %v6318 = vsel %vm6293, %v6189, %v4356
  %v6319 = vsel %vm6293, %v6190, %v4358
  %v6320 = vsel %vm6293, %v6191, %v4360
  %v6321 = vsel %vm6293, %v6192, %v4362
  %v6322 = vsel %vm6293, %v6193, %v4364
  %v6323 = vsel %vm6293, %v6194, %v4366
  %v6324 = vsel %vm6293, %v6195, %v4368
  %v6325 = vsel %vm6293, %v6196, %v4370
  %v6326 = vsel %vm6293, %v6197, %v4372
  %v6327 = vsel %vm6293, %v6198, %v4374
  %v6328 = vsel %vm6293, %v6199, %v4376
  %v6329 = vsel %vm6293, %v6200, %v4378
  %v6330 = vsel %vm6293, %v6201, %v4380
  %v6331 = vsel %vm6293, %v6202, %v4382
  %v6332 = vsel %vm6293, %v6203, %v4384
  %v6333 = vsel %vm6293, %v6204, %v4386
  %v6334 = vsel %vm6293, %v6205, %v4388
  %v6335 = vsel %vm6293, %v6206, %v4390
  %v6336 = vsel %vm6293, %v6207, %v4392
  %v6337 = vsel %vm6293, %v6208, %v4394
  %v6338 = vsel %vm6293, %v6209, %v4396
  %v6339 = vsel %vm6293, %v6210, %v4398
  %v6340 = vsel %vm6293, %v6211, %v4400
  %v6341 = vsel %vm6293, %v6212, %v4402
  %v6342 = vsel %vm6293, %v6213, %v4404
  %v6343 = vsel %vm6293, %v6214, %v4406
  %v6344 = vsel %vm6293, %v6215, %v4408
  %v6345 = vsel %vm6293, %v6216, %v4410
  %v6346 = vsel %vm6293, %v6217, %v4412
  %v6347 = vsel %vm6293, %v6218, %v4414
  %v6348 = vsel %vm6293, %v6219, %v4416
  %v6349 = vsel %vm6293, %v6220, %v4418
  %v6350 = vsel %vm6293, %v6221, %v4420
  %v6351 = vsel %vm6293, %v6222, %v4422
  %v6352 = vsel %vm6293, %v6223, %v4424
  %v6353 = vsel %vm6293, %v6224, %v4426
  %v6354 = vsel %vm6293, %v6225, %v4428
  %v6355 = vsel %vm6293, %v6226, %v4430
  %v6356 = vsel %vm6293, %v6227, %v4432
  %v6357 = vsel %vm6293, %v6228, %v4434
  %v6358 = vsel %vm6293, %v6229, %v4436
  %v6359 = vsel %vm6293, %v6230, %v4438
  %v6360 = vsel %vm6293, %v6231, %v4440
  %v6361 = vsel %vm6293, %v6232, %v4442
  %v6362 = vsel %vm6293, %v6233, %v4444
  %v6363 = vsel %vm6293, %v6234, %v4446
  %v6364 = vsel %vm6293, %v6235, %v4448
  %v6365 = vsel %vm6293, %v6236, %v4450
  %v6366 = vsel %vm6293, %v6237, %v4452
  %v6367 = vsel %vm6293, %v6238, %v4454
  %v6368 = vsel %vm6293, %v6239, %v4456
  %v6369 = vsel %vm6293, %v6240, %v4458
  %v6370 = vsel %vm6293, %v6241, %v4460
  %v6371 = vsel %vm6293, %v6242, %v4462
  %v6372 = vsel %vm6293, %v6243, %v4464
  %v6373 = vsel %vm6293, %v6244, %v4466
  %v6374 = vsel %vm6293, %v6245, %v4468
  %v6375 = vsel %vm6293, %v6246, %v4470
  %v6376 = vsel %vm6293, %v6247, %v4472
  %v6377 = vsel %vm6293, %v6248, %v4474
  %v6378 = vsel %vm6293, %v6249, %v4476
  %v6379 = vsel %vm6293, %v6250, %v4478
  %v6380 = vsel %vm6293, %v6251, %v4480
  %v6381 = vsel %vm6293, %v6252, %v4482
  %v6382 = vsel %vm6293, %v6253, %v4484
  %v6383 = vsel %vm6293, %v6254, %v4486
  %v6384 = vsel %vm6293, %v6255, %v4488
  %v6385 = vsel %vm6293, %v6256, %v4490
  %v6386 = vsel %vm6293, %v6257, %v4492
  %v6387 = vsel %vm6293, %v6258, %v4494
  %v6388 = vsel %vm6293, %v6259, %v4496
  %v6389 = vsel %vm6293, %v6260, %v4498
  %v6390 = vsel %vm6293, %v6261, %v4500
  %v6391 = vsel %vm6293, %v6262, %v4502
  %v6392 = vsel %vm6293, %v6263, %v4504
  %v6393 = vsel %vm6293, %v6264, %v4506
  %v6394 = vsel %vm6293, %v6265, %v4508
  %v6395 = vsel %vm6293, %v6266, %v4510
  %v6396 = vsel %vm6293, %v6267, %v4512
  %v6397 = vsel %vm6293, %v6268, %v4514
  %v6398 = vsel %vm6293, %v6269, %v4516
  %v6399 = vsel %vm6293, %v6270, %v4518
  %v6400 = vsel %vm6293, %v6271, %v4520
  %v6401 = vsel %vm6293, %v6272, %v4522
  %v6402 = vsel %vm6293, %v6273, %v4524
  %v6403 = vsel %vm6293, %v6274, %v4526
  %v6404 = vsel %vm6293, %v6275, %v4528
  %v6405 = vsel %vm6293, %v6276, %v4530
  %v6406 = vsel %vm6293, %v6277, %v4532
  %v6407 = vsel %vm6293, %v6278, %v4534
  %v6408 = vsel %vm6293, %v6279, %v4536
  %v6409 = vsel %vm6293, %v6280, %v4538
  %v6410 = vsel %vm6293, %v6281, %v4540
  %v6411 = vsel %vm6293, %v6282, %v4542
  %v6412 = vsel %vm6293, %v6283, %v4544
  %v6413 = vsel %vm6293, %v6284, %v4546
  %v6414 = vsel %vm6293, %v6285, %v4548
  %v6415 = vsel %vm6293, %v6286, %v4550
  %v6416 = vsel %vm6293, %v6287, %v4552
  %v6417 = vsel %vm6293, %v6288, %v4554
  %v6418 = vsel %vm6293, %v6289, %v4556
  %v6419 = vsel %vm6293, %v6290, %v4558
  %v6420 = vsel %vm6293, %v6291, %v4560
  %v6421 = vsel %vm6293, %v6292, %v4562
  %vm6422 = vcmask 392192
  %v6423 = vsel %vm6422, %v6294, %v4692
  %v6424 = vsel %vm6422, %v6295, %v4694
  %v6425 = vsel %vm6422, %v6296, %v4696
  %v6426 = vsel %vm6422, %v6297, %v4698
  %v6427 = vsel %vm6422, %v6298, %v4700
  %v6428 = vsel %vm6422, %v6299, %v4702
  %v6429 = vsel %vm6422, %v6300, %v4704
  %v6430 = vsel %vm6422, %v6301, %v4706
  %v6431 = vsel %vm6422, %v6302, %v4708
  %v6432 = vsel %vm6422, %v6303, %v4710
  %v6433 = vsel %vm6422, %v6304, %v4712
  %v6434 = vsel %vm6422, %v6305, %v4714
  %v6435 = vsel %vm6422, %v6306, %v4716
  %v6436 = vsel %vm6422, %v6307, %v4718
  %v6437 = vsel %vm6422, %v6308, %v4720
  %v6438 = vsel %vm6422, %v6309, %v4722
  %v6439 = vsel %vm6422, %v6310, %v4724
  %v6440 = vsel %vm6422, %v6311, %v4726
  %v6441 = vsel %vm6422, %v6312, %v4728
  %v6442 = vsel %vm6422, %v6313, %v4730
  %v6443 = vsel %vm6422, %v6314, %v4732
  %v6444 = vsel %vm6422, %v6315, %v4734
  %v6445 = vsel %vm6422, %v6316, %v4736
  %v6446 = vsel %vm6422, %v6317, %v4738
  %v6447 = vsel %vm6422, %v6318, %v4740
  %v6448 = vsel %vm6422, %v6319, %v4742
  %v6449 = vsel %vm6422, %v6320, %v4744
  %v6450 = vsel %vm6422, %v6321, %v4746
  %v6451 = vsel %vm6422, %v6322, %v4748
  %v6452 = vsel %vm6422, %v6323, %v4750
  %v6453 = vsel %vm6422, %v6324, %v4752
  %v6454 = vsel %vm6422, %v6325, %v4754
  %v6455 = vsel %vm6422, %v6326, %v4756
  %v6456 = vsel %vm6422, %v6327, %v4758
  %v6457 = vsel %vm6422, %v6328, %v4760
  %v6458 = vsel %vm6422, %v6329, %v4762
  %v6459 = vsel %vm6422, %v6330, %v4764
  %v6460 = vsel %vm6422, %v6331, %v4766
  %v6461 = vsel %vm6422, %v6332, %v4768
  %v6462 = vsel %vm6422, %v6333, %v4770
  %v6463 = vsel %vm6422, %v6334, %v4772
  %v6464 = vsel %vm6422, %v6335, %v4774
  %v6465 = vsel %vm6422, %v6336, %v4776
  %v6466 = vsel %vm6422, %v6337, %v4778
  %v6467 = vsel %vm6422, %v6338, %v4780
  %v6468 = vsel %vm6422, %v6339, %v4782
  %v6469 = vsel %vm6422, %v6340, %v4784
  %v6470 = vsel %vm6422, %v6341, %v4786
  %v6471 = vsel %vm6422, %v6342, %v4788
  %v6472 = vsel %vm6422, %v6343, %v4790
  %v6473 = vsel %vm6422, %v6344, %v4792
  %v6474 = vsel %vm6422, %v6345, %v4794
  %v6475 = vsel %vm6422, %v6346, %v4796
  %v6476 = vsel %vm6422, %v6347, %v4798
  %v6477 = vsel %vm6422, %v6348, %v4800
  %v6478 = vsel %vm6422, %v6349, %v4802
  %v6479 = vsel %vm6422, %v6350, %v4804
  %v6480 = vsel %vm6422, %v6351, %v4806
  %v6481 = vsel %vm6422, %v6352, %v4808
  %v6482 = vsel %vm6422, %v6353, %v4810
  %v6483 = vsel %vm6422, %v6354, %v4812
  %v6484 = vsel %vm6422, %v6355, %v4814
  %v6485 = vsel %vm6422, %v6356, %v4752
  %v6486 = vsel %vm6422, %v6357, %v4754
  %v6487 = vsel %vm6422, %v6358, %v4816
  %v6488 = vsel %vm6422, %v6359, %v4818
  %v6489 = vsel %vm6422, %v6360, %v4820
  %v6490 = vsel %vm6422, %v6361, %v4822
  %v6491 = vsel %vm6422, %v6362, %v4824
  %v6492 = vsel %vm6422, %v6363, %v4826
  %v6493 = vsel %vm6422, %v6364, %v4828
  %v6494 = vsel %vm6422, %v6365, %v4830
  %v6495 = vsel %vm6422, %v6366, %v4832
  %v6496 = vsel %vm6422, %v6367, %v4834
  %v6497 = vsel %vm6422, %v6368, %v4836
  %v6498 = vsel %vm6422, %v6369, %v4838
  %v6499 = vsel %vm6422, %v6370, %v4840
  %v6500 = vsel %vm6422, %v6371, %v4842
  %v6501 = vsel %vm6422, %v6372, %v4844
  %v6502 = vsel %vm6422, %v6373, %v4846
  %v6503 = vsel %vm6422, %v6374, %v4848
  %v6504 = vsel %vm6422, %v6375, %v4850
  %v6505 = vsel %vm6422, %v6376, %v4852
  %v6506 = vsel %vm6422, %v6377, %v4854
  %v6507 = vsel %vm6422, %v6378, %v4856
  %v6508 = vsel %vm6422, %v6379, %v4858
  %v6509 = vsel %vm6422, %v6380, %v4860
  %v6510 = vsel %vm6422, %v6381, %v4862
  %v6511 = vsel %vm6422, %v6382, %v4864
  %v6512 = vsel %vm6422, %v6383, %v4866
  %v6513 = vsel %vm6422, %v6384, %v4868
  %v6514 = vsel %vm6422, %v6385, %v4870
  %v6515 = vsel %vm6422, %v6386, %v4872
  %v6516 = vsel %vm6422, %v6387, %v4874
  %v6517 = vsel %vm6422, %v6388, %v4752
  %v6518 = vsel %vm6422, %v6389, %v4754
  %v6519 = vsel %vm6422, %v6390, %v4876
  %v6520 = vsel %vm6422, %v6391, %v4878
  %v6521 = vsel %vm6422, %v6392, %v4880
  %v6522 = vsel %vm6422, %v6393, %v4882
  %v6523 = vsel %vm6422, %v6394, %v4884
  %v6524 = vsel %vm6422, %v6395, %v4886
  %v6525 = vsel %vm6422, %v6396, %v4888
  %v6526 = vsel %vm6422, %v6397, %v4890
  %v6527 = vsel %vm6422, %v6398, %v4892
  %v6528 = vsel %vm6422, %v6399, %v4894
  %v6529 = vsel %vm6422, %v6400, %v4896
  %v6530 = vsel %vm6422, %v6401, %v4898
  %v6531 = vsel %vm6422, %v6402, %v4900
  %v6532 = vsel %vm6422, %v6403, %v4902
  %v6533 = vsel %vm6422, %v6404, %v4904
  %v6534 = vsel %vm6422, %v6405, %v4906
  %v6535 = vsel %vm6422, %v6406, %v4908
  %v6536 = vsel %vm6422, %v6407, %v4910
  %v6537 = vsel %vm6422, %v6408, %v4912
  %v6538 = vsel %vm6422, %v6409, %v4914
  %v6539 = vsel %vm6422, %v6410, %v4916
  %v6540 = vsel %vm6422, %v6411, %v4918
  %v6541 = vsel %vm6422, %v6412, %v4920
  %v6542 = vsel %vm6422, %v6413, %v4922
  %v6543 = vsel %vm6422, %v6414, %v4924
  %v6544 = vsel %vm6422, %v6415, %v4926
  %v6545 = vsel %vm6422, %v6416, %v4928
  %v6546 = vsel %vm6422, %v6417, %v4930
  %v6547 = vsel %vm6422, %v6418, %v4932
  %v6548 = vsel %vm6422, %v6419, %v4934
  %v6549 = vsel %vm6422, %v6420, %v4752
  %v6550 = vsel %vm6422, %v6421, %v4754
  %vm6551 = vcmask 457728
  %v6552 = vsel %vm6551, %v6423, %v5058
  %v6553 = vsel %vm6551, %v6424, %v5060
  %v6554 = vsel %vm6551, %v6425, %v5062
  %v6555 = vsel %vm6551, %v6426, %v5064
  %v6556 = vsel %vm6551, %v6427, %v5066
  %v6557 = vsel %vm6551, %v6428, %v5068
  %v6558 = vsel %vm6551, %v6429, %v5070
  %v6559 = vsel %vm6551, %v6430, %v5072
  %v6560 = vsel %vm6551, %v6431, %v5074
  %v6561 = vsel %vm6551, %v6432, %v5076
  %v6562 = vsel %vm6551, %v6433, %v5078
  %v6563 = vsel %vm6551, %v6434, %v5080
  %v6564 = vsel %vm6551, %v6435, %v5082
  %v6565 = vsel %vm6551, %v6436, %v5084
  %v6566 = vsel %vm6551, %v6437, %v5086
  %v6567 = vsel %vm6551, %v6438, %v5088
  %v6568 = vsel %vm6551, %v6439, %v5090
  %v6569 = vsel %vm6551, %v6440, %v5092
  %v6570 = vsel %vm6551, %v6441, %v5094
  %v6571 = vsel %vm6551, %v6442, %v5096
  %v6572 = vsel %vm6551, %v6443, %v5098
  %v6573 = vsel %vm6551, %v6444, %v5100
  %v6574 = vsel %vm6551, %v6445, %v5102
  %v6575 = vsel %vm6551, %v6446, %v5104
  %v6576 = vsel %vm6551, %v6447, %v5106
  %v6577 = vsel %vm6551, %v6448, %v5108
  %v6578 = vsel %vm6551, %v6449, %v5110
  %v6579 = vsel %vm6551, %v6450, %v5112
  %v6580 = vsel %vm6551, %v6451, %v5114
  %v6581 = vsel %vm6551, %v6452, %v5116
  %v6582 = vsel %vm6551, %v6453, %v5118
  %v6583 = vsel %vm6551, %v6454, %v5120
  %v6584 = vsel %vm6551, %v6455, %v5122
  %v6585 = vsel %vm6551, %v6456, %v5124
  %v6586 = vsel %vm6551, %v6457, %v5126
  %v6587 = vsel %vm6551, %v6458, %v5128
  %v6588 = vsel %vm6551, %v6459, %v5130
  %v6589 = vsel %vm6551, %v6460, %v5132
  %v6590 = vsel %vm6551, %v6461, %v5134
  %v6591 = vsel %vm6551, %v6462, %v5136
  %v6592 = vsel %vm6551, %v6463, %v5138
  %v6593 = vsel %vm6551, %v6464, %v5140
  %v6594 = vsel %vm6551, %v6465, %v5142
  %v6595 = vsel %vm6551, %v6466, %v5144
  %v6596 = vsel %vm6551, %v6467, %v5146
  %v6597 = vsel %vm6551, %v6468, %v5148
  %v6598 = vsel %vm6551, %v6469, %v5150
  %v6599 = vsel %vm6551, %v6470, %v5152
  %v6600 = vsel %vm6551, %v6471, %v5154
  %v6601 = vsel %vm6551, %v6472, %v5156
  %v6602 = vsel %vm6551, %v6473, %v5158
  %v6603 = vsel %vm6551, %v6474, %v5160
  %v6604 = vsel %vm6551, %v6475, %v5162
  %v6605 = vsel %vm6551, %v6476, %v5164
  %v6606 = vsel %vm6551, %v6477, %v5166
  %v6607 = vsel %vm6551, %v6478, %v5168
  %v6608 = vsel %vm6551, %v6479, %v5170
  %v6609 = vsel %vm6551, %v6480, %v5172
  %v6610 = vsel %vm6551, %v6481, %v5174
  %v6611 = vsel %vm6551, %v6482, %v5176
  %v6612 = vsel %vm6551, %v6483, %v5178
  %v6613 = vsel %vm6551, %v6484, %v5180
  %v6614 = vsel %vm6551, %v6485, %v5118
  %v6615 = vsel %vm6551, %v6486, %v5120
  %v6616 = vsel %vm6551, %v6487, %v5182
  %v6617 = vsel %vm6551, %v6488, %v5184
  %v6618 = vsel %vm6551, %v6489, %v5186
  %v6619 = vsel %vm6551, %v6490, %v5188
  %v6620 = vsel %vm6551, %v6491, %v5190
  %v6621 = vsel %vm6551, %v6492, %v5192
  %v6622 = vsel %vm6551, %v6493, %v5194
  %v6623 = vsel %vm6551, %v6494, %v5196
  %v6624 = vsel %vm6551, %v6495, %v5198
  %v6625 = vsel %vm6551, %v6496, %v5200
  %v6626 = vsel %vm6551, %v6497, %v5202
  %v6627 = vsel %vm6551, %v6498, %v5204
  %v6628 = vsel %vm6551, %v6499, %v5206
  %v6629 = vsel %vm6551, %v6500, %v5208
  %v6630 = vsel %vm6551, %v6501, %v5210
  %v6631 = vsel %vm6551, %v6502, %v5212
  %v6632 = vsel %vm6551, %v6503, %v5214
  %v6633 = vsel %vm6551, %v6504, %v5216
  %v6634 = vsel %vm6551, %v6505, %v5218
  %v6635 = vsel %vm6551, %v6506, %v5220
  %v6636 = vsel %vm6551, %v6507, %v5222
  %v6637 = vsel %vm6551, %v6508, %v5224
  %v6638 = vsel %vm6551, %v6509, %v5226
  %v6639 = vsel %vm6551, %v6510, %v5228
  %v6640 = vsel %vm6551, %v6511, %v5230
  %v6641 = vsel %vm6551, %v6512, %v5232
  %v6642 = vsel %vm6551, %v6513, %v5234
  %v6643 = vsel %vm6551, %v6514, %v5236
  %v6644 = vsel %vm6551, %v6515, %v5238
  %v6645 = vsel %vm6551, %v6516, %v5240
  %v6646 = vsel %vm6551, %v6517, %v5118
  %v6647 = vsel %vm6551, %v6518, %v5120
  %v6648 = vsel %vm6551, %v6519, %v5242
  %v6649 = vsel %vm6551, %v6520, %v5244
  %v6650 = vsel %vm6551, %v6521, %v5246
  %v6651 = vsel %vm6551, %v6522, %v5248
  %v6652 = vsel %vm6551, %v6523, %v5250
  %v6653 = vsel %vm6551, %v6524, %v5252
  %v6654 = vsel %vm6551, %v6525, %v5254
  %v6655 = vsel %vm6551, %v6526, %v5256
  %v6656 = vsel %vm6551, %v6527, %v5258
  %v6657 = vsel %vm6551, %v6528, %v5260
  %v6658 = vsel %vm6551, %v6529, %v5262
  %v6659 = vsel %vm6551, %v6530, %v5264
  %v6660 = vsel %vm6551, %v6531, %v5266
  %v6661 = vsel %vm6551, %v6532, %v5268
  %v6662 = vsel %vm6551, %v6533, %v5270
  %v6663 = vsel %vm6551, %v6534, %v5272
  %v6664 = vsel %vm6551, %v6535, %v5274
  %v6665 = vsel %vm6551, %v6536, %v5276
  %v6666 = vsel %vm6551, %v6537, %v5278
  %v6667 = vsel %vm6551, %v6538, %v5280
  %v6668 = vsel %vm6551, %v6539, %v5282
  %v6669 = vsel %vm6551, %v6540, %v5284
  %v6670 = vsel %vm6551, %v6541, %v5286
  %v6671 = vsel %vm6551, %v6542, %v5288
  %v6672 = vsel %vm6551, %v6543, %v5290
  %v6673 = vsel %vm6551, %v6544, %v5292
  %v6674 = vsel %vm6551, %v6545, %v5294
  %v6675 = vsel %vm6551, %v6546, %v5296
  %v6676 = vsel %vm6551, %v6547, %v5298
  %v6677 = vsel %vm6551, %v6548, %v5300
  %v6678 = vsel %vm6551, %v6549, %v5118
  %v6679 = vsel %vm6551, %v6550, %v5120
  %vm6680 = vcmask 523264
  %v6681 = vsel %vm6680, %v6552, %v5424
  %v6682 = vsel %vm6680, %v6553, %v5426
  %v6683 = vsel %vm6680, %v6554, %v5428
  %v6684 = vsel %vm6680, %v6555, %v5430
  %v6685 = vsel %vm6680, %v6556, %v5432
  %v6686 = vsel %vm6680, %v6557, %v5434
  %v6687 = vsel %vm6680, %v6558, %v5436
  %v6688 = vsel %vm6680, %v6559, %v5438
  %v6689 = vsel %vm6680, %v6560, %v5440
  %v6690 = vsel %vm6680, %v6561, %v5442
  %v6691 = vsel %vm6680, %v6562, %v5444
  %v6692 = vsel %vm6680, %v6563, %v5446
  %v6693 = vsel %vm6680, %v6564, %v5448
  %v6694 = vsel %vm6680, %v6565, %v5450
  %v6695 = vsel %vm6680, %v6566, %v5452
  %v6696 = vsel %vm6680, %v6567, %v5454
  %v6697 = vsel %vm6680, %v6568, %v5456
  %v6698 = vsel %vm6680, %v6569, %v5458
  %v6699 = vsel %vm6680, %v6570, %v5460
  %v6700 = vsel %vm6680, %v6571, %v5462
  %v6701 = vsel %vm6680, %v6572, %v5464
  %v6702 = vsel %vm6680, %v6573, %v5466
  %v6703 = vsel %vm6680, %v6574, %v5468
  %v6704 = vsel %vm6680, %v6575, %v5470
  %v6705 = vsel %vm6680, %v6576, %v5472
  %v6706 = vsel %vm6680, %v6577, %v5474
  %v6707 = vsel %vm6680, %v6578, %v5476
  %v6708 = vsel %vm6680, %v6579, %v5478
  %v6709 = vsel %vm6680, %v6580, %v5480
  %v6710 = vsel %vm6680, %v6581, %v5482
  %v6711 = vsel %vm6680, %v6582, %v5484
  %v6712 = vsel %vm6680, %v6583, %v5486
  %v6713 = vsel %vm6680, %v6584, %v5488
  %v6714 = vsel %vm6680, %v6585, %v5490
  %v6715 = vsel %vm6680, %v6586, %v5492
  %v6716 = vsel %vm6680, %v6587, %v5494
  %v6717 = vsel %vm6680, %v6588, %v5496
  %v6718 = vsel %vm6680, %v6589, %v5498
  %v6719 = vsel %vm6680, %v6590, %v5500
  %v6720 = vsel %vm6680, %v6591, %v5502
  %v6721 = vsel %vm6680, %v6592, %v5504
  %v6722 = vsel %vm6680, %v6593, %v5506
  %v6723 = vsel %vm6680, %v6594, %v5508
  %v6724 = vsel %vm6680, %v6595, %v5510
  %v6725 = vsel %vm6680, %v6596, %v5512
  %v6726 = vsel %vm6680, %v6597, %v5514
  %v6727 = vsel %vm6680, %v6598, %v5516
  %v6728 = vsel %vm6680, %v6599, %v5518
  %v6729 = vsel %vm6680, %v6600, %v5520
  %v6730 = vsel %vm6680, %v6601, %v5522
  %v6731 = vsel %vm6680, %v6602, %v5524
  %v6732 = vsel %vm6680, %v6603, %v5526
  %v6733 = vsel %vm6680, %v6604, %v5528
  %v6734 = vsel %vm6680, %v6605, %v5530
  %v6735 = vsel %vm6680, %v6606, %v5532
  %v6736 = vsel %vm6680, %v6607, %v5534
  %v6737 = vsel %vm6680, %v6608, %v5536
  %v6738 = vsel %vm6680, %v6609, %v5538
  %v6739 = vsel %vm6680, %v6610, %v5540
  %v6740 = vsel %vm6680, %v6611, %v5542
  %v6741 = vsel %vm6680, %v6612, %v5544
  %v6742 = vsel %vm6680, %v6613, %v5546
  %v6743 = vsel %vm6680, %v6614, %v5484
  %v6744 = vsel %vm6680, %v6615, %v5486
  %v6745 = vsel %vm6680, %v6616, %v5548
  %v6746 = vsel %vm6680, %v6617, %v5550
  %v6747 = vsel %vm6680, %v6618, %v5552
  %v6748 = vsel %vm6680, %v6619, %v5554
  %v6749 = vsel %vm6680, %v6620, %v5556
  %v6750 = vsel %vm6680, %v6621, %v5558
  %v6751 = vsel %vm6680, %v6622, %v5560
  %v6752 = vsel %vm6680, %v6623, %v5562
  %v6753 = vsel %vm6680, %v6624, %v5564
  %v6754 = vsel %vm6680, %v6625, %v5566
  %v6755 = vsel %vm6680, %v6626, %v5568
  %v6756 = vsel %vm6680, %v6627, %v5570
  %v6757 = vsel %vm6680, %v6628, %v5572
  %v6758 = vsel %vm6680, %v6629, %v5574
  %v6759 = vsel %vm6680, %v6630, %v5576
  %v6760 = vsel %vm6680, %v6631, %v5578
  %v6761 = vsel %vm6680, %v6632, %v5580
  %v6762 = vsel %vm6680, %v6633, %v5582
  %v6763 = vsel %vm6680, %v6634, %v5584
  %v6764 = vsel %vm6680, %v6635, %v5586
  %v6765 = vsel %vm6680, %v6636, %v5588
  %v6766 = vsel %vm6680, %v6637, %v5590
  %v6767 = vsel %vm6680, %v6638, %v5592
  %v6768 = vsel %vm6680, %v6639, %v5594
  %v6769 = vsel %vm6680, %v6640, %v5596
  %v6770 = vsel %vm6680, %v6641, %v5598
  %v6771 = vsel %vm6680, %v6642, %v5600
  %v6772 = vsel %vm6680, %v6643, %v5602
  %v6773 = vsel %vm6680, %v6644, %v5604
  %v6774 = vsel %vm6680, %v6645, %v5606
  %v6775 = vsel %vm6680, %v6646, %v5484
  %v6776 = vsel %vm6680, %v6647, %v5486
  %v6777 = vsel %vm6680, %v6648, %v5608
  %v6778 = vsel %vm6680, %v6649, %v5610
  %v6779 = vsel %vm6680, %v6650, %v5612
  %v6780 = vsel %vm6680, %v6651, %v5614
  %v6781 = vsel %vm6680, %v6652, %v5616
  %v6782 = vsel %vm6680, %v6653, %v5618
  %v6783 = vsel %vm6680, %v6654, %v5620
  %v6784 = vsel %vm6680, %v6655, %v5622
  %v6785 = vsel %vm6680, %v6656, %v5624
  %v6786 = vsel %vm6680, %v6657, %v5626
  %v6787 = vsel %vm6680, %v6658, %v5628
  %v6788 = vsel %vm6680, %v6659, %v5630
  %v6789 = vsel %vm6680, %v6660, %v5632
  %v6790 = vsel %vm6680, %v6661, %v5634
  %v6791 = vsel %vm6680, %v6662, %v5636
  %v6792 = vsel %vm6680, %v6663, %v5638
  %v6793 = vsel %vm6680, %v6664, %v5640
  %v6794 = vsel %vm6680, %v6665, %v5642
  %v6795 = vsel %vm6680, %v6666, %v5644
  %v6796 = vsel %vm6680, %v6667, %v5646
  %v6797 = vsel %vm6680, %v6668, %v5648
  %v6798 = vsel %vm6680, %v6669, %v5650
  %v6799 = vsel %vm6680, %v6670, %v5652
  %v6800 = vsel %vm6680, %v6671, %v5654
  %v6801 = vsel %vm6680, %v6672, %v5656
  %v6802 = vsel %vm6680, %v6673, %v5658
  %v6803 = vsel %vm6680, %v6674, %v5660
  %v6804 = vsel %vm6680, %v6675, %v5662
  %v6805 = vsel %vm6680, %v6676, %v5664
  %v6806 = vsel %vm6680, %v6677, %v5666
  %v6807 = vsel %vm6680, %v6678, %v5484
  %v6808 = vsel %vm6680, %v6679, %v5486
  %v6809 = vld [vmem:[%s3] sm:$0xff]
  %v6810 = vld [vmem:[%s3 + $0x8] sm:$0xff]
  %v6811 = vld [vmem:[%s3 + $0x10] sm:$0xff]
  %v6812 = vld [vmem:[%s3 + $0x18] sm:$0xff]
  %v6813 = vld [vmem:[%s3 + $0x20] sm:$0xff]
  %v6814 = vld [vmem:[%s3 + $0x28] sm:$0xff]
  %v6815 = vld [vmem:[%s3 + $0x30] sm:$0xff]
  %v6816 = vld [vmem:[%s3 + $0x38] sm:$0xff]
  %v6817 = vld [vmem:[%s3 + $0x40] sm:$0xff]
  %v6818 = vld [vmem:[%s4] sm:$0x1]
  %v6820 = vlaneseq
  %v6821 = vshrl.u32 %v6820, 7
  %v6822 = vsub.s32 0, %v6821
  %v6823 = vrot.slane %v6818, %v6822
  %vm6825 = vcmask 588800
  %v6827 = vsel %vm6825, %v6681, 0
  %v6830 = vsel %vm6825, %v6682, 0
  %v6833 = vsel %vm6825, %v6683, 0
  %v6836 = vsel %vm6825, %v6684, 0
  %v6839 = vsel %vm6825, %v6685, 0
  %v6842 = vsel %vm6825, %v6686, 0
  %v6845 = vsel %vm6825, %v6687, 0
  %v6848 = vsel %vm6825, %v6688, 0
  %v6851 = vsel %vm6825, %v6689, 0
  %v6854 = vsel %vm6825, %v6690, 0
  %v6857 = vsel %vm6825, %v6691, 0
  %v6860 = vsel %vm6825, %v6692, 0
  %v6863 = vsel %vm6825, %v6693, 0
  %v6866 = vsel %vm6825, %v6694, 0
  %v6869 = vsel %vm6825, %v6695, 0
  %v6872 = vsel %vm6825, %v6696, 0
  %v6875 = vsel %vm6825, %v6697, 0
  %v6878 = vsel %vm6825, %v6698, 0
  %v6881 = vsel %vm6825, %v6699, 0
  %v6884 = vsel %vm6825, %v6700, 0
  %v6887 = vsel %vm6825, %v6701, 0
  %v6890 = vsel %vm6825, %v6702, 0
  %v6893 = vsel %vm6825, %v6703, 0
  %v6896 = vsel %vm6825, %v6704, 0
  %v6899 = vsel %vm6825, %v6705, 0
  %v6902 = vsel %vm6825, %v6706, 0
  %v6905 = vsel %vm6825, %v6707, 0
  %v6908 = vsel %vm6825, %v6708, 0
  %v6911 = vsel %vm6825, %v6709, 0
  %v6914 = vsel %vm6825, %v6710, 0
  %v6917 = vsel %vm6825, %v6711, 0
  %v6920 = vsel %vm6825, %v6712, 0
  %v6923 = vsel %vm6825, %v6713, 0
  %v6926 = vsel %vm6825, %v6714, 0
  %v6929 = vsel %vm6825, %v6715, 0
  %v6932 = vsel %vm6825, %v6716, 0
  %v6935 = vsel %vm6825, %v6717, 0
  %v6938 = vsel %vm6825, %v6718, 0
  %v6941 = vsel %vm6825, %v6719, 0
  %v6944 = vsel %vm6825, %v6720, 0
  %v6947 = vsel %vm6825, %v6721, 0
  %v6950 = vsel %vm6825, %v6722, 0
  %v6953 = vsel %vm6825, %v6723, 0
  %v6956 = vsel %vm6825, %v6724, 0
  %v6959 = vsel %vm6825, %v6725, 0
  %v6962 = vsel %vm6825, %v6726, 0
  %v6965 = vsel %vm6825, %v6727, 0
  %v6968 = vsel %vm6825, %v6728, 0
  %v6971 = vsel %vm6825, %v6729, 0
  %v6974 = vsel %vm6825, %v6730, 0
  %v6977 = vsel %vm6825, %v6731, 0
  %v6980 = vsel %vm6825, %v6732, 0
  %v6983 = vsel %vm6825, %v6733, 0
  %v6986 = vsel %vm6825, %v6734, 0
  %v6989 = vsel %vm6825, %v6735, 0
  %v6992 = vsel %vm6825, %v6736, 0
  %v6995 = vsel %vm6825, %v6737, 0
  %v6998 = vsel %vm6825, %v6738, 0
  %v7001 = vsel %vm6825, %v6739, 0
  %v7004 = vsel %vm6825, %v6740, 0
  %v7007 = vsel %vm6825, %v6741, 0
  %v7010 = vsel %vm6825, %v6742, 0
  %v7013 = vsel %vm6825, %v6743, 0
  %v7016 = vsel %vm6825, %v6744, 0
  %v7019 = vsel %vm6825, %v6745, 0
  %v7022 = vsel %vm6825, %v6746, 0
  %v7025 = vsel %vm6825, %v6747, 0
  %v7028 = vsel %vm6825, %v6748, 0
  %v7031 = vsel %vm6825, %v6749, 0
  %v7034 = vsel %vm6825, %v6750, 0
  %v7037 = vsel %vm6825, %v6751, 0
  %v7040 = vsel %vm6825, %v6752, 0
  %v7043 = vsel %vm6825, %v6753, 0
  %v7046 = vsel %vm6825, %v6754, 0
  %v7049 = vsel %vm6825, %v6755, 0
  %v7052 = vsel %vm6825, %v6756, 0
  %v7055 = vsel %vm6825, %v6757, 0
  %v7058 = vsel %vm6825, %v6758, 0
  %v7061 = vsel %vm6825, %v6759, 0
  %v7064 = vsel %vm6825, %v6760, 0
  %v7067 = vsel %vm6825, %v6761, 0
  %v7070 = vsel %vm6825, %v6762, 0
  %v7073 = vsel %vm6825, %v6763, 0
  %v7076 = vsel %vm6825, %v6764, 0
  %v7079 = vsel %vm6825, %v6765, 0
  %v7082 = vsel %vm6825, %v6766, 0
  %v7085 = vsel %vm6825, %v6767, 0
  %v7088 = vsel %vm6825, %v6768, 0
  %v7091 = vsel %vm6825, %v6769, 0
  %v7094 = vsel %vm6825, %v6770, 0
  %v7097 = vsel %vm6825, %v6771, 0
  %v7100 = vsel %vm6825, %v6772, 0
  %v7103 = vsel %vm6825, %v6773, 0
  %v7106 = vsel %vm6825, %v6774, 0
  %v7109 = vsel %vm6825, %v6775, 0
  %v7112 = vsel %vm6825, %v6776, 0
  %v7115 = vsel %vm6825, %v6777, 0
  %v7118 = vsel %vm6825, %v6778, 0
  %v7121 = vsel %vm6825, %v6779, 0
  %v7124 = vsel %vm6825, %v6780, 0
  %v7127 = vsel %vm6825, %v6781, 0
  %v7130 = vsel %vm6825, %v6782, 0
  %v7133 = vsel %vm6825, %v6783, 0
  %v7136 = vsel %vm6825, %v6784, 0
  %v7139 = vsel %vm6825, %v6785, 0
  %v7142 = vsel %vm6825, %v6786, 0
  %v7145 = vsel %vm6825, %v6787, 0
  %v7148 = vsel %vm6825, %v6788, 0
  %v7151 = vsel %vm6825, %v6789, 0
  %v7154 = vsel %vm6825, %v6790, 0
  %v7157 = vsel %vm6825, %v6791, 0
  %v7160 = vsel %vm6825, %v6792, 0
  %v7163 = vsel %vm6825, %v6793, 0
  %v7166 = vsel %vm6825, %v6794, 0
  %v7169 = vsel %vm6825, %v6795, 0
  %v7172 = vsel %vm6825, %v6796, 0
  %v7175 = vsel %vm6825, %v6797, 0
  %v7178 = vsel %vm6825, %v6798, 0
  %v7181 = vsel %vm6825, %v6799, 0
  %v7184 = vsel %vm6825, %v6800, 0
  %v7187 = vsel %vm6825, %v6801, 0
  %v7190 = vsel %vm6825, %v6802, 0
  %v7193 = vsel %vm6825, %v6803, 0
  %v7196 = vsel %vm6825, %v6804, 0
  %v7199 = vsel %vm6825, %v6805, 0
  %v7202 = vsel %vm6825, %v6806, 0
  %v7205 = vsel %vm6825, %v6807, 0
  %v7208 = vsel %vm6825, %v6808, 0
  %7210 = vmatprep.subr.mxu0 0.0
  %7211 = vmatpush1.msra.mxu0 %v6809
  %7212 = vmatprep.subr.mxu0 0.0
  %7213 = vmatpush1.msra.mxu0 %v6810
  %7214 = vmatprep.subr.mxu0 0.0
  %7215 = vmatpush1.msra.mxu0 %v6811
  %7216 = vmatprep.subr.mxu0 0.0
  %7217 = vmatpush1.msra.mxu0 %v6812
  %7218 = vmatprep.subr.mxu0 0.0
  %7219 = vmatpush1.msra.mxu0 %v6813
  %7220 = vmatprep.subr.mxu0 0.0
  %7221 = vmatpush1.msra.mxu0 %v6814
  %7222 = vmatprep.subr.mxu0 0.0
  %7223 = vmatpush1.msra.mxu0 %v6815
  %7224 = vmatprep.subr.mxu0 0.0
  %7225 = vmatpush1.msra.mxu0 %v6816
  %7226 = vmatprep.subr.mxu0 0.0
  %7227 = vmatpush1.msra.mxu0 %v6817
  %7228 = vmatprep.subr.mxu0 0.0
  %7229 = vmatpush1.msra.mxu0 0.0
  %7230 = vmatprep.subr.mxu0 0.0
  %7231 = vmatpush1.msra.mxu0 0.0
  %7232 = vmatprep.subr.mxu0 0.0
  %7233 = vmatpush1.msra.mxu0 0.0
  %7234 = vmatprep.subr.mxu0 0.0
  %7235 = vmatpush1.msra.mxu0 0.0
  %7236 = vmatprep.subr.mxu0 0.0
  %7237 = vmatpush1.msra.mxu0 0.0
  %7238 = vmatprep.subr.mxu0 0.0
  %7239 = vmatpush1.msra.mxu0 0.0
  %7240 = vmatprep.subr.mxu0 0.0
  %7241 = vmatpush1.msra.mxu0 0.0
  %7242 = vmatprep.subr.mxu0 0.0
  %7243 = vmatpush1.msra.mxu0 0.0
  %7244 = vmatprep.subr.mxu0 0.0
  %7245 = vmatpush1.msra.mxu0 0.0
  %7246 = vmatprep.subr.mxu0 0.0
  %7247 = vmatpush1.msra.mxu0 0.0
  %7248 = vmatprep.subr.mxu0 0.0
  %7249 = vmatpush1.msra.mxu0 0.0
  %7250 = vmatprep.subr.mxu0 0.0
  %7251 = vmatpush1.msra.mxu0 0.0
  %7252 = vmatprep.subr.mxu0 0.0
  %7253 = vmatpush1.msra.mxu0 0.0
  %7254 = vmatprep.subr.mxu0 0.0
  %7255 = vmatpush1.msra.mxu0 0.0
  %7256 = vmatprep.subr.mxu0 0.0
  %7257 = vmatpush1.msra.mxu0 0.0
  %7258 = vmatprep.subr.mxu0 0.0
  %7259 = vmatpush1.msra.mxu0 0.0
  %7260 = vmatprep.subr.mxu0 0.0
  %7261 = vmatpush1.msra.mxu0 0.0
  %7262 = vmatprep.subr.mxu0 0.0
  %7263 = vmatpush1.msra.mxu0 0.0
  %7264 = vmatprep.subr.mxu0 0.0
  %7265 = vmatpush1.msra.mxu0 0.0
  %7266 = vmatprep.subr.mxu0 0.0
  %7267 = vmatpush1.msra.mxu0 0.0
  %7268 = vmatprep.subr.mxu0 0.0
  %7269 = vmatpush1.msra.mxu0 0.0
  %7270 = vmatprep.subr.mxu0 0.0
  %7271 = vmatpush1.msra.mxu0 0.0
  %7272 = vmatprep.subr.mxu0 0.0
  %7273 = vmatpush1.msra.mxu0 0.0
  %7274 = vmatprep.mubr.f32.mxu0 0.0
  %7275 = vmatmul.mubr.f32.gmra.mrb[0].mxu0 %v6827
  %v7276 = vpop.f32.mrb[0].mxu0
  %v7277 = vadd.f32 %v6823, %v7276
  %v7278 = vpop.f32.mrb[0].mxu0
  %7279 = vmatprep.mubr.f32.mxu0 0.0
  %7280 = vmatmul.mubr.f32.gmra.mrb[0].mxu0 %v6830
  %v7281 = vpop.f32.mrb[0].mxu0
  %v7282 = vadd.f32 %v6823, %v7281
  %v7283 = vpop.f32.mrb[0].mxu0
  %7284 = vmatprep.mubr.f32.mxu0 0.0
  %7285 = vmatmul.mubr.f32.gmra.mrb[0].mxu0 %v6833
  %v7286 = vpop.f32.mrb[0].mxu0
  %v7287 = vadd.f32 %v6823, %v7286
  %v7288 = vpop.f32.mrb[0].mxu0
  %7289 = vmatprep.mubr.f32.mxu0 0.0
  %7290 = vmatmul.mubr.f32.gmra.mrb[0].mxu0 %v6836
  %v7291 = vpop.f32.mrb[0].mxu0
  %v7292 = vadd.f32 %v6823, %v7291
  %v7293 = vpop.f32.mrb[0].mxu0
  %7294 = vmatprep.mubr.f32.mxu0 0.0
  %7295 = vmatmul.mubr.f32.gmra.mrb[0].mxu0 %v6839
  %v7296 = vpop.f32.mrb[0].mxu0
  %v7297 = vadd.f32 %v6823, %v7296
  %v7298 = vpop.f32.mrb[0].mxu0
  %7299 = vmatprep.mubr.f32.mxu0 0.0
  %7300 = vmatmul.mubr.f32.gmra.mrb[0].mxu0 %v6842
  %v7301 = vpop.f32.mrb[0].mxu0
  %v7302 = vadd.f32 %v6823, %v7301
  %v7303 = vpop.f32.mrb[0].mxu0
  %7304 = vmatprep.mubr.f32.mxu0 0.0
  %7305 = vmatmul.mubr.f32.gmra.mrb[0].mxu0 %v6845
  %v7306 = vpop.f32.mrb[0].mxu0
  %v7307 = vadd.f32 %v6823, %v7306
  %v7308 = vpop.f32.mrb[0].mxu0
  %7309 = vmatprep.mubr.f32.mxu0 0.0
  %7310 = vmatmul.mubr.f32.gmra.mrb[0].mxu0 %v6848
  %v7311 = vpop.f32.mrb[0].mxu0
  %v7312 = vadd.f32 %v6823, %v7311
  %v7313 = vpop.f32.mrb[0].mxu0
  %7314 = vmatprep.mubr.f32.mxu0 0.0
  %7315 = vmatmul.mubr.f32.gmra.mrb[0].mxu0 %v6851
  %v7316 = vpop.f32.mrb[0].mxu0
  %v7317 = vadd.f32 %v6823, %v7316
  %v7318 = vpop.f32.mrb[0].mxu0
  %7319 = vmatprep.mubr.f32.mxu0 0.0
  %7320 = vmatmul.mubr.f32.gmra.mrb[0].mxu0 %v6854
  %v7321 = vpop.f32.mrb[0].mxu0
  %v7322 = vadd.f32 %v6823, %v7321
  %v7323 = vpop.f32.mrb[0].mxu0
  %7324 = vmatprep.mubr.f32.mxu0 0.0
  %7325 = vmatmul.mubr.f32.gmra.mrb[0].mxu0 %v6857
  %v7326 = vpop.f32.mrb[0].mxu0
  %v7327 = vadd.f32 %v6823, %v7326
  %v7328 = vpop.f32.mrb[0].mxu0
  %7329 = vmatprep.mubr.f32.mxu0 0.0
  %7330 = vmatmul.mubr.f32.gmra.mrb[0].mxu0 %v6860
  %v7331 = vpop.f32.mrb[0].mxu0
  %v7332 = vadd.f32 %v6823, %v7331
  %v7333 = vpop.f32.mrb[0].mxu0
  %7334 = vmatprep.mubr.f32.mxu0 0.0
  %7335 = vmatmul.mubr.f32.gmra.mrb[0].mxu0 %v6863
  %v7336 = vpop.f32.mrb[0].mxu0
  %v7337 = vadd.f32 %v6823, %v7336
  %v7338 = vpop.f32.mrb[0].mxu0
  %7339 = vmatprep.mubr.f32.mxu0 0.0
  %7340 = vmatmul.mubr.f32.gmra.mrb[0].mxu0 %v6866
  %v7341 = vpop.f32.mrb[0].mxu0
  %v7342 = vadd.f32 %v6823, %v7341
  %v7343 = vpop.f32.mrb[0].mxu0
  %7344 = vmatprep.mubr.f32.mxu0 0.0
  %7345 = vmatmul.mubr.f32.gmra.mrb[0].mxu0 %v6869
  %v7346 = vpop.f32.mrb[0].mxu0
  %v7347 = vadd.f32 %v6823, %v7346
  %v7348 = vpop.f32.mrb[0].mxu0
  %7349 = vmatprep.mubr.f32.mxu0 0.0
  %7350 = vmatmul.mubr.f32.gmra.mrb[0].mxu0 %v6872
  %v7351 = vpop.f32.mrb[0].mxu0
  %v7352 = vadd.f32 %v6823, %v7351
  %v7353 = vpop.f32.mrb[0].mxu0
  %7354 = vmatprep.mubr.f32.mxu0 0.0
  %7355 = vmatmul.mubr.f32.gmra.mrb[0].mxu0 %v6875
  %v7356 = vpop.f32.mrb[0].mxu0
  %v7357 = vadd.f32 %v6823, %v7356
  %v7358 = vpop.f32.mrb[0].mxu0
  %7359 = vmatprep.mubr.f32.mxu0 0.0
  %7360 = vmatmul.mubr.f32.gmra.mrb[0].mxu0 %v6878
  %v7361 = vpop.f32.mrb[0].mxu0
  %v7362 = vadd.f32 %v6823, %v7361
  %v7363 = vpop.f32.mrb[0].mxu0
  %7364 = vmatprep.mubr.f32.mxu0 0.0
  %7365 = vmatmul.mubr.f32.gmra.mrb[0].mxu0 %v6881
  %v7366 = vpop.f32.mrb[0].mxu0
  %v7367 = vadd.f32 %v6823, %v7366
  %v7368 = vpop.f32.mrb[0].mxu0
  %7369 = vmatprep.mubr.f32.mxu0 0.0
  %7370 = vmatmul.mubr.f32.gmra.mrb[0].mxu0 %v6884
  %v7371 = vpop.f32.mrb[0].mxu0
  %v7372 = vadd.f32 %v6823, %v7371
  %v7373 = vpop.f32.mrb[0].mxu0
  %7374 = vmatprep.mubr.f32.mxu0 0.0
  %7375 = vmatmul.mubr.f32.gmra.mrb[0].mxu0 %v6887
  %v7376 = vpop.f32.mrb[0].mxu0
  %v7377 = vadd.f32 %v6823, %v7376
  %v7378 = vpop.f32.mrb[0].mxu0
  %7379 = vmatprep.mubr.f32.mxu0 0.0
  %7380 = vmatmul.mubr.f32.gmra.mrb[0].mxu0 %v6890
  %v7381 = vpop.f32.mrb[0].mxu0
  %v7382 = vadd.f32 %v6823, %v7381
  %v7383 = vpop.f32.mrb[0].mxu0
  %7384 = vmatprep.mubr.f32.mxu0 0.0
  %7385 = vmatmul.mubr.f32.gmra.mrb[0].mxu0 %v6893
  %v7386 = vpop.f32.mrb[0].mxu0
  %v7387 = vadd.f32 %v6823, %v7386
  %v7388 = vpop.f32.mrb[0].mxu0
  %7389 = vmatprep.mubr.f32.mxu0 0.0
  %7390 = vmatmul.mubr.f32.gmra.mrb[0].mxu0 %v6896
  %v7391 = vpop.f32.mrb[0].mxu0
  %v7392 = vadd.f32 %v6823, %v7391
  %v7393 = vpop.f32.mrb[0].mxu0
  %7394 = vmatprep.mubr.f32.mxu0 0.0
  %7395 = vmatmul.mubr.f32.gmra.mrb[0].mxu0 %v6899
  %v7396 = vpop.f32.mrb[0].mxu0
  %v7397 = vadd.f32 %v6823, %v7396
  %v7398 = vpop.f32.mrb[0].mxu0
  %7399 = vmatprep.mubr.f32.mxu0 0.0
  %7400 = vmatmul.mubr.f32.gmra.mrb[0].mxu0 %v6902
  %v7401 = vpop.f32.mrb[0].mxu0
  %v7402 = vadd.f32 %v6823, %v7401
  %v7403 = vpop.f32.mrb[0].mxu0
  %7404 = vmatprep.mubr.f32.mxu0 0.0
  %7405 = vmatmul.mubr.f32.gmra.mrb[0].mxu0 %v6905
  %v7406 = vpop.f32.mrb[0].mxu0
  %v7407 = vadd.f32 %v6823, %v7406
  %v7408 = vpop.f32.mrb[0].mxu0
  %7409 = vmatprep.mubr.f32.mxu0 0.0
  %7410 = vmatmul.mubr.f32.gmra.mrb[0].mxu0 %v6908
  %v7411 = vpop.f32.mrb[0].mxu0
  %v7412 = vadd.f32 %v6823, %v7411
  %v7413 = vpop.f32.mrb[0].mxu0
  %7414 = vmatprep.mubr.f32.mxu0 0.0
  %7415 = vmatmul.mubr.f32.gmra.mrb[0].mxu0 %v6911
  %v7416 = vpop.f32.mrb[0].mxu0
  %v7417 = vadd.f32 %v6823, %v7416
  %v7418 = vpop.f32.mrb[0].mxu0
  %7419 = vmatprep.mubr.f32.mxu0 0.0
  %7420 = vmatmul.mubr.f32.gmra.mrb[0].mxu0 %v6914
  %v7421 = vpop.f32.mrb[0].mxu0
  %v7422 = vadd.f32 %v6823, %v7421
  %v7423 = vpop.f32.mrb[0].mxu0
  %7424 = vmatprep.mubr.f32.mxu0 0.0
  %7425 = vmatmul.mubr.f32.gmra.mrb[0].mxu0 %v6917
  %v7426 = vpop.f32.mrb[0].mxu0
  %v7427 = vadd.f32 %v6823, %v7426
  %v7428 = vpop.f32.mrb[0].mxu0
  %7429 = vmatprep.mubr.f32.mxu0 0.0
  %7430 = vmatmul.mubr.f32.gmra.mrb[0].mxu0 %v6920
  %v7431 = vpop.f32.mrb[0].mxu0
  %v7432 = vadd.f32 %v6823, %v7431
  %v7433 = vpop.f32.mrb[0].mxu0
  %7434 = vmatprep.mubr.f32.mxu0 0.0
  %7435 = vmatmul.mubr.f32.gmra.mrb[0].mxu0 %v6923
  %v7436 = vpop.f32.mrb[0].mxu0
  %v7437 = vadd.f32 %v6823, %v7436
  %v7438 = vpop.f32.mrb[0].mxu0
  %7439 = vmatprep.mubr.f32.mxu0 0.0
  %7440 = vmatmul.mubr.f32.gmra.mrb[0].mxu0 %v6926
  %v7441 = vpop.f32.mrb[0].mxu0
  %v7442 = vadd.f32 %v6823, %v7441
  %v7443 = vpop.f32.mrb[0].mxu0
  %7444 = vmatprep.mubr.f32.mxu0 0.0
  %7445 = vmatmul.mubr.f32.gmra.mrb[0].mxu0 %v6929
  %v7446 = vpop.f32.mrb[0].mxu0
  %v7447 = vadd.f32 %v6823, %v7446
  %v7448 = vpop.f32.mrb[0].mxu0
  %7449 = vmatprep.mubr.f32.mxu0 0.0
  %7450 = vmatmul.mubr.f32.gmra.mrb[0].mxu0 %v6932
  %v7451 = vpop.f32.mrb[0].mxu0
  %v7452 = vadd.f32 %v6823, %v7451
  %v7453 = vpop.f32.mrb[0].mxu0
  %7454 = vmatprep.mubr.f32.mxu0 0.0
  %7455 = vmatmul.mubr.f32.gmra.mrb[0].mxu0 %v6935
  %v7456 = vpop.f32.mrb[0].mxu0
  %v7457 = vadd.f32 %v6823, %v7456
  %v7458 = vpop.f32.mrb[0].mxu0
  %7459 = vmatprep.mubr.f32.mxu0 0.0
  %7460 = vmatmul.mubr.f32.gmra.mrb[0].mxu0 %v6938
  %v7461 = vpop.f32.mrb[0].mxu0
  %v7462 = vadd.f32 %v6823, %v7461
  %v7463 = vpop.f32.mrb[0].mxu0
  %7464 = vmatprep.mubr.f32.mxu0 0.0
  %7465 = vmatmul.mubr.f32.gmra.mrb[0].mxu0 %v6941
  %v7466 = vpop.f32.mrb[0].mxu0
  %v7467 = vadd.f32 %v6823, %v7466
  %v7468 = vpop.f32.mrb[0].mxu0
  %7469 = vmatprep.mubr.f32.mxu0 0.0
  %7470 = vmatmul.mubr.f32.gmra.mrb[0].mxu0 %v6944
  %v7471 = vpop.f32.mrb[0].mxu0
  %v7472 = vadd.f32 %v6823, %v7471
  %v7473 = vpop.f32.mrb[0].mxu0
  %7474 = vmatprep.mubr.f32.mxu0 0.0
  %7475 = vmatmul.mubr.f32.gmra.mrb[0].mxu0 %v6947
  %v7476 = vpop.f32.mrb[0].mxu0
  %v7477 = vadd.f32 %v6823, %v7476
  %v7478 = vpop.f32.mrb[0].mxu0
  %7479 = vmatprep.mubr.f32.mxu0 0.0
  %7480 = vmatmul.mubr.f32.gmra.mrb[0].mxu0 %v6950
  %v7481 = vpop.f32.mrb[0].mxu0
  %v7482 = vadd.f32 %v6823, %v7481
  %v7483 = vpop.f32.mrb[0].mxu0
  %7484 = vmatprep.mubr.f32.mxu0 0.0
  %7485 = vmatmul.mubr.f32.gmra.mrb[0].mxu0 %v6953
  %v7486 = vpop.f32.mrb[0].mxu0
  %v7487 = vadd.f32 %v6823, %v7486
  %v7488 = vpop.f32.mrb[0].mxu0
  %7489 = vmatprep.mubr.f32.mxu0 0.0
  %7490 = vmatmul.mubr.f32.gmra.mrb[0].mxu0 %v6956
  %v7491 = vpop.f32.mrb[0].mxu0
  %v7492 = vadd.f32 %v6823, %v7491
  %v7493 = vpop.f32.mrb[0].mxu0
  %7494 = vmatprep.mubr.f32.mxu0 0.0
  %7495 = vmatmul.mubr.f32.gmra.mrb[0].mxu0 %v6959
  %v7496 = vpop.f32.mrb[0].mxu0
  %v7497 = vadd.f32 %v6823, %v7496
  %v7498 = vpop.f32.mrb[0].mxu0
  %7499 = vmatprep.mubr.f32.mxu0 0.0
  %7500 = vmatmul.mubr.f32.gmra.mrb[0].mxu0 %v6962
  %v7501 = vpop.f32.mrb[0].mxu0
  %v7502 = vadd.f32 %v6823, %v7501
  %v7503 = vpop.f32.mrb[0].mxu0
  %7504 = vmatprep.mubr.f32.mxu0 0.0
  %7505 = vmatmul.mubr.f32.gmra.mrb[0].mxu0 %v6965
  %v7506 = vpop.f32.mrb[0].mxu0
  %v7507 = vadd.f32 %v6823, %v7506
  %v7508 = vpop.f32.mrb[0].mxu0
  %7509 = vmatprep.mubr.f32.mxu0 0.0
  %7510 = vmatmul.mubr.f32.gmra.mrb[0].mxu0 %v6968
  %v7511 = vpop.f32.mrb[0].mxu0
  %v7512 = vadd.f32 %v6823, %v7511
  %v7513 = vpop.f32.mrb[0].mxu0
  %7514 = vmatprep.mubr.f32.mxu0 0.0
  %7515 = vmatmul.mubr.f32.gmra.mrb[0].mxu0 %v6971
  %v7516 = vpop.f32.mrb[0].mxu0
  %v7517 = vadd.f32 %v6823, %v7516
  %v7518 = vpop.f32.mrb[0].mxu0
  %7519 = vmatprep.mubr.f32.mxu0 0.0
  %7520 = vmatmul.mubr.f32.gmra.mrb[0].mxu0 %v6974
  %v7521 = vpop.f32.mrb[0].mxu0
  %v7522 = vadd.f32 %v6823, %v7521
  %v7523 = vpop.f32.mrb[0].mxu0
  %7524 = vmatprep.mubr.f32.mxu0 0.0
  %7525 = vmatmul.mubr.f32.gmra.mrb[0].mxu0 %v6977
  %v7526 = vpop.f32.mrb[0].mxu0
  %v7527 = vadd.f32 %v6823, %v7526
  %v7528 = vpop.f32.mrb[0].mxu0
  %7529 = vmatprep.mubr.f32.mxu0 0.0
  %7530 = vmatmul.mubr.f32.gmra.mrb[0].mxu0 %v6980
  %v7531 = vpop.f32.mrb[0].mxu0
  %v7532 = vadd.f32 %v6823, %v7531
  %v7533 = vpop.f32.mrb[0].mxu0
  %7534 = vmatprep.mubr.f32.mxu0 0.0
  %7535 = vmatmul.mubr.f32.gmra.mrb[0].mxu0 %v6983
  %v7536 = vpop.f32.mrb[0].mxu0
  %v7537 = vadd.f32 %v6823, %v7536
  %v7538 = vpop.f32.mrb[0].mxu0
  %7539 = vmatprep.mubr.f32.mxu0 0.0
  %7540 = vmatmul.mubr.f32.gmra.mrb[0].mxu0 %v6986
  %v7541 = vpop.f32.mrb[0].mxu0
  %v7542 = vadd.f32 %v6823, %v7541
  %v7543 = vpop.f32.mrb[0].mxu0
  %7544 = vmatprep.mubr.f32.mxu0 0.0
  %7545 = vmatmul.mubr.f32.gmra.mrb[0].mxu0 %v6989
  %v7546 = vpop.f32.mrb[0].mxu0
  %v7547 = vadd.f32 %v6823, %v7546
  %v7548 = vpop.f32.mrb[0].mxu0
  %7549 = vmatprep.mubr.f32.mxu0 0.0
  %7550 = vmatmul.mubr.f32.gmra.mrb[0].mxu0 %v6992
  %v7551 = vpop.f32.mrb[0].mxu0
  %v7552 = vadd.f32 %v6823, %v7551
  %v7553 = vpop.f32.mrb[0].mxu0
  %7554 = vmatprep.mubr.f32.mxu0 0.0
  %7555 = vmatmul.mubr.f32.gmra.mrb[0].mxu0 %v6995
  %v7556 = vpop.f32.mrb[0].mxu0
  %v7557 = vadd.f32 %v6823, %v7556
  %v7558 = vpop.f32.mrb[0].mxu0
  %7559 = vmatprep.mubr.f32.mxu0 0.0
  %7560 = vmatmul.mubr.f32.gmra.mrb[0].mxu0 %v6998
  %v7561 = vpop.f32.mrb[0].mxu0
  %v7562 = vadd.f32 %v6823, %v7561
  %v7563 = vpop.f32.mrb[0].mxu0
  %7564 = vmatprep.mubr.f32.mxu0 0.0
  %7565 = vmatmul.mubr.f32.gmra.mrb[0].mxu0 %v7001
  %v7566 = vpop.f32.mrb[0].mxu0
  %v7567 = vadd.f32 %v6823, %v7566
  %v7568 = vpop.f32.mrb[0].mxu0
  %7569 = vmatprep.mubr.f32.mxu0 0.0
  %7570 = vmatmul.mubr.f32.gmra.mrb[0].mxu0 %v7004
  %v7571 = vpop.f32.mrb[0].mxu0
  %v7572 = vadd.f32 %v6823, %v7571
  %v7573 = vpop.f32.mrb[0].mxu0
  %7574 = vmatprep.mubr.f32.mxu0 0.0
  %7575 = vmatmul.mubr.f32.gmra.mrb[0].mxu0 %v7007
  %v7576 = vpop.f32.mrb[0].mxu0
  %v7577 = vadd.f32 %v6823, %v7576
  %v7578 = vpop.f32.mrb[0].mxu0
  %7579 = vmatprep.mubr.f32.mxu0 0.0
  %7580 = vmatmul.mubr.f32.gmra.mrb[0].mxu0 %v7010
  %v7581 = vpop.f32.mrb[0].mxu0
  %v7582 = vadd.f32 %v6823, %v7581
  %v7583 = vpop.f32.mrb[0].mxu0
  %7584 = vmatprep.mubr.f32.mxu0 0.0
  %7585 = vmatmul.mubr.f32.gmra.mrb[0].mxu0 %v7013
  %v7586 = vpop.f32.mrb[0].mxu0
  %v7587 = vadd.f32 %v6823, %v7586
  %v7588 = vpop.f32.mrb[0].mxu0
  %7589 = vmatprep.mubr.f32.mxu0 0.0
  %7590 = vmatmul.mubr.f32.gmra.mrb[0].mxu0 %v7016
  %v7591 = vpop.f32.mrb[0].mxu0
  %v7592 = vadd.f32 %v6823, %v7591
  %v7593 = vpop.f32.mrb[0].mxu0
  %7594 = vmatprep.mubr.f32.mxu0 0.0
  %7595 = vmatmul.mubr.f32.gmra.mrb[0].mxu0 %v7019
  %v7596 = vpop.f32.mrb[0].mxu0
  %v7597 = vadd.f32 %v6823, %v7596
  %v7598 = vpop.f32.mrb[0].mxu0
  %7599 = vmatprep.mubr.f32.mxu0 0.0
  %7600 = vmatmul.mubr.f32.gmra.mrb[0].mxu0 %v7022
  %v7601 = vpop.f32.mrb[0].mxu0
  %v7602 = vadd.f32 %v6823, %v7601
  %v7603 = vpop.f32.mrb[0].mxu0
  %7604 = vmatprep.mubr.f32.mxu0 0.0
  %7605 = vmatmul.mubr.f32.gmra.mrb[0].mxu0 %v7025
  %v7606 = vpop.f32.mrb[0].mxu0
  %v7607 = vadd.f32 %v6823, %v7606
  %v7608 = vpop.f32.mrb[0].mxu0
  %7609 = vmatprep.mubr.f32.mxu0 0.0
  %7610 = vmatmul.mubr.f32.gmra.mrb[0].mxu0 %v7028
  %v7611 = vpop.f32.mrb[0].mxu0
  %v7612 = vadd.f32 %v6823, %v7611
  %v7613 = vpop.f32.mrb[0].mxu0
  %7614 = vmatprep.mubr.f32.mxu0 0.0
  %7615 = vmatmul.mubr.f32.gmra.mrb[0].mxu0 %v7031
  %v7616 = vpop.f32.mrb[0].mxu0
  %v7617 = vadd.f32 %v6823, %v7616
  %v7618 = vpop.f32.mrb[0].mxu0
  %7619 = vmatprep.mubr.f32.mxu0 0.0
  %7620 = vmatmul.mubr.f32.gmra.mrb[0].mxu0 %v7034
  %v7621 = vpop.f32.mrb[0].mxu0
  %v7622 = vadd.f32 %v6823, %v7621
  %v7623 = vpop.f32.mrb[0].mxu0
  %7624 = vmatprep.mubr.f32.mxu0 0.0
  %7625 = vmatmul.mubr.f32.gmra.mrb[0].mxu0 %v7037
  %v7626 = vpop.f32.mrb[0].mxu0
  %v7627 = vadd.f32 %v6823, %v7626
  %v7628 = vpop.f32.mrb[0].mxu0
  %7629 = vmatprep.mubr.f32.mxu0 0.0
  %7630 = vmatmul.mubr.f32.gmra.mrb[0].mxu0 %v7040
  %v7631 = vpop.f32.mrb[0].mxu0
  %v7632 = vadd.f32 %v6823, %v7631
  %v7633 = vpop.f32.mrb[0].mxu0
  %7634 = vmatprep.mubr.f32.mxu0 0.0
  %7635 = vmatmul.mubr.f32.gmra.mrb[0].mxu0 %v7043
  %v7636 = vpop.f32.mrb[0].mxu0
  %v7637 = vadd.f32 %v6823, %v7636
  %v7638 = vpop.f32.mrb[0].mxu0
  %7639 = vmatprep.mubr.f32.mxu0 0.0
  %7640 = vmatmul.mubr.f32.gmra.mrb[0].mxu0 %v7046
  %v7641 = vpop.f32.mrb[0].mxu0
  %v7642 = vadd.f32 %v6823, %v7641
  %v7643 = vpop.f32.mrb[0].mxu0
  %7644 = vmatprep.mubr.f32.mxu0 0.0
  %7645 = vmatmul.mubr.f32.gmra.mrb[0].mxu0 %v7049
  %v7646 = vpop.f32.mrb[0].mxu0
  %v7647 = vadd.f32 %v6823, %v7646
  %v7648 = vpop.f32.mrb[0].mxu0
  %7649 = vmatprep.mubr.f32.mxu0 0.0
  %7650 = vmatmul.mubr.f32.gmra.mrb[0].mxu0 %v7052
  %v7651 = vpop.f32.mrb[0].mxu0
  %v7652 = vadd.f32 %v6823, %v7651
  %v7653 = vpop.f32.mrb[0].mxu0
  %7654 = vmatprep.mubr.f32.mxu0 0.0
  %7655 = vmatmul.mubr.f32.gmra.mrb[0].mxu0 %v7055
  %v7656 = vpop.f32.mrb[0].mxu0
  %v7657 = vadd.f32 %v6823, %v7656
  %v7658 = vpop.f32.mrb[0].mxu0
  %7659 = vmatprep.mubr.f32.mxu0 0.0
  %7660 = vmatmul.mubr.f32.gmra.mrb[0].mxu0 %v7058
  %v7661 = vpop.f32.mrb[0].mxu0
  %v7662 = vadd.f32 %v6823, %v7661
  %v7663 = vpop.f32.mrb[0].mxu0
  %7664 = vmatprep.mubr.f32.mxu0 0.0
  %7665 = vmatmul.mubr.f32.gmra.mrb[0].mxu0 %v7061
  %v7666 = vpop.f32.mrb[0].mxu0
  %v7667 = vadd.f32 %v6823, %v7666
  %v7668 = vpop.f32.mrb[0].mxu0
  %7669 = vmatprep.mubr.f32.mxu0 0.0
  %7670 = vmatmul.mubr.f32.gmra.mrb[0].mxu0 %v7064
  %v7671 = vpop.f32.mrb[0].mxu0
  %v7672 = vadd.f32 %v6823, %v7671
  %v7673 = vpop.f32.mrb[0].mxu0
  %7674 = vmatprep.mubr.f32.mxu0 0.0
  %7675 = vmatmul.mubr.f32.gmra.mrb[0].mxu0 %v7067
  %v7676 = vpop.f32.mrb[0].mxu0
  %v7677 = vadd.f32 %v6823, %v7676
  %v7678 = vpop.f32.mrb[0].mxu0
  %7679 = vmatprep.mubr.f32.mxu0 0.0
  %7680 = vmatmul.mubr.f32.gmra.mrb[0].mxu0 %v7070
  %v7681 = vpop.f32.mrb[0].mxu0
  %v7682 = vadd.f32 %v6823, %v7681
  %v7683 = vpop.f32.mrb[0].mxu0
  %7684 = vmatprep.mubr.f32.mxu0 0.0
  %7685 = vmatmul.mubr.f32.gmra.mrb[0].mxu0 %v7073
  %v7686 = vpop.f32.mrb[0].mxu0
  %v7687 = vadd.f32 %v6823, %v7686
  %v7688 = vpop.f32.mrb[0].mxu0
  %7689 = vmatprep.mubr.f32.mxu0 0.0
  %7690 = vmatmul.mubr.f32.gmra.mrb[0].mxu0 %v7076
  %v7691 = vpop.f32.mrb[0].mxu0
  %v7692 = vadd.f32 %v6823, %v7691
  %v7693 = vpop.f32.mrb[0].mxu0
  %7694 = vmatprep.mubr.f32.mxu0 0.0
  %7695 = vmatmul.mubr.f32.gmra.mrb[0].mxu0 %v7079
  %v7696 = vpop.f32.mrb[0].mxu0
  %v7697 = vadd.f32 %v6823, %v7696
  %v7698 = vpop.f32.mrb[0].mxu0
  %7699 = vmatprep.mubr.f32.mxu0 0.0
  %7700 = vmatmul.mubr.f32.gmra.mrb[0].mxu0 %v7082
  %v7701 = vpop.f32.mrb[0].mxu0
  %v7702 = vadd.f32 %v6823, %v7701
  %v7703 = vpop.f32.mrb[0].mxu0
  %7704 = vmatprep.mubr.f32.mxu0 0.0
  %7705 = vmatmul.mubr.f32.gmra.mrb[0].mxu0 %v7085
  %v7706 = vpop.f32.mrb[0].mxu0
  %v7707 = vadd.f32 %v6823, %v7706
  %v7708 = vpop.f32.mrb[0].mxu0
  %7709 = vmatprep.mubr.f32.mxu0 0.0
  %7710 = vmatmul.mubr.f32.gmra.mrb[0].mxu0 %v7088
  %v7711 = vpop.f32.mrb[0].mxu0
  %v7712 = vadd.f32 %v6823, %v7711
  %v7713 = vpop.f32.mrb[0].mxu0
  %7714 = vmatprep.mubr.f32.mxu0 0.0
  %7715 = vmatmul.mubr.f32.gmra.mrb[0].mxu0 %v7091
  %v7716 = vpop.f32.mrb[0].mxu0
  %v7717 = vadd.f32 %v6823, %v7716
  %v7718 = vpop.f32.mrb[0].mxu0
  %7719 = vmatprep.mubr.f32.mxu0 0.0
  %7720 = vmatmul.mubr.f32.gmra.mrb[0].mxu0 %v7094
  %v7721 = vpop.f32.mrb[0].mxu0
  %v7722 = vadd.f32 %v6823, %v7721
  %v7723 = vpop.f32.mrb[0].mxu0
  %7724 = vmatprep.mubr.f32.mxu0 0.0
  %7725 = vmatmul.mubr.f32.gmra.mrb[0].mxu0 %v7097
  %v7726 = vpop.f32.mrb[0].mxu0
  %v7727 = vadd.f32 %v6823, %v7726
  %v7728 = vpop.f32.mrb[0].mxu0
  %7729 = vmatprep.mubr.f32.mxu0 0.0
  %7730 = vmatmul.mubr.f32.gmra.mrb[0].mxu0 %v7100
  %v7731 = vpop.f32.mrb[0].mxu0
  %v7732 = vadd.f32 %v6823, %v7731
  %v7733 = vpop.f32.mrb[0].mxu0
  %7734 = vmatprep.mubr.f32.mxu0 0.0
  %7735 = vmatmul.mubr.f32.gmra.mrb[0].mxu0 %v7103
  %v7736 = vpop.f32.mrb[0].mxu0
  %v7737 = vadd.f32 %v6823, %v7736
  %v7738 = vpop.f32.mrb[0].mxu0
  %7739 = vmatprep.mubr.f32.mxu0 0.0
  %7740 = vmatmul.mubr.f32.gmra.mrb[0].mxu0 %v7106
  %v7741 = vpop.f32.mrb[0].mxu0
  %v7742 = vadd.f32 %v6823, %v7741
  %v7743 = vpop.f32.mrb[0].mxu0
  %7744 = vmatprep.mubr.f32.mxu0 0.0
  %7745 = vmatmul.mubr.f32.gmra.mrb[0].mxu0 %v7109
  %v7746 = vpop.f32.mrb[0].mxu0
  %v7747 = vadd.f32 %v6823, %v7746
  %v7748 = vpop.f32.mrb[0].mxu0
  %7749 = vmatprep.mubr.f32.mxu0 0.0
  %7750 = vmatmul.mubr.f32.gmra.mrb[0].mxu0 %v7112
  %v7751 = vpop.f32.mrb[0].mxu0
  %v7752 = vadd.f32 %v6823, %v7751
  %v7753 = vpop.f32.mrb[0].mxu0
  %7754 = vmatprep.mubr.f32.mxu0 0.0
  %7755 = vmatmul.mubr.f32.gmra.mrb[0].mxu0 %v7115
  %v7756 = vpop.f32.mrb[0].mxu0
  %v7757 = vadd.f32 %v6823, %v7756
  %v7758 = vpop.f32.mrb[0].mxu0
  %7759 = vmatprep.mubr.f32.mxu0 0.0
  %7760 = vmatmul.mubr.f32.gmra.mrb[0].mxu0 %v7118
  %v7761 = vpop.f32.mrb[0].mxu0
  %v7762 = vadd.f32 %v6823, %v7761
  %v7763 = vpop.f32.mrb[0].mxu0
  %7764 = vmatprep.mubr.f32.mxu0 0.0
  %7765 = vmatmul.mubr.f32.gmra.mrb[0].mxu0 %v7121
  %v7766 = vpop.f32.mrb[0].mxu0
  %v7767 = vadd.f32 %v6823, %v7766
  %v7768 = vpop.f32.mrb[0].mxu0
  %7769 = vmatprep.mubr.f32.mxu0 0.0
  %7770 = vmatmul.mubr.f32.gmra.mrb[0].mxu0 %v7124
  %v7771 = vpop.f32.mrb[0].mxu0
  %v7772 = vadd.f32 %v6823, %v7771
  %v7773 = vpop.f32.mrb[0].mxu0
  %7774 = vmatprep.mubr.f32.mxu0 0.0
  %7775 = vmatmul.mubr.f32.gmra.mrb[0].mxu0 %v7127
  %v7776 = vpop.f32.mrb[0].mxu0
  %v7777 = vadd.f32 %v6823, %v7776
  %v7778 = vpop.f32.mrb[0].mxu0
  %7779 = vmatprep.mubr.f32.mxu0 0.0
  %7780 = vmatmul.mubr.f32.gmra.mrb[0].mxu0 %v7130
  %v7781 = vpop.f32.mrb[0].mxu0
  %v7782 = vadd.f32 %v6823, %v7781
  %v7783 = vpop.f32.mrb[0].mxu0
  %7784 = vmatprep.mubr.f32.mxu0 0.0
  %7785 = vmatmul.mubr.f32.gmra.mrb[0].mxu0 %v7133
  %v7786 = vpop.f32.mrb[0].mxu0
  %v7787 = vadd.f32 %v6823, %v7786
  %v7788 = vpop.f32.mrb[0].mxu0
  %7789 = vmatprep.mubr.f32.mxu0 0.0
  %7790 = vmatmul.mubr.f32.gmra.mrb[0].mxu0 %v7136
  %v7791 = vpop.f32.mrb[0].mxu0
  %v7792 = vadd.f32 %v6823, %v7791
  %v7793 = vpop.f32.mrb[0].mxu0
  %7794 = vmatprep.mubr.f32.mxu0 0.0
  %7795 = vmatmul.mubr.f32.gmra.mrb[0].mxu0 %v7139
  %v7796 = vpop.f32.mrb[0].mxu0
  %v7797 = vadd.f32 %v6823, %v7796
  %v7798 = vpop.f32.mrb[0].mxu0
  %7799 = vmatprep.mubr.f32.mxu0 0.0
  %7800 = vmatmul.mubr.f32.gmra.mrb[0].mxu0 %v7142
  %v7801 = vpop.f32.mrb[0].mxu0
  %v7802 = vadd.f32 %v6823, %v7801
  %v7803 = vpop.f32.mrb[0].mxu0
  %7804 = vmatprep.mubr.f32.mxu0 0.0
  %7805 = vmatmul.mubr.f32.gmra.mrb[0].mxu0 %v7145
  %v7806 = vpop.f32.mrb[0].mxu0
  %v7807 = vadd.f32 %v6823, %v7806
  %v7808 = vpop.f32.mrb[0].mxu0
  %7809 = vmatprep.mubr.f32.mxu0 0.0
  %7810 = vmatmul.mubr.f32.gmra.mrb[0].mxu0 %v7148
  %v7811 = vpop.f32.mrb[0].mxu0
  %v7812 = vadd.f32 %v6823, %v7811
  %v7813 = vpop.f32.mrb[0].mxu0
  %7814 = vmatprep.mubr.f32.mxu0 0.0
  %7815 = vmatmul.mubr.f32.gmra.mrb[0].mxu0 %v7151
  %v7816 = vpop.f32.mrb[0].mxu0
  %v7817 = vadd.f32 %v6823, %v7816
  %v7818 = vpop.f32.mrb[0].mxu0
  %7819 = vmatprep.mubr.f32.mxu0 0.0
  %7820 = vmatmul.mubr.f32.gmra.mrb[0].mxu0 %v7154
  %v7821 = vpop.f32.mrb[0].mxu0
  %v7822 = vadd.f32 %v6823, %v7821
  %v7823 = vpop.f32.mrb[0].mxu0
  %7824 = vmatprep.mubr.f32.mxu0 0.0
  %7825 = vmatmul.mubr.f32.gmra.mrb[0].mxu0 %v7157
  %v7826 = vpop.f32.mrb[0].mxu0
  %v7827 = vadd.f32 %v6823, %v7826
  %v7828 = vpop.f32.mrb[0].mxu0
  %7829 = vmatprep.mubr.f32.mxu0 0.0
  %7830 = vmatmul.mubr.f32.gmra.mrb[0].mxu0 %v7160
  %v7831 = vpop.f32.mrb[0].mxu0
  %v7832 = vadd.f32 %v6823, %v7831
  %v7833 = vpop.f32.mrb[0].mxu0
  %7834 = vmatprep.mubr.f32.mxu0 0.0
  %7835 = vmatmul.mubr.f32.gmra.mrb[0].mxu0 %v7163
  %v7836 = vpop.f32.mrb[0].mxu0
  %v7837 = vadd.f32 %v6823, %v7836
  %v7838 = vpop.f32.mrb[0].mxu0
  %7839 = vmatprep.mubr.f32.mxu0 0.0
  %7840 = vmatmul.mubr.f32.gmra.mrb[0].mxu0 %v7166
  %v7841 = vpop.f32.mrb[0].mxu0
  %v7842 = vadd.f32 %v6823, %v7841
  %v7843 = vpop.f32.mrb[0].mxu0
  %7844 = vmatprep.mubr.f32.mxu0 0.0
  %7845 = vmatmul.mubr.f32.gmra.mrb[0].mxu0 %v7169
  %v7846 = vpop.f32.mrb[0].mxu0
  %v7847 = vadd.f32 %v6823, %v7846
  %v7848 = vpop.f32.mrb[0].mxu0
  %7849 = vmatprep.mubr.f32.mxu0 0.0
  %7850 = vmatmul.mubr.f32.gmra.mrb[0].mxu0 %v7172
  %v7851 = vpop.f32.mrb[0].mxu0
  %v7852 = vadd.f32 %v6823, %v7851
  %v7853 = vpop.f32.mrb[0].mxu0
  %7854 = vmatprep.mubr.f32.mxu0 0.0
  %7855 = vmatmul.mubr.f32.gmra.mrb[0].mxu0 %v7175
  %v7856 = vpop.f32.mrb[0].mxu0
  %v7857 = vadd.f32 %v6823, %v7856
  %v7858 = vpop.f32.mrb[0].mxu0
  %7859 = vmatprep.mubr.f32.mxu0 0.0
  %7860 = vmatmul.mubr.f32.gmra.mrb[0].mxu0 %v7178
  %v7861 = vpop.f32.mrb[0].mxu0
  %v7862 = vadd.f32 %v6823, %v7861
  %v7863 = vpop.f32.mrb[0].mxu0
  %7864 = vmatprep.mubr.f32.mxu0 0.0
  %7865 = vmatmul.mubr.f32.gmra.mrb[0].mxu0 %v7181
  %v7866 = vpop.f32.mrb[0].mxu0
  %v7867 = vadd.f32 %v6823, %v7866
  %v7868 = vpop.f32.mrb[0].mxu0
  %7869 = vmatprep.mubr.f32.mxu0 0.0
  %7870 = vmatmul.mubr.f32.gmra.mrb[0].mxu0 %v7184
  %v7871 = vpop.f32.mrb[0].mxu0
  %v7872 = vadd.f32 %v6823, %v7871
  %v7873 = vpop.f32.mrb[0].mxu0
  %7874 = vmatprep.mubr.f32.mxu0 0.0
  %7875 = vmatmul.mubr.f32.gmra.mrb[0].mxu0 %v7187
  %v7876 = vpop.f32.mrb[0].mxu0
  %v7877 = vadd.f32 %v6823, %v7876
  %v7878 = vpop.f32.mrb[0].mxu0
  %7879 = vmatprep.mubr.f32.mxu0 0.0
  %7880 = vmatmul.mubr.f32.gmra.mrb[0].mxu0 %v7190
  %v7881 = vpop.f32.mrb[0].mxu0
  %v7882 = vadd.f32 %v6823, %v7881
  %v7883 = vpop.f32.mrb[0].mxu0
  %7884 = vmatprep.mubr.f32.mxu0 0.0
  %7885 = vmatmul.mubr.f32.gmra.mrb[0].mxu0 %v7193
  %v7886 = vpop.f32.mrb[0].mxu0
  %v7887 = vadd.f32 %v6823, %v7886
  %v7888 = vpop.f32.mrb[0].mxu0
  %7889 = vmatprep.mubr.f32.mxu0 0.0
  %7890 = vmatmul.mubr.f32.gmra.mrb[0].mxu0 %v7196
  %v7891 = vpop.f32.mrb[0].mxu0
  %v7892 = vadd.f32 %v6823, %v7891
  %v7893 = vpop.f32.mrb[0].mxu0
  %7894 = vmatprep.mubr.f32.mxu0 0.0
  %7895 = vmatmul.mubr.f32.gmra.mrb[0].mxu0 %v7199
  %v7896 = vpop.f32.mrb[0].mxu0
  %v7897 = vadd.f32 %v6823, %v7896
  %v7898 = vpop.f32.mrb[0].mxu0
  %7899 = vmatprep.mubr.f32.mxu0 0.0
  %7900 = vmatmul.mubr.f32.gmra.mrb[0].mxu0 %v7202
  %v7901 = vpop.f32.mrb[0].mxu0
  %v7902 = vadd.f32 %v6823, %v7901
  %v7903 = vpop.f32.mrb[0].mxu0
  %7904 = vmatprep.mubr.f32.mxu0 0.0
  %7905 = vmatmul.mubr.f32.gmra.mrb[0].mxu0 %v7205
  %v7906 = vpop.f32.mrb[0].mxu0
  %v7907 = vadd.f32 %v6823, %v7906
  %v7908 = vpop.f32.mrb[0].mxu0
  %7909 = vmatprep.mubr.f32.mxu0 0.0
  %7910 = vmatmul.mubr.f32.gmra.mrb[0].mxu0 %v7208
  %v7911 = vpop.f32.mrb[0].mxu0
  %v7912 = vadd.f32 %v6823, %v7911
  %v7913 = vpop.f32.mrb[0].mxu0
  %7914 = vdwg.mxu0
  %v7915 = vmax.f32 %v7277, 0.0
  %v7916 = vmax.f32 %v7282, 0.0
  %v7917 = vmax.f32 %v7287, 0.0
  %v7918 = vmax.f32 %v7292, 0.0
  %v7919 = vmax.f32 %v7297, 0.0
  %v7920 = vmax.f32 %v7302, 0.0
  %v7921 = vmax.f32 %v7307, 0.0
  %v7922 = vmax.f32 %v7312, 0.0
  %v7923 = vmax.f32 %v7317, 0.0
  %v7924 = vmax.f32 %v7322, 0.0
  %v7925 = vmax.f32 %v7327, 0.0
  %v7926 = vmax.f32 %v7332, 0.0
  %v7927 = vmax.f32 %v7337, 0.0
  %v7928 = vmax.f32 %v7342, 0.0
  %v7929 = vmax.f32 %v7347, 0.0
  %v7930 = vmax.f32 %v7352, 0.0
  %v7931 = vmax.f32 %v7357, 0.0
  %v7932 = vmax.f32 %v7362, 0.0
  %v7933 = vmax.f32 %v7367, 0.0
  %v7934 = vmax.f32 %v7372, 0.0
  %v7935 = vmax.f32 %v7377, 0.0
  %v7936 = vmax.f32 %v7382, 0.0
  %v7937 = vmax.f32 %v7387, 0.0
  %v7938 = vmax.f32 %v7392, 0.0
  %v7939 = vmax.f32 %v7397, 0.0
  %v7940 = vmax.f32 %v7402, 0.0
  %v7941 = vmax.f32 %v7407, 0.0
  %v7942 = vmax.f32 %v7412, 0.0
  %v7943 = vmax.f32 %v7417, 0.0
  %v7944 = vmax.f32 %v7422, 0.0
  %v7945 = vmax.f32 %v7427, 0.0
  %v7946 = vmax.f32 %v7432, 0.0
  %v7947 = vmax.f32 %v7437, 0.0
  %v7948 = vmax.f32 %v7442, 0.0
  %v7949 = vmax.f32 %v7447, 0.0
  %v7950 = vmax.f32 %v7452, 0.0
  %v7951 = vmax.f32 %v7457, 0.0
  %v7952 = vmax.f32 %v7462, 0.0
  %v7953 = vmax.f32 %v7467, 0.0
  %v7954 = vmax.f32 %v7472, 0.0
  %v7955 = vmax.f32 %v7477, 0.0
  %v7956 = vmax.f32 %v7482, 0.0
  %v7957 = vmax.f32 %v7487, 0.0
  %v7958 = vmax.f32 %v7492, 0.0
  %v7959 = vmax.f32 %v7497, 0.0
  %v7960 = vmax.f32 %v7502, 0.0
  %v7961 = vmax.f32 %v7507, 0.0
  %v7962 = vmax.f32 %v7512, 0.0
  %v7963 = vmax.f32 %v7517, 0.0
  %v7964 = vmax.f32 %v7522, 0.0
  %v7965 = vmax.f32 %v7527, 0.0
  %v7966 = vmax.f32 %v7532, 0.0
  %v7967 = vmax.f32 %v7537, 0.0
  %v7968 = vmax.f32 %v7542, 0.0
  %v7969 = vmax.f32 %v7547, 0.0
  %v7970 = vmax.f32 %v7552, 0.0
  %v7971 = vmax.f32 %v7557, 0.0
  %v7972 = vmax.f32 %v7562, 0.0
  %v7973 = vmax.f32 %v7567, 0.0
  %v7974 = vmax.f32 %v7572, 0.0
  %v7975 = vmax.f32 %v7577, 0.0
  %v7976 = vmax.f32 %v7582, 0.0
  %v7977 = vmax.f32 %v7587, 0.0
  %v7978 = vmax.f32 %v7592, 0.0
  %v7979 = vmax.f32 %v7597, 0.0
  %v7980 = vmax.f32 %v7602, 0.0
  %v7981 = vmax.f32 %v7607, 0.0
  %v7982 = vmax.f32 %v7612, 0.0
  %v7983 = vmax.f32 %v7617, 0.0
  %v7984 = vmax.f32 %v7622, 0.0
  %v7985 = vmax.f32 %v7627, 0.0
  %v7986 = vmax.f32 %v7632, 0.0
  %v7987 = vmax.f32 %v7637, 0.0
  %v7988 = vmax.f32 %v7642, 0.0
  %v7989 = vmax.f32 %v7647, 0.0
  %v7990 = vmax.f32 %v7652, 0.0
  %v7991 = vmax.f32 %v7657, 0.0
  %v7992 = vmax.f32 %v7662, 0.0
  %v7993 = vmax.f32 %v7667, 0.0
  %v7994 = vmax.f32 %v7672, 0.0
  %v7995 = vmax.f32 %v7677, 0.0
  %v7996 = vmax.f32 %v7682, 0.0
  %v7997 = vmax.f32 %v7687, 0.0
  %v7998 = vmax.f32 %v7692, 0.0
  %v7999 = vmax.f32 %v7697, 0.0
  %v8000 = vmax.f32 %v7702, 0.0
  %v8001 = vmax.f32 %v7707, 0.0
  %v8002 = vmax.f32 %v7712, 0.0
  %v8003 = vmax.f32 %v7717, 0.0
  %v8004 = vmax.f32 %v7722, 0.0
  %v8005 = vmax.f32 %v7727, 0.0
  %v8006 = vmax.f32 %v7732, 0.0
  %v8007 = vmax.f32 %v7737, 0.0
  %v8008 = vmax.f32 %v7742, 0.0
  %v8009 = vmax.f32 %v7747, 0.0
  %v8010 = vmax.f32 %v7752, 0.0
  %v8011 = vmax.f32 %v7757, 0.0
  %v8012 = vmax.f32 %v7762, 0.0
  %v8013 = vmax.f32 %v7767, 0.0
  %v8014 = vmax.f32 %v7772, 0.0
  %v8015 = vmax.f32 %v7777, 0.0
  %v8016 = vmax.f32 %v7782, 0.0
  %v8017 = vmax.f32 %v7787, 0.0
  %v8018 = vmax.f32 %v7792, 0.0
  %v8019 = vmax.f32 %v7797, 0.0
  %v8020 = vmax.f32 %v7802, 0.0
  %v8021 = vmax.f32 %v7807, 0.0
  %v8022 = vmax.f32 %v7812, 0.0
  %v8023 = vmax.f32 %v7817, 0.0
  %v8024 = vmax.f32 %v7822, 0.0
  %v8025 = vmax.f32 %v7827, 0.0
  %v8026 = vmax.f32 %v7832, 0.0
  %v8027 = vmax.f32 %v7837, 0.0
  %v8028 = vmax.f32 %v7842, 0.0
  %v8029 = vmax.f32 %v7847, 0.0
  %v8030 = vmax.f32 %v7852, 0.0
  %v8031 = vmax.f32 %v7857, 0.0
  %v8032 = vmax.f32 %v7862, 0.0
  %v8033 = vmax.f32 %v7867, 0.0
  %v8034 = vmax.f32 %v7872, 0.0
  %v8035 = vmax.f32 %v7877, 0.0
  %v8036 = vmax.f32 %v7882, 0.0
  %v8037 = vmax.f32 %v7887, 0.0
  %v8038 = vmax.f32 %v7892, 0.0
  %v8039 = vmax.f32 %v7897, 0.0
  %v8040 = vmax.f32 %v7902, 0.0
  %v8041 = vmax.f32 %v7907, 0.0
  %v8042 = vmax.f32 %v7912, 0.0
  %v8043 = vsel %vm5789, %v1253, 0.0
  %v8044 = vsel %vm5789, %v1254, 0.0
  %v8045 = vadd.f32 %v8043, %v8044
  %v8046 = vsel %vm5789, %v1255, 0.0
  %v8047 = vadd.f32 %v8045, %v8046
  %v8048 = vsel %vm5789, %v1256, 0.0
  %v8049 = vadd.f32 %v8047, %v8048
  %v8050 = vsel %vm5789, %v1257, 0.0
  %v8051 = vadd.f32 %v8049, %v8050
  %v8052 = vsel %vm5789, %v1258, 0.0
  %v8053 = vadd.f32 %v8051, %v8052
  %v8054 = vsel %vm5789, %v1259, 0.0
  %v8055 = vadd.f32 %v8053, %v8054
  %v8056 = vsel %vm5789, %v1260, 0.0
  %v8057 = vadd.f32 %v8055, %v8056
  %v8058 = vsel %vm5789, %v1261, 0.0
  %v8059 = vadd.f32 %v8057, %v8058
  %v8060 = vsel %vm5789, %v1262, 0.0
  %v8061 = vadd.f32 %v8059, %v8060
  %v8062 = vsel %vm5789, %v1263, 0.0
  %v8063 = vadd.f32 %v8061, %v8062
  %v8064 = vsel %vm5789, %v1264, 0.0
  %v8065 = vadd.f32 %v8063, %v8064
  %v8066 = vsel %vm5789, %v1265, 0.0
  %v8067 = vadd.f32 %v8065, %v8066
  %v8068 = vsel %vm5789, %v1266, 0.0
  %v8069 = vadd.f32 %v8067, %v8068
  %v8070 = vsel %vm5789, %v1267, 0.0
  %v8071 = vadd.f32 %v8069, %v8070
  %v8072 = vsel %vm5789, %v1268, 0.0
  %v8073 = vadd.f32 %v8071, %v8072
  %v8074 = vsel %vm5789, %v1269, 0.0
  %v8075 = vadd.f32 %v8073, %v8074
  %v8076 = vsel %vm5789, %v1270, 0.0
  %v8077 = vadd.f32 %v8075, %v8076
  %v8078 = vsel %vm5789, %v1271, 0.0
  %v8079 = vadd.f32 %v8077, %v8078
  %v8080 = vsel %vm5789, %v1272, 0.0
  %v8081 = vadd.f32 %v8079, %v8080
  %v8082 = vsel %vm5789, %v1273, 0.0
  %v8083 = vadd.f32 %v8081, %v8082
  %v8084 = vsel %vm5789, %v1274, 0.0
  %v8085 = vadd.f32 %v8083, %v8084
  %v8086 = vsel %vm5789, %v1275, 0.0
  %v8087 = vadd.f32 %v8085, %v8086
  %v8088 = vsel %vm5789, %v1276, 0.0
  %v8089 = vadd.f32 %v8087, %v8088
  %v8090 = vsel %vm5789, %v1277, 0.0
  %v8091 = vadd.f32 %v8089, %v8090
  %v8092 = vsel %vm5789, %v1278, 0.0
  %v8093 = vadd.f32 %v8091, %v8092
  %v8094 = vsel %vm5789, %v1279, 0.0
  %v8095 = vadd.f32 %v8093, %v8094
  %v8096 = vsel %vm5789, %v1280, 0.0
  %v8097 = vadd.f32 %v8095, %v8096
  %v8098 = vsel %vm5789, %v1281, 0.0
  %v8099 = vadd.f32 %v8097, %v8098
  %v8100 = vsel %vm5789, %v1282, 0.0
  %v8101 = vadd.f32 %v8099, %v8100
  %v8102 = vsel %vm5789, %v1283, 0.0
  %v8103 = vadd.f32 %v8101, %v8102
  %v8104 = vsel %vm5789, %v1284, 0.0
  %v8105 = vadd.f32 %v8103, %v8104
  %v8106 = vrot.slane %v8105, 4
  %v8107 = vadd.f32 %v8105, %v8106
  %v8108 = vrot.slane %v8107, 2
  %v8109 = vadd.f32 %v8107, %v8108
  %v8110 = vrot.slane %v8109, 1
  %v8111 = vadd.f32 %v8109, %v8110
  %v8112 = vsel %vm5789, %v1285, 0.0
  %v8113 = vsel %vm5789, %v1286, 0.0
  %v8114 = vadd.f32 %v8112, %v8113
  %v8115 = vsel %vm5789, %v1287, 0.0
  %v8116 = vadd.f32 %v8114, %v8115
  %v8117 = vsel %vm5789, %v1288, 0.0
  %v8118 = vadd.f32 %v8116, %v8117
  %v8119 = vsel %vm5789, %v1289, 0.0
  %v8120 = vadd.f32 %v8118, %v8119
  %v8121 = vsel %vm5789, %v1290, 0.0
  %v8122 = vadd.f32 %v8120, %v8121
  %v8123 = vsel %vm5789, %v1291, 0.0
  %v8124 = vadd.f32 %v8122, %v8123
  %v8125 = vsel %vm5789, %v1292, 0.0
  %v8126 = vadd.f32 %v8124, %v8125
  %v8127 = vsel %vm5789, %v1293, 0.0
  %v8128 = vadd.f32 %v8126, %v8127
  %v8129 = vsel %vm5789, %v1294, 0.0
  %v8130 = vadd.f32 %v8128, %v8129
  %v8131 = vsel %vm5789, %v1295, 0.0
  %v8132 = vadd.f32 %v8130, %v8131
  %v8133 = vsel %vm5789, %v1296, 0.0
  %v8134 = vadd.f32 %v8132, %v8133
  %v8135 = vsel %vm5789, %v1297, 0.0
  %v8136 = vadd.f32 %v8134, %v8135
  %v8137 = vsel %vm5789, %v1298, 0.0
  %v8138 = vadd.f32 %v8136, %v8137
  %v8139 = vsel %vm5789, %v1299, 0.0
  %v8140 = vadd.f32 %v8138, %v8139
  %v8141 = vsel %vm5789, %v1300, 0.0
  %v8142 = vadd.f32 %v8140, %v8141
  %v8143 = vsel %vm5789, %v1301, 0.0
  %v8144 = vadd.f32 %v8142, %v8143
  %v8145 = vsel %vm5789, %v1302, 0.0
  %v8146 = vadd.f32 %v8144, %v8145
  %v8147 = vsel %vm5789, %v1303, 0.0
  %v8148 = vadd.f32 %v8146, %v8147
  %v8149 = vsel %vm5789, %v1304, 0.0
  %v8150 = vadd.f32 %v8148, %v8149
  %v8151 = vsel %vm5789, %v1305, 0.0
  %v8152 = vadd.f32 %v8150, %v8151
  %v8153 = vsel %vm5789, %v1306, 0.0
  %v8154 = vadd.f32 %v8152, %v8153
  %v8155 = vsel %vm5789, %v1307, 0.0
  %v8156 = vadd.f32 %v8154, %v8155
  %v8157 = vsel %vm5789, %v1308, 0.0
  %v8158 = vadd.f32 %v8156, %v8157
  %v8159 = vsel %vm5789, %v1309, 0.0
  %v8160 = vadd.f32 %v8158, %v8159
  %v8161 = vsel %vm5789, %v1310, 0.0
  %v8162 = vadd.f32 %v8160, %v8161
  %v8163 = vsel %vm5789, %v1311, 0.0
  %v8164 = vadd.f32 %v8162, %v8163
  %v8165 = vsel %vm5789, %v1312, 0.0
  %v8166 = vadd.f32 %v8164, %v8165
  %v8167 = vsel %vm5789, %v1313, 0.0
  %v8168 = vadd.f32 %v8166, %v8167
  %v8169 = vsel %vm5789, %v1314, 0.0
  %v8170 = vadd.f32 %v8168, %v8169
  %v8171 = vsel %vm5789, %v1315, 0.0
  %v8172 = vadd.f32 %v8170, %v8171
  %v8173 = vsel %vm5789, %v1316, 0.0
  %v8174 = vadd.f32 %v8172, %v8173
  %v8175 = vrot.slane %v8174, 4
  %v8176 = vadd.f32 %v8174, %v8175
  %v8177 = vrot.slane %v8176, 2
  %v8178 = vadd.f32 %v8176, %v8177
  %v8179 = vrot.slane %v8178, 1
  %v8180 = vadd.f32 %v8178, %v8179
  %v8181 = vsel %vm5789, %v1317, 0.0
  %v8182 = vsel %vm5789, %v1318, 0.0
  %v8183 = vadd.f32 %v8181, %v8182
  %v8184 = vsel %vm5789, %v1319, 0.0
  %v8185 = vadd.f32 %v8183, %v8184
  %v8186 = vsel %vm5789, %v1320, 0.0
  %v8187 = vadd.f32 %v8185, %v8186
  %v8188 = vsel %vm5789, %v1321, 0.0
  %v8189 = vadd.f32 %v8187, %v8188
  %v8190 = vsel %vm5789, %v1322, 0.0
  %v8191 = vadd.f32 %v8189, %v8190
  %v8192 = vsel %vm5789, %v1323, 0.0
  %v8193 = vadd.f32 %v8191, %v8192
  %v8194 = vsel %vm5789, %v1324, 0.0
  %v8195 = vadd.f32 %v8193, %v8194
  %v8196 = vsel %vm5789, %v1325, 0.0
  %v8197 = vadd.f32 %v8195, %v8196
  %v8198 = vsel %vm5789, %v1326, 0.0
  %v8199 = vadd.f32 %v8197, %v8198
  %v8200 = vsel %vm5789, %v1327, 0.0
  %v8201 = vadd.f32 %v8199, %v8200
  %v8202 = vsel %vm5789, %v1328, 0.0
  %v8203 = vadd.f32 %v8201, %v8202
  %v8204 = vsel %vm5789, %v1329, 0.0
  %v8205 = vadd.f32 %v8203, %v8204
  %v8206 = vsel %vm5789, %v1330, 0.0
  %v8207 = vadd.f32 %v8205, %v8206
  %v8208 = vsel %vm5789, %v1331, 0.0
  %v8209 = vadd.f32 %v8207, %v8208
  %v8210 = vsel %vm5789, %v1332, 0.0
  %v8211 = vadd.f32 %v8209, %v8210
  %v8212 = vsel %vm5789, %v1333, 0.0
  %v8213 = vadd.f32 %v8211, %v8212
  %v8214 = vsel %vm5789, %v1334, 0.0
  %v8215 = vadd.f32 %v8213, %v8214
  %v8216 = vsel %vm5789, %v1335, 0.0
  %v8217 = vadd.f32 %v8215, %v8216
  %v8218 = vsel %vm5789, %v1336, 0.0
  %v8219 = vadd.f32 %v8217, %v8218
  %v8220 = vsel %vm5789, %v1337, 0.0
  %v8221 = vadd.f32 %v8219, %v8220
  %v8222 = vsel %vm5789, %v1338, 0.0
  %v8223 = vadd.f32 %v8221, %v8222
  %v8224 = vsel %vm5789, %v1339, 0.0
  %v8225 = vadd.f32 %v8223, %v8224
  %v8226 = vsel %vm5789, %v1340, 0.0
  %v8227 = vadd.f32 %v8225, %v8226
  %v8228 = vsel %vm5789, %v1341, 0.0
  %v8229 = vadd.f32 %v8227, %v8228
  %v8230 = vsel %vm5789, %v1342, 0.0
  %v8231 = vadd.f32 %v8229, %v8230
  %v8232 = vsel %vm5789, %v1343, 0.0
  %v8233 = vadd.f32 %v8231, %v8232
  %v8234 = vsel %vm5789, %v1344, 0.0
  %v8235 = vadd.f32 %v8233, %v8234
  %v8236 = vsel %vm5789, %v1345, 0.0
  %v8237 = vadd.f32 %v8235, %v8236
  %v8238 = vsel %vm5789, %v1346, 0.0
  %v8239 = vadd.f32 %v8237, %v8238
  %v8240 = vsel %vm5789, %v1347, 0.0
  %v8241 = vadd.f32 %v8239, %v8240
  %v8242 = vsel %vm5789, %v1348, 0.0
  %v8243 = vadd.f32 %v8241, %v8242
  %v8244 = vrot.slane %v8243, 4
  %v8245 = vadd.f32 %v8243, %v8244
  %v8246 = vrot.slane %v8245, 2
  %v8247 = vadd.f32 %v8245, %v8246
  %v8248 = vrot.slane %v8247, 1
  %v8249 = vadd.f32 %v8247, %v8248
  %v8250 = vsel %vm5789, %v1349, 0.0
  %v8251 = vsel %vm5789, %v1350, 0.0
  %v8252 = vadd.f32 %v8250, %v8251
  %v8253 = vsel %vm5789, %v1351, 0.0
  %v8254 = vadd.f32 %v8252, %v8253
  %v8255 = vsel %vm5789, %v1352, 0.0
  %v8256 = vadd.f32 %v8254, %v8255
  %v8257 = vsel %vm5789, %v1353, 0.0
  %v8258 = vadd.f32 %v8256, %v8257
  %v8259 = vsel %vm5789, %v1354, 0.0
  %v8260 = vadd.f32 %v8258, %v8259
  %v8261 = vsel %vm5789, %v1355, 0.0
  %v8262 = vadd.f32 %v8260, %v8261
  %v8263 = vsel %vm5789, %v1356, 0.0
  %v8264 = vadd.f32 %v8262, %v8263
  %v8265 = vsel %vm5789, %v1357, 0.0
  %v8266 = vadd.f32 %v8264, %v8265
  %v8267 = vsel %vm5789, %v1358, 0.0
  %v8268 = vadd.f32 %v8266, %v8267
  %v8269 = vsel %vm5789, %v1359, 0.0
  %v8270 = vadd.f32 %v8268, %v8269
  %v8271 = vsel %vm5789, %v1360, 0.0
  %v8272 = vadd.f32 %v8270, %v8271
  %v8273 = vsel %vm5789, %v1361, 0.0
  %v8274 = vadd.f32 %v8272, %v8273
  %v8275 = vsel %vm5789, %v1362, 0.0
  %v8276 = vadd.f32 %v8274, %v8275
  %v8277 = vsel %vm5789, %v1363, 0.0
  %v8278 = vadd.f32 %v8276, %v8277
  %v8279 = vsel %vm5789, %v1364, 0.0
  %v8280 = vadd.f32 %v8278, %v8279
  %v8281 = vsel %vm5789, %v1365, 0.0
  %v8282 = vadd.f32 %v8280, %v8281
  %v8283 = vsel %vm5789, %v1366, 0.0
  %v8284 = vadd.f32 %v8282, %v8283
  %v8285 = vsel %vm5789, %v1367, 0.0
  %v8286 = vadd.f32 %v8284, %v8285
  %v8287 = vsel %vm5789, %v1368, 0.0
  %v8288 = vadd.f32 %v8286, %v8287
  %v8289 = vsel %vm5789, %v1369, 0.0
  %v8290 = vadd.f32 %v8288, %v8289
  %v8291 = vsel %vm5789, %v1370, 0.0
  %v8292 = vadd.f32 %v8290, %v8291
  %v8293 = vsel %vm5789, %v1371, 0.0
  %v8294 = vadd.f32 %v8292, %v8293
  %v8295 = vsel %vm5789, %v1372, 0.0
  %v8296 = vadd.f32 %v8294, %v8295
  %v8297 = vsel %vm5789, %v1373, 0.0
  %v8298 = vadd.f32 %v8296, %v8297
  %v8299 = vsel %vm5789, %v1374, 0.0
  %v8300 = vadd.f32 %v8298, %v8299
  %v8301 = vsel %vm5789, %v1375, 0.0
  %v8302 = vadd.f32 %v8300, %v8301
  %v8303 = vsel %vm5789, %v1376, 0.0
  %v8304 = vadd.f32 %v8302, %v8303
  %v8305 = vsel %vm5789, %v1377, 0.0
  %v8306 = vadd.f32 %v8304, %v8305
  %v8307 = vsel %vm5789, %v1378, 0.0
  %v8308 = vadd.f32 %v8306, %v8307
  %v8309 = vsel %vm5789, %v1379, 0.0
  %v8310 = vadd.f32 %v8308, %v8309
  %v8311 = vsel %vm5789, %v1380, 0.0
  %v8312 = vadd.f32 %v8310, %v8311
  %v8313 = vrot.slane %v8312, 4
  %v8314 = vadd.f32 %v8312, %v8313
  %v8315 = vrot.slane %v8314, 2
  %v8316 = vadd.f32 %v8314, %v8315
  %v8317 = vrot.slane %v8316, 1
  %v8318 = vadd.f32 %v8316, %v8317
  %v8319 = vmul.f32 %v8111, 0.00390625
  %v8320 = vmul.f32 %v8180, 0.00390625
  %v8321 = vmul.f32 %v8249, 0.00390625
  %v8322 = vmul.f32 %v8318, 0.00390625
  %v8323 = vsel %vm5912, %v7915, 0.0
  %v8324 = vsel %vm5912, %v7916, 0.0
  %v8325 = vadd.f32 %v8323, %v8324
  %v8326 = vsel %vm5912, %v7917, 0.0
  %v8327 = vadd.f32 %v8325, %v8326
  %v8328 = vsel %vm5912, %v7918, 0.0
  %v8329 = vadd.f32 %v8327, %v8328
  %v8330 = vsel %vm5912, %v7919, 0.0
  %v8331 = vadd.f32 %v8329, %v8330
  %v8332 = vsel %vm5912, %v7920, 0.0
  %v8333 = vadd.f32 %v8331, %v8332
  %v8334 = vsel %vm5912, %v7921, 0.0
  %v8335 = vadd.f32 %v8333, %v8334
  %v8336 = vsel %vm5912, %v7922, 0.0
  %v8337 = vadd.f32 %v8335, %v8336
  %v8338 = vsel %vm5912, %v7923, 0.0
  %v8339 = vadd.f32 %v8337, %v8338
  %v8340 = vsel %vm5912, %v7924, 0.0
  %v8341 = vadd.f32 %v8339, %v8340
  %v8342 = vsel %vm5912, %v7925, 0.0
  %v8343 = vadd.f32 %v8341, %v8342
  %v8344 = vsel %vm5912, %v7926, 0.0
  %v8345 = vadd.f32 %v8343, %v8344
  %v8346 = vsel %vm5912, %v7927, 0.0
  %v8347 = vadd.f32 %v8345, %v8346
  %v8348 = vsel %vm5912, %v7928, 0.0
  %v8349 = vadd.f32 %v8347, %v8348
  %v8350 = vsel %vm5912, %v7929, 0.0
  %v8351 = vadd.f32 %v8349, %v8350
  %v8352 = vsel %vm5912, %v7930, 0.0
  %v8353 = vadd.f32 %v8351, %v8352
  %v8354 = vsel %vm5912, %v7931, 0.0
  %v8355 = vadd.f32 %v8353, %v8354
  %v8356 = vsel %vm5912, %v7932, 0.0
  %v8357 = vadd.f32 %v8355, %v8356
  %v8358 = vsel %vm5912, %v7933, 0.0
  %v8359 = vadd.f32 %v8357, %v8358
  %v8360 = vsel %vm5912, %v7934, 0.0
  %v8361 = vadd.f32 %v8359, %v8360
  %v8362 = vsel %vm5912, %v7935, 0.0
  %v8363 = vadd.f32 %v8361, %v8362
  %v8364 = vsel %vm5912, %v7936, 0.0
  %v8365 = vadd.f32 %v8363, %v8364
  %v8366 = vsel %vm5912, %v7937, 0.0
  %v8367 = vadd.f32 %v8365, %v8366
  %v8368 = vsel %vm5912, %v7938, 0.0
  %v8369 = vadd.f32 %v8367, %v8368
  %v8370 = vsel %vm5912, %v7939, 0.0
  %v8371 = vadd.f32 %v8369, %v8370
  %v8372 = vsel %vm5912, %v7940, 0.0
  %v8373 = vadd.f32 %v8371, %v8372
  %v8374 = vsel %vm5912, %v7941, 0.0
  %v8375 = vadd.f32 %v8373, %v8374
  %v8376 = vsel %vm5912, %v7942, 0.0
  %v8377 = vadd.f32 %v8375, %v8376
  %v8378 = vsel %vm5912, %v7943, 0.0
  %v8379 = vadd.f32 %v8377, %v8378
  %v8380 = vsel %vm5912, %v7944, 0.0
  %v8381 = vadd.f32 %v8379, %v8380
  %v8382 = vsel %vm5912, %v7945, 0.0
  %v8383 = vadd.f32 %v8381, %v8382
  %v8384 = vsel %vm5912, %v7946, 0.0
  %v8385 = vadd.f32 %v8383, %v8384
  %v8386 = vrot.slane %v8385, 4
  %v8387 = vadd.f32 %v8385, %v8386
  %v8388 = vrot.slane %v8387, 2
  %v8389 = vadd.f32 %v8387, %v8388
  %v8390 = vrot.slane %v8389, 1
  %v8391 = vadd.f32 %v8389, %v8390
  %v8392 = vsel %vm5912, %v7947, 0.0
  %v8393 = vsel %vm5912, %v7948, 0.0
  %v8394 = vadd.f32 %v8392, %v8393
  %v8395 = vsel %vm5912, %v7949, 0.0
  %v8396 = vadd.f32 %v8394, %v8395
  %v8397 = vsel %vm5912, %v7950, 0.0
  %v8398 = vadd.f32 %v8396, %v8397
  %v8399 = vsel %vm5912, %v7951, 0.0
  %v8400 = vadd.f32 %v8398, %v8399
  %v8401 = vsel %vm5912, %v7952, 0.0
  %v8402 = vadd.f32 %v8400, %v8401
  %v8403 = vsel %vm5912, %v7953, 0.0
  %v8404 = vadd.f32 %v8402, %v8403
  %v8405 = vsel %vm5912, %v7954, 0.0
  %v8406 = vadd.f32 %v8404, %v8405
  %v8407 = vsel %vm5912, %v7955, 0.0
  %v8408 = vadd.f32 %v8406, %v8407
  %v8409 = vsel %vm5912, %v7956, 0.0
  %v8410 = vadd.f32 %v8408, %v8409
  %v8411 = vsel %vm5912, %v7957, 0.0
  %v8412 = vadd.f32 %v8410, %v8411
  %v8413 = vsel %vm5912, %v7958, 0.0
  %v8414 = vadd.f32 %v8412, %v8413
  %v8415 = vsel %vm5912, %v7959, 0.0
  %v8416 = vadd.f32 %v8414, %v8415
  %v8417 = vsel %vm5912, %v7960, 0.0
  %v8418 = vadd.f32 %v8416, %v8417
  %v8419 = vsel %vm5912, %v7961, 0.0
  %v8420 = vadd.f32 %v8418, %v8419
  %v8421 = vsel %vm5912, %v7962, 0.0
  %v8422 = vadd.f32 %v8420, %v8421
  %v8423 = vsel %vm5912, %v7963, 0.0
  %v8424 = vadd.f32 %v8422, %v8423
  %v8425 = vsel %vm5912, %v7964, 0.0
  %v8426 = vadd.f32 %v8424, %v8425
  %v8427 = vsel %vm5912, %v7965, 0.0
  %v8428 = vadd.f32 %v8426, %v8427
  %v8429 = vsel %vm5912, %v7966, 0.0
  %v8430 = vadd.f32 %v8428, %v8429
  %v8431 = vsel %vm5912, %v7967, 0.0
  %v8432 = vadd.f32 %v8430, %v8431
  %v8433 = vsel %vm5912, %v7968, 0.0
  %v8434 = vadd.f32 %v8432, %v8433
  %v8435 = vsel %vm5912, %v7969, 0.0
  %v8436 = vadd.f32 %v8434, %v8435
  %v8437 = vsel %vm5912, %v7970, 0.0
  %v8438 = vadd.f32 %v8436, %v8437
  %v8439 = vsel %vm5912, %v7971, 0.0
  %v8440 = vadd.f32 %v8438, %v8439
  %v8441 = vsel %vm5912, %v7972, 0.0
  %v8442 = vadd.f32 %v8440, %v8441
  %v8443 = vsel %vm5912, %v7973, 0.0
  %v8444 = vadd.f32 %v8442, %v8443
  %v8445 = vsel %vm5912, %v7974, 0.0
  %v8446 = vadd.f32 %v8444, %v8445
  %v8447 = vsel %vm5912, %v7975, 0.0
  %v8448 = vadd.f32 %v8446, %v8447
  %v8449 = vsel %vm5912, %v7976, 0.0
  %v8450 = vadd.f32 %v8448, %v8449
  %v8451 = vsel %vm5912, %v7977, 0.0
  %v8452 = vadd.f32 %v8450, %v8451
  %v8453 = vsel %vm5912, %v7978, 0.0
  %v8454 = vadd.f32 %v8452, %v8453
  %v8455 = vrot.slane %v8454, 4
  %v8456 = vadd.f32 %v8454, %v8455
  %v8457 = vrot.slane %v8456, 2
  %v8458 = vadd.f32 %v8456, %v8457
  %v8459 = vrot.slane %v8458, 1
  %v8460 = vadd.f32 %v8458, %v8459
  %v8461 = vsel %vm5912, %v7979, 0.0
  %v8462 = vsel %vm5912, %v7980, 0.0
  %v8463 = vadd.f32 %v8461, %v8462
  %v8464 = vsel %vm5912, %v7981, 0.0
  %v8465 = vadd.f32 %v8463, %v8464
  %v8466 = vsel %vm5912, %v7982, 0.0
  %v8467 = vadd.f32 %v8465, %v8466
  %v8468 = vsel %vm5912, %v7983, 0.0
  %v8469 = vadd.f32 %v8467, %v8468
  %v8470 = vsel %vm5912, %v7984, 0.0
  %v8471 = vadd.f32 %v8469, %v8470
  %v8472 = vsel %vm5912, %v7985, 0.0
  %v8473 = vadd.f32 %v8471, %v8472
  %v8474 = vsel %vm5912, %v7986, 0.0
  %v8475 = vadd.f32 %v8473, %v8474
  %v8476 = vsel %vm5912, %v7987, 0.0
  %v8477 = vadd.f32 %v8475, %v8476
  %v8478 = vsel %vm5912, %v7988, 0.0
  %v8479 = vadd.f32 %v8477, %v8478
  %v8480 = vsel %vm5912, %v7989, 0.0
  %v8481 = vadd.f32 %v8479, %v8480
  %v8482 = vsel %vm5912, %v7990, 0.0
  %v8483 = vadd.f32 %v8481, %v8482
  %v8484 = vsel %vm5912, %v7991, 0.0
  %v8485 = vadd.f32 %v8483, %v8484
  %v8486 = vsel %vm5912, %v7992, 0.0
  %v8487 = vadd.f32 %v8485, %v8486
  %v8488 = vsel %vm5912, %v7993, 0.0
  %v8489 = vadd.f32 %v8487, %v8488
  %v8490 = vsel %vm5912, %v7994, 0.0
  %v8491 = vadd.f32 %v8489, %v8490
  %v8492 = vsel %vm5912, %v7995, 0.0
  %v8493 = vadd.f32 %v8491, %v8492
  %v8494 = vsel %vm5912, %v7996, 0.0
  %v8495 = vadd.f32 %v8493, %v8494
  %v8496 = vsel %vm5912, %v7997, 0.0
  %v8497 = vadd.f32 %v8495, %v8496
  %v8498 = vsel %vm5912, %v7998, 0.0
  %v8499 = vadd.f32 %v8497, %v8498
  %v8500 = vsel %vm5912, %v7999, 0.0
  %v8501 = vadd.f32 %v8499, %v8500
  %v8502 = vsel %vm5912, %v8000, 0.0
  %v8503 = vadd.f32 %v8501, %v8502
  %v8504 = vsel %vm5912, %v8001, 0.0
  %v8505 = vadd.f32 %v8503, %v8504
  %v8506 = vsel %vm5912, %v8002, 0.0
  %v8507 = vadd.f32 %v8505, %v8506
  %v8508 = vsel %vm5912, %v8003, 0.0
  %v8509 = vadd.f32 %v8507, %v8508
  %v8510 = vsel %vm5912, %v8004, 0.0
  %v8511 = vadd.f32 %v8509, %v8510
  %v8512 = vsel %vm5912, %v8005, 0.0
  %v8513 = vadd.f32 %v8511, %v8512
  %v8514 = vsel %vm5912, %v8006, 0.0
  %v8515 = vadd.f32 %v8513, %v8514
  %v8516 = vsel %vm5912, %v8007, 0.0
  %v8517 = vadd.f32 %v8515, %v8516
  %v8518 = vsel %vm5912, %v8008, 0.0
  %v8519 = vadd.f32 %v8517, %v8518
  %v8520 = vsel %vm5912, %v8009, 0.0
  %v8521 = vadd.f32 %v8519, %v8520
  %v8522 = vsel %vm5912, %v8010, 0.0
  %v8523 = vadd.f32 %v8521, %v8522
  %v8524 = vrot.slane %v8523, 4
  %v8525 = vadd.f32 %v8523, %v8524
  %v8526 = vrot.slane %v8525, 2
  %v8527 = vadd.f32 %v8525, %v8526
  %v8528 = vrot.slane %v8527, 1
  %v8529 = vadd.f32 %v8527, %v8528
  %v8530 = vsel %vm5912, %v8011, 0.0
  %v8531 = vsel %vm5912, %v8012, 0.0
  %v8532 = vadd.f32 %v8530, %v8531
  %v8533 = vsel %vm5912, %v8013, 0.0
  %v8534 = vadd.f32 %v8532, %v8533
  %v8535 = vsel %vm5912, %v8014, 0.0
  %v8536 = vadd.f32 %v8534, %v8535
  %v8537 = vsel %vm5912, %v8015, 0.0
  %v8538 = vadd.f32 %v8536, %v8537
  %v8539 = vsel %vm5912, %v8016, 0.0
  %v8540 = vadd.f32 %v8538, %v8539
  %v8541 = vsel %vm5912, %v8017, 0.0
  %v8542 = vadd.f32 %v8540, %v8541
  %v8543 = vsel %vm5912, %v8018, 0.0
  %v8544 = vadd.f32 %v8542, %v8543
  %v8545 = vsel %vm5912, %v8019, 0.0
  %v8546 = vadd.f32 %v8544, %v8545
  %v8547 = vsel %vm5912, %v8020, 0.0
  %v8548 = vadd.f32 %v8546, %v8547
  %v8549 = vsel %vm5912, %v8021, 0.0
  %v8550 = vadd.f32 %v8548, %v8549
  %v8551 = vsel %vm5912, %v8022, 0.0
  %v8552 = vadd.f32 %v8550, %v8551
  %v8553 = vsel %vm5912, %v8023, 0.0
  %v8554 = vadd.f32 %v8552, %v8553
  %v8555 = vsel %vm5912, %v8024, 0.0
  %v8556 = vadd.f32 %v8554, %v8555
  %v8557 = vsel %vm5912, %v8025, 0.0
  %v8558 = vadd.f32 %v8556, %v8557
  %v8559 = vsel %vm5912, %v8026, 0.0
  %v8560 = vadd.f32 %v8558, %v8559
  %v8561 = vsel %vm5912, %v8027, 0.0
  %v8562 = vadd.f32 %v8560, %v8561
  %v8563 = vsel %vm5912, %v8028, 0.0
  %v8564 = vadd.f32 %v8562, %v8563
  %v8565 = vsel %vm5912, %v8029, 0.0
  %v8566 = vadd.f32 %v8564, %v8565
  %v8567 = vsel %vm5912, %v8030, 0.0
  %v8568 = vadd.f32 %v8566, %v8567
  %v8569 = vsel %vm5912, %v8031, 0.0
  %v8570 = vadd.f32 %v8568, %v8569
  %v8571 = vsel %vm5912, %v8032, 0.0
  %v8572 = vadd.f32 %v8570, %v8571
  %v8573 = vsel %vm5912, %v8033, 0.0
  %v8574 = vadd.f32 %v8572, %v8573
  %v8575 = vsel %vm5912, %v8034, 0.0
  %v8576 = vadd.f32 %v8574, %v8575
  %v8577 = vsel %vm5912, %v8035, 0.0
  %v8578 = vadd.f32 %v8576, %v8577
  %v8579 = vsel %vm5912, %v8036, 0.0
  %v8580 = vadd.f32 %v8578, %v8579
  %v8581 = vsel %vm5912, %v8037, 0.0
  %v8582 = vadd.f32 %v8580, %v8581
  %v8583 = vsel %vm5912, %v8038, 0.0
  %v8584 = vadd.f32 %v8582, %v8583
  %v8585 = vsel %vm5912, %v8039, 0.0
  %v8586 = vadd.f32 %v8584, %v8585
  %v8587 = vsel %vm5912, %v8040, 0.0
  %v8588 = vadd.f32 %v8586, %v8587
  %v8589 = vsel %vm5912, %v8041, 0.0
  %v8590 = vadd.f32 %v8588, %v8589
  %v8591 = vsel %vm5912, %v8042, 0.0
  %v8592 = vadd.f32 %v8590, %v8591
  %v8593 = vrot.slane %v8592, 4
  %v8594 = vadd.f32 %v8592, %v8593
  %v8595 = vrot.slane %v8594, 2
  %v8596 = vadd.f32 %v8594, %v8595
  %v8597 = vrot.slane %v8596, 1
  %v8598 = vadd.f32 %v8596, %v8597
  %v8599 = vmul.f32 %v8391, 0.00390625
  %v8600 = vmul.f32 %v8460, 0.00390625
  %v8601 = vmul.f32 %v8529, 0.00390625
  %v8602 = vmul.f32 %v8598, 0.00390625
  %vm8607 = vcmask 1041409
  %v8608 = vsel %vm8607, %v8320, %v8319
  %vm8609 = vcmask 1042434
  %v8610 = vsel %vm8609, %v8321, %v8608
  %vm8611 = vcmask 1043459
  %v8612 = vsel %vm8611, %v8322, %v8610
  %v8618 = vsel %vm8607, %v8600, %v8599
  %v8619 = vsel %vm8609, %v8601, %v8618
  %v8620 = vsel %vm8611, %v8602, %v8619
  %8621 = vrot.lane.b32.xlu0 %v8620, 8
  %v8622 = vpop.permute.xlu0 %8621
  %v8624 = vsel %vm5789, %v8612, %v8622
  %v8625 = vsel %vm6035, %v8624, 0.0
  %8626 = vst [vmem:[%s5] sm:$0xf] %v8625
  // Predicated region
  $region22: #{atomnet_forward.2} parent=0 // pred_check
    _
  $region23: #{atomnet_forward.2} parent=0 // pred_check_branch
    %8628 = sbr.rel (0) target = $region25
  $region24: #{atomnet_forward.2} parent=0 // pred_region
    _
  $region25: #{atomnet_forward.2} parent=0 // pred_fallthru
    _
  // Predicated region
  $region26: #{atomnet_forward.2} parent=0 // pred_check
    _
  $region27: #{atomnet_forward.2} parent=0 // pred_check_branch
    %8630 = sbr.rel (0) target = $region29
  $region28: #{atomnet_forward.2} parent=0 // pred_region
    _
  $region29: #{atomnet_forward.2} parent=0 // pred_fallthru
    _

</llo_original>
